<compile_context>
chip_gen: v6e
topology: v6e:2x2x1
jax: 0.10.0
libtpu: 0.0.40
codegen_flags: <defaults>
</compile_context>

<pallas_src>
import numpy as np
import jax
import jax.numpy as jnp
from jax.experimental import pallas as pl
from jax.experimental.pallas import tpu as pltpu

HIDDEN_DIM = 90   # must be divisible by 6 (PyTorch default)
DIM = 128         # output embedding dim (PyTorch default)
_LANE = 128
_DELTA = 2.0 ** -7   # power of two: delta*x and W_x/delta are exact scalings


def _round_up(x, m):
    return (x + m - 1) // m * m


def point_embed(x, basis, weight, bias, *, tm=4096,
                out_dtype=jnp.float32, pe_matmul_dtype=jnp.float32):
    """x: (B,N,3) f32; basis: (3, hidden/2); weight: (dim, hidden+3); bias: (dim,).

    out_dtype:        output array dtype (bf16 halves the dominant HBM stream).
    pe_matmul_dtype:  dtype of pe / W_sc for the second MXU pass (bf16 ~4x MXU
                      speedup on v5e; keep f32 on v6e/v7x). Accumulation is f32.
    """
    B, N, D = x.shape
    assert D == 3
    E2 = basis.shape[1]                  # hidden // 2
    E = 2 * E2                           # hidden
    dim = weight.shape[0]
    assert weight.shape[1] == E + 3

    # q-lane count: sin(E2) + cos(E2) + x(3) + bias(1), rounded to full lanes.
    QL = _round_up(E + 4, _LANE)
    delta = jnp.float32(_DELTA)

    # ---- weight packing (wrapper-side; constant-folded under jit) ----------
    w_sin = weight[:, :E2].T.astype(jnp.float32)                    # (E2, dim)
    w_cos = weight[:, E2:E].T.astype(jnp.float32)                   # (E2, dim)
    w_x = weight[:, E:E + 3].T.astype(jnp.float32)                  # (3,  dim)

    # W_q columns: [basis | basis | delta*I3 | 0 (bias lane) | 0 pad]
    w_q = jnp.zeros((3, QL), jnp.float32)
    w_q = w_q.at[:, :E2].set(basis.astype(jnp.float32))
    w_q = w_q.at[:, E2:E].set(basis.astype(jnp.float32))
    w_q = w_q.at[:, E:E + 3].set(delta * jnp.eye(3, dtype=jnp.float32))

    # phase: cos(t) = sin(t + pi/2); bias lane: sin(0 + pi/2) = 1
    phase = jnp.zeros((QL,), jnp.float32)
    phase = phase.at[E2:E].set(jnp.float32(np.pi / 2))
    phase = phase.at[E + 3].set(jnp.float32(np.pi / 2))
    phase = phase.reshape(1, QL)

    # W_sc rows: [W_sin ; W_cos ; W_x/delta ; bias ; 0 pad]
    w_sc = jnp.zeros((QL, dim), jnp.float32)
    w_sc = w_sc.at[:E2].set(w_sin)
    w_sc = w_sc.at[E2:E].set(w_cos)
    w_sc = w_sc.at[E:E + 3].set(w_x / delta)
    w_sc = w_sc.at[E + 3].set(jnp.asarray(bias, jnp.float32))
    w_sc = w_sc.astype(pe_matmul_dtype)

    # ---- row tiling ---------------------------------------------------------
    # Minimal number of grid steps for the requested tile, then balance the
    # tile across those steps (keeps padding waste below one 128-row tile).
    M = B * N
    tm = max(_LANE, _round_up(tm, _LANE))
    n_steps = max(1, -(-M // tm))                       # cdiv
    tm_eff = min(tm, _round_up(-(-M // n_steps), _LANE))
    M_pad = n_steps * tm_eff

    xf = x.reshape(M, 3).astype(jnp.float32)
    if M_pad != M:
        xf = jnp.pad(xf, ((0, M_pad - M), (0, 0)))      # padded rows -> zeros

    cast_pe = np.dtype(pe_matmul_dtype) != np.dtype(jnp.float32)

    def kernel(x_ref, w_q_ref, phase_ref, w_sc_ref, out_ref):
        # One K=3 MXU pass -> [x@basis | x@basis | delta*x | 0 | 0-pad].
        q = jnp.dot(x_ref[...], w_q_ref[...], preferred_element_type=jnp.float32)
        # One full-lane sin does sin, cos (phase pi/2), the x pass-through
        # (small angle) and the constant-1 bias lane all at once.
        pe = jnp.sin(q + phase_ref[...])
        if cast_pe:
            pe = pe.astype(pe_matmul_dtype)
        # One K=128 MXU pass folds W_sin, W_cos, W_x and the bias.
        out_ref[...] = jnp.dot(pe, w_sc_ref[...],
                               preferred_element_type=jnp.float32).astype(out_ref.dtype)

    out = pl.pallas_call(
        kernel,
        out_shape=jax.ShapeDtypeStruct((M_pad, dim), out_dtype),
        grid_spec=pltpu.PrefetchScalarGridSpec(
            num_scalar_prefetch=0,
            grid=(n_steps,),
            in_specs=[
                pl.BlockSpec((tm_eff, 3), lambda i: (i, 0)),   # x rows (tiled)
                pl.BlockSpec((3, QL), lambda i: (0, 0)),       # W_q (resident)
                pl.BlockSpec((1, QL), lambda i: (0, 0)),       # phase row
                pl.BlockSpec((QL, dim), lambda i: (0, 0)),     # W_sc (resident)
            ],
            out_specs=pl.BlockSpec((tm_eff, dim), lambda i: (i, 0)),
        ),
        compiler_params=pltpu.CompilerParams(
            dimension_semantics=("parallel",),
            # ~14-18 MiB used at tm=4096 (x tile is lane-padded to (tm,128) f32,
            # i.e. as large as the output tile); 40 MiB leaves headroom and is
            # safe on v7x's 64 MiB physical VMEM per TensorCore.
            vmem_limit_bytes=40 * 1024 * 1024,
        ),
    )(xf, w_q, phase, w_sc)

    if M_pad != M:
        out = out[:M]
    return out.reshape(B, N, dim)


def make_basis(hidden_dim=HIDDEN_DIM):
    assert hidden_dim % 6 == 0
    k = hidden_dim // 6
    e = (2.0 ** np.arange(k)).astype(np.float32) * np.pi
    z = np.zeros(k, np.float32)
    basis = np.stack([
        np.concatenate([e, z, z]),
        np.concatenate([z, e, z]),
        np.concatenate([z, z, e]),
    ])                                       # (3, hidden_dim // 2)
    return jnp.asarray(basis, jnp.float32)


def reference(x, basis, weight, bias):
    # Pure-JAX reference matching the PyTorch forward exactly.
    p = jnp.einsum('bnd,de->bne', x, basis)
    pe = jnp.concatenate([jnp.sin(p), jnp.cos(p)], axis=2)
    feat = jnp.concatenate([pe, x], axis=2)
    return jnp.einsum('bnf,of->bno', feat, weight) + bias


if __name__ == "__main__":
    B, N = 2, 200            # B*N = 400: exercises the pad-to-tile / slice path
    key = jax.random.PRNGKey(0)
    kx, kw, kb = jax.random.split(key, 3)

    # point coordinates in [-1, 1] (normalized point cloud, the usual PointEmbed input)
    x = jax.random.uniform(kx, (B, N, 3), jnp.float32, -1.0, 1.0)
    basis = make_basis(HIDDEN_DIM)

    fan_in = HIDDEN_DIM + 3
    bound = 1.0 / np.sqrt(fan_in)
    weight = jax.random.uniform(kw, (DIM, fan_in), jnp.float32, -bound, bound)
    bias = jax.random.uniform(kb, (DIM,), jnp.float32, -bound, bound)

    out = jax.block_until_ready(point_embed(x, basis, weight, bias))
    ref = reference(x, basis, weight, bias)
    assert out.shape == (B, N, DIM)
    # Tolerance notes:
    #  * cos(t) is evaluated as sin(t + pi/2); at the top Fourier frequency
    #    (2^14 * pi) the f32 rounding of (t + pi/2) bounds the per-element
    #    difference at ~1e-3 -- same order as the reference's own f32
    #    range-reduction error there (valid for |x| <= 1 and hidden_dim = 90).
    #  * the x residual goes through sin(delta*x)/delta with delta = 2^-7:
    #    relative error <= delta^2/6 ~ 1e-5 (negligible).
    np.testing.assert_allclose(np.asarray(out), np.asarray(ref),
                               rtol=3e-3, atol=3e-3)
    print("KERNEL_OK")
</pallas_src>

<mosaic_0001>
module attributes {stable_mosaic.version = 11 : i64} {
  func.func @kernel(%arg0: i32, %arg1: memref<512x3xf32, #tpu.memory_space<vmem>>, %arg2: memref<3x128xf32, #tpu.memory_space<vmem>>, %arg3: memref<1x128xf32, #tpu.memory_space<vmem>>, %arg4: memref<128x128xf32, #tpu.memory_space<vmem>>, %arg5: memref<512x128xf32, #tpu.memory_space<vmem>>) attributes {dimension_semantics = [#tpu.dimension_semantics<parallel>], iteration_bounds = array<i64: 1>, scalar_prefetch = 0 : i64, scratch_operands = 0 : i64, tpu.core_type = #tpu.core_type<tc>, window_params = [{transform_indices = @transform_0, window_bounds = array<i64: 512, 3>}, {pipeline_mode = #tpu.pipeline_mode<synchronous>, transform_indices = @transform_1, window_bounds = array<i64: 3, 128>}, {pipeline_mode = #tpu.pipeline_mode<synchronous>, transform_indices = @transform_2, window_bounds = array<i64: 1, 128>}, {pipeline_mode = #tpu.pipeline_mode<synchronous>, transform_indices = @transform_3, window_bounds = array<i64: 128, 128>}, {transform_indices = @transform_4, window_bounds = array<i64: 512, 128>}]} {
    %c0 = arith.constant 0 : index
    %c0_0 = arith.constant 0 : index
    %0 = vector.load %arg1[%c0, %c0_0] : memref<512x3xf32, #tpu.memory_space<vmem>>, vector<512x3xf32>
    %c0_1 = arith.constant 0 : index
    %c0_2 = arith.constant 0 : index
    %1 = vector.load %arg2[%c0_1, %c0_2] : memref<3x128xf32, #tpu.memory_space<vmem>>, vector<3x128xf32>
    %cst = arith.constant dense<0.000000e+00> : vector<512x128xf32>
    %2 = tpu.matmul %0, %1, %cst {dimension_numbers = #tpu.dot_dimension_numbers<[1], [0], [0], [1], [0, 0, 1, 1], [], []>} : vector<512x3xf32>, vector<3x128xf32>, vector<512x128xf32> -> vector<512x128xf32>
    %c0_3 = arith.constant 0 : index
    %c0_4 = arith.constant 0 : index
    %3 = vector.load %arg3[%c0_3, %c0_4] : memref<1x128xf32, #tpu.memory_space<vmem>>, vector<1x128xf32>
    %4 = vector.broadcast %3 : vector<1x128xf32> to vector<512x128xf32>
    %5 = arith.addf %2, %4 : vector<512x128xf32>
    %6 = math.sin %5 : vector<512x128xf32>
    %c0_5 = arith.constant 0 : index
    %c0_6 = arith.constant 0 : index
    %7 = vector.load %arg4[%c0_5, %c0_6] : memref<128x128xf32, #tpu.memory_space<vmem>>, vector<128x128xf32>
    %cst_7 = arith.constant dense<0.000000e+00> : vector<512x128xf32>
    %8 = tpu.matmul %6, %7, %cst_7 {dimension_numbers = #tpu.dot_dimension_numbers<[1], [0], [0], [1], [0, 0, 1, 1], [], []>} : vector<512x128xf32>, vector<128x128xf32>, vector<512x128xf32> -> vector<512x128xf32>
    %c0_8 = arith.constant 0 : index
    %c0_9 = arith.constant 0 : index
    %9 = vector.load %arg5[%c0_8, %c0_9] : memref<512x128xf32, #tpu.memory_space<vmem>>, vector<512x128xf32>
    tpu.vector_store %arg5[%c0_8, %c0_9], %8 {strides = array<i32>} : memref<512x128xf32, #tpu.memory_space<vmem>>, vector<512x128xf32>,
    return
  }
  func.func @transform_0(%arg0: i32) -> (i32, i32) {
    %c0_i32 = arith.constant 0 : i32
    %c0_i32_0 = arith.constant 0 : i32
    return %arg0, %c0_i32 : i32, i32
  }
  func.func @transform_1(%arg0: i32) -> (i32, i32) {
    %c0_i32 = arith.constant 0 : i32
    %c0_i32_0 = arith.constant 0 : i32
    %c0_i32_1 = arith.constant 0 : i32
    return %c0_i32, %c0_i32_0 : i32, i32
  }
  func.func @transform_2(%arg0: i32) -> (i32, i32) {
    %c0_i32 = arith.constant 0 : i32
    %c0_i32_0 = arith.constant 0 : i32
    %c0_i32_1 = arith.constant 0 : i32
    return %c0_i32, %c0_i32_0 : i32, i32
  }
  func.func @transform_3(%arg0: i32) -> (i32, i32) {
    %c0_i32 = arith.constant 0 : i32
    %c0_i32_0 = arith.constant 0 : i32
    %c0_i32_1 = arith.constant 0 : i32
    return %c0_i32, %c0_i32_0 : i32, i32
  }
  func.func @transform_4(%arg0: i32) -> (i32, i32) {
    %c0_i32 = arith.constant 0 : i32
    %c0_i32_0 = arith.constant 0 : i32
    return %arg0, %c0_i32 : i32, i32
  }
}

</mosaic_0001>

<llo_original>
// kernel: tpu_custom_call.1
$region0: #{tpu_custom_call.1}
  #allocation0 [shape = 'u32[]', space=smem, size = 0x4, offset = 0x4, fixed_abs, tag = 'smem constant byte address 0x4 - core index']
  #allocation1 [shape = 'u32[144,128]{1,0:T(1,128)}', space=vmem, size = 0x12000, scoped, tag = 'internal scratch']
  %s0 = inlined_call_operand.vmem [shape: f32[512,3], index: 0, kind: input, shape index: {}]
  %s1 = inlined_call_operand.vmem [shape: f32[3,128], index: 1, kind: input, shape index: {}]
  %s2 = inlined_call_operand.vmem [shape: f32[1,128], index: 2, kind: input, shape index: {}]
  %s3 = inlined_call_operand.vmem [shape: f32[128,128], index: 3, kind: input, shape index: {}]
  %s4 = inlined_call_operand.hbm [shape: f32[512,128], index: 4, kind: output, shape index: {}]
  %s5 = sld [smem:[#allocation0]]
  $region26: #{tpu_custom_call.1} parent=0
    _
  %s7 = ssub.s32 1, %s5
  %s8 = scalar_select 0, %s7, %s5
  $region1: #{tpu_custom_call.1} parent=0
    #allocation2 [shape = 'u8[262144]{0}', space=vmem, size = 0x40000, scoped, tag = 'output window, operand 0, single buffered']
    #allocation3 [shape = 's32[1]{0}', space=sflag, size = 0x4, scoped, tag = 'scoped memory for tpu_custom_call.1']
    %9 = vsyncpa [#allocation3], 0
    // Predicated region
    $region2: #{tpu_custom_call.1} parent=1 // pred_check
      _
    $region3: #{tpu_custom_call.1} parent=1 // pred_check_branch
      %11 = sbr.rel (0) target = $region5
    $region4: #{tpu_custom_call.1} parent=1 // pred_region
      _
    $region5: #{tpu_custom_call.1} parent=1 // pred_fallthru
      _
    // Predicated region
    $region6: #{tpu_custom_call.1} parent=1 // pred_check
      _
    $region7: #{tpu_custom_call.1} parent=1 // pred_check_branch
      %13 = sbr.rel (0) target = $region9
    $region8: #{tpu_custom_call.1} parent=1 // pred_region
      _
    $region9: #{tpu_custom_call.1} parent=1 // pred_fallthru
      _
    // Predicated region
    $region10: #{tpu_custom_call.1} parent=1 // pred_check
      _
    $region11: #{tpu_custom_call.1} parent=1 // pred_check_branch
      %15 = sbr.rel (0) target = $region13
    $region12: #{tpu_custom_call.1} parent=1 // pred_region
      _
    $region13: #{tpu_custom_call.1} parent=1 // pred_fallthru
      _
    // Predicated region
    $region14: #{tpu_custom_call.1} parent=1 // pred_check
      _
    $region15: #{tpu_custom_call.1} parent=1 // pred_check_branch
      %17 = sbr.rel (0) target = $region17
    $region16: #{tpu_custom_call.1} parent=1 // pred_region
      _
    $region17: #{tpu_custom_call.1} parent=1 // pred_fallthru
      _
    %v18 = vld [vmem:[%s0] sm:$0xff]
    %v19 = vld [vmem:[%s0 + $0x8] sm:$0xff]
    %v20 = vld [vmem:[%s0 + $0x10] sm:$0xff]
    %v21 = vld [vmem:[%s0 + $0x18] sm:$0xff]
    %v22 = vld [vmem:[%s0 + $0x20] sm:$0xff]
    %v23 = vld [vmem:[%s0 + $0x28] sm:$0xff]
    %v24 = vld [vmem:[%s0 + $0x30] sm:$0xff]
    %v25 = vld [vmem:[%s0 + $0x38] sm:$0xff]
    %v26 = vld [vmem:[%s0 + $0x40] sm:$0xff]
    %v27 = vld [vmem:[%s0 + $0x48] sm:$0xff]
    %v28 = vld [vmem:[%s0 + $0x50] sm:$0xff]
    %v29 = vld [vmem:[%s0 + $0x58] sm:$0xff]
    %v30 = vld [vmem:[%s0 + $0x60] sm:$0xff]
    %v31 = vld [vmem:[%s0 + $0x68] sm:$0xff]
    %v32 = vld [vmem:[%s0 + $0x70] sm:$0xff]
    %v33 = vld [vmem:[%s0 + $0x78] sm:$0xff]
    %v34 = vld [vmem:[%s0 + $0x80] sm:$0xff]
    %v35 = vld [vmem:[%s0 + $0x88] sm:$0xff]
    %v36 = vld [vmem:[%s0 + $0x90] sm:$0xff]
    %v37 = vld [vmem:[%s0 + $0x98] sm:$0xff]
    %v38 = vld [vmem:[%s0 + $0xa0] sm:$0xff]
    %v39 = vld [vmem:[%s0 + $0xa8] sm:$0xff]
    %v40 = vld [vmem:[%s0 + $0xb0] sm:$0xff]
    %v41 = vld [vmem:[%s0 + $0xb8] sm:$0xff]
    %v42 = vld [vmem:[%s0 + $0xc0] sm:$0xff]
    %v43 = vld [vmem:[%s0 + $0xc8] sm:$0xff]
    %v44 = vld [vmem:[%s0 + $0xd0] sm:$0xff]
    %v45 = vld [vmem:[%s0 + $0xd8] sm:$0xff]
    %v46 = vld [vmem:[%s0 + $0xe0] sm:$0xff]
    %v47 = vld [vmem:[%s0 + $0xe8] sm:$0xff]
    %v48 = vld [vmem:[%s0 + $0xf0] sm:$0xff]
    %v49 = vld [vmem:[%s0 + $0xf8] sm:$0xff]
    %v50 = vld [vmem:[%s0 + $0x100] sm:$0xff]
    %v51 = vld [vmem:[%s0 + $0x108] sm:$0xff]
    %v52 = vld [vmem:[%s0 + $0x110] sm:$0xff]
    %v53 = vld [vmem:[%s0 + $0x118] sm:$0xff]
    %v54 = vld [vmem:[%s0 + $0x120] sm:$0xff]
    %v55 = vld [vmem:[%s0 + $0x128] sm:$0xff]
    %v56 = vld [vmem:[%s0 + $0x130] sm:$0xff]
    %v57 = vld [vmem:[%s0 + $0x138] sm:$0xff]
    %v58 = vld [vmem:[%s0 + $0x140] sm:$0xff]
    %v59 = vld [vmem:[%s0 + $0x148] sm:$0xff]
    %v60 = vld [vmem:[%s0 + $0x150] sm:$0xff]
    %v61 = vld [vmem:[%s0 + $0x158] sm:$0xff]
    %v62 = vld [vmem:[%s0 + $0x160] sm:$0xff]
    %v63 = vld [vmem:[%s0 + $0x168] sm:$0xff]
    %v64 = vld [vmem:[%s0 + $0x170] sm:$0xff]
    %v65 = vld [vmem:[%s0 + $0x178] sm:$0xff]
    %v66 = vld [vmem:[%s0 + $0x180] sm:$0xff]
    %v67 = vld [vmem:[%s0 + $0x188] sm:$0xff]
    %v68 = vld [vmem:[%s0 + $0x190] sm:$0xff]
    %v69 = vld [vmem:[%s0 + $0x198] sm:$0xff]
    %v70 = vld [vmem:[%s0 + $0x1a0] sm:$0xff]
    %v71 = vld [vmem:[%s0 + $0x1a8] sm:$0xff]
    %v72 = vld [vmem:[%s0 + $0x1b0] sm:$0xff]
    %v73 = vld [vmem:[%s0 + $0x1b8] sm:$0xff]
    %v74 = vld [vmem:[%s0 + $0x1c0] sm:$0xff]
    %v75 = vld [vmem:[%s0 + $0x1c8] sm:$0xff]
    %v76 = vld [vmem:[%s0 + $0x1d0] sm:$0xff]
    %v77 = vld [vmem:[%s0 + $0x1d8] sm:$0xff]
    %v78 = vld [vmem:[%s0 + $0x1e0] sm:$0xff]
    %v79 = vld [vmem:[%s0 + $0x1e8] sm:$0xff]
    %v80 = vld [vmem:[%s0 + $0x1f0] sm:$0xff]
    %v81 = vld [vmem:[%s0 + $0x1f8] sm:$0xff]
    %v82 = vld [vmem:[%s1] sm:$0x7]
    %v83 = vld [vmem:[%s2] sm:$0x1]
    %v85 = vlaneseq
    %v86 = vshrl.u32 %v85, 7
    %v87 = vsub.s32 0, %v86
    %v88 = vrot.slane %v83, %v87
    %vm90 = vcmask 23552
    %v92 = vsel %vm90, %v18, 0
    %v95 = vsel %vm90, %v19, 0
    %v98 = vsel %vm90, %v20, 0
    %v101 = vsel %vm90, %v21, 0
    %v104 = vsel %vm90, %v22, 0
    %v107 = vsel %vm90, %v23, 0
    %v110 = vsel %vm90, %v24, 0
    %v113 = vsel %vm90, %v25, 0
    %v116 = vsel %vm90, %v26, 0
    %v119 = vsel %vm90, %v27, 0
    %v122 = vsel %vm90, %v28, 0
    %v125 = vsel %vm90, %v29, 0
    %v128 = vsel %vm90, %v30, 0
    %v131 = vsel %vm90, %v31, 0
    %v134 = vsel %vm90, %v32, 0
    %v137 = vsel %vm90, %v33, 0
    %v140 = vsel %vm90, %v34, 0
    %v143 = vsel %vm90, %v35, 0
    %v146 = vsel %vm90, %v36, 0
    %v149 = vsel %vm90, %v37, 0
    %v152 = vsel %vm90, %v38, 0
    %v155 = vsel %vm90, %v39, 0
    %v158 = vsel %vm90, %v40, 0
    %v161 = vsel %vm90, %v41, 0
    %v164 = vsel %vm90, %v42, 0
    %v167 = vsel %vm90, %v43, 0
    %v170 = vsel %vm90, %v44, 0
    %v173 = vsel %vm90, %v45, 0
    %v176 = vsel %vm90, %v46, 0
    %v179 = vsel %vm90, %v47, 0
    %v182 = vsel %vm90, %v48, 0
    %v185 = vsel %vm90, %v49, 0
    %v188 = vsel %vm90, %v50, 0
    %v191 = vsel %vm90, %v51, 0
    %v194 = vsel %vm90, %v52, 0
    %v197 = vsel %vm90, %v53, 0
    %v200 = vsel %vm90, %v54, 0
    %v203 = vsel %vm90, %v55, 0
    %v206 = vsel %vm90, %v56, 0
    %v209 = vsel %vm90, %v57, 0
    %v212 = vsel %vm90, %v58, 0
    %v215 = vsel %vm90, %v59, 0
    %v218 = vsel %vm90, %v60, 0
    %v221 = vsel %vm90, %v61, 0
    %v224 = vsel %vm90, %v62, 0
    %v227 = vsel %vm90, %v63, 0
    %v230 = vsel %vm90, %v64, 0
    %v233 = vsel %vm90, %v65, 0
    %v236 = vsel %vm90, %v66, 0
    %v239 = vsel %vm90, %v67, 0
    %v242 = vsel %vm90, %v68, 0
    %v245 = vsel %vm90, %v69, 0
    %v248 = vsel %vm90, %v70, 0
    %v251 = vsel %vm90, %v71, 0
    %v254 = vsel %vm90, %v72, 0
    %v257 = vsel %vm90, %v73, 0
    %v260 = vsel %vm90, %v74, 0
    %v263 = vsel %vm90, %v75, 0
    %v266 = vsel %vm90, %v76, 0
    %v269 = vsel %vm90, %v77, 0
    %v272 = vsel %vm90, %v78, 0
    %v275 = vsel %vm90, %v79, 0
    %v278 = vsel %vm90, %v80, 0
    %v281 = vsel %vm90, %v81, 0
    %vm283 = vcmask 1042432
    %v285 = vsel %vm283, %v82, 0
    %287 = vmatprep.subr.mxu0 0.0
    %288 = vmatpush1.msra.mxu0 0.0
    %289 = vmatprep.subr.mxu0 0.0
    %290 = vmatpush1.msra.mxu0 0.0
    %291 = vmatprep.subr.mxu0 0.0
    %292 = vmatpush1.msra.mxu0 0.0
    %293 = vmatprep.subr.mxu0 0.0
    %294 = vmatpush1.msra.mxu0 0.0
    %295 = vmatprep.subr.mxu0 0.0
    %296 = vmatpush1.msra.mxu0 0.0
    %297 = vmatprep.subr.mxu0 0.0
    %298 = vmatpush1.msra.mxu0 0.0
    %299 = vmatprep.subr.mxu0 0.0
    %300 = vmatpush1.msra.mxu0 0.0
    %301 = vmatprep.subr.mxu0 0.0
    %302 = vmatpush1.msra.mxu0 0.0
    %303 = vmatprep.subr.mxu0 0.0
    %304 = vmatpush1.msra.mxu0 0.0
    %305 = vmatprep.subr.mxu0 0.0
    %306 = vmatpush1.msra.mxu0 0.0
    %307 = vmatprep.subr.mxu0 0.0
    %308 = vmatpush1.msra.mxu0 0.0
    %309 = vmatprep.subr.mxu0 0.0
    %310 = vmatpush1.msra.mxu0 0.0
    %311 = vmatprep.subr.mxu0 0.0
    %312 = vmatpush1.msra.mxu0 0.0
    %313 = vmatprep.subr.mxu0 0.0
    %314 = vmatpush1.msra.mxu0 0.0
    %315 = vmatprep.subr.mxu0 0.0
    %316 = vmatpush1.msra.mxu0 0.0
    %317 = vmatprep.subr.mxu0 0.0
    %318 = vmatpush1.msra.mxu0 %v285
    %319 = vmatprep.subr.mxu0 0.0
    %320 = vmatpush2.msra.mxu0 0.0
    %321 = vmatprep.subr.mxu0 0.0
    %322 = vmatpush2.msra.mxu0 0.0
    %323 = vmatprep.subr.mxu0 0.0
    %324 = vmatpush2.msra.mxu0 0.0
    %325 = vmatprep.subr.mxu0 0.0
    %326 = vmatpush2.msra.mxu0 0.0
    %327 = vmatprep.subr.mxu0 0.0
    %328 = vmatpush2.msra.mxu0 0.0
    %329 = vmatprep.subr.mxu0 0.0
    %330 = vmatpush2.msra.mxu0 0.0
    %331 = vmatprep.subr.mxu0 0.0
    %332 = vmatpush2.msra.mxu0 0.0
    %333 = vmatprep.subr.mxu0 0.0
    %334 = vmatpush2.msra.mxu0 0.0
    %335 = vmatprep.subr.mxu0 0.0
    %336 = vmatpush2.msra.mxu0 0.0
    %337 = vmatprep.subr.mxu0 0.0
    %338 = vmatpush2.msra.mxu0 0.0
    %339 = vmatprep.subr.mxu0 0.0
    %340 = vmatpush2.msra.mxu0 0.0
    %341 = vmatprep.subr.mxu0 0.0
    %342 = vmatpush2.msra.mxu0 0.0
    %343 = vmatprep.subr.mxu0 0.0
    %344 = vmatpush2.msra.mxu0 0.0
    %345 = vmatprep.subr.mxu0 0.0
    %346 = vmatpush2.msra.mxu0 0.0
    %347 = vmatprep.subr.mxu0 0.0
    %348 = vmatpush2.msra.mxu0 0.0
    %349 = vmatprep.subr.mxu0 0.0
    %350 = vmatpush2.msra.mxu0 0.0
    %351 = vmatprep.mubr.f32.mxu0 0.0
    %352 = vmatmul.mubr.f32.gmra.mxu0 %v92
    %v353 = vpop.f32.mrf.mxu0
    %v354 = vadd.f32 %v88, %v353
    %v355 = vpop.f32.mrf.mxu0
    %356 = vmatprep.mubr.f32.mxu0 0.0
    %357 = vmatmul.mubr.f32.gmra.mxu0 %v95
    %v358 = vpop.f32.mrf.mxu0
    %v359 = vadd.f32 %v88, %v358
    %v360 = vpop.f32.mrf.mxu0
    %361 = vmatprep.mubr.f32.mxu0 0.0
    %362 = vmatmul.mubr.f32.gmra.mxu0 %v98
    %v363 = vpop.f32.mrf.mxu0
    %v364 = vadd.f32 %v88, %v363
    %v365 = vpop.f32.mrf.mxu0
    %366 = vmatprep.mubr.f32.mxu0 0.0
    %367 = vmatmul.mubr.f32.gmra.mxu0 %v101
    %v368 = vpop.f32.mrf.mxu0
    %v369 = vadd.f32 %v88, %v368
    %v370 = vpop.f32.mrf.mxu0
    %371 = vmatprep.mubr.f32.mxu0 0.0
    %372 = vmatmul.mubr.f32.gmra.mxu0 %v104
    %v373 = vpop.f32.mrf.mxu0
    %v374 = vadd.f32 %v88, %v373
    %v375 = vpop.f32.mrf.mxu0
    %376 = vmatprep.mubr.f32.mxu0 0.0
    %377 = vmatmul.mubr.f32.gmra.mxu0 %v107
    %v378 = vpop.f32.mrf.mxu0
    %v379 = vadd.f32 %v88, %v378
    %v380 = vpop.f32.mrf.mxu0
    %381 = vmatprep.mubr.f32.mxu0 0.0
    %382 = vmatmul.mubr.f32.gmra.mxu0 %v110
    %v383 = vpop.f32.mrf.mxu0
    %v384 = vadd.f32 %v88, %v383
    %v385 = vpop.f32.mrf.mxu0
    %386 = vmatprep.mubr.f32.mxu0 0.0
    %387 = vmatmul.mubr.f32.gmra.mxu0 %v113
    %v388 = vpop.f32.mrf.mxu0
    %v389 = vadd.f32 %v88, %v388
    %v390 = vpop.f32.mrf.mxu0
    %391 = vmatprep.mubr.f32.mxu0 0.0
    %392 = vmatmul.mubr.f32.gmra.mxu0 %v116
    %v393 = vpop.f32.mrf.mxu0
    %v394 = vadd.f32 %v88, %v393
    %v395 = vpop.f32.mrf.mxu0
    %396 = vmatprep.mubr.f32.mxu0 0.0
    %397 = vmatmul.mubr.f32.gmra.mxu0 %v119
    %v398 = vpop.f32.mrf.mxu0
    %v399 = vadd.f32 %v88, %v398
    %v400 = vpop.f32.mrf.mxu0
    %401 = vmatprep.mubr.f32.mxu0 0.0
    %402 = vmatmul.mubr.f32.gmra.mxu0 %v122
    %v403 = vpop.f32.mrf.mxu0
    %v404 = vadd.f32 %v88, %v403
    %v405 = vpop.f32.mrf.mxu0
    %406 = vmatprep.mubr.f32.mxu0 0.0
    %407 = vmatmul.mubr.f32.gmra.mxu0 %v125
    %v408 = vpop.f32.mrf.mxu0
    %v409 = vadd.f32 %v88, %v408
    %v410 = vpop.f32.mrf.mxu0
    %411 = vmatprep.mubr.f32.mxu0 0.0
    %412 = vmatmul.mubr.f32.gmra.mxu0 %v128
    %v413 = vpop.f32.mrf.mxu0
    %v414 = vadd.f32 %v88, %v413
    %v415 = vpop.f32.mrf.mxu0
    %416 = vmatprep.mubr.f32.mxu0 0.0
    %417 = vmatmul.mubr.f32.gmra.mxu0 %v131
    %v418 = vpop.f32.mrf.mxu0
    %v419 = vadd.f32 %v88, %v418
    %v420 = vpop.f32.mrf.mxu0
    %421 = vmatprep.mubr.f32.mxu0 0.0
    %422 = vmatmul.mubr.f32.gmra.mxu0 %v134
    %v423 = vpop.f32.mrf.mxu0
    %v424 = vadd.f32 %v88, %v423
    %v425 = vpop.f32.mrf.mxu0
    %426 = vmatprep.mubr.f32.mxu0 0.0
    %427 = vmatmul.mubr.f32.gmra.mxu0 %v137
    %v428 = vpop.f32.mrf.mxu0
    %v429 = vadd.f32 %v88, %v428
    %v430 = vpop.f32.mrf.mxu0
    %431 = vmatprep.mubr.f32.mxu0 0.0
    %432 = vmatmul.mubr.f32.gmra.mxu0 %v140
    %v433 = vpop.f32.mrf.mxu0
    %v434 = vadd.f32 %v88, %v433
    %v435 = vpop.f32.mrf.mxu0
    %436 = vmatprep.mubr.f32.mxu0 0.0
    %437 = vmatmul.mubr.f32.gmra.mxu0 %v143
    %v438 = vpop.f32.mrf.mxu0
    %v439 = vadd.f32 %v88, %v438
    %v440 = vpop.f32.mrf.mxu0
    %441 = vmatprep.mubr.f32.mxu0 0.0
    %442 = vmatmul.mubr.f32.gmra.mxu0 %v146
    %v443 = vpop.f32.mrf.mxu0
    %v444 = vadd.f32 %v88, %v443
    %v445 = vpop.f32.mrf.mxu0
    %446 = vmatprep.mubr.f32.mxu0 0.0
    %447 = vmatmul.mubr.f32.gmra.mxu0 %v149
    %v448 = vpop.f32.mrf.mxu0
    %v449 = vadd.f32 %v88, %v448
    %v450 = vpop.f32.mrf.mxu0
    %451 = vmatprep.mubr.f32.mxu0 0.0
    %452 = vmatmul.mubr.f32.gmra.mxu0 %v152
    %v453 = vpop.f32.mrf.mxu0
    %v454 = vadd.f32 %v88, %v453
    %v455 = vpop.f32.mrf.mxu0
    %456 = vmatprep.mubr.f32.mxu0 0.0
    %457 = vmatmul.mubr.f32.gmra.mxu0 %v155
    %v458 = vpop.f32.mrf.mxu0
    %v459 = vadd.f32 %v88, %v458
    %v460 = vpop.f32.mrf.mxu0
    %461 = vmatprep.mubr.f32.mxu0 0.0
    %462 = vmatmul.mubr.f32.gmra.mxu0 %v158
    %v463 = vpop.f32.mrf.mxu0
    %v464 = vadd.f32 %v88, %v463
    %v465 = vpop.f32.mrf.mxu0
    %466 = vmatprep.mubr.f32.mxu0 0.0
    %467 = vmatmul.mubr.f32.gmra.mxu0 %v161
    %v468 = vpop.f32.mrf.mxu0
    %v469 = vadd.f32 %v88, %v468
    %v470 = vpop.f32.mrf.mxu0
    %471 = vmatprep.mubr.f32.mxu0 0.0
    %472 = vmatmul.mubr.f32.gmra.mxu0 %v164
    %v473 = vpop.f32.mrf.mxu0
    %v474 = vadd.f32 %v88, %v473
    %v475 = vpop.f32.mrf.mxu0
    %476 = vmatprep.mubr.f32.mxu0 0.0
    %477 = vmatmul.mubr.f32.gmra.mxu0 %v167
    %v478 = vpop.f32.mrf.mxu0
    %v479 = vadd.f32 %v88, %v478
    %v480 = vpop.f32.mrf.mxu0
    %481 = vmatprep.mubr.f32.mxu0 0.0
    %482 = vmatmul.mubr.f32.gmra.mxu0 %v170
    %v483 = vpop.f32.mrf.mxu0
    %v484 = vadd.f32 %v88, %v483
    %v485 = vpop.f32.mrf.mxu0
    %486 = vmatprep.mubr.f32.mxu0 0.0
    %487 = vmatmul.mubr.f32.gmra.mxu0 %v173
    %v488 = vpop.f32.mrf.mxu0
    %v489 = vadd.f32 %v88, %v488
    %v490 = vpop.f32.mrf.mxu0
    %491 = vmatprep.mubr.f32.mxu0 0.0
    %492 = vmatmul.mubr.f32.gmra.mxu0 %v176
    %v493 = vpop.f32.mrf.mxu0
    %v494 = vadd.f32 %v88, %v493
    %v495 = vpop.f32.mrf.mxu0
    %496 = vmatprep.mubr.f32.mxu0 0.0
    %497 = vmatmul.mubr.f32.gmra.mxu0 %v179
    %v498 = vpop.f32.mrf.mxu0
    %v499 = vadd.f32 %v88, %v498
    %v500 = vpop.f32.mrf.mxu0
    %501 = vmatprep.mubr.f32.mxu0 0.0
    %502 = vmatmul.mubr.f32.gmra.mxu0 %v182
    %v503 = vpop.f32.mrf.mxu0
    %v504 = vadd.f32 %v88, %v503
    %v505 = vpop.f32.mrf.mxu0
    %506 = vmatprep.mubr.f32.mxu0 0.0
    %507 = vmatmul.mubr.f32.gmra.mxu0 %v185
    %v508 = vpop.f32.mrf.mxu0
    %v509 = vadd.f32 %v88, %v508
    %v510 = vpop.f32.mrf.mxu0
    %511 = vmatprep.mubr.f32.mxu0 0.0
    %512 = vmatmul.mubr.f32.gmra.mxu0 %v188
    %v513 = vpop.f32.mrf.mxu0
    %v514 = vadd.f32 %v88, %v513
    %v515 = vpop.f32.mrf.mxu0
    %516 = vmatprep.mubr.f32.mxu0 0.0
    %517 = vmatmul.mubr.f32.gmra.mxu0 %v191
    %v518 = vpop.f32.mrf.mxu0
    %v519 = vadd.f32 %v88, %v518
    %v520 = vpop.f32.mrf.mxu0
    %521 = vmatprep.mubr.f32.mxu0 0.0
    %522 = vmatmul.mubr.f32.gmra.mxu0 %v194
    %v523 = vpop.f32.mrf.mxu0
    %v524 = vadd.f32 %v88, %v523
    %v525 = vpop.f32.mrf.mxu0
    %526 = vmatprep.mubr.f32.mxu0 0.0
    %527 = vmatmul.mubr.f32.gmra.mxu0 %v197
    %v528 = vpop.f32.mrf.mxu0
    %v529 = vadd.f32 %v88, %v528
    %v530 = vpop.f32.mrf.mxu0
    %531 = vmatprep.mubr.f32.mxu0 0.0
    %532 = vmatmul.mubr.f32.gmra.mxu0 %v200
    %v533 = vpop.f32.mrf.mxu0
    %v534 = vadd.f32 %v88, %v533
    %v535 = vpop.f32.mrf.mxu0
    %536 = vmatprep.mubr.f32.mxu0 0.0
    %537 = vmatmul.mubr.f32.gmra.mxu0 %v203
    %v538 = vpop.f32.mrf.mxu0
    %v539 = vadd.f32 %v88, %v538
    %v540 = vpop.f32.mrf.mxu0
    %541 = vmatprep.mubr.f32.mxu0 0.0
    %542 = vmatmul.mubr.f32.gmra.mxu0 %v206
    %v543 = vpop.f32.mrf.mxu0
    %v544 = vadd.f32 %v88, %v543
    %v545 = vpop.f32.mrf.mxu0
    %546 = vmatprep.mubr.f32.mxu0 0.0
    %547 = vmatmul.mubr.f32.gmra.mxu0 %v209
    %v548 = vpop.f32.mrf.mxu0
    %v549 = vadd.f32 %v88, %v548
    %v550 = vpop.f32.mrf.mxu0
    %551 = vmatprep.mubr.f32.mxu0 0.0
    %552 = vmatmul.mubr.f32.gmra.mxu0 %v212
    %v553 = vpop.f32.mrf.mxu0
    %v554 = vadd.f32 %v88, %v553
    %v555 = vpop.f32.mrf.mxu0
    %556 = vmatprep.mubr.f32.mxu0 0.0
    %557 = vmatmul.mubr.f32.gmra.mxu0 %v215
    %v558 = vpop.f32.mrf.mxu0
    %v559 = vadd.f32 %v88, %v558
    %v560 = vpop.f32.mrf.mxu0
    %561 = vmatprep.mubr.f32.mxu0 0.0
    %562 = vmatmul.mubr.f32.gmra.mxu0 %v218
    %v563 = vpop.f32.mrf.mxu0
    %v564 = vadd.f32 %v88, %v563
    %v565 = vpop.f32.mrf.mxu0
    %566 = vmatprep.mubr.f32.mxu0 0.0
    %567 = vmatmul.mubr.f32.gmra.mxu0 %v221
    %v568 = vpop.f32.mrf.mxu0
    %v569 = vadd.f32 %v88, %v568
    %v570 = vpop.f32.mrf.mxu0
    %571 = vmatprep.mubr.f32.mxu0 0.0
    %572 = vmatmul.mubr.f32.gmra.mxu0 %v224
    %v573 = vpop.f32.mrf.mxu0
    %v574 = vadd.f32 %v88, %v573
    %v575 = vpop.f32.mrf.mxu0
    %576 = vmatprep.mubr.f32.mxu0 0.0
    %577 = vmatmul.mubr.f32.gmra.mxu0 %v227
    %v578 = vpop.f32.mrf.mxu0
    %v579 = vadd.f32 %v88, %v578
    %v580 = vpop.f32.mrf.mxu0
    %581 = vmatprep.mubr.f32.mxu0 0.0
    %582 = vmatmul.mubr.f32.gmra.mxu0 %v230
    %v583 = vpop.f32.mrf.mxu0
    %v584 = vadd.f32 %v88, %v583
    %v585 = vpop.f32.mrf.mxu0
    %586 = vmatprep.mubr.f32.mxu0 0.0
    %587 = vmatmul.mubr.f32.gmra.mxu0 %v233
    %v588 = vpop.f32.mrf.mxu0
    %v589 = vadd.f32 %v88, %v588
    %v590 = vpop.f32.mrf.mxu0
    %591 = vmatprep.mubr.f32.mxu0 0.0
    %592 = vmatmul.mubr.f32.gmra.mxu0 %v236
    %v593 = vpop.f32.mrf.mxu0
    %v594 = vadd.f32 %v88, %v593
    %v595 = vpop.f32.mrf.mxu0
    %596 = vmatprep.mubr.f32.mxu0 0.0
    %597 = vmatmul.mubr.f32.gmra.mxu0 %v239
    %v598 = vpop.f32.mrf.mxu0
    %v599 = vadd.f32 %v88, %v598
    %v600 = vpop.f32.mrf.mxu0
    %601 = vmatprep.mubr.f32.mxu0 0.0
    %602 = vmatmul.mubr.f32.gmra.mxu0 %v242
    %v603 = vpop.f32.mrf.mxu0
    %v604 = vadd.f32 %v88, %v603
    %v605 = vpop.f32.mrf.mxu0
    %606 = vmatprep.mubr.f32.mxu0 0.0
    %607 = vmatmul.mubr.f32.gmra.mxu0 %v245
    %v608 = vpop.f32.mrf.mxu0
    %v609 = vadd.f32 %v88, %v608
    %v610 = vpop.f32.mrf.mxu0
    %611 = vmatprep.mubr.f32.mxu0 0.0
    %612 = vmatmul.mubr.f32.gmra.mxu0 %v248
    %v613 = vpop.f32.mrf.mxu0
    %v614 = vadd.f32 %v88, %v613
    %v615 = vpop.f32.mrf.mxu0
    %616 = vmatprep.mubr.f32.mxu0 0.0
    %617 = vmatmul.mubr.f32.gmra.mxu0 %v251
    %v618 = vpop.f32.mrf.mxu0
    %v619 = vadd.f32 %v88, %v618
    %v620 = vpop.f32.mrf.mxu0
    %621 = vmatprep.mubr.f32.mxu0 0.0
    %622 = vmatmul.mubr.f32.gmra.mxu0 %v254
    %v623 = vpop.f32.mrf.mxu0
    %v624 = vadd.f32 %v88, %v623
    %v625 = vpop.f32.mrf.mxu0
    %626 = vmatprep.mubr.f32.mxu0 0.0
    %627 = vmatmul.mubr.f32.gmra.mxu0 %v257
    %v628 = vpop.f32.mrf.mxu0
    %v629 = vadd.f32 %v88, %v628
    %v630 = vpop.f32.mrf.mxu0
    %631 = vmatprep.mubr.f32.mxu0 0.0
    %632 = vmatmul.mubr.f32.gmra.mxu0 %v260
    %v633 = vpop.f32.mrf.mxu0
    %v634 = vadd.f32 %v88, %v633
    %v635 = vpop.f32.mrf.mxu0
    %636 = vmatprep.mubr.f32.mxu0 0.0
    %637 = vmatmul.mubr.f32.gmra.mxu0 %v263
    %v638 = vpop.f32.mrf.mxu0
    %v639 = vadd.f32 %v88, %v638
    %v640 = vpop.f32.mrf.mxu0
    %641 = vmatprep.mubr.f32.mxu0 0.0
    %642 = vmatmul.mubr.f32.gmra.mxu0 %v266
    %v643 = vpop.f32.mrf.mxu0
    %v644 = vadd.f32 %v88, %v643
    %v645 = vpop.f32.mrf.mxu0
    %646 = vmatprep.mubr.f32.mxu0 0.0
    %647 = vmatmul.mubr.f32.gmra.mxu0 %v269
    %v648 = vpop.f32.mrf.mxu0
    %v649 = vadd.f32 %v88, %v648
    %v650 = vpop.f32.mrf.mxu0
    %651 = vmatprep.mubr.f32.mxu0 0.0
    %652 = vmatmul.mubr.f32.gmra.mxu0 %v272
    %v653 = vpop.f32.mrf.mxu0
    %v654 = vadd.f32 %v88, %v653
    %v655 = vpop.f32.mrf.mxu0
    %656 = vmatprep.mubr.f32.mxu0 0.0
    %657 = vmatmul.mubr.f32.gmra.mxu0 %v275
    %v658 = vpop.f32.mrf.mxu0
    %v659 = vadd.f32 %v88, %v658
    %v660 = vpop.f32.mrf.mxu0
    %661 = vmatprep.mubr.f32.mxu0 0.0
    %662 = vmatmul.mubr.f32.gmra.mxu0 %v278
    %v663 = vpop.f32.mrf.mxu0
    %v664 = vadd.f32 %v88, %v663
    %v665 = vpop.f32.mrf.mxu0
    %666 = vmatprep.mubr.f32.mxu0 0.0
    %667 = vmatmul.mubr.f32.gmra.mxu0 %v281
    %v668 = vpop.f32.mrf.mxu0
    %v669 = vadd.f32 %v88, %v668
    %v670 = vpop.f32.mrf.mxu0
    %671 = vdwg.mxu0
    %v672 = vand.u32 2147483647, %v354
    %vm673 = vcmp.le.f32.partialorder %v672, 0.7853982
    %vm674 = vcmp.lt.s32.totalorder %v354, 0
    %v675 = vand.u32 %v354, 2139095040
    %v676 = vshrl.u32 %v675, 23
    %v677 = vsub.s32 %v676, 127
    %v678 = vand.u32 2147483647, %v354
    %v679 = vand.u32 %v678, 8388607
    %v680 = vor.u32 %v679, 8388608
    %v681 = vsub.s32 0, %v680
    %v682 = vadd.s32 %v677, 1
    %vm683 = vcmp.gt.s32.totalorder %v682, 0
    %v684 = vsel %vm683, %v682, 0
    %v685 = vshrl.u32 %v684, 5
    %v686 = vand.u32 %v684, 31
    %v687 = vsub.s32 32, %v686
    %v688 = vshrl.u32 683565275, %v687
    %v689 = vshll.u32 683565275, %v686
    %v690 = vshrl.u32 2475754826, %v687
    %v691 = vor.u32 %v689, %v690
    %v692 = vshll.u32 2475754826, %v686
    %v693 = vshrl.u32 2131351028, %v687
    %v694 = vor.u32 %v692, %v693
    %v695 = vshll.u32 2131351028, %v686
    %v696 = vshrl.u32 2102212464, %v687
    %v697 = vor.u32 %v695, %v696
    %v698 = vshll.u32 2102212464, %v686
    %v699 = vshrl.u32 920167782, %v687
    %v700 = vor.u32 %v698, %v699
    %v701 = vshll.u32 920167782, %v686
    %v702 = vshrl.u32 1326507024, %v687
    %v703 = vor.u32 %v701, %v702
    %vm704 = vcmp.lt.s32.totalorder %v685, 1
    %vm705 = vcmp.lt.s32.totalorder %v685, 2
    %vm706 = vcmp.lt.s32.totalorder %v685, 3
    %vm707 = vcmp.lt.s32.totalorder %v685, 4
    %v708 = vsel %vm704, %v688, %v691
    %v709 = vsel %vm707, %v697, 2102212464
    %v710 = vsel %vm706, %v694, %v709
    %v711 = vsel %vm705, %v708, %v710
    %v712 = vsel %vm704, %v691, %v694
    %v713 = vsel %vm707, %v700, 920167782
    %v714 = vsel %vm706, %v697, %v713
    %v715 = vsel %vm705, %v712, %v714
    %v716 = vsel %vm704, %v694, %v697
    %v717 = vsel %vm707, %v703, 1326507024
    %v718 = vsel %vm706, %v700, %v717
    %v719 = vsel %vm705, %v716, %v718
    %v720 = vshll.u32 %v680, 8
    %v721 = vmul.u32.u64.compose %v720, %v719
    %v722 = vextract.low.u32 %v721
    %v723 = vextract.high.u32 %v721
    %v724 = vmul.u32.u64.compose %v720, %v715
    %v725 = vextract.low.u32 %v724
    %v726 = vextract.high.u32 %v724
    %v727 = vmul.u32 %v720, %v711
    %v728 = vadd.s32 %v723, %v725
    %vm729 = vc.u32 %v723, %v725
    %v730 = vadd.s32 %v726, 1
    %v731 = vsel %vm729, %v730, %v726
    %v732 = vadd.s32 %v727, %v731
    %v733 = vadd.s32 %v732, 536870912
    %v734 = vshrl.u32 %v733, 30
    %v735 = vshll.u32 %v734, 30
    %v736 = vsub.s32 %v732, %v735
    %vm737 = vcmp.lt.s32.totalorder %v736, 0
    %v738 = vsub.s32 0, %v736
    %v739 = vsel %vm737, %v738, %v736
    %v740 = vclz %v739
    %v741 = vsub.s32 %v740, 2
    %vm742 = vcmp.gt.s32.totalorder 0, %v741
    %v743 = vsel %vm742, 0, %v741
    %v744 = vsub.s32 32, %v743
    %v745 = vshll.u32 %v736, %v743
    %v746 = vshrl.u32 %v728, %v744
    %v747 = vor.u32 %v745, %v746
    %v748 = vsub.s32 4294967266, %v743
    %v749 = vadd.s32 %v748, 127
    %v750 = vshll.u32 %v749, 23
    %v751 = vor.u32 4788187, %v750
    %v752 = vand.u32 2147483647, %v751
    %v754 = vcvt.s32.f32 %v747
    %v755 = vmul.f32 %v754, %v752
    %v756 = vxor.u32 %v755, 2147483648
    %v757 = vsel %vm674, %v756, %v755
    %v758 = vsub.s32 4, %v734
    %v759 = vsel %vm674, %v758, %v734
    %v760 = vsel %vm673, %v354, %v757
    %v761 = vsel %vm673, 0, %v759
    %v762 = vcosq.f32.pop %v760
    %v763 = vsinq.f32.pop %v760
    %vm764 = vweird.f32 %v354
    %v765 = vadd.s32 %v761, 3
    %v766 = vand.u32 %v765, 3
    %vm767 = vcmp.lt.s32.totalorder %v766, 2
    %vm768 = vcmp.eq.s32.totalorder %v766, 0
    %v769 = vxor.u32 %v763, 2147483648
    %v770 = vsel %vm768, %v762, %v769
    %vm771 = vcmp.eq.s32.totalorder %v766, 2
    %v772 = vxor.u32 %v762, 2147483648
    %v773 = vsel %vm771, %v772, %v763
    %v774 = vsel %vm767, %v770, %v773
    %v775 = vsel %vm764, nan, %v774
    %v776 = vand.u32 2147483647, %v359
    %vm777 = vcmp.le.f32.partialorder %v776, 0.7853982
    %vm778 = vcmp.lt.s32.totalorder %v359, 0
    %v779 = vand.u32 %v359, 2139095040
    %v780 = vshrl.u32 %v779, 23
    %v781 = vsub.s32 %v780, 127
    %v782 = vand.u32 2147483647, %v359
    %v783 = vand.u32 %v782, 8388607
    %v784 = vor.u32 %v783, 8388608
    %v785 = vsub.s32 0, %v784
    %v786 = vadd.s32 %v781, 1
    %vm787 = vcmp.gt.s32.totalorder %v786, 0
    %v788 = vsel %vm787, %v786, 0
    %v789 = vshrl.u32 %v788, 5
    %v790 = vand.u32 %v788, 31
    %v791 = vsub.s32 32, %v790
    %v792 = vshrl.u32 683565275, %v791
    %v793 = vshll.u32 683565275, %v790
    %v794 = vshrl.u32 2475754826, %v791
    %v795 = vor.u32 %v793, %v794
    %v796 = vshll.u32 2475754826, %v790
    %v797 = vshrl.u32 2131351028, %v791
    %v798 = vor.u32 %v796, %v797
    %v799 = vshll.u32 2131351028, %v790
    %v800 = vshrl.u32 2102212464, %v791
    %v801 = vor.u32 %v799, %v800
    %v802 = vshll.u32 2102212464, %v790
    %v803 = vshrl.u32 920167782, %v791
    %v804 = vor.u32 %v802, %v803
    %v805 = vshll.u32 920167782, %v790
    %v806 = vshrl.u32 1326507024, %v791
    %v807 = vor.u32 %v805, %v806
    %vm808 = vcmp.lt.s32.totalorder %v789, 1
    %vm809 = vcmp.lt.s32.totalorder %v789, 2
    %vm810 = vcmp.lt.s32.totalorder %v789, 3
    %vm811 = vcmp.lt.s32.totalorder %v789, 4
    %v812 = vsel %vm808, %v792, %v795
    %v813 = vsel %vm811, %v801, 2102212464
    %v814 = vsel %vm810, %v798, %v813
    %v815 = vsel %vm809, %v812, %v814
    %v816 = vsel %vm808, %v795, %v798
    %v817 = vsel %vm811, %v804, 920167782
    %v818 = vsel %vm810, %v801, %v817
    %v819 = vsel %vm809, %v816, %v818
    %v820 = vsel %vm808, %v798, %v801
    %v821 = vsel %vm811, %v807, 1326507024
    %v822 = vsel %vm810, %v804, %v821
    %v823 = vsel %vm809, %v820, %v822
    %v824 = vshll.u32 %v784, 8
    %v825 = vmul.u32.u64.compose %v824, %v823
    %v826 = vextract.low.u32 %v825
    %v827 = vextract.high.u32 %v825
    %v828 = vmul.u32.u64.compose %v824, %v819
    %v829 = vextract.low.u32 %v828
    %v830 = vextract.high.u32 %v828
    %v831 = vmul.u32 %v824, %v815
    %v832 = vadd.s32 %v827, %v829
    %vm833 = vc.u32 %v827, %v829
    %v834 = vadd.s32 %v830, 1
    %v835 = vsel %vm833, %v834, %v830
    %v836 = vadd.s32 %v831, %v835
    %v837 = vadd.s32 %v836, 536870912
    %v838 = vshrl.u32 %v837, 30
    %v839 = vshll.u32 %v838, 30
    %v840 = vsub.s32 %v836, %v839
    %vm841 = vcmp.lt.s32.totalorder %v840, 0
    %v842 = vsub.s32 0, %v840
    %v843 = vsel %vm841, %v842, %v840
    %v844 = vclz %v843
    %v845 = vsub.s32 %v844, 2
    %vm846 = vcmp.gt.s32.totalorder 0, %v845
    %v847 = vsel %vm846, 0, %v845
    %v848 = vsub.s32 32, %v847
    %v849 = vshll.u32 %v840, %v847
    %v850 = vshrl.u32 %v832, %v848
    %v851 = vor.u32 %v849, %v850
    %v852 = vsub.s32 4294967266, %v847
    %v853 = vadd.s32 %v852, 127
    %v854 = vshll.u32 %v853, 23
    %v855 = vor.u32 4788187, %v854
    %v856 = vand.u32 2147483647, %v855
    %v858 = vcvt.s32.f32 %v851
    %v859 = vmul.f32 %v858, %v856
    %v860 = vxor.u32 %v859, 2147483648
    %v861 = vsel %vm778, %v860, %v859
    %v862 = vsub.s32 4, %v838
    %v863 = vsel %vm778, %v862, %v838
    %v864 = vsel %vm777, %v359, %v861
    %v865 = vsel %vm777, 0, %v863
    %v866 = vcosq.f32.pop %v864
    %v867 = vsinq.f32.pop %v864
    %vm868 = vweird.f32 %v359
    %v869 = vadd.s32 %v865, 3
    %v870 = vand.u32 %v869, 3
    %vm871 = vcmp.lt.s32.totalorder %v870, 2
    %vm872 = vcmp.eq.s32.totalorder %v870, 0
    %v873 = vxor.u32 %v867, 2147483648
    %v874 = vsel %vm872, %v866, %v873
    %vm875 = vcmp.eq.s32.totalorder %v870, 2
    %v876 = vxor.u32 %v866, 2147483648
    %v877 = vsel %vm875, %v876, %v867
    %v878 = vsel %vm871, %v874, %v877
    %v879 = vsel %vm868, nan, %v878
    %v880 = vand.u32 2147483647, %v364
    %vm881 = vcmp.le.f32.partialorder %v880, 0.7853982
    %vm882 = vcmp.lt.s32.totalorder %v364, 0
    %v883 = vand.u32 %v364, 2139095040
    %v884 = vshrl.u32 %v883, 23
    %v885 = vsub.s32 %v884, 127
    %v886 = vand.u32 2147483647, %v364
    %v887 = vand.u32 %v886, 8388607
    %v888 = vor.u32 %v887, 8388608
    %v889 = vsub.s32 0, %v888
    %v890 = vadd.s32 %v885, 1
    %vm891 = vcmp.gt.s32.totalorder %v890, 0
    %v892 = vsel %vm891, %v890, 0
    %v893 = vshrl.u32 %v892, 5
    %v894 = vand.u32 %v892, 31
    %v895 = vsub.s32 32, %v894
    %v896 = vshrl.u32 683565275, %v895
    %v897 = vshll.u32 683565275, %v894
    %v898 = vshrl.u32 2475754826, %v895
    %v899 = vor.u32 %v897, %v898
    %v900 = vshll.u32 2475754826, %v894
    %v901 = vshrl.u32 2131351028, %v895
    %v902 = vor.u32 %v900, %v901
    %v903 = vshll.u32 2131351028, %v894
    %v904 = vshrl.u32 2102212464, %v895
    %v905 = vor.u32 %v903, %v904
    %v906 = vshll.u32 2102212464, %v894
    %v907 = vshrl.u32 920167782, %v895
    %v908 = vor.u32 %v906, %v907
    %v909 = vshll.u32 920167782, %v894
    %v910 = vshrl.u32 1326507024, %v895
    %v911 = vor.u32 %v909, %v910
    %vm912 = vcmp.lt.s32.totalorder %v893, 1
    %vm913 = vcmp.lt.s32.totalorder %v893, 2
    %vm914 = vcmp.lt.s32.totalorder %v893, 3
    %vm915 = vcmp.lt.s32.totalorder %v893, 4
    %v916 = vsel %vm912, %v896, %v899
    %v917 = vsel %vm915, %v905, 2102212464
    %v918 = vsel %vm914, %v902, %v917
    %v919 = vsel %vm913, %v916, %v918
    %v920 = vsel %vm912, %v899, %v902
    %v921 = vsel %vm915, %v908, 920167782
    %v922 = vsel %vm914, %v905, %v921
    %v923 = vsel %vm913, %v920, %v922
    %v924 = vsel %vm912, %v902, %v905
    %v925 = vsel %vm915, %v911, 1326507024
    %v926 = vsel %vm914, %v908, %v925
    %v927 = vsel %vm913, %v924, %v926
    %v928 = vshll.u32 %v888, 8
    %v929 = vmul.u32.u64.compose %v928, %v927
    %v930 = vextract.low.u32 %v929
    %v931 = vextract.high.u32 %v929
    %v932 = vmul.u32.u64.compose %v928, %v923
    %v933 = vextract.low.u32 %v932
    %v934 = vextract.high.u32 %v932
    %v935 = vmul.u32 %v928, %v919
    %v936 = vadd.s32 %v931, %v933
    %vm937 = vc.u32 %v931, %v933
    %v938 = vadd.s32 %v934, 1
    %v939 = vsel %vm937, %v938, %v934
    %v940 = vadd.s32 %v935, %v939
    %v941 = vadd.s32 %v940, 536870912
    %v942 = vshrl.u32 %v941, 30
    %v943 = vshll.u32 %v942, 30
    %v944 = vsub.s32 %v940, %v943
    %vm945 = vcmp.lt.s32.totalorder %v944, 0
    %v946 = vsub.s32 0, %v944
    %v947 = vsel %vm945, %v946, %v944
    %v948 = vclz %v947
    %v949 = vsub.s32 %v948, 2
    %vm950 = vcmp.gt.s32.totalorder 0, %v949
    %v951 = vsel %vm950, 0, %v949
    %v952 = vsub.s32 32, %v951
    %v953 = vshll.u32 %v944, %v951
    %v954 = vshrl.u32 %v936, %v952
    %v955 = vor.u32 %v953, %v954
    %v956 = vsub.s32 4294967266, %v951
    %v957 = vadd.s32 %v956, 127
    %v958 = vshll.u32 %v957, 23
    %v959 = vor.u32 4788187, %v958
    %v960 = vand.u32 2147483647, %v959
    %v962 = vcvt.s32.f32 %v955
    %v963 = vmul.f32 %v962, %v960
    %v964 = vxor.u32 %v963, 2147483648
    %v965 = vsel %vm882, %v964, %v963
    %v966 = vsub.s32 4, %v942
    %v967 = vsel %vm882, %v966, %v942
    %v968 = vsel %vm881, %v364, %v965
    %v969 = vsel %vm881, 0, %v967
    %v970 = vcosq.f32.pop %v968
    %v971 = vsinq.f32.pop %v968
    %vm972 = vweird.f32 %v364
    %v973 = vadd.s32 %v969, 3
    %v974 = vand.u32 %v973, 3
    %vm975 = vcmp.lt.s32.totalorder %v974, 2
    %vm976 = vcmp.eq.s32.totalorder %v974, 0
    %v977 = vxor.u32 %v971, 2147483648
    %v978 = vsel %vm976, %v970, %v977
    %vm979 = vcmp.eq.s32.totalorder %v974, 2
    %v980 = vxor.u32 %v970, 2147483648
    %v981 = vsel %vm979, %v980, %v971
    %v982 = vsel %vm975, %v978, %v981
    %v983 = vsel %vm972, nan, %v982
    %v984 = vand.u32 2147483647, %v369
    %vm985 = vcmp.le.f32.partialorder %v984, 0.7853982
    %vm986 = vcmp.lt.s32.totalorder %v369, 0
    %v987 = vand.u32 %v369, 2139095040
    %v988 = vshrl.u32 %v987, 23
    %v989 = vsub.s32 %v988, 127
    %v990 = vand.u32 2147483647, %v369
    %v991 = vand.u32 %v990, 8388607
    %v992 = vor.u32 %v991, 8388608
    %v993 = vsub.s32 0, %v992
    %v994 = vadd.s32 %v989, 1
    %vm995 = vcmp.gt.s32.totalorder %v994, 0
    %v996 = vsel %vm995, %v994, 0
    %v997 = vshrl.u32 %v996, 5
    %v998 = vand.u32 %v996, 31
    %v999 = vsub.s32 32, %v998
    %v1000 = vshrl.u32 683565275, %v999
    %v1001 = vshll.u32 683565275, %v998
    %v1002 = vshrl.u32 2475754826, %v999
    %v1003 = vor.u32 %v1001, %v1002
    %v1004 = vshll.u32 2475754826, %v998
    %v1005 = vshrl.u32 2131351028, %v999
    %v1006 = vor.u32 %v1004, %v1005
    %v1007 = vshll.u32 2131351028, %v998
    %v1008 = vshrl.u32 2102212464, %v999
    %v1009 = vor.u32 %v1007, %v1008
    %v1010 = vshll.u32 2102212464, %v998
    %v1011 = vshrl.u32 920167782, %v999
    %v1012 = vor.u32 %v1010, %v1011
    %v1013 = vshll.u32 920167782, %v998
    %v1014 = vshrl.u32 1326507024, %v999
    %v1015 = vor.u32 %v1013, %v1014
    %vm1016 = vcmp.lt.s32.totalorder %v997, 1
    %vm1017 = vcmp.lt.s32.totalorder %v997, 2
    %vm1018 = vcmp.lt.s32.totalorder %v997, 3
    %vm1019 = vcmp.lt.s32.totalorder %v997, 4
    %v1020 = vsel %vm1016, %v1000, %v1003
    %v1021 = vsel %vm1019, %v1009, 2102212464
    %v1022 = vsel %vm1018, %v1006, %v1021
    %v1023 = vsel %vm1017, %v1020, %v1022
    %v1024 = vsel %vm1016, %v1003, %v1006
    %v1025 = vsel %vm1019, %v1012, 920167782
    %v1026 = vsel %vm1018, %v1009, %v1025
    %v1027 = vsel %vm1017, %v1024, %v1026
    %v1028 = vsel %vm1016, %v1006, %v1009
    %v1029 = vsel %vm1019, %v1015, 1326507024
    %v1030 = vsel %vm1018, %v1012, %v1029
    %v1031 = vsel %vm1017, %v1028, %v1030
    %v1032 = vshll.u32 %v992, 8
    %v1033 = vmul.u32.u64.compose %v1032, %v1031
    %v1034 = vextract.low.u32 %v1033
    %v1035 = vextract.high.u32 %v1033
    %v1036 = vmul.u32.u64.compose %v1032, %v1027
    %v1037 = vextract.low.u32 %v1036
    %v1038 = vextract.high.u32 %v1036
    %v1039 = vmul.u32 %v1032, %v1023
    %v1040 = vadd.s32 %v1035, %v1037
    %vm1041 = vc.u32 %v1035, %v1037
    %v1042 = vadd.s32 %v1038, 1
    %v1043 = vsel %vm1041, %v1042, %v1038
    %v1044 = vadd.s32 %v1039, %v1043
    %v1045 = vadd.s32 %v1044, 536870912
    %v1046 = vshrl.u32 %v1045, 30
    %v1047 = vshll.u32 %v1046, 30
    %v1048 = vsub.s32 %v1044, %v1047
    %vm1049 = vcmp.lt.s32.totalorder %v1048, 0
    %v1050 = vsub.s32 0, %v1048
    %v1051 = vsel %vm1049, %v1050, %v1048
    %v1052 = vclz %v1051
    %v1053 = vsub.s32 %v1052, 2
    %vm1054 = vcmp.gt.s32.totalorder 0, %v1053
    %v1055 = vsel %vm1054, 0, %v1053
    %v1056 = vsub.s32 32, %v1055
    %v1057 = vshll.u32 %v1048, %v1055
    %v1058 = vshrl.u32 %v1040, %v1056
    %v1059 = vor.u32 %v1057, %v1058
    %v1060 = vsub.s32 4294967266, %v1055
    %v1061 = vadd.s32 %v1060, 127
    %v1062 = vshll.u32 %v1061, 23
    %v1063 = vor.u32 4788187, %v1062
    %v1064 = vand.u32 2147483647, %v1063
    %v1066 = vcvt.s32.f32 %v1059
    %v1067 = vmul.f32 %v1066, %v1064
    %v1068 = vxor.u32 %v1067, 2147483648
    %v1069 = vsel %vm986, %v1068, %v1067
    %v1070 = vsub.s32 4, %v1046
    %v1071 = vsel %vm986, %v1070, %v1046
    %v1072 = vsel %vm985, %v369, %v1069
    %v1073 = vsel %vm985, 0, %v1071
    %v1074 = vcosq.f32.pop %v1072
    %v1075 = vsinq.f32.pop %v1072
    %vm1076 = vweird.f32 %v369
    %v1077 = vadd.s32 %v1073, 3
    %v1078 = vand.u32 %v1077, 3
    %vm1079 = vcmp.lt.s32.totalorder %v1078, 2
    %vm1080 = vcmp.eq.s32.totalorder %v1078, 0
    %v1081 = vxor.u32 %v1075, 2147483648
    %v1082 = vsel %vm1080, %v1074, %v1081
    %vm1083 = vcmp.eq.s32.totalorder %v1078, 2
    %v1084 = vxor.u32 %v1074, 2147483648
    %v1085 = vsel %vm1083, %v1084, %v1075
    %v1086 = vsel %vm1079, %v1082, %v1085
    %v1087 = vsel %vm1076, nan, %v1086
    %v1088 = vand.u32 2147483647, %v374
    %vm1089 = vcmp.le.f32.partialorder %v1088, 0.7853982
    %vm1090 = vcmp.lt.s32.totalorder %v374, 0
    %v1091 = vand.u32 %v374, 2139095040
    %v1092 = vshrl.u32 %v1091, 23
    %v1093 = vsub.s32 %v1092, 127
    %v1094 = vand.u32 2147483647, %v374
    %v1095 = vand.u32 %v1094, 8388607
    %v1096 = vor.u32 %v1095, 8388608
    %v1097 = vsub.s32 0, %v1096
    %v1098 = vadd.s32 %v1093, 1
    %vm1099 = vcmp.gt.s32.totalorder %v1098, 0
    %v1100 = vsel %vm1099, %v1098, 0
    %v1101 = vshrl.u32 %v1100, 5
    %v1102 = vand.u32 %v1100, 31
    %v1103 = vsub.s32 32, %v1102
    %v1104 = vshrl.u32 683565275, %v1103
    %v1105 = vshll.u32 683565275, %v1102
    %v1106 = vshrl.u32 2475754826, %v1103
    %v1107 = vor.u32 %v1105, %v1106
    %v1108 = vshll.u32 2475754826, %v1102
    %v1109 = vshrl.u32 2131351028, %v1103
    %v1110 = vor.u32 %v1108, %v1109
    %v1111 = vshll.u32 2131351028, %v1102
    %v1112 = vshrl.u32 2102212464, %v1103
    %v1113 = vor.u32 %v1111, %v1112
    %v1114 = vshll.u32 2102212464, %v1102
    %v1115 = vshrl.u32 920167782, %v1103
    %v1116 = vor.u32 %v1114, %v1115
    %v1117 = vshll.u32 920167782, %v1102
    %v1118 = vshrl.u32 1326507024, %v1103
    %v1119 = vor.u32 %v1117, %v1118
    %vm1120 = vcmp.lt.s32.totalorder %v1101, 1
    %vm1121 = vcmp.lt.s32.totalorder %v1101, 2
    %vm1122 = vcmp.lt.s32.totalorder %v1101, 3
    %vm1123 = vcmp.lt.s32.totalorder %v1101, 4
    %v1124 = vsel %vm1120, %v1104, %v1107
    %v1125 = vsel %vm1123, %v1113, 2102212464
    %v1126 = vsel %vm1122, %v1110, %v1125
    %v1127 = vsel %vm1121, %v1124, %v1126
    %v1128 = vsel %vm1120, %v1107, %v1110
    %v1129 = vsel %vm1123, %v1116, 920167782
    %v1130 = vsel %vm1122, %v1113, %v1129
    %v1131 = vsel %vm1121, %v1128, %v1130
    %v1132 = vsel %vm1120, %v1110, %v1113
    %v1133 = vsel %vm1123, %v1119, 1326507024
    %v1134 = vsel %vm1122, %v1116, %v1133
    %v1135 = vsel %vm1121, %v1132, %v1134
    %v1136 = vshll.u32 %v1096, 8
    %v1137 = vmul.u32.u64.compose %v1136, %v1135
    %v1138 = vextract.low.u32 %v1137
    %v1139 = vextract.high.u32 %v1137
    %v1140 = vmul.u32.u64.compose %v1136, %v1131
    %v1141 = vextract.low.u32 %v1140
    %v1142 = vextract.high.u32 %v1140
    %v1143 = vmul.u32 %v1136, %v1127
    %v1144 = vadd.s32 %v1139, %v1141
    %vm1145 = vc.u32 %v1139, %v1141
    %v1146 = vadd.s32 %v1142, 1
    %v1147 = vsel %vm1145, %v1146, %v1142
    %v1148 = vadd.s32 %v1143, %v1147
    %v1149 = vadd.s32 %v1148, 536870912
    %v1150 = vshrl.u32 %v1149, 30
    %v1151 = vshll.u32 %v1150, 30
    %v1152 = vsub.s32 %v1148, %v1151
    %vm1153 = vcmp.lt.s32.totalorder %v1152, 0
    %v1154 = vsub.s32 0, %v1152
    %v1155 = vsel %vm1153, %v1154, %v1152
    %v1156 = vclz %v1155
    %v1157 = vsub.s32 %v1156, 2
    %vm1158 = vcmp.gt.s32.totalorder 0, %v1157
    %v1159 = vsel %vm1158, 0, %v1157
    %v1160 = vsub.s32 32, %v1159
    %v1161 = vshll.u32 %v1152, %v1159
    %v1162 = vshrl.u32 %v1144, %v1160
    %v1163 = vor.u32 %v1161, %v1162
    %v1164 = vsub.s32 4294967266, %v1159
    %v1165 = vadd.s32 %v1164, 127
    %v1166 = vshll.u32 %v1165, 23
    %v1167 = vor.u32 4788187, %v1166
    %v1168 = vand.u32 2147483647, %v1167
    %v1170 = vcvt.s32.f32 %v1163
    %v1171 = vmul.f32 %v1170, %v1168
    %v1172 = vxor.u32 %v1171, 2147483648
    %v1173 = vsel %vm1090, %v1172, %v1171
    %v1174 = vsub.s32 4, %v1150
    %v1175 = vsel %vm1090, %v1174, %v1150
    %v1176 = vsel %vm1089, %v374, %v1173
    %v1177 = vsel %vm1089, 0, %v1175
    %v1178 = vcosq.f32.pop %v1176
    %v1179 = vsinq.f32.pop %v1176
    %vm1180 = vweird.f32 %v374
    %v1181 = vadd.s32 %v1177, 3
    %v1182 = vand.u32 %v1181, 3
    %vm1183 = vcmp.lt.s32.totalorder %v1182, 2
    %vm1184 = vcmp.eq.s32.totalorder %v1182, 0
    %v1185 = vxor.u32 %v1179, 2147483648
    %v1186 = vsel %vm1184, %v1178, %v1185
    %vm1187 = vcmp.eq.s32.totalorder %v1182, 2
    %v1188 = vxor.u32 %v1178, 2147483648
    %v1189 = vsel %vm1187, %v1188, %v1179
    %v1190 = vsel %vm1183, %v1186, %v1189
    %v1191 = vsel %vm1180, nan, %v1190
    %v1192 = vand.u32 2147483647, %v379
    %vm1193 = vcmp.le.f32.partialorder %v1192, 0.7853982
    %vm1194 = vcmp.lt.s32.totalorder %v379, 0
    %v1195 = vand.u32 %v379, 2139095040
    %v1196 = vshrl.u32 %v1195, 23
    %v1197 = vsub.s32 %v1196, 127
    %v1198 = vand.u32 2147483647, %v379
    %v1199 = vand.u32 %v1198, 8388607
    %v1200 = vor.u32 %v1199, 8388608
    %v1201 = vsub.s32 0, %v1200
    %v1202 = vadd.s32 %v1197, 1
    %vm1203 = vcmp.gt.s32.totalorder %v1202, 0
    %v1204 = vsel %vm1203, %v1202, 0
    %v1205 = vshrl.u32 %v1204, 5
    %v1206 = vand.u32 %v1204, 31
    %v1207 = vsub.s32 32, %v1206
    %v1208 = vshrl.u32 683565275, %v1207
    %v1209 = vshll.u32 683565275, %v1206
    %v1210 = vshrl.u32 2475754826, %v1207
    %v1211 = vor.u32 %v1209, %v1210
    %v1212 = vshll.u32 2475754826, %v1206
    %v1213 = vshrl.u32 2131351028, %v1207
    %v1214 = vor.u32 %v1212, %v1213
    %v1215 = vshll.u32 2131351028, %v1206
    %v1216 = vshrl.u32 2102212464, %v1207
    %v1217 = vor.u32 %v1215, %v1216
    %v1218 = vshll.u32 2102212464, %v1206
    %v1219 = vshrl.u32 920167782, %v1207
    %v1220 = vor.u32 %v1218, %v1219
    %v1221 = vshll.u32 920167782, %v1206
    %v1222 = vshrl.u32 1326507024, %v1207
    %v1223 = vor.u32 %v1221, %v1222
    %vm1224 = vcmp.lt.s32.totalorder %v1205, 1
    %vm1225 = vcmp.lt.s32.totalorder %v1205, 2
    %vm1226 = vcmp.lt.s32.totalorder %v1205, 3
    %vm1227 = vcmp.lt.s32.totalorder %v1205, 4
    %v1228 = vsel %vm1224, %v1208, %v1211
    %v1229 = vsel %vm1227, %v1217, 2102212464
    %v1230 = vsel %vm1226, %v1214, %v1229
    %v1231 = vsel %vm1225, %v1228, %v1230
    %v1232 = vsel %vm1224, %v1211, %v1214
    %v1233 = vsel %vm1227, %v1220, 920167782
    %v1234 = vsel %vm1226, %v1217, %v1233
    %v1235 = vsel %vm1225, %v1232, %v1234
    %v1236 = vsel %vm1224, %v1214, %v1217
    %v1237 = vsel %vm1227, %v1223, 1326507024
    %v1238 = vsel %vm1226, %v1220, %v1237
    %v1239 = vsel %vm1225, %v1236, %v1238
    %v1240 = vshll.u32 %v1200, 8
    %v1241 = vmul.u32.u64.compose %v1240, %v1239
    %v1242 = vextract.low.u32 %v1241
    %v1243 = vextract.high.u32 %v1241
    %v1244 = vmul.u32.u64.compose %v1240, %v1235
    %v1245 = vextract.low.u32 %v1244
    %v1246 = vextract.high.u32 %v1244
    %v1247 = vmul.u32 %v1240, %v1231
    %v1248 = vadd.s32 %v1243, %v1245
    %vm1249 = vc.u32 %v1243, %v1245
    %v1250 = vadd.s32 %v1246, 1
    %v1251 = vsel %vm1249, %v1250, %v1246
    %v1252 = vadd.s32 %v1247, %v1251
    %v1253 = vadd.s32 %v1252, 536870912
    %v1254 = vshrl.u32 %v1253, 30
    %v1255 = vshll.u32 %v1254, 30
    %v1256 = vsub.s32 %v1252, %v1255
    %vm1257 = vcmp.lt.s32.totalorder %v1256, 0
    %v1258 = vsub.s32 0, %v1256
    %v1259 = vsel %vm1257, %v1258, %v1256
    %v1260 = vclz %v1259
    %v1261 = vsub.s32 %v1260, 2
    %vm1262 = vcmp.gt.s32.totalorder 0, %v1261
    %v1263 = vsel %vm1262, 0, %v1261
    %v1264 = vsub.s32 32, %v1263
    %v1265 = vshll.u32 %v1256, %v1263
    %v1266 = vshrl.u32 %v1248, %v1264
    %v1267 = vor.u32 %v1265, %v1266
    %v1268 = vsub.s32 4294967266, %v1263
    %v1269 = vadd.s32 %v1268, 127
    %v1270 = vshll.u32 %v1269, 23
    %v1271 = vor.u32 4788187, %v1270
    %v1272 = vand.u32 2147483647, %v1271
    %v1274 = vcvt.s32.f32 %v1267
    %v1275 = vmul.f32 %v1274, %v1272
    %v1276 = vxor.u32 %v1275, 2147483648
    %v1277 = vsel %vm1194, %v1276, %v1275
    %v1278 = vsub.s32 4, %v1254
    %v1279 = vsel %vm1194, %v1278, %v1254
    %v1280 = vsel %vm1193, %v379, %v1277
    %v1281 = vsel %vm1193, 0, %v1279
    %v1282 = vcosq.f32.pop %v1280
    %v1283 = vsinq.f32.pop %v1280
    %vm1284 = vweird.f32 %v379
    %v1285 = vadd.s32 %v1281, 3
    %v1286 = vand.u32 %v1285, 3
    %vm1287 = vcmp.lt.s32.totalorder %v1286, 2
    %vm1288 = vcmp.eq.s32.totalorder %v1286, 0
    %v1289 = vxor.u32 %v1283, 2147483648
    %v1290 = vsel %vm1288, %v1282, %v1289
    %vm1291 = vcmp.eq.s32.totalorder %v1286, 2
    %v1292 = vxor.u32 %v1282, 2147483648
    %v1293 = vsel %vm1291, %v1292, %v1283
    %v1294 = vsel %vm1287, %v1290, %v1293
    %v1295 = vsel %vm1284, nan, %v1294
    %v1296 = vand.u32 2147483647, %v384
    %vm1297 = vcmp.le.f32.partialorder %v1296, 0.7853982
    %vm1298 = vcmp.lt.s32.totalorder %v384, 0
    %v1299 = vand.u32 %v384, 2139095040
    %v1300 = vshrl.u32 %v1299, 23
    %v1301 = vsub.s32 %v1300, 127
    %v1302 = vand.u32 2147483647, %v384
    %v1303 = vand.u32 %v1302, 8388607
    %v1304 = vor.u32 %v1303, 8388608
    %v1305 = vsub.s32 0, %v1304
    %v1306 = vadd.s32 %v1301, 1
    %vm1307 = vcmp.gt.s32.totalorder %v1306, 0
    %v1308 = vsel %vm1307, %v1306, 0
    %v1309 = vshrl.u32 %v1308, 5
    %v1310 = vand.u32 %v1308, 31
    %v1311 = vsub.s32 32, %v1310
    %v1312 = vshrl.u32 683565275, %v1311
    %v1313 = vshll.u32 683565275, %v1310
    %v1314 = vshrl.u32 2475754826, %v1311
    %v1315 = vor.u32 %v1313, %v1314
    %v1316 = vshll.u32 2475754826, %v1310
    %v1317 = vshrl.u32 2131351028, %v1311
    %v1318 = vor.u32 %v1316, %v1317
    %v1319 = vshll.u32 2131351028, %v1310
    %v1320 = vshrl.u32 2102212464, %v1311
    %v1321 = vor.u32 %v1319, %v1320
    %v1322 = vshll.u32 2102212464, %v1310
    %v1323 = vshrl.u32 920167782, %v1311
    %v1324 = vor.u32 %v1322, %v1323
    %v1325 = vshll.u32 920167782, %v1310
    %v1326 = vshrl.u32 1326507024, %v1311
    %v1327 = vor.u32 %v1325, %v1326
    %vm1328 = vcmp.lt.s32.totalorder %v1309, 1
    %vm1329 = vcmp.lt.s32.totalorder %v1309, 2
    %vm1330 = vcmp.lt.s32.totalorder %v1309, 3
    %vm1331 = vcmp.lt.s32.totalorder %v1309, 4
    %v1332 = vsel %vm1328, %v1312, %v1315
    %v1333 = vsel %vm1331, %v1321, 2102212464
    %v1334 = vsel %vm1330, %v1318, %v1333
    %v1335 = vsel %vm1329, %v1332, %v1334
    %v1336 = vsel %vm1328, %v1315, %v1318
    %v1337 = vsel %vm1331, %v1324, 920167782
    %v1338 = vsel %vm1330, %v1321, %v1337
    %v1339 = vsel %vm1329, %v1336, %v1338
    %v1340 = vsel %vm1328, %v1318, %v1321
    %v1341 = vsel %vm1331, %v1327, 1326507024
    %v1342 = vsel %vm1330, %v1324, %v1341
    %v1343 = vsel %vm1329, %v1340, %v1342
    %v1344 = vshll.u32 %v1304, 8
    %v1345 = vmul.u32.u64.compose %v1344, %v1343
    %v1346 = vextract.low.u32 %v1345
    %v1347 = vextract.high.u32 %v1345
    %v1348 = vmul.u32.u64.compose %v1344, %v1339
    %v1349 = vextract.low.u32 %v1348
    %v1350 = vextract.high.u32 %v1348
    %v1351 = vmul.u32 %v1344, %v1335
    %v1352 = vadd.s32 %v1347, %v1349
    %vm1353 = vc.u32 %v1347, %v1349
    %v1354 = vadd.s32 %v1350, 1
    %v1355 = vsel %vm1353, %v1354, %v1350
    %v1356 = vadd.s32 %v1351, %v1355
    %v1357 = vadd.s32 %v1356, 536870912
    %v1358 = vshrl.u32 %v1357, 30
    %v1359 = vshll.u32 %v1358, 30
    %v1360 = vsub.s32 %v1356, %v1359
    %vm1361 = vcmp.lt.s32.totalorder %v1360, 0
    %v1362 = vsub.s32 0, %v1360
    %v1363 = vsel %vm1361, %v1362, %v1360
    %v1364 = vclz %v1363
    %v1365 = vsub.s32 %v1364, 2
    %vm1366 = vcmp.gt.s32.totalorder 0, %v1365
    %v1367 = vsel %vm1366, 0, %v1365
    %v1368 = vsub.s32 32, %v1367
    %v1369 = vshll.u32 %v1360, %v1367
    %v1370 = vshrl.u32 %v1352, %v1368
    %v1371 = vor.u32 %v1369, %v1370
    %v1372 = vsub.s32 4294967266, %v1367
    %v1373 = vadd.s32 %v1372, 127
    %v1374 = vshll.u32 %v1373, 23
    %v1375 = vor.u32 4788187, %v1374
    %v1376 = vand.u32 2147483647, %v1375
    %v1378 = vcvt.s32.f32 %v1371
    %v1379 = vmul.f32 %v1378, %v1376
    %v1380 = vxor.u32 %v1379, 2147483648
    %v1381 = vsel %vm1298, %v1380, %v1379
    %v1382 = vsub.s32 4, %v1358
    %v1383 = vsel %vm1298, %v1382, %v1358
    %v1384 = vsel %vm1297, %v384, %v1381
    %v1385 = vsel %vm1297, 0, %v1383
    %v1386 = vcosq.f32.pop %v1384
    %v1387 = vsinq.f32.pop %v1384
    %vm1388 = vweird.f32 %v384
    %v1389 = vadd.s32 %v1385, 3
    %v1390 = vand.u32 %v1389, 3
    %vm1391 = vcmp.lt.s32.totalorder %v1390, 2
    %vm1392 = vcmp.eq.s32.totalorder %v1390, 0
    %v1393 = vxor.u32 %v1387, 2147483648
    %v1394 = vsel %vm1392, %v1386, %v1393
    %vm1395 = vcmp.eq.s32.totalorder %v1390, 2
    %v1396 = vxor.u32 %v1386, 2147483648
    %v1397 = vsel %vm1395, %v1396, %v1387
    %v1398 = vsel %vm1391, %v1394, %v1397
    %v1399 = vsel %vm1388, nan, %v1398
    %v1400 = vand.u32 2147483647, %v389
    %vm1401 = vcmp.le.f32.partialorder %v1400, 0.7853982
    %vm1402 = vcmp.lt.s32.totalorder %v389, 0
    %v1403 = vand.u32 %v389, 2139095040
    %v1404 = vshrl.u32 %v1403, 23
    %v1405 = vsub.s32 %v1404, 127
    %v1406 = vand.u32 2147483647, %v389
    %v1407 = vand.u32 %v1406, 8388607
    %v1408 = vor.u32 %v1407, 8388608
    %v1409 = vsub.s32 0, %v1408
    %v1410 = vadd.s32 %v1405, 1
    %vm1411 = vcmp.gt.s32.totalorder %v1410, 0
    %v1412 = vsel %vm1411, %v1410, 0
    %v1413 = vshrl.u32 %v1412, 5
    %v1414 = vand.u32 %v1412, 31
    %v1415 = vsub.s32 32, %v1414
    %v1416 = vshrl.u32 683565275, %v1415
    %v1417 = vshll.u32 683565275, %v1414
    %v1418 = vshrl.u32 2475754826, %v1415
    %v1419 = vor.u32 %v1417, %v1418
    %v1420 = vshll.u32 2475754826, %v1414
    %v1421 = vshrl.u32 2131351028, %v1415
    %v1422 = vor.u32 %v1420, %v1421
    %v1423 = vshll.u32 2131351028, %v1414
    %v1424 = vshrl.u32 2102212464, %v1415
    %v1425 = vor.u32 %v1423, %v1424
    %v1426 = vshll.u32 2102212464, %v1414
    %v1427 = vshrl.u32 920167782, %v1415
    %v1428 = vor.u32 %v1426, %v1427
    %v1429 = vshll.u32 920167782, %v1414
    %v1430 = vshrl.u32 1326507024, %v1415
    %v1431 = vor.u32 %v1429, %v1430
    %vm1432 = vcmp.lt.s32.totalorder %v1413, 1
    %vm1433 = vcmp.lt.s32.totalorder %v1413, 2
    %vm1434 = vcmp.lt.s32.totalorder %v1413, 3
    %vm1435 = vcmp.lt.s32.totalorder %v1413, 4
    %v1436 = vsel %vm1432, %v1416, %v1419
    %v1437 = vsel %vm1435, %v1425, 2102212464
    %v1438 = vsel %vm1434, %v1422, %v1437
    %v1439 = vsel %vm1433, %v1436, %v1438
    %v1440 = vsel %vm1432, %v1419, %v1422
    %v1441 = vsel %vm1435, %v1428, 920167782
    %v1442 = vsel %vm1434, %v1425, %v1441
    %v1443 = vsel %vm1433, %v1440, %v1442
    %v1444 = vsel %vm1432, %v1422, %v1425
    %v1445 = vsel %vm1435, %v1431, 1326507024
    %v1446 = vsel %vm1434, %v1428, %v1445
    %v1447 = vsel %vm1433, %v1444, %v1446
    %v1448 = vshll.u32 %v1408, 8
    %v1449 = vmul.u32.u64.compose %v1448, %v1447
    %v1450 = vextract.low.u32 %v1449
    %v1451 = vextract.high.u32 %v1449
    %v1452 = vmul.u32.u64.compose %v1448, %v1443
    %v1453 = vextract.low.u32 %v1452
    %v1454 = vextract.high.u32 %v1452
    %v1455 = vmul.u32 %v1448, %v1439
    %v1456 = vadd.s32 %v1451, %v1453
    %vm1457 = vc.u32 %v1451, %v1453
    %v1458 = vadd.s32 %v1454, 1
    %v1459 = vsel %vm1457, %v1458, %v1454
    %v1460 = vadd.s32 %v1455, %v1459
    %v1461 = vadd.s32 %v1460, 536870912
    %v1462 = vshrl.u32 %v1461, 30
    %v1463 = vshll.u32 %v1462, 30
    %v1464 = vsub.s32 %v1460, %v1463
    %vm1465 = vcmp.lt.s32.totalorder %v1464, 0
    %v1466 = vsub.s32 0, %v1464
    %v1467 = vsel %vm1465, %v1466, %v1464
    %v1468 = vclz %v1467
    %v1469 = vsub.s32 %v1468, 2
    %vm1470 = vcmp.gt.s32.totalorder 0, %v1469
    %v1471 = vsel %vm1470, 0, %v1469
    %v1472 = vsub.s32 32, %v1471
    %v1473 = vshll.u32 %v1464, %v1471
    %v1474 = vshrl.u32 %v1456, %v1472
    %v1475 = vor.u32 %v1473, %v1474
    %v1476 = vsub.s32 4294967266, %v1471
    %v1477 = vadd.s32 %v1476, 127
    %v1478 = vshll.u32 %v1477, 23
    %v1479 = vor.u32 4788187, %v1478
    %v1480 = vand.u32 2147483647, %v1479
    %v1482 = vcvt.s32.f32 %v1475
    %v1483 = vmul.f32 %v1482, %v1480
    %v1484 = vxor.u32 %v1483, 2147483648
    %v1485 = vsel %vm1402, %v1484, %v1483
    %v1486 = vsub.s32 4, %v1462
    %v1487 = vsel %vm1402, %v1486, %v1462
    %v1488 = vsel %vm1401, %v389, %v1485
    %v1489 = vsel %vm1401, 0, %v1487
    %v1490 = vcosq.f32.pop %v1488
    %v1491 = vsinq.f32.pop %v1488
    %vm1492 = vweird.f32 %v389
    %v1493 = vadd.s32 %v1489, 3
    %v1494 = vand.u32 %v1493, 3
    %vm1495 = vcmp.lt.s32.totalorder %v1494, 2
    %vm1496 = vcmp.eq.s32.totalorder %v1494, 0
    %v1497 = vxor.u32 %v1491, 2147483648
    %v1498 = vsel %vm1496, %v1490, %v1497
    %vm1499 = vcmp.eq.s32.totalorder %v1494, 2
    %v1500 = vxor.u32 %v1490, 2147483648
    %v1501 = vsel %vm1499, %v1500, %v1491
    %v1502 = vsel %vm1495, %v1498, %v1501
    %v1503 = vsel %vm1492, nan, %v1502
    %v1504 = vand.u32 2147483647, %v394
    %vm1505 = vcmp.le.f32.partialorder %v1504, 0.7853982
    %vm1506 = vcmp.lt.s32.totalorder %v394, 0
    %v1507 = vand.u32 %v394, 2139095040
    %v1508 = vshrl.u32 %v1507, 23
    %v1509 = vsub.s32 %v1508, 127
    %v1510 = vand.u32 2147483647, %v394
    %v1511 = vand.u32 %v1510, 8388607
    %v1512 = vor.u32 %v1511, 8388608
    %v1513 = vsub.s32 0, %v1512
    %v1514 = vadd.s32 %v1509, 1
    %vm1515 = vcmp.gt.s32.totalorder %v1514, 0
    %v1516 = vsel %vm1515, %v1514, 0
    %v1517 = vshrl.u32 %v1516, 5
    %v1518 = vand.u32 %v1516, 31
    %v1519 = vsub.s32 32, %v1518
    %v1520 = vshrl.u32 683565275, %v1519
    %v1521 = vshll.u32 683565275, %v1518
    %v1522 = vshrl.u32 2475754826, %v1519
    %v1523 = vor.u32 %v1521, %v1522
    %v1524 = vshll.u32 2475754826, %v1518
    %v1525 = vshrl.u32 2131351028, %v1519
    %v1526 = vor.u32 %v1524, %v1525
    %v1527 = vshll.u32 2131351028, %v1518
    %v1528 = vshrl.u32 2102212464, %v1519
    %v1529 = vor.u32 %v1527, %v1528
    %v1530 = vshll.u32 2102212464, %v1518
    %v1531 = vshrl.u32 920167782, %v1519
    %v1532 = vor.u32 %v1530, %v1531
    %v1533 = vshll.u32 920167782, %v1518
    %v1534 = vshrl.u32 1326507024, %v1519
    %v1535 = vor.u32 %v1533, %v1534
    %vm1536 = vcmp.lt.s32.totalorder %v1517, 1
    %vm1537 = vcmp.lt.s32.totalorder %v1517, 2
    %vm1538 = vcmp.lt.s32.totalorder %v1517, 3
    %vm1539 = vcmp.lt.s32.totalorder %v1517, 4
    %v1540 = vsel %vm1536, %v1520, %v1523
    %v1541 = vsel %vm1539, %v1529, 2102212464
    %v1542 = vsel %vm1538, %v1526, %v1541
    %v1543 = vsel %vm1537, %v1540, %v1542
    %v1544 = vsel %vm1536, %v1523, %v1526
    %v1545 = vsel %vm1539, %v1532, 920167782
    %v1546 = vsel %vm1538, %v1529, %v1545
    %v1547 = vsel %vm1537, %v1544, %v1546
    %v1548 = vsel %vm1536, %v1526, %v1529
    %v1549 = vsel %vm1539, %v1535, 1326507024
    %v1550 = vsel %vm1538, %v1532, %v1549
    %v1551 = vsel %vm1537, %v1548, %v1550
    %v1552 = vshll.u32 %v1512, 8
    %v1553 = vmul.u32.u64.compose %v1552, %v1551
    %v1554 = vextract.low.u32 %v1553
    %v1555 = vextract.high.u32 %v1553
    %v1556 = vmul.u32.u64.compose %v1552, %v1547
    %v1557 = vextract.low.u32 %v1556
    %v1558 = vextract.high.u32 %v1556
    %v1559 = vmul.u32 %v1552, %v1543
    %v1560 = vadd.s32 %v1555, %v1557
    %vm1561 = vc.u32 %v1555, %v1557
    %v1562 = vadd.s32 %v1558, 1
    %v1563 = vsel %vm1561, %v1562, %v1558
    %v1564 = vadd.s32 %v1559, %v1563
    %v1565 = vadd.s32 %v1564, 536870912
    %v1566 = vshrl.u32 %v1565, 30
    %v1567 = vshll.u32 %v1566, 30
    %v1568 = vsub.s32 %v1564, %v1567
    %vm1569 = vcmp.lt.s32.totalorder %v1568, 0
    %v1570 = vsub.s32 0, %v1568
    %v1571 = vsel %vm1569, %v1570, %v1568
    %v1572 = vclz %v1571
    %v1573 = vsub.s32 %v1572, 2
    %vm1574 = vcmp.gt.s32.totalorder 0, %v1573
    %v1575 = vsel %vm1574, 0, %v1573
    %v1576 = vsub.s32 32, %v1575
    %v1577 = vshll.u32 %v1568, %v1575
    %v1578 = vshrl.u32 %v1560, %v1576
    %v1579 = vor.u32 %v1577, %v1578
    %v1580 = vsub.s32 4294967266, %v1575
    %v1581 = vadd.s32 %v1580, 127
    %v1582 = vshll.u32 %v1581, 23
    %v1583 = vor.u32 4788187, %v1582
    %v1584 = vand.u32 2147483647, %v1583
    %v1586 = vcvt.s32.f32 %v1579
    %v1587 = vmul.f32 %v1586, %v1584
    %v1588 = vxor.u32 %v1587, 2147483648
    %v1589 = vsel %vm1506, %v1588, %v1587
    %v1590 = vsub.s32 4, %v1566
    %v1591 = vsel %vm1506, %v1590, %v1566
    %v1592 = vsel %vm1505, %v394, %v1589
    %v1593 = vsel %vm1505, 0, %v1591
    %v1594 = vcosq.f32.pop %v1592
    %v1595 = vsinq.f32.pop %v1592
    %vm1596 = vweird.f32 %v394
    %v1597 = vadd.s32 %v1593, 3
    %v1598 = vand.u32 %v1597, 3
    %vm1599 = vcmp.lt.s32.totalorder %v1598, 2
    %vm1600 = vcmp.eq.s32.totalorder %v1598, 0
    %v1601 = vxor.u32 %v1595, 2147483648
    %v1602 = vsel %vm1600, %v1594, %v1601
    %vm1603 = vcmp.eq.s32.totalorder %v1598, 2
    %v1604 = vxor.u32 %v1594, 2147483648
    %v1605 = vsel %vm1603, %v1604, %v1595
    %v1606 = vsel %vm1599, %v1602, %v1605
    %v1607 = vsel %vm1596, nan, %v1606
    %v1608 = vand.u32 2147483647, %v399
    %vm1609 = vcmp.le.f32.partialorder %v1608, 0.7853982
    %vm1610 = vcmp.lt.s32.totalorder %v399, 0
    %v1611 = vand.u32 %v399, 2139095040
    %v1612 = vshrl.u32 %v1611, 23
    %v1613 = vsub.s32 %v1612, 127
    %v1614 = vand.u32 2147483647, %v399
    %v1615 = vand.u32 %v1614, 8388607
    %v1616 = vor.u32 %v1615, 8388608
    %v1617 = vsub.s32 0, %v1616
    %v1618 = vadd.s32 %v1613, 1
    %vm1619 = vcmp.gt.s32.totalorder %v1618, 0
    %v1620 = vsel %vm1619, %v1618, 0
    %v1621 = vshrl.u32 %v1620, 5
    %v1622 = vand.u32 %v1620, 31
    %v1623 = vsub.s32 32, %v1622
    %v1624 = vshrl.u32 683565275, %v1623
    %v1625 = vshll.u32 683565275, %v1622
    %v1626 = vshrl.u32 2475754826, %v1623
    %v1627 = vor.u32 %v1625, %v1626
    %v1628 = vshll.u32 2475754826, %v1622
    %v1629 = vshrl.u32 2131351028, %v1623
    %v1630 = vor.u32 %v1628, %v1629
    %v1631 = vshll.u32 2131351028, %v1622
    %v1632 = vshrl.u32 2102212464, %v1623
    %v1633 = vor.u32 %v1631, %v1632
    %v1634 = vshll.u32 2102212464, %v1622
    %v1635 = vshrl.u32 920167782, %v1623
    %v1636 = vor.u32 %v1634, %v1635
    %v1637 = vshll.u32 920167782, %v1622
    %v1638 = vshrl.u32 1326507024, %v1623
    %v1639 = vor.u32 %v1637, %v1638
    %vm1640 = vcmp.lt.s32.totalorder %v1621, 1
    %vm1641 = vcmp.lt.s32.totalorder %v1621, 2
    %vm1642 = vcmp.lt.s32.totalorder %v1621, 3
    %vm1643 = vcmp.lt.s32.totalorder %v1621, 4
    %v1644 = vsel %vm1640, %v1624, %v1627
    %v1645 = vsel %vm1643, %v1633, 2102212464
    %v1646 = vsel %vm1642, %v1630, %v1645
    %v1647 = vsel %vm1641, %v1644, %v1646
    %v1648 = vsel %vm1640, %v1627, %v1630
    %v1649 = vsel %vm1643, %v1636, 920167782
    %v1650 = vsel %vm1642, %v1633, %v1649
    %v1651 = vsel %vm1641, %v1648, %v1650
    %v1652 = vsel %vm1640, %v1630, %v1633
    %v1653 = vsel %vm1643, %v1639, 1326507024
    %v1654 = vsel %vm1642, %v1636, %v1653
    %v1655 = vsel %vm1641, %v1652, %v1654
    %v1656 = vshll.u32 %v1616, 8
    %v1657 = vmul.u32.u64.compose %v1656, %v1655
    %v1658 = vextract.low.u32 %v1657
    %v1659 = vextract.high.u32 %v1657
    %v1660 = vmul.u32.u64.compose %v1656, %v1651
    %v1661 = vextract.low.u32 %v1660
    %v1662 = vextract.high.u32 %v1660
    %v1663 = vmul.u32 %v1656, %v1647
    %v1664 = vadd.s32 %v1659, %v1661
    %vm1665 = vc.u32 %v1659, %v1661
    %v1666 = vadd.s32 %v1662, 1
    %v1667 = vsel %vm1665, %v1666, %v1662
    %v1668 = vadd.s32 %v1663, %v1667
    %v1669 = vadd.s32 %v1668, 536870912
    %v1670 = vshrl.u32 %v1669, 30
    %v1671 = vshll.u32 %v1670, 30
    %v1672 = vsub.s32 %v1668, %v1671
    %vm1673 = vcmp.lt.s32.totalorder %v1672, 0
    %v1674 = vsub.s32 0, %v1672
    %v1675 = vsel %vm1673, %v1674, %v1672
    %v1676 = vclz %v1675
    %v1677 = vsub.s32 %v1676, 2
    %vm1678 = vcmp.gt.s32.totalorder 0, %v1677
    %v1679 = vsel %vm1678, 0, %v1677
    %v1680 = vsub.s32 32, %v1679
    %v1681 = vshll.u32 %v1672, %v1679
    %v1682 = vshrl.u32 %v1664, %v1680
    %v1683 = vor.u32 %v1681, %v1682
    %v1684 = vsub.s32 4294967266, %v1679
    %v1685 = vadd.s32 %v1684, 127
    %v1686 = vshll.u32 %v1685, 23
    %v1687 = vor.u32 4788187, %v1686
    %v1688 = vand.u32 2147483647, %v1687
    %v1690 = vcvt.s32.f32 %v1683
    %v1691 = vmul.f32 %v1690, %v1688
    %v1692 = vxor.u32 %v1691, 2147483648
    %v1693 = vsel %vm1610, %v1692, %v1691
    %v1694 = vsub.s32 4, %v1670
    %v1695 = vsel %vm1610, %v1694, %v1670
    %v1696 = vsel %vm1609, %v399, %v1693
    %v1697 = vsel %vm1609, 0, %v1695
    %v1698 = vcosq.f32.pop %v1696
    %v1699 = vsinq.f32.pop %v1696
    %vm1700 = vweird.f32 %v399
    %v1701 = vadd.s32 %v1697, 3
    %v1702 = vand.u32 %v1701, 3
    %vm1703 = vcmp.lt.s32.totalorder %v1702, 2
    %vm1704 = vcmp.eq.s32.totalorder %v1702, 0
    %v1705 = vxor.u32 %v1699, 2147483648
    %v1706 = vsel %vm1704, %v1698, %v1705
    %vm1707 = vcmp.eq.s32.totalorder %v1702, 2
    %v1708 = vxor.u32 %v1698, 2147483648
    %v1709 = vsel %vm1707, %v1708, %v1699
    %v1710 = vsel %vm1703, %v1706, %v1709
    %v1711 = vsel %vm1700, nan, %v1710
    %v1712 = vand.u32 2147483647, %v404
    %vm1713 = vcmp.le.f32.partialorder %v1712, 0.7853982
    %vm1714 = vcmp.lt.s32.totalorder %v404, 0
    %v1715 = vand.u32 %v404, 2139095040
    %v1716 = vshrl.u32 %v1715, 23
    %v1717 = vsub.s32 %v1716, 127
    %v1718 = vand.u32 2147483647, %v404
    %v1719 = vand.u32 %v1718, 8388607
    %v1720 = vor.u32 %v1719, 8388608
    %v1721 = vsub.s32 0, %v1720
    %v1722 = vadd.s32 %v1717, 1
    %vm1723 = vcmp.gt.s32.totalorder %v1722, 0
    %v1724 = vsel %vm1723, %v1722, 0
    %v1725 = vshrl.u32 %v1724, 5
    %v1726 = vand.u32 %v1724, 31
    %v1727 = vsub.s32 32, %v1726
    %v1728 = vshrl.u32 683565275, %v1727
    %v1729 = vshll.u32 683565275, %v1726
    %v1730 = vshrl.u32 2475754826, %v1727
    %v1731 = vor.u32 %v1729, %v1730
    %v1732 = vshll.u32 2475754826, %v1726
    %v1733 = vshrl.u32 2131351028, %v1727
    %v1734 = vor.u32 %v1732, %v1733
    %v1735 = vshll.u32 2131351028, %v1726
    %v1736 = vshrl.u32 2102212464, %v1727
    %v1737 = vor.u32 %v1735, %v1736
    %v1738 = vshll.u32 2102212464, %v1726
    %v1739 = vshrl.u32 920167782, %v1727
    %v1740 = vor.u32 %v1738, %v1739
    %v1741 = vshll.u32 920167782, %v1726
    %v1742 = vshrl.u32 1326507024, %v1727
    %v1743 = vor.u32 %v1741, %v1742
    %vm1744 = vcmp.lt.s32.totalorder %v1725, 1
    %vm1745 = vcmp.lt.s32.totalorder %v1725, 2
    %vm1746 = vcmp.lt.s32.totalorder %v1725, 3
    %vm1747 = vcmp.lt.s32.totalorder %v1725, 4
    %v1748 = vsel %vm1744, %v1728, %v1731
    %v1749 = vsel %vm1747, %v1737, 2102212464
    %v1750 = vsel %vm1746, %v1734, %v1749
    %v1751 = vsel %vm1745, %v1748, %v1750
    %v1752 = vsel %vm1744, %v1731, %v1734
    %v1753 = vsel %vm1747, %v1740, 920167782
    %v1754 = vsel %vm1746, %v1737, %v1753
    %v1755 = vsel %vm1745, %v1752, %v1754
    %v1756 = vsel %vm1744, %v1734, %v1737
    %v1757 = vsel %vm1747, %v1743, 1326507024
    %v1758 = vsel %vm1746, %v1740, %v1757
    %v1759 = vsel %vm1745, %v1756, %v1758
    %v1760 = vshll.u32 %v1720, 8
    %v1761 = vmul.u32.u64.compose %v1760, %v1759
    %v1762 = vextract.low.u32 %v1761
    %v1763 = vextract.high.u32 %v1761
    %v1764 = vmul.u32.u64.compose %v1760, %v1755
    %v1765 = vextract.low.u32 %v1764
    %v1766 = vextract.high.u32 %v1764
    %v1767 = vmul.u32 %v1760, %v1751
    %v1768 = vadd.s32 %v1763, %v1765
    %vm1769 = vc.u32 %v1763, %v1765
    %v1770 = vadd.s32 %v1766, 1
    %v1771 = vsel %vm1769, %v1770, %v1766
    %v1772 = vadd.s32 %v1767, %v1771
    %v1773 = vadd.s32 %v1772, 536870912
    %v1774 = vshrl.u32 %v1773, 30
    %v1775 = vshll.u32 %v1774, 30
    %v1776 = vsub.s32 %v1772, %v1775
    %vm1777 = vcmp.lt.s32.totalorder %v1776, 0
    %v1778 = vsub.s32 0, %v1776
    %v1779 = vsel %vm1777, %v1778, %v1776
    %v1780 = vclz %v1779
    %v1781 = vsub.s32 %v1780, 2
    %vm1782 = vcmp.gt.s32.totalorder 0, %v1781
    %v1783 = vsel %vm1782, 0, %v1781
    %v1784 = vsub.s32 32, %v1783
    %v1785 = vshll.u32 %v1776, %v1783
    %v1786 = vshrl.u32 %v1768, %v1784
    %v1787 = vor.u32 %v1785, %v1786
    %v1788 = vsub.s32 4294967266, %v1783
    %v1789 = vadd.s32 %v1788, 127
    %v1790 = vshll.u32 %v1789, 23
    %v1791 = vor.u32 4788187, %v1790
    %v1792 = vand.u32 2147483647, %v1791
    %v1794 = vcvt.s32.f32 %v1787
    %v1795 = vmul.f32 %v1794, %v1792
    %v1796 = vxor.u32 %v1795, 2147483648
    %v1797 = vsel %vm1714, %v1796, %v1795
    %v1798 = vsub.s32 4, %v1774
    %v1799 = vsel %vm1714, %v1798, %v1774
    %v1800 = vsel %vm1713, %v404, %v1797
    %v1801 = vsel %vm1713, 0, %v1799
    %v1802 = vcosq.f32.pop %v1800
    %v1803 = vsinq.f32.pop %v1800
    %vm1804 = vweird.f32 %v404
    %v1805 = vadd.s32 %v1801, 3
    %v1806 = vand.u32 %v1805, 3
    %vm1807 = vcmp.lt.s32.totalorder %v1806, 2
    %vm1808 = vcmp.eq.s32.totalorder %v1806, 0
    %v1809 = vxor.u32 %v1803, 2147483648
    %v1810 = vsel %vm1808, %v1802, %v1809
    %vm1811 = vcmp.eq.s32.totalorder %v1806, 2
    %v1812 = vxor.u32 %v1802, 2147483648
    %v1813 = vsel %vm1811, %v1812, %v1803
    %v1814 = vsel %vm1807, %v1810, %v1813
    %v1815 = vsel %vm1804, nan, %v1814
    %v1816 = vand.u32 2147483647, %v409
    %vm1817 = vcmp.le.f32.partialorder %v1816, 0.7853982
    %vm1818 = vcmp.lt.s32.totalorder %v409, 0
    %v1819 = vand.u32 %v409, 2139095040
    %v1820 = vshrl.u32 %v1819, 23
    %v1821 = vsub.s32 %v1820, 127
    %v1822 = vand.u32 2147483647, %v409
    %v1823 = vand.u32 %v1822, 8388607
    %v1824 = vor.u32 %v1823, 8388608
    %v1825 = vsub.s32 0, %v1824
    %v1826 = vadd.s32 %v1821, 1
    %vm1827 = vcmp.gt.s32.totalorder %v1826, 0
    %v1828 = vsel %vm1827, %v1826, 0
    %v1829 = vshrl.u32 %v1828, 5
    %v1830 = vand.u32 %v1828, 31
    %v1831 = vsub.s32 32, %v1830
    %v1832 = vshrl.u32 683565275, %v1831
    %v1833 = vshll.u32 683565275, %v1830
    %v1834 = vshrl.u32 2475754826, %v1831
    %v1835 = vor.u32 %v1833, %v1834
    %v1836 = vshll.u32 2475754826, %v1830
    %v1837 = vshrl.u32 2131351028, %v1831
    %v1838 = vor.u32 %v1836, %v1837
    %v1839 = vshll.u32 2131351028, %v1830
    %v1840 = vshrl.u32 2102212464, %v1831
    %v1841 = vor.u32 %v1839, %v1840
    %v1842 = vshll.u32 2102212464, %v1830
    %v1843 = vshrl.u32 920167782, %v1831
    %v1844 = vor.u32 %v1842, %v1843
    %v1845 = vshll.u32 920167782, %v1830
    %v1846 = vshrl.u32 1326507024, %v1831
    %v1847 = vor.u32 %v1845, %v1846
    %vm1848 = vcmp.lt.s32.totalorder %v1829, 1
    %vm1849 = vcmp.lt.s32.totalorder %v1829, 2
    %vm1850 = vcmp.lt.s32.totalorder %v1829, 3
    %vm1851 = vcmp.lt.s32.totalorder %v1829, 4
    %v1852 = vsel %vm1848, %v1832, %v1835
    %v1853 = vsel %vm1851, %v1841, 2102212464
    %v1854 = vsel %vm1850, %v1838, %v1853
    %v1855 = vsel %vm1849, %v1852, %v1854
    %v1856 = vsel %vm1848, %v1835, %v1838
    %v1857 = vsel %vm1851, %v1844, 920167782
    %v1858 = vsel %vm1850, %v1841, %v1857
    %v1859 = vsel %vm1849, %v1856, %v1858
    %v1860 = vsel %vm1848, %v1838, %v1841
    %v1861 = vsel %vm1851, %v1847, 1326507024
    %v1862 = vsel %vm1850, %v1844, %v1861
    %v1863 = vsel %vm1849, %v1860, %v1862
    %v1864 = vshll.u32 %v1824, 8
    %v1865 = vmul.u32.u64.compose %v1864, %v1863
    %v1866 = vextract.low.u32 %v1865
    %v1867 = vextract.high.u32 %v1865
    %v1868 = vmul.u32.u64.compose %v1864, %v1859
    %v1869 = vextract.low.u32 %v1868
    %v1870 = vextract.high.u32 %v1868
    %v1871 = vmul.u32 %v1864, %v1855
    %v1872 = vadd.s32 %v1867, %v1869
    %vm1873 = vc.u32 %v1867, %v1869
    %v1874 = vadd.s32 %v1870, 1
    %v1875 = vsel %vm1873, %v1874, %v1870
    %v1876 = vadd.s32 %v1871, %v1875
    %v1877 = vadd.s32 %v1876, 536870912
    %v1878 = vshrl.u32 %v1877, 30
    %v1879 = vshll.u32 %v1878, 30
    %v1880 = vsub.s32 %v1876, %v1879
    %vm1881 = vcmp.lt.s32.totalorder %v1880, 0
    %v1882 = vsub.s32 0, %v1880
    %v1883 = vsel %vm1881, %v1882, %v1880
    %v1884 = vclz %v1883
    %v1885 = vsub.s32 %v1884, 2
    %vm1886 = vcmp.gt.s32.totalorder 0, %v1885
    %v1887 = vsel %vm1886, 0, %v1885
    %v1888 = vsub.s32 32, %v1887
    %v1889 = vshll.u32 %v1880, %v1887
    %v1890 = vshrl.u32 %v1872, %v1888
    %v1891 = vor.u32 %v1889, %v1890
    %v1892 = vsub.s32 4294967266, %v1887
    %v1893 = vadd.s32 %v1892, 127
    %v1894 = vshll.u32 %v1893, 23
    %v1895 = vor.u32 4788187, %v1894
    %v1896 = vand.u32 2147483647, %v1895
    %v1898 = vcvt.s32.f32 %v1891
    %v1899 = vmul.f32 %v1898, %v1896
    %v1900 = vxor.u32 %v1899, 2147483648
    %v1901 = vsel %vm1818, %v1900, %v1899
    %v1902 = vsub.s32 4, %v1878
    %v1903 = vsel %vm1818, %v1902, %v1878
    %v1904 = vsel %vm1817, %v409, %v1901
    %v1905 = vsel %vm1817, 0, %v1903
    %v1906 = vcosq.f32.pop %v1904
    %v1907 = vsinq.f32.pop %v1904
    %vm1908 = vweird.f32 %v409
    %v1909 = vadd.s32 %v1905, 3
    %v1910 = vand.u32 %v1909, 3
    %vm1911 = vcmp.lt.s32.totalorder %v1910, 2
    %vm1912 = vcmp.eq.s32.totalorder %v1910, 0
    %v1913 = vxor.u32 %v1907, 2147483648
    %v1914 = vsel %vm1912, %v1906, %v1913
    %vm1915 = vcmp.eq.s32.totalorder %v1910, 2
    %v1916 = vxor.u32 %v1906, 2147483648
    %v1917 = vsel %vm1915, %v1916, %v1907
    %v1918 = vsel %vm1911, %v1914, %v1917
    %v1919 = vsel %vm1908, nan, %v1918
    %v1920 = vand.u32 2147483647, %v414
    %vm1921 = vcmp.le.f32.partialorder %v1920, 0.7853982
    %vm1922 = vcmp.lt.s32.totalorder %v414, 0
    %v1923 = vand.u32 %v414, 2139095040
    %v1924 = vshrl.u32 %v1923, 23
    %v1925 = vsub.s32 %v1924, 127
    %v1926 = vand.u32 2147483647, %v414
    %v1927 = vand.u32 %v1926, 8388607
    %v1928 = vor.u32 %v1927, 8388608
    %v1929 = vsub.s32 0, %v1928
    %v1930 = vadd.s32 %v1925, 1
    %vm1931 = vcmp.gt.s32.totalorder %v1930, 0
    %v1932 = vsel %vm1931, %v1930, 0
    %v1933 = vshrl.u32 %v1932, 5
    %v1934 = vand.u32 %v1932, 31
    %v1935 = vsub.s32 32, %v1934
    %v1936 = vshrl.u32 683565275, %v1935
    %v1937 = vshll.u32 683565275, %v1934
    %v1938 = vshrl.u32 2475754826, %v1935
    %v1939 = vor.u32 %v1937, %v1938
    %v1940 = vshll.u32 2475754826, %v1934
    %v1941 = vshrl.u32 2131351028, %v1935
    %v1942 = vor.u32 %v1940, %v1941
    %v1943 = vshll.u32 2131351028, %v1934
    %v1944 = vshrl.u32 2102212464, %v1935
    %v1945 = vor.u32 %v1943, %v1944
    %v1946 = vshll.u32 2102212464, %v1934
    %v1947 = vshrl.u32 920167782, %v1935
    %v1948 = vor.u32 %v1946, %v1947
    %v1949 = vshll.u32 920167782, %v1934
    %v1950 = vshrl.u32 1326507024, %v1935
    %v1951 = vor.u32 %v1949, %v1950
    %vm1952 = vcmp.lt.s32.totalorder %v1933, 1
    %vm1953 = vcmp.lt.s32.totalorder %v1933, 2
    %vm1954 = vcmp.lt.s32.totalorder %v1933, 3
    %vm1955 = vcmp.lt.s32.totalorder %v1933, 4
    %v1956 = vsel %vm1952, %v1936, %v1939
    %v1957 = vsel %vm1955, %v1945, 2102212464
    %v1958 = vsel %vm1954, %v1942, %v1957
    %v1959 = vsel %vm1953, %v1956, %v1958
    %v1960 = vsel %vm1952, %v1939, %v1942
    %v1961 = vsel %vm1955, %v1948, 920167782
    %v1962 = vsel %vm1954, %v1945, %v1961
    %v1963 = vsel %vm1953, %v1960, %v1962
    %v1964 = vsel %vm1952, %v1942, %v1945
    %v1965 = vsel %vm1955, %v1951, 1326507024
    %v1966 = vsel %vm1954, %v1948, %v1965
    %v1967 = vsel %vm1953, %v1964, %v1966
    %v1968 = vshll.u32 %v1928, 8
    %v1969 = vmul.u32.u64.compose %v1968, %v1967
    %v1970 = vextract.low.u32 %v1969
    %v1971 = vextract.high.u32 %v1969
    %v1972 = vmul.u32.u64.compose %v1968, %v1963
    %v1973 = vextract.low.u32 %v1972
    %v1974 = vextract.high.u32 %v1972
    %v1975 = vmul.u32 %v1968, %v1959
    %v1976 = vadd.s32 %v1971, %v1973
    %vm1977 = vc.u32 %v1971, %v1973
    %v1978 = vadd.s32 %v1974, 1
    %v1979 = vsel %vm1977, %v1978, %v1974
    %v1980 = vadd.s32 %v1975, %v1979
    %v1981 = vadd.s32 %v1980, 536870912
    %v1982 = vshrl.u32 %v1981, 30
    %v1983 = vshll.u32 %v1982, 30
    %v1984 = vsub.s32 %v1980, %v1983
    %vm1985 = vcmp.lt.s32.totalorder %v1984, 0
    %v1986 = vsub.s32 0, %v1984
    %v1987 = vsel %vm1985, %v1986, %v1984
    %v1988 = vclz %v1987
    %v1989 = vsub.s32 %v1988, 2
    %vm1990 = vcmp.gt.s32.totalorder 0, %v1989
    %v1991 = vsel %vm1990, 0, %v1989
    %v1992 = vsub.s32 32, %v1991
    %v1993 = vshll.u32 %v1984, %v1991
    %v1994 = vshrl.u32 %v1976, %v1992
    %v1995 = vor.u32 %v1993, %v1994
    %v1996 = vsub.s32 4294967266, %v1991
    %v1997 = vadd.s32 %v1996, 127
    %v1998 = vshll.u32 %v1997, 23
    %v1999 = vor.u32 4788187, %v1998
    %v2000 = vand.u32 2147483647, %v1999
    %v2002 = vcvt.s32.f32 %v1995
    %v2003 = vmul.f32 %v2002, %v2000
    %v2004 = vxor.u32 %v2003, 2147483648
    %v2005 = vsel %vm1922, %v2004, %v2003
    %v2006 = vsub.s32 4, %v1982
    %v2007 = vsel %vm1922, %v2006, %v1982
    %v2008 = vsel %vm1921, %v414, %v2005
    %v2009 = vsel %vm1921, 0, %v2007
    %v2010 = vcosq.f32.pop %v2008
    %v2011 = vsinq.f32.pop %v2008
    %vm2012 = vweird.f32 %v414
    %v2013 = vadd.s32 %v2009, 3
    %v2014 = vand.u32 %v2013, 3
    %vm2015 = vcmp.lt.s32.totalorder %v2014, 2
    %vm2016 = vcmp.eq.s32.totalorder %v2014, 0
    %v2017 = vxor.u32 %v2011, 2147483648
    %v2018 = vsel %vm2016, %v2010, %v2017
    %vm2019 = vcmp.eq.s32.totalorder %v2014, 2
    %v2020 = vxor.u32 %v2010, 2147483648
    %v2021 = vsel %vm2019, %v2020, %v2011
    %v2022 = vsel %vm2015, %v2018, %v2021
    %v2023 = vsel %vm2012, nan, %v2022
    %v2024 = vand.u32 2147483647, %v419
    %vm2025 = vcmp.le.f32.partialorder %v2024, 0.7853982
    %vm2026 = vcmp.lt.s32.totalorder %v419, 0
    %v2027 = vand.u32 %v419, 2139095040
    %v2028 = vshrl.u32 %v2027, 23
    %v2029 = vsub.s32 %v2028, 127
    %v2030 = vand.u32 2147483647, %v419
    %v2031 = vand.u32 %v2030, 8388607
    %v2032 = vor.u32 %v2031, 8388608
    %v2033 = vsub.s32 0, %v2032
    %v2034 = vadd.s32 %v2029, 1
    %vm2035 = vcmp.gt.s32.totalorder %v2034, 0
    %v2036 = vsel %vm2035, %v2034, 0
    %v2037 = vshrl.u32 %v2036, 5
    %v2038 = vand.u32 %v2036, 31
    %v2039 = vsub.s32 32, %v2038
    %v2040 = vshrl.u32 683565275, %v2039
    %v2041 = vshll.u32 683565275, %v2038
    %v2042 = vshrl.u32 2475754826, %v2039
    %v2043 = vor.u32 %v2041, %v2042
    %v2044 = vshll.u32 2475754826, %v2038
    %v2045 = vshrl.u32 2131351028, %v2039
    %v2046 = vor.u32 %v2044, %v2045
    %v2047 = vshll.u32 2131351028, %v2038
    %v2048 = vshrl.u32 2102212464, %v2039
    %v2049 = vor.u32 %v2047, %v2048
    %v2050 = vshll.u32 2102212464, %v2038
    %v2051 = vshrl.u32 920167782, %v2039
    %v2052 = vor.u32 %v2050, %v2051
    %v2053 = vshll.u32 920167782, %v2038
    %v2054 = vshrl.u32 1326507024, %v2039
    %v2055 = vor.u32 %v2053, %v2054
    %vm2056 = vcmp.lt.s32.totalorder %v2037, 1
    %vm2057 = vcmp.lt.s32.totalorder %v2037, 2
    %vm2058 = vcmp.lt.s32.totalorder %v2037, 3
    %vm2059 = vcmp.lt.s32.totalorder %v2037, 4
    %v2060 = vsel %vm2056, %v2040, %v2043
    %v2061 = vsel %vm2059, %v2049, 2102212464
    %v2062 = vsel %vm2058, %v2046, %v2061
    %v2063 = vsel %vm2057, %v2060, %v2062
    %v2064 = vsel %vm2056, %v2043, %v2046
    %v2065 = vsel %vm2059, %v2052, 920167782
    %v2066 = vsel %vm2058, %v2049, %v2065
    %v2067 = vsel %vm2057, %v2064, %v2066
    %v2068 = vsel %vm2056, %v2046, %v2049
    %v2069 = vsel %vm2059, %v2055, 1326507024
    %v2070 = vsel %vm2058, %v2052, %v2069
    %v2071 = vsel %vm2057, %v2068, %v2070
    %v2072 = vshll.u32 %v2032, 8
    %v2073 = vmul.u32.u64.compose %v2072, %v2071
    %v2074 = vextract.low.u32 %v2073
    %v2075 = vextract.high.u32 %v2073
    %v2076 = vmul.u32.u64.compose %v2072, %v2067
    %v2077 = vextract.low.u32 %v2076
    %v2078 = vextract.high.u32 %v2076
    %v2079 = vmul.u32 %v2072, %v2063
    %v2080 = vadd.s32 %v2075, %v2077
    %vm2081 = vc.u32 %v2075, %v2077
    %v2082 = vadd.s32 %v2078, 1
    %v2083 = vsel %vm2081, %v2082, %v2078
    %v2084 = vadd.s32 %v2079, %v2083
    %v2085 = vadd.s32 %v2084, 536870912
    %v2086 = vshrl.u32 %v2085, 30
    %v2087 = vshll.u32 %v2086, 30
    %v2088 = vsub.s32 %v2084, %v2087
    %vm2089 = vcmp.lt.s32.totalorder %v2088, 0
    %v2090 = vsub.s32 0, %v2088
    %v2091 = vsel %vm2089, %v2090, %v2088
    %v2092 = vclz %v2091
    %v2093 = vsub.s32 %v2092, 2
    %vm2094 = vcmp.gt.s32.totalorder 0, %v2093
    %v2095 = vsel %vm2094, 0, %v2093
    %v2096 = vsub.s32 32, %v2095
    %v2097 = vshll.u32 %v2088, %v2095
    %v2098 = vshrl.u32 %v2080, %v2096
    %v2099 = vor.u32 %v2097, %v2098
    %v2100 = vsub.s32 4294967266, %v2095
    %v2101 = vadd.s32 %v2100, 127
    %v2102 = vshll.u32 %v2101, 23
    %v2103 = vor.u32 4788187, %v2102
    %v2104 = vand.u32 2147483647, %v2103
    %v2106 = vcvt.s32.f32 %v2099
    %v2107 = vmul.f32 %v2106, %v2104
    %v2108 = vxor.u32 %v2107, 2147483648
    %v2109 = vsel %vm2026, %v2108, %v2107
    %v2110 = vsub.s32 4, %v2086
    %v2111 = vsel %vm2026, %v2110, %v2086
    %v2112 = vsel %vm2025, %v419, %v2109
    %v2113 = vsel %vm2025, 0, %v2111
    %v2114 = vcosq.f32.pop %v2112
    %v2115 = vsinq.f32.pop %v2112
    %vm2116 = vweird.f32 %v419
    %v2117 = vadd.s32 %v2113, 3
    %v2118 = vand.u32 %v2117, 3
    %vm2119 = vcmp.lt.s32.totalorder %v2118, 2
    %vm2120 = vcmp.eq.s32.totalorder %v2118, 0
    %v2121 = vxor.u32 %v2115, 2147483648
    %v2122 = vsel %vm2120, %v2114, %v2121
    %vm2123 = vcmp.eq.s32.totalorder %v2118, 2
    %v2124 = vxor.u32 %v2114, 2147483648
    %v2125 = vsel %vm2123, %v2124, %v2115
    %v2126 = vsel %vm2119, %v2122, %v2125
    %v2127 = vsel %vm2116, nan, %v2126
    %v2128 = vand.u32 2147483647, %v424
    %vm2129 = vcmp.le.f32.partialorder %v2128, 0.7853982
    %vm2130 = vcmp.lt.s32.totalorder %v424, 0
    %v2131 = vand.u32 %v424, 2139095040
    %v2132 = vshrl.u32 %v2131, 23
    %v2133 = vsub.s32 %v2132, 127
    %v2134 = vand.u32 2147483647, %v424
    %v2135 = vand.u32 %v2134, 8388607
    %v2136 = vor.u32 %v2135, 8388608
    %v2137 = vsub.s32 0, %v2136
    %v2138 = vadd.s32 %v2133, 1
    %vm2139 = vcmp.gt.s32.totalorder %v2138, 0
    %v2140 = vsel %vm2139, %v2138, 0
    %v2141 = vshrl.u32 %v2140, 5
    %v2142 = vand.u32 %v2140, 31
    %v2143 = vsub.s32 32, %v2142
    %v2144 = vshrl.u32 683565275, %v2143
    %v2145 = vshll.u32 683565275, %v2142
    %v2146 = vshrl.u32 2475754826, %v2143
    %v2147 = vor.u32 %v2145, %v2146
    %v2148 = vshll.u32 2475754826, %v2142
    %v2149 = vshrl.u32 2131351028, %v2143
    %v2150 = vor.u32 %v2148, %v2149
    %v2151 = vshll.u32 2131351028, %v2142
    %v2152 = vshrl.u32 2102212464, %v2143
    %v2153 = vor.u32 %v2151, %v2152
    %v2154 = vshll.u32 2102212464, %v2142
    %v2155 = vshrl.u32 920167782, %v2143
    %v2156 = vor.u32 %v2154, %v2155
    %v2157 = vshll.u32 920167782, %v2142
    %v2158 = vshrl.u32 1326507024, %v2143
    %v2159 = vor.u32 %v2157, %v2158
    %vm2160 = vcmp.lt.s32.totalorder %v2141, 1
    %vm2161 = vcmp.lt.s32.totalorder %v2141, 2
    %vm2162 = vcmp.lt.s32.totalorder %v2141, 3
    %vm2163 = vcmp.lt.s32.totalorder %v2141, 4
    %v2164 = vsel %vm2160, %v2144, %v2147
    %v2165 = vsel %vm2163, %v2153, 2102212464
    %v2166 = vsel %vm2162, %v2150, %v2165
    %v2167 = vsel %vm2161, %v2164, %v2166
    %v2168 = vsel %vm2160, %v2147, %v2150
    %v2169 = vsel %vm2163, %v2156, 920167782
    %v2170 = vsel %vm2162, %v2153, %v2169
    %v2171 = vsel %vm2161, %v2168, %v2170
    %v2172 = vsel %vm2160, %v2150, %v2153
    %v2173 = vsel %vm2163, %v2159, 1326507024
    %v2174 = vsel %vm2162, %v2156, %v2173
    %v2175 = vsel %vm2161, %v2172, %v2174
    %v2176 = vshll.u32 %v2136, 8
    %v2177 = vmul.u32.u64.compose %v2176, %v2175
    %v2178 = vextract.low.u32 %v2177
    %v2179 = vextract.high.u32 %v2177
    %v2180 = vmul.u32.u64.compose %v2176, %v2171
    %v2181 = vextract.low.u32 %v2180
    %v2182 = vextract.high.u32 %v2180
    %v2183 = vmul.u32 %v2176, %v2167
    %v2184 = vadd.s32 %v2179, %v2181
    %vm2185 = vc.u32 %v2179, %v2181
    %v2186 = vadd.s32 %v2182, 1
    %v2187 = vsel %vm2185, %v2186, %v2182
    %v2188 = vadd.s32 %v2183, %v2187
    %v2189 = vadd.s32 %v2188, 536870912
    %v2190 = vshrl.u32 %v2189, 30
    %v2191 = vshll.u32 %v2190, 30
    %v2192 = vsub.s32 %v2188, %v2191
    %vm2193 = vcmp.lt.s32.totalorder %v2192, 0
    %v2194 = vsub.s32 0, %v2192
    %v2195 = vsel %vm2193, %v2194, %v2192
    %v2196 = vclz %v2195
    %v2197 = vsub.s32 %v2196, 2
    %vm2198 = vcmp.gt.s32.totalorder 0, %v2197
    %v2199 = vsel %vm2198, 0, %v2197
    %v2200 = vsub.s32 32, %v2199
    %v2201 = vshll.u32 %v2192, %v2199
    %v2202 = vshrl.u32 %v2184, %v2200
    %v2203 = vor.u32 %v2201, %v2202
    %v2204 = vsub.s32 4294967266, %v2199
    %v2205 = vadd.s32 %v2204, 127
    %v2206 = vshll.u32 %v2205, 23
    %v2207 = vor.u32 4788187, %v2206
    %v2208 = vand.u32 2147483647, %v2207
    %v2210 = vcvt.s32.f32 %v2203
    %v2211 = vmul.f32 %v2210, %v2208
    %v2212 = vxor.u32 %v2211, 2147483648
    %v2213 = vsel %vm2130, %v2212, %v2211
    %v2214 = vsub.s32 4, %v2190
    %v2215 = vsel %vm2130, %v2214, %v2190
    %v2216 = vsel %vm2129, %v424, %v2213
    %v2217 = vsel %vm2129, 0, %v2215
    %v2218 = vcosq.f32.pop %v2216
    %v2219 = vsinq.f32.pop %v2216
    %vm2220 = vweird.f32 %v424
    %v2221 = vadd.s32 %v2217, 3
    %v2222 = vand.u32 %v2221, 3
    %vm2223 = vcmp.lt.s32.totalorder %v2222, 2
    %vm2224 = vcmp.eq.s32.totalorder %v2222, 0
    %v2225 = vxor.u32 %v2219, 2147483648
    %v2226 = vsel %vm2224, %v2218, %v2225
    %vm2227 = vcmp.eq.s32.totalorder %v2222, 2
    %v2228 = vxor.u32 %v2218, 2147483648
    %v2229 = vsel %vm2227, %v2228, %v2219
    %v2230 = vsel %vm2223, %v2226, %v2229
    %v2231 = vsel %vm2220, nan, %v2230
    %v2232 = vand.u32 2147483647, %v429
    %vm2233 = vcmp.le.f32.partialorder %v2232, 0.7853982
    %vm2234 = vcmp.lt.s32.totalorder %v429, 0
    %v2235 = vand.u32 %v429, 2139095040
    %v2236 = vshrl.u32 %v2235, 23
    %v2237 = vsub.s32 %v2236, 127
    %v2238 = vand.u32 2147483647, %v429
    %v2239 = vand.u32 %v2238, 8388607
    %v2240 = vor.u32 %v2239, 8388608
    %v2241 = vsub.s32 0, %v2240
    %v2242 = vadd.s32 %v2237, 1
    %vm2243 = vcmp.gt.s32.totalorder %v2242, 0
    %v2244 = vsel %vm2243, %v2242, 0
    %v2245 = vshrl.u32 %v2244, 5
    %v2246 = vand.u32 %v2244, 31
    %v2247 = vsub.s32 32, %v2246
    %v2248 = vshrl.u32 683565275, %v2247
    %v2249 = vshll.u32 683565275, %v2246
    %v2250 = vshrl.u32 2475754826, %v2247
    %v2251 = vor.u32 %v2249, %v2250
    %v2252 = vshll.u32 2475754826, %v2246
    %v2253 = vshrl.u32 2131351028, %v2247
    %v2254 = vor.u32 %v2252, %v2253
    %v2255 = vshll.u32 2131351028, %v2246
    %v2256 = vshrl.u32 2102212464, %v2247
    %v2257 = vor.u32 %v2255, %v2256
    %v2258 = vshll.u32 2102212464, %v2246
    %v2259 = vshrl.u32 920167782, %v2247
    %v2260 = vor.u32 %v2258, %v2259
    %v2261 = vshll.u32 920167782, %v2246
    %v2262 = vshrl.u32 1326507024, %v2247
    %v2263 = vor.u32 %v2261, %v2262
    %vm2264 = vcmp.lt.s32.totalorder %v2245, 1
    %vm2265 = vcmp.lt.s32.totalorder %v2245, 2
    %vm2266 = vcmp.lt.s32.totalorder %v2245, 3
    %vm2267 = vcmp.lt.s32.totalorder %v2245, 4
    %v2268 = vsel %vm2264, %v2248, %v2251
    %v2269 = vsel %vm2267, %v2257, 2102212464
    %v2270 = vsel %vm2266, %v2254, %v2269
    %v2271 = vsel %vm2265, %v2268, %v2270
    %v2272 = vsel %vm2264, %v2251, %v2254
    %v2273 = vsel %vm2267, %v2260, 920167782
    %v2274 = vsel %vm2266, %v2257, %v2273
    %v2275 = vsel %vm2265, %v2272, %v2274
    %v2276 = vsel %vm2264, %v2254, %v2257
    %v2277 = vsel %vm2267, %v2263, 1326507024
    %v2278 = vsel %vm2266, %v2260, %v2277
    %v2279 = vsel %vm2265, %v2276, %v2278
    %v2280 = vshll.u32 %v2240, 8
    %v2281 = vmul.u32.u64.compose %v2280, %v2279
    %v2282 = vextract.low.u32 %v2281
    %v2283 = vextract.high.u32 %v2281
    %v2284 = vmul.u32.u64.compose %v2280, %v2275
    %v2285 = vextract.low.u32 %v2284
    %v2286 = vextract.high.u32 %v2284
    %v2287 = vmul.u32 %v2280, %v2271
    %v2288 = vadd.s32 %v2283, %v2285
    %vm2289 = vc.u32 %v2283, %v2285
    %v2290 = vadd.s32 %v2286, 1
    %v2291 = vsel %vm2289, %v2290, %v2286
    %v2292 = vadd.s32 %v2287, %v2291
    %v2293 = vadd.s32 %v2292, 536870912
    %v2294 = vshrl.u32 %v2293, 30
    %v2295 = vshll.u32 %v2294, 30
    %v2296 = vsub.s32 %v2292, %v2295
    %vm2297 = vcmp.lt.s32.totalorder %v2296, 0
    %v2298 = vsub.s32 0, %v2296
    %v2299 = vsel %vm2297, %v2298, %v2296
    %v2300 = vclz %v2299
    %v2301 = vsub.s32 %v2300, 2
    %vm2302 = vcmp.gt.s32.totalorder 0, %v2301
    %v2303 = vsel %vm2302, 0, %v2301
    %v2304 = vsub.s32 32, %v2303
    %v2305 = vshll.u32 %v2296, %v2303
    %v2306 = vshrl.u32 %v2288, %v2304
    %v2307 = vor.u32 %v2305, %v2306
    %v2308 = vsub.s32 4294967266, %v2303
    %v2309 = vadd.s32 %v2308, 127
    %v2310 = vshll.u32 %v2309, 23
    %v2311 = vor.u32 4788187, %v2310
    %v2312 = vand.u32 2147483647, %v2311
    %v2314 = vcvt.s32.f32 %v2307
    %v2315 = vmul.f32 %v2314, %v2312
    %v2316 = vxor.u32 %v2315, 2147483648
    %v2317 = vsel %vm2234, %v2316, %v2315
    %v2318 = vsub.s32 4, %v2294
    %v2319 = vsel %vm2234, %v2318, %v2294
    %v2320 = vsel %vm2233, %v429, %v2317
    %v2321 = vsel %vm2233, 0, %v2319
    %v2322 = vcosq.f32.pop %v2320
    %v2323 = vsinq.f32.pop %v2320
    %vm2324 = vweird.f32 %v429
    %v2325 = vadd.s32 %v2321, 3
    %v2326 = vand.u32 %v2325, 3
    %vm2327 = vcmp.lt.s32.totalorder %v2326, 2
    %vm2328 = vcmp.eq.s32.totalorder %v2326, 0
    %v2329 = vxor.u32 %v2323, 2147483648
    %v2330 = vsel %vm2328, %v2322, %v2329
    %vm2331 = vcmp.eq.s32.totalorder %v2326, 2
    %v2332 = vxor.u32 %v2322, 2147483648
    %v2333 = vsel %vm2331, %v2332, %v2323
    %v2334 = vsel %vm2327, %v2330, %v2333
    %v2335 = vsel %vm2324, nan, %v2334
    %v2336 = vand.u32 2147483647, %v434
    %vm2337 = vcmp.le.f32.partialorder %v2336, 0.7853982
    %vm2338 = vcmp.lt.s32.totalorder %v434, 0
    %v2339 = vand.u32 %v434, 2139095040
    %v2340 = vshrl.u32 %v2339, 23
    %v2341 = vsub.s32 %v2340, 127
    %v2342 = vand.u32 2147483647, %v434
    %v2343 = vand.u32 %v2342, 8388607
    %v2344 = vor.u32 %v2343, 8388608
    %v2345 = vsub.s32 0, %v2344
    %v2346 = vadd.s32 %v2341, 1
    %vm2347 = vcmp.gt.s32.totalorder %v2346, 0
    %v2348 = vsel %vm2347, %v2346, 0
    %v2349 = vshrl.u32 %v2348, 5
    %v2350 = vand.u32 %v2348, 31
    %v2351 = vsub.s32 32, %v2350
    %v2352 = vshrl.u32 683565275, %v2351
    %v2353 = vshll.u32 683565275, %v2350
    %v2354 = vshrl.u32 2475754826, %v2351
    %v2355 = vor.u32 %v2353, %v2354
    %v2356 = vshll.u32 2475754826, %v2350
    %v2357 = vshrl.u32 2131351028, %v2351
    %v2358 = vor.u32 %v2356, %v2357
    %v2359 = vshll.u32 2131351028, %v2350
    %v2360 = vshrl.u32 2102212464, %v2351
    %v2361 = vor.u32 %v2359, %v2360
    %v2362 = vshll.u32 2102212464, %v2350
    %v2363 = vshrl.u32 920167782, %v2351
    %v2364 = vor.u32 %v2362, %v2363
    %v2365 = vshll.u32 920167782, %v2350
    %v2366 = vshrl.u32 1326507024, %v2351
    %v2367 = vor.u32 %v2365, %v2366
    %vm2368 = vcmp.lt.s32.totalorder %v2349, 1
    %vm2369 = vcmp.lt.s32.totalorder %v2349, 2
    %vm2370 = vcmp.lt.s32.totalorder %v2349, 3
    %vm2371 = vcmp.lt.s32.totalorder %v2349, 4
    %v2372 = vsel %vm2368, %v2352, %v2355
    %v2373 = vsel %vm2371, %v2361, 2102212464
    %v2374 = vsel %vm2370, %v2358, %v2373
    %v2375 = vsel %vm2369, %v2372, %v2374
    %v2376 = vsel %vm2368, %v2355, %v2358
    %v2377 = vsel %vm2371, %v2364, 920167782
    %v2378 = vsel %vm2370, %v2361, %v2377
    %v2379 = vsel %vm2369, %v2376, %v2378
    %v2380 = vsel %vm2368, %v2358, %v2361
    %v2381 = vsel %vm2371, %v2367, 1326507024
    %v2382 = vsel %vm2370, %v2364, %v2381
    %v2383 = vsel %vm2369, %v2380, %v2382
    %v2384 = vshll.u32 %v2344, 8
    %v2385 = vmul.u32.u64.compose %v2384, %v2383
    %v2386 = vextract.low.u32 %v2385
    %v2387 = vextract.high.u32 %v2385
    %v2388 = vmul.u32.u64.compose %v2384, %v2379
    %v2389 = vextract.low.u32 %v2388
    %v2390 = vextract.high.u32 %v2388
    %v2391 = vmul.u32 %v2384, %v2375
    %v2392 = vadd.s32 %v2387, %v2389
    %vm2393 = vc.u32 %v2387, %v2389
    %v2394 = vadd.s32 %v2390, 1
    %v2395 = vsel %vm2393, %v2394, %v2390
    %v2396 = vadd.s32 %v2391, %v2395
    %v2397 = vadd.s32 %v2396, 536870912
    %v2398 = vshrl.u32 %v2397, 30
    %v2399 = vshll.u32 %v2398, 30
    %v2400 = vsub.s32 %v2396, %v2399
    %vm2401 = vcmp.lt.s32.totalorder %v2400, 0
    %v2402 = vsub.s32 0, %v2400
    %v2403 = vsel %vm2401, %v2402, %v2400
    %v2404 = vclz %v2403
    %v2405 = vsub.s32 %v2404, 2
    %vm2406 = vcmp.gt.s32.totalorder 0, %v2405
    %v2407 = vsel %vm2406, 0, %v2405
    %v2408 = vsub.s32 32, %v2407
    %v2409 = vshll.u32 %v2400, %v2407
    %v2410 = vshrl.u32 %v2392, %v2408
    %v2411 = vor.u32 %v2409, %v2410
    %v2412 = vsub.s32 4294967266, %v2407
    %v2413 = vadd.s32 %v2412, 127
    %v2414 = vshll.u32 %v2413, 23
    %v2415 = vor.u32 4788187, %v2414
    %v2416 = vand.u32 2147483647, %v2415
    %v2418 = vcvt.s32.f32 %v2411
    %v2419 = vmul.f32 %v2418, %v2416
    %v2420 = vxor.u32 %v2419, 2147483648
    %v2421 = vsel %vm2338, %v2420, %v2419
    %v2422 = vsub.s32 4, %v2398
    %v2423 = vsel %vm2338, %v2422, %v2398
    %v2424 = vsel %vm2337, %v434, %v2421
    %v2425 = vsel %vm2337, 0, %v2423
    %v2426 = vcosq.f32.pop %v2424
    %v2427 = vsinq.f32.pop %v2424
    %vm2428 = vweird.f32 %v434
    %v2429 = vadd.s32 %v2425, 3
    %v2430 = vand.u32 %v2429, 3
    %vm2431 = vcmp.lt.s32.totalorder %v2430, 2
    %vm2432 = vcmp.eq.s32.totalorder %v2430, 0
    %v2433 = vxor.u32 %v2427, 2147483648
    %v2434 = vsel %vm2432, %v2426, %v2433
    %vm2435 = vcmp.eq.s32.totalorder %v2430, 2
    %v2436 = vxor.u32 %v2426, 2147483648
    %v2437 = vsel %vm2435, %v2436, %v2427
    %v2438 = vsel %vm2431, %v2434, %v2437
    %v2439 = vsel %vm2428, nan, %v2438
    %v2440 = vand.u32 2147483647, %v439
    %vm2441 = vcmp.le.f32.partialorder %v2440, 0.7853982
    %vm2442 = vcmp.lt.s32.totalorder %v439, 0
    %v2443 = vand.u32 %v439, 2139095040
    %v2444 = vshrl.u32 %v2443, 23
    %v2445 = vsub.s32 %v2444, 127
    %v2446 = vand.u32 2147483647, %v439
    %v2447 = vand.u32 %v2446, 8388607
    %v2448 = vor.u32 %v2447, 8388608
    %v2449 = vsub.s32 0, %v2448
    %v2450 = vadd.s32 %v2445, 1
    %vm2451 = vcmp.gt.s32.totalorder %v2450, 0
    %v2452 = vsel %vm2451, %v2450, 0
    %v2453 = vshrl.u32 %v2452, 5
    %v2454 = vand.u32 %v2452, 31
    %v2455 = vsub.s32 32, %v2454
    %v2456 = vshrl.u32 683565275, %v2455
    %v2457 = vshll.u32 683565275, %v2454
    %v2458 = vshrl.u32 2475754826, %v2455
    %v2459 = vor.u32 %v2457, %v2458
    %v2460 = vshll.u32 2475754826, %v2454
    %v2461 = vshrl.u32 2131351028, %v2455
    %v2462 = vor.u32 %v2460, %v2461
    %v2463 = vshll.u32 2131351028, %v2454
    %v2464 = vshrl.u32 2102212464, %v2455
    %v2465 = vor.u32 %v2463, %v2464
    %v2466 = vshll.u32 2102212464, %v2454
    %v2467 = vshrl.u32 920167782, %v2455
    %v2468 = vor.u32 %v2466, %v2467
    %v2469 = vshll.u32 920167782, %v2454
    %v2470 = vshrl.u32 1326507024, %v2455
    %v2471 = vor.u32 %v2469, %v2470
    %vm2472 = vcmp.lt.s32.totalorder %v2453, 1
    %vm2473 = vcmp.lt.s32.totalorder %v2453, 2
    %vm2474 = vcmp.lt.s32.totalorder %v2453, 3
    %vm2475 = vcmp.lt.s32.totalorder %v2453, 4
    %v2476 = vsel %vm2472, %v2456, %v2459
    %v2477 = vsel %vm2475, %v2465, 2102212464
    %v2478 = vsel %vm2474, %v2462, %v2477
    %v2479 = vsel %vm2473, %v2476, %v2478
    %v2480 = vsel %vm2472, %v2459, %v2462
    %v2481 = vsel %vm2475, %v2468, 920167782
    %v2482 = vsel %vm2474, %v2465, %v2481
    %v2483 = vsel %vm2473, %v2480, %v2482
    %v2484 = vsel %vm2472, %v2462, %v2465
    %v2485 = vsel %vm2475, %v2471, 1326507024
    %v2486 = vsel %vm2474, %v2468, %v2485
    %v2487 = vsel %vm2473, %v2484, %v2486
    %v2488 = vshll.u32 %v2448, 8
    %v2489 = vmul.u32.u64.compose %v2488, %v2487
    %v2490 = vextract.low.u32 %v2489
    %v2491 = vextract.high.u32 %v2489
    %v2492 = vmul.u32.u64.compose %v2488, %v2483
    %v2493 = vextract.low.u32 %v2492
    %v2494 = vextract.high.u32 %v2492
    %v2495 = vmul.u32 %v2488, %v2479
    %v2496 = vadd.s32 %v2491, %v2493
    %vm2497 = vc.u32 %v2491, %v2493
    %v2498 = vadd.s32 %v2494, 1
    %v2499 = vsel %vm2497, %v2498, %v2494
    %v2500 = vadd.s32 %v2495, %v2499
    %v2501 = vadd.s32 %v2500, 536870912
    %v2502 = vshrl.u32 %v2501, 30
    %v2503 = vshll.u32 %v2502, 30
    %v2504 = vsub.s32 %v2500, %v2503
    %vm2505 = vcmp.lt.s32.totalorder %v2504, 0
    %v2506 = vsub.s32 0, %v2504
    %v2507 = vsel %vm2505, %v2506, %v2504
    %v2508 = vclz %v2507
    %v2509 = vsub.s32 %v2508, 2
    %vm2510 = vcmp.gt.s32.totalorder 0, %v2509
    %v2511 = vsel %vm2510, 0, %v2509
    %v2512 = vsub.s32 32, %v2511
    %v2513 = vshll.u32 %v2504, %v2511
    %v2514 = vshrl.u32 %v2496, %v2512
    %v2515 = vor.u32 %v2513, %v2514
    %v2516 = vsub.s32 4294967266, %v2511
    %v2517 = vadd.s32 %v2516, 127
    %v2518 = vshll.u32 %v2517, 23
    %v2519 = vor.u32 4788187, %v2518
    %v2520 = vand.u32 2147483647, %v2519
    %v2522 = vcvt.s32.f32 %v2515
    %v2523 = vmul.f32 %v2522, %v2520
    %v2524 = vxor.u32 %v2523, 2147483648
    %v2525 = vsel %vm2442, %v2524, %v2523
    %v2526 = vsub.s32 4, %v2502
    %v2527 = vsel %vm2442, %v2526, %v2502
    %v2528 = vsel %vm2441, %v439, %v2525
    %v2529 = vsel %vm2441, 0, %v2527
    %v2530 = vcosq.f32.pop %v2528
    %v2531 = vsinq.f32.pop %v2528
    %vm2532 = vweird.f32 %v439
    %v2533 = vadd.s32 %v2529, 3
    %v2534 = vand.u32 %v2533, 3
    %vm2535 = vcmp.lt.s32.totalorder %v2534, 2
    %vm2536 = vcmp.eq.s32.totalorder %v2534, 0
    %v2537 = vxor.u32 %v2531, 2147483648
    %v2538 = vsel %vm2536, %v2530, %v2537
    %vm2539 = vcmp.eq.s32.totalorder %v2534, 2
    %v2540 = vxor.u32 %v2530, 2147483648
    %v2541 = vsel %vm2539, %v2540, %v2531
    %v2542 = vsel %vm2535, %v2538, %v2541
    %v2543 = vsel %vm2532, nan, %v2542
    %v2544 = vand.u32 2147483647, %v444
    %vm2545 = vcmp.le.f32.partialorder %v2544, 0.7853982
    %vm2546 = vcmp.lt.s32.totalorder %v444, 0
    %v2547 = vand.u32 %v444, 2139095040
    %v2548 = vshrl.u32 %v2547, 23
    %v2549 = vsub.s32 %v2548, 127
    %v2550 = vand.u32 2147483647, %v444
    %v2551 = vand.u32 %v2550, 8388607
    %v2552 = vor.u32 %v2551, 8388608
    %v2553 = vsub.s32 0, %v2552
    %v2554 = vadd.s32 %v2549, 1
    %vm2555 = vcmp.gt.s32.totalorder %v2554, 0
    %v2556 = vsel %vm2555, %v2554, 0
    %v2557 = vshrl.u32 %v2556, 5
    %v2558 = vand.u32 %v2556, 31
    %v2559 = vsub.s32 32, %v2558
    %v2560 = vshrl.u32 683565275, %v2559
    %v2561 = vshll.u32 683565275, %v2558
    %v2562 = vshrl.u32 2475754826, %v2559
    %v2563 = vor.u32 %v2561, %v2562
    %v2564 = vshll.u32 2475754826, %v2558
    %v2565 = vshrl.u32 2131351028, %v2559
    %v2566 = vor.u32 %v2564, %v2565
    %v2567 = vshll.u32 2131351028, %v2558
    %v2568 = vshrl.u32 2102212464, %v2559
    %v2569 = vor.u32 %v2567, %v2568
    %v2570 = vshll.u32 2102212464, %v2558
    %v2571 = vshrl.u32 920167782, %v2559
    %v2572 = vor.u32 %v2570, %v2571
    %v2573 = vshll.u32 920167782, %v2558
    %v2574 = vshrl.u32 1326507024, %v2559
    %v2575 = vor.u32 %v2573, %v2574
    %vm2576 = vcmp.lt.s32.totalorder %v2557, 1
    %vm2577 = vcmp.lt.s32.totalorder %v2557, 2
    %vm2578 = vcmp.lt.s32.totalorder %v2557, 3
    %vm2579 = vcmp.lt.s32.totalorder %v2557, 4
    %v2580 = vsel %vm2576, %v2560, %v2563
    %v2581 = vsel %vm2579, %v2569, 2102212464
    %v2582 = vsel %vm2578, %v2566, %v2581
    %v2583 = vsel %vm2577, %v2580, %v2582
    %v2584 = vsel %vm2576, %v2563, %v2566
    %v2585 = vsel %vm2579, %v2572, 920167782
    %v2586 = vsel %vm2578, %v2569, %v2585
    %v2587 = vsel %vm2577, %v2584, %v2586
    %v2588 = vsel %vm2576, %v2566, %v2569
    %v2589 = vsel %vm2579, %v2575, 1326507024
    %v2590 = vsel %vm2578, %v2572, %v2589
    %v2591 = vsel %vm2577, %v2588, %v2590
    %v2592 = vshll.u32 %v2552, 8
    %v2593 = vmul.u32.u64.compose %v2592, %v2591
    %v2594 = vextract.low.u32 %v2593
    %v2595 = vextract.high.u32 %v2593
    %v2596 = vmul.u32.u64.compose %v2592, %v2587
    %v2597 = vextract.low.u32 %v2596
    %v2598 = vextract.high.u32 %v2596
    %v2599 = vmul.u32 %v2592, %v2583
    %v2600 = vadd.s32 %v2595, %v2597
    %vm2601 = vc.u32 %v2595, %v2597
    %v2602 = vadd.s32 %v2598, 1
    %v2603 = vsel %vm2601, %v2602, %v2598
    %v2604 = vadd.s32 %v2599, %v2603
    %v2605 = vadd.s32 %v2604, 536870912
    %v2606 = vshrl.u32 %v2605, 30
    %v2607 = vshll.u32 %v2606, 30
    %v2608 = vsub.s32 %v2604, %v2607
    %vm2609 = vcmp.lt.s32.totalorder %v2608, 0
    %v2610 = vsub.s32 0, %v2608
    %v2611 = vsel %vm2609, %v2610, %v2608
    %v2612 = vclz %v2611
    %v2613 = vsub.s32 %v2612, 2
    %vm2614 = vcmp.gt.s32.totalorder 0, %v2613
    %v2615 = vsel %vm2614, 0, %v2613
    %v2616 = vsub.s32 32, %v2615
    %v2617 = vshll.u32 %v2608, %v2615
    %v2618 = vshrl.u32 %v2600, %v2616
    %v2619 = vor.u32 %v2617, %v2618
    %v2620 = vsub.s32 4294967266, %v2615
    %v2621 = vadd.s32 %v2620, 127
    %v2622 = vshll.u32 %v2621, 23
    %v2623 = vor.u32 4788187, %v2622
    %v2624 = vand.u32 2147483647, %v2623
    %v2626 = vcvt.s32.f32 %v2619
    %v2627 = vmul.f32 %v2626, %v2624
    %v2628 = vxor.u32 %v2627, 2147483648
    %v2629 = vsel %vm2546, %v2628, %v2627
    %v2630 = vsub.s32 4, %v2606
    %v2631 = vsel %vm2546, %v2630, %v2606
    %v2632 = vsel %vm2545, %v444, %v2629
    %v2633 = vsel %vm2545, 0, %v2631
    %v2634 = vcosq.f32.pop %v2632
    %v2635 = vsinq.f32.pop %v2632
    %vm2636 = vweird.f32 %v444
    %v2637 = vadd.s32 %v2633, 3
    %v2638 = vand.u32 %v2637, 3
    %vm2639 = vcmp.lt.s32.totalorder %v2638, 2
    %vm2640 = vcmp.eq.s32.totalorder %v2638, 0
    %v2641 = vxor.u32 %v2635, 2147483648
    %v2642 = vsel %vm2640, %v2634, %v2641
    %vm2643 = vcmp.eq.s32.totalorder %v2638, 2
    %v2644 = vxor.u32 %v2634, 2147483648
    %v2645 = vsel %vm2643, %v2644, %v2635
    %v2646 = vsel %vm2639, %v2642, %v2645
    %v2647 = vsel %vm2636, nan, %v2646
    %v2648 = vand.u32 2147483647, %v449
    %vm2649 = vcmp.le.f32.partialorder %v2648, 0.7853982
    %vm2650 = vcmp.lt.s32.totalorder %v449, 0
    %v2651 = vand.u32 %v449, 2139095040
    %v2652 = vshrl.u32 %v2651, 23
    %v2653 = vsub.s32 %v2652, 127
    %v2654 = vand.u32 2147483647, %v449
    %v2655 = vand.u32 %v2654, 8388607
    %v2656 = vor.u32 %v2655, 8388608
    %v2657 = vsub.s32 0, %v2656
    %v2658 = vadd.s32 %v2653, 1
    %vm2659 = vcmp.gt.s32.totalorder %v2658, 0
    %v2660 = vsel %vm2659, %v2658, 0
    %v2661 = vshrl.u32 %v2660, 5
    %v2662 = vand.u32 %v2660, 31
    %v2663 = vsub.s32 32, %v2662
    %v2664 = vshrl.u32 683565275, %v2663
    %v2665 = vshll.u32 683565275, %v2662
    %v2666 = vshrl.u32 2475754826, %v2663
    %v2667 = vor.u32 %v2665, %v2666
    %v2668 = vshll.u32 2475754826, %v2662
    %v2669 = vshrl.u32 2131351028, %v2663
    %v2670 = vor.u32 %v2668, %v2669
    %v2671 = vshll.u32 2131351028, %v2662
    %v2672 = vshrl.u32 2102212464, %v2663
    %v2673 = vor.u32 %v2671, %v2672
    %v2674 = vshll.u32 2102212464, %v2662
    %v2675 = vshrl.u32 920167782, %v2663
    %v2676 = vor.u32 %v2674, %v2675
    %v2677 = vshll.u32 920167782, %v2662
    %v2678 = vshrl.u32 1326507024, %v2663
    %v2679 = vor.u32 %v2677, %v2678
    %vm2680 = vcmp.lt.s32.totalorder %v2661, 1
    %vm2681 = vcmp.lt.s32.totalorder %v2661, 2
    %vm2682 = vcmp.lt.s32.totalorder %v2661, 3
    %vm2683 = vcmp.lt.s32.totalorder %v2661, 4
    %v2684 = vsel %vm2680, %v2664, %v2667
    %v2685 = vsel %vm2683, %v2673, 2102212464
    %v2686 = vsel %vm2682, %v2670, %v2685
    %v2687 = vsel %vm2681, %v2684, %v2686
    %v2688 = vsel %vm2680, %v2667, %v2670
    %v2689 = vsel %vm2683, %v2676, 920167782
    %v2690 = vsel %vm2682, %v2673, %v2689
    %v2691 = vsel %vm2681, %v2688, %v2690
    %v2692 = vsel %vm2680, %v2670, %v2673
    %v2693 = vsel %vm2683, %v2679, 1326507024
    %v2694 = vsel %vm2682, %v2676, %v2693
    %v2695 = vsel %vm2681, %v2692, %v2694
    %v2696 = vshll.u32 %v2656, 8
    %v2697 = vmul.u32.u64.compose %v2696, %v2695
    %v2698 = vextract.low.u32 %v2697
    %v2699 = vextract.high.u32 %v2697
    %v2700 = vmul.u32.u64.compose %v2696, %v2691
    %v2701 = vextract.low.u32 %v2700
    %v2702 = vextract.high.u32 %v2700
    %v2703 = vmul.u32 %v2696, %v2687
    %v2704 = vadd.s32 %v2699, %v2701
    %vm2705 = vc.u32 %v2699, %v2701
    %v2706 = vadd.s32 %v2702, 1
    %v2707 = vsel %vm2705, %v2706, %v2702
    %v2708 = vadd.s32 %v2703, %v2707
    %v2709 = vadd.s32 %v2708, 536870912
    %v2710 = vshrl.u32 %v2709, 30
    %v2711 = vshll.u32 %v2710, 30
    %v2712 = vsub.s32 %v2708, %v2711
    %vm2713 = vcmp.lt.s32.totalorder %v2712, 0
    %v2714 = vsub.s32 0, %v2712
    %v2715 = vsel %vm2713, %v2714, %v2712
    %v2716 = vclz %v2715
    %v2717 = vsub.s32 %v2716, 2
    %vm2718 = vcmp.gt.s32.totalorder 0, %v2717
    %v2719 = vsel %vm2718, 0, %v2717
    %v2720 = vsub.s32 32, %v2719
    %v2721 = vshll.u32 %v2712, %v2719
    %v2722 = vshrl.u32 %v2704, %v2720
    %v2723 = vor.u32 %v2721, %v2722
    %v2724 = vsub.s32 4294967266, %v2719
    %v2725 = vadd.s32 %v2724, 127
    %v2726 = vshll.u32 %v2725, 23
    %v2727 = vor.u32 4788187, %v2726
    %v2728 = vand.u32 2147483647, %v2727
    %v2730 = vcvt.s32.f32 %v2723
    %v2731 = vmul.f32 %v2730, %v2728
    %v2732 = vxor.u32 %v2731, 2147483648
    %v2733 = vsel %vm2650, %v2732, %v2731
    %v2734 = vsub.s32 4, %v2710
    %v2735 = vsel %vm2650, %v2734, %v2710
    %v2736 = vsel %vm2649, %v449, %v2733
    %v2737 = vsel %vm2649, 0, %v2735
    %v2738 = vcosq.f32.pop %v2736
    %v2739 = vsinq.f32.pop %v2736
    %vm2740 = vweird.f32 %v449
    %v2741 = vadd.s32 %v2737, 3
    %v2742 = vand.u32 %v2741, 3
    %vm2743 = vcmp.lt.s32.totalorder %v2742, 2
    %vm2744 = vcmp.eq.s32.totalorder %v2742, 0
    %v2745 = vxor.u32 %v2739, 2147483648
    %v2746 = vsel %vm2744, %v2738, %v2745
    %vm2747 = vcmp.eq.s32.totalorder %v2742, 2
    %v2748 = vxor.u32 %v2738, 2147483648
    %v2749 = vsel %vm2747, %v2748, %v2739
    %v2750 = vsel %vm2743, %v2746, %v2749
    %v2751 = vsel %vm2740, nan, %v2750
    %v2752 = vand.u32 2147483647, %v454
    %vm2753 = vcmp.le.f32.partialorder %v2752, 0.7853982
    %vm2754 = vcmp.lt.s32.totalorder %v454, 0
    %v2755 = vand.u32 %v454, 2139095040
    %v2756 = vshrl.u32 %v2755, 23
    %v2757 = vsub.s32 %v2756, 127
    %v2758 = vand.u32 2147483647, %v454
    %v2759 = vand.u32 %v2758, 8388607
    %v2760 = vor.u32 %v2759, 8388608
    %v2761 = vsub.s32 0, %v2760
    %v2762 = vadd.s32 %v2757, 1
    %vm2763 = vcmp.gt.s32.totalorder %v2762, 0
    %v2764 = vsel %vm2763, %v2762, 0
    %v2765 = vshrl.u32 %v2764, 5
    %v2766 = vand.u32 %v2764, 31
    %v2767 = vsub.s32 32, %v2766
    %v2768 = vshrl.u32 683565275, %v2767
    %v2769 = vshll.u32 683565275, %v2766
    %v2770 = vshrl.u32 2475754826, %v2767
    %v2771 = vor.u32 %v2769, %v2770
    %v2772 = vshll.u32 2475754826, %v2766
    %v2773 = vshrl.u32 2131351028, %v2767
    %v2774 = vor.u32 %v2772, %v2773
    %v2775 = vshll.u32 2131351028, %v2766
    %v2776 = vshrl.u32 2102212464, %v2767
    %v2777 = vor.u32 %v2775, %v2776
    %v2778 = vshll.u32 2102212464, %v2766
    %v2779 = vshrl.u32 920167782, %v2767
    %v2780 = vor.u32 %v2778, %v2779
    %v2781 = vshll.u32 920167782, %v2766
    %v2782 = vshrl.u32 1326507024, %v2767
    %v2783 = vor.u32 %v2781, %v2782
    %vm2784 = vcmp.lt.s32.totalorder %v2765, 1
    %vm2785 = vcmp.lt.s32.totalorder %v2765, 2
    %vm2786 = vcmp.lt.s32.totalorder %v2765, 3
    %vm2787 = vcmp.lt.s32.totalorder %v2765, 4
    %v2788 = vsel %vm2784, %v2768, %v2771
    %v2789 = vsel %vm2787, %v2777, 2102212464
    %v2790 = vsel %vm2786, %v2774, %v2789
    %v2791 = vsel %vm2785, %v2788, %v2790
    %v2792 = vsel %vm2784, %v2771, %v2774
    %v2793 = vsel %vm2787, %v2780, 920167782
    %v2794 = vsel %vm2786, %v2777, %v2793
    %v2795 = vsel %vm2785, %v2792, %v2794
    %v2796 = vsel %vm2784, %v2774, %v2777
    %v2797 = vsel %vm2787, %v2783, 1326507024
    %v2798 = vsel %vm2786, %v2780, %v2797
    %v2799 = vsel %vm2785, %v2796, %v2798
    %v2800 = vshll.u32 %v2760, 8
    %v2801 = vmul.u32.u64.compose %v2800, %v2799
    %v2802 = vextract.low.u32 %v2801
    %v2803 = vextract.high.u32 %v2801
    %v2804 = vmul.u32.u64.compose %v2800, %v2795
    %v2805 = vextract.low.u32 %v2804
    %v2806 = vextract.high.u32 %v2804
    %v2807 = vmul.u32 %v2800, %v2791
    %v2808 = vadd.s32 %v2803, %v2805
    %vm2809 = vc.u32 %v2803, %v2805
    %v2810 = vadd.s32 %v2806, 1
    %v2811 = vsel %vm2809, %v2810, %v2806
    %v2812 = vadd.s32 %v2807, %v2811
    %v2813 = vadd.s32 %v2812, 536870912
    %v2814 = vshrl.u32 %v2813, 30
    %v2815 = vshll.u32 %v2814, 30
    %v2816 = vsub.s32 %v2812, %v2815
    %vm2817 = vcmp.lt.s32.totalorder %v2816, 0
    %v2818 = vsub.s32 0, %v2816
    %v2819 = vsel %vm2817, %v2818, %v2816
    %v2820 = vclz %v2819
    %v2821 = vsub.s32 %v2820, 2
    %vm2822 = vcmp.gt.s32.totalorder 0, %v2821
    %v2823 = vsel %vm2822, 0, %v2821
    %v2824 = vsub.s32 32, %v2823
    %v2825 = vshll.u32 %v2816, %v2823
    %v2826 = vshrl.u32 %v2808, %v2824
    %v2827 = vor.u32 %v2825, %v2826
    %v2828 = vsub.s32 4294967266, %v2823
    %v2829 = vadd.s32 %v2828, 127
    %v2830 = vshll.u32 %v2829, 23
    %v2831 = vor.u32 4788187, %v2830
    %v2832 = vand.u32 2147483647, %v2831
    %v2834 = vcvt.s32.f32 %v2827
    %v2835 = vmul.f32 %v2834, %v2832
    %v2836 = vxor.u32 %v2835, 2147483648
    %v2837 = vsel %vm2754, %v2836, %v2835
    %v2838 = vsub.s32 4, %v2814
    %v2839 = vsel %vm2754, %v2838, %v2814
    %v2840 = vsel %vm2753, %v454, %v2837
    %v2841 = vsel %vm2753, 0, %v2839
    %v2842 = vcosq.f32.pop %v2840
    %v2843 = vsinq.f32.pop %v2840
    %vm2844 = vweird.f32 %v454
    %v2845 = vadd.s32 %v2841, 3
    %v2846 = vand.u32 %v2845, 3
    %vm2847 = vcmp.lt.s32.totalorder %v2846, 2
    %vm2848 = vcmp.eq.s32.totalorder %v2846, 0
    %v2849 = vxor.u32 %v2843, 2147483648
    %v2850 = vsel %vm2848, %v2842, %v2849
    %vm2851 = vcmp.eq.s32.totalorder %v2846, 2
    %v2852 = vxor.u32 %v2842, 2147483648
    %v2853 = vsel %vm2851, %v2852, %v2843
    %v2854 = vsel %vm2847, %v2850, %v2853
    %v2855 = vsel %vm2844, nan, %v2854
    %v2856 = vand.u32 2147483647, %v459
    %vm2857 = vcmp.le.f32.partialorder %v2856, 0.7853982
    %vm2858 = vcmp.lt.s32.totalorder %v459, 0
    %v2859 = vand.u32 %v459, 2139095040
    %v2860 = vshrl.u32 %v2859, 23
    %v2861 = vsub.s32 %v2860, 127
    %v2862 = vand.u32 2147483647, %v459
    %v2863 = vand.u32 %v2862, 8388607
    %v2864 = vor.u32 %v2863, 8388608
    %v2865 = vsub.s32 0, %v2864
    %v2866 = vadd.s32 %v2861, 1
    %vm2867 = vcmp.gt.s32.totalorder %v2866, 0
    %v2868 = vsel %vm2867, %v2866, 0
    %v2869 = vshrl.u32 %v2868, 5
    %v2870 = vand.u32 %v2868, 31
    %v2871 = vsub.s32 32, %v2870
    %v2872 = vshrl.u32 683565275, %v2871
    %v2873 = vshll.u32 683565275, %v2870
    %v2874 = vshrl.u32 2475754826, %v2871
    %v2875 = vor.u32 %v2873, %v2874
    %v2876 = vshll.u32 2475754826, %v2870
    %v2877 = vshrl.u32 2131351028, %v2871
    %v2878 = vor.u32 %v2876, %v2877
    %v2879 = vshll.u32 2131351028, %v2870
    %v2880 = vshrl.u32 2102212464, %v2871
    %v2881 = vor.u32 %v2879, %v2880
    %v2882 = vshll.u32 2102212464, %v2870
    %v2883 = vshrl.u32 920167782, %v2871
    %v2884 = vor.u32 %v2882, %v2883
    %v2885 = vshll.u32 920167782, %v2870
    %v2886 = vshrl.u32 1326507024, %v2871
    %v2887 = vor.u32 %v2885, %v2886
    %vm2888 = vcmp.lt.s32.totalorder %v2869, 1
    %vm2889 = vcmp.lt.s32.totalorder %v2869, 2
    %vm2890 = vcmp.lt.s32.totalorder %v2869, 3
    %vm2891 = vcmp.lt.s32.totalorder %v2869, 4
    %v2892 = vsel %vm2888, %v2872, %v2875
    %v2893 = vsel %vm2891, %v2881, 2102212464
    %v2894 = vsel %vm2890, %v2878, %v2893
    %v2895 = vsel %vm2889, %v2892, %v2894
    %v2896 = vsel %vm2888, %v2875, %v2878
    %v2897 = vsel %vm2891, %v2884, 920167782
    %v2898 = vsel %vm2890, %v2881, %v2897
    %v2899 = vsel %vm2889, %v2896, %v2898
    %v2900 = vsel %vm2888, %v2878, %v2881
    %v2901 = vsel %vm2891, %v2887, 1326507024
    %v2902 = vsel %vm2890, %v2884, %v2901
    %v2903 = vsel %vm2889, %v2900, %v2902
    %v2904 = vshll.u32 %v2864, 8
    %v2905 = vmul.u32.u64.compose %v2904, %v2903
    %v2906 = vextract.low.u32 %v2905
    %v2907 = vextract.high.u32 %v2905
    %v2908 = vmul.u32.u64.compose %v2904, %v2899
    %v2909 = vextract.low.u32 %v2908
    %v2910 = vextract.high.u32 %v2908
    %v2911 = vmul.u32 %v2904, %v2895
    %v2912 = vadd.s32 %v2907, %v2909
    %vm2913 = vc.u32 %v2907, %v2909
    %v2914 = vadd.s32 %v2910, 1
    %v2915 = vsel %vm2913, %v2914, %v2910
    %v2916 = vadd.s32 %v2911, %v2915
    %v2917 = vadd.s32 %v2916, 536870912
    %v2918 = vshrl.u32 %v2917, 30
    %v2919 = vshll.u32 %v2918, 30
    %v2920 = vsub.s32 %v2916, %v2919
    %vm2921 = vcmp.lt.s32.totalorder %v2920, 0
    %v2922 = vsub.s32 0, %v2920
    %v2923 = vsel %vm2921, %v2922, %v2920
    %v2924 = vclz %v2923
    %v2925 = vsub.s32 %v2924, 2
    %vm2926 = vcmp.gt.s32.totalorder 0, %v2925
    %v2927 = vsel %vm2926, 0, %v2925
    %v2928 = vsub.s32 32, %v2927
    %v2929 = vshll.u32 %v2920, %v2927
    %v2930 = vshrl.u32 %v2912, %v2928
    %v2931 = vor.u32 %v2929, %v2930
    %v2932 = vsub.s32 4294967266, %v2927
    %v2933 = vadd.s32 %v2932, 127
    %v2934 = vshll.u32 %v2933, 23
    %v2935 = vor.u32 4788187, %v2934
    %v2936 = vand.u32 2147483647, %v2935
    %v2938 = vcvt.s32.f32 %v2931
    %v2939 = vmul.f32 %v2938, %v2936
    %v2940 = vxor.u32 %v2939, 2147483648
    %v2941 = vsel %vm2858, %v2940, %v2939
    %v2942 = vsub.s32 4, %v2918
    %v2943 = vsel %vm2858, %v2942, %v2918
    %v2944 = vsel %vm2857, %v459, %v2941
    %v2945 = vsel %vm2857, 0, %v2943
    %v2946 = vcosq.f32.pop %v2944
    %v2947 = vsinq.f32.pop %v2944
    %vm2948 = vweird.f32 %v459
    %v2949 = vadd.s32 %v2945, 3
    %v2950 = vand.u32 %v2949, 3
    %vm2951 = vcmp.lt.s32.totalorder %v2950, 2
    %vm2952 = vcmp.eq.s32.totalorder %v2950, 0
    %v2953 = vxor.u32 %v2947, 2147483648
    %v2954 = vsel %vm2952, %v2946, %v2953
    %vm2955 = vcmp.eq.s32.totalorder %v2950, 2
    %v2956 = vxor.u32 %v2946, 2147483648
    %v2957 = vsel %vm2955, %v2956, %v2947
    %v2958 = vsel %vm2951, %v2954, %v2957
    %v2959 = vsel %vm2948, nan, %v2958
    %v2960 = vand.u32 2147483647, %v464
    %vm2961 = vcmp.le.f32.partialorder %v2960, 0.7853982
    %vm2962 = vcmp.lt.s32.totalorder %v464, 0
    %v2963 = vand.u32 %v464, 2139095040
    %v2964 = vshrl.u32 %v2963, 23
    %v2965 = vsub.s32 %v2964, 127
    %v2966 = vand.u32 2147483647, %v464
    %v2967 = vand.u32 %v2966, 8388607
    %v2968 = vor.u32 %v2967, 8388608
    %v2969 = vsub.s32 0, %v2968
    %v2970 = vadd.s32 %v2965, 1
    %vm2971 = vcmp.gt.s32.totalorder %v2970, 0
    %v2972 = vsel %vm2971, %v2970, 0
    %v2973 = vshrl.u32 %v2972, 5
    %v2974 = vand.u32 %v2972, 31
    %v2975 = vsub.s32 32, %v2974
    %v2976 = vshrl.u32 683565275, %v2975
    %v2977 = vshll.u32 683565275, %v2974
    %v2978 = vshrl.u32 2475754826, %v2975
    %v2979 = vor.u32 %v2977, %v2978
    %v2980 = vshll.u32 2475754826, %v2974
    %v2981 = vshrl.u32 2131351028, %v2975
    %v2982 = vor.u32 %v2980, %v2981
    %v2983 = vshll.u32 2131351028, %v2974
    %v2984 = vshrl.u32 2102212464, %v2975
    %v2985 = vor.u32 %v2983, %v2984
    %v2986 = vshll.u32 2102212464, %v2974
    %v2987 = vshrl.u32 920167782, %v2975
    %v2988 = vor.u32 %v2986, %v2987
    %v2989 = vshll.u32 920167782, %v2974
    %v2990 = vshrl.u32 1326507024, %v2975
    %v2991 = vor.u32 %v2989, %v2990
    %vm2992 = vcmp.lt.s32.totalorder %v2973, 1
    %vm2993 = vcmp.lt.s32.totalorder %v2973, 2
    %vm2994 = vcmp.lt.s32.totalorder %v2973, 3
    %vm2995 = vcmp.lt.s32.totalorder %v2973, 4
    %v2996 = vsel %vm2992, %v2976, %v2979
    %v2997 = vsel %vm2995, %v2985, 2102212464
    %v2998 = vsel %vm2994, %v2982, %v2997
    %v2999 = vsel %vm2993, %v2996, %v2998
    %v3000 = vsel %vm2992, %v2979, %v2982
    %v3001 = vsel %vm2995, %v2988, 920167782
    %v3002 = vsel %vm2994, %v2985, %v3001
    %v3003 = vsel %vm2993, %v3000, %v3002
    %v3004 = vsel %vm2992, %v2982, %v2985
    %v3005 = vsel %vm2995, %v2991, 1326507024
    %v3006 = vsel %vm2994, %v2988, %v3005
    %v3007 = vsel %vm2993, %v3004, %v3006
    %v3008 = vshll.u32 %v2968, 8
    %v3009 = vmul.u32.u64.compose %v3008, %v3007
    %v3010 = vextract.low.u32 %v3009
    %v3011 = vextract.high.u32 %v3009
    %v3012 = vmul.u32.u64.compose %v3008, %v3003
    %v3013 = vextract.low.u32 %v3012
    %v3014 = vextract.high.u32 %v3012
    %v3015 = vmul.u32 %v3008, %v2999
    %v3016 = vadd.s32 %v3011, %v3013
    %vm3017 = vc.u32 %v3011, %v3013
    %v3018 = vadd.s32 %v3014, 1
    %v3019 = vsel %vm3017, %v3018, %v3014
    %v3020 = vadd.s32 %v3015, %v3019
    %v3021 = vadd.s32 %v3020, 536870912
    %v3022 = vshrl.u32 %v3021, 30
    %v3023 = vshll.u32 %v3022, 30
    %v3024 = vsub.s32 %v3020, %v3023
    %vm3025 = vcmp.lt.s32.totalorder %v3024, 0
    %v3026 = vsub.s32 0, %v3024
    %v3027 = vsel %vm3025, %v3026, %v3024
    %v3028 = vclz %v3027
    %v3029 = vsub.s32 %v3028, 2
    %vm3030 = vcmp.gt.s32.totalorder 0, %v3029
    %v3031 = vsel %vm3030, 0, %v3029
    %v3032 = vsub.s32 32, %v3031
    %v3033 = vshll.u32 %v3024, %v3031
    %v3034 = vshrl.u32 %v3016, %v3032
    %v3035 = vor.u32 %v3033, %v3034
    %v3036 = vsub.s32 4294967266, %v3031
    %v3037 = vadd.s32 %v3036, 127
    %v3038 = vshll.u32 %v3037, 23
    %v3039 = vor.u32 4788187, %v3038
    %v3040 = vand.u32 2147483647, %v3039
    %v3042 = vcvt.s32.f32 %v3035
    %v3043 = vmul.f32 %v3042, %v3040
    %v3044 = vxor.u32 %v3043, 2147483648
    %v3045 = vsel %vm2962, %v3044, %v3043
    %v3046 = vsub.s32 4, %v3022
    %v3047 = vsel %vm2962, %v3046, %v3022
    %v3048 = vsel %vm2961, %v464, %v3045
    %v3049 = vsel %vm2961, 0, %v3047
    %v3050 = vcosq.f32.pop %v3048
    %v3051 = vsinq.f32.pop %v3048
    %vm3052 = vweird.f32 %v464
    %v3053 = vadd.s32 %v3049, 3
    %v3054 = vand.u32 %v3053, 3
    %vm3055 = vcmp.lt.s32.totalorder %v3054, 2
    %vm3056 = vcmp.eq.s32.totalorder %v3054, 0
    %v3057 = vxor.u32 %v3051, 2147483648
    %v3058 = vsel %vm3056, %v3050, %v3057
    %vm3059 = vcmp.eq.s32.totalorder %v3054, 2
    %v3060 = vxor.u32 %v3050, 2147483648
    %v3061 = vsel %vm3059, %v3060, %v3051
    %v3062 = vsel %vm3055, %v3058, %v3061
    %v3063 = vsel %vm3052, nan, %v3062
    %v3064 = vand.u32 2147483647, %v469
    %vm3065 = vcmp.le.f32.partialorder %v3064, 0.7853982
    %vm3066 = vcmp.lt.s32.totalorder %v469, 0
    %v3067 = vand.u32 %v469, 2139095040
    %v3068 = vshrl.u32 %v3067, 23
    %v3069 = vsub.s32 %v3068, 127
    %v3070 = vand.u32 2147483647, %v469
    %v3071 = vand.u32 %v3070, 8388607
    %v3072 = vor.u32 %v3071, 8388608
    %v3073 = vsub.s32 0, %v3072
    %v3074 = vadd.s32 %v3069, 1
    %vm3075 = vcmp.gt.s32.totalorder %v3074, 0
    %v3076 = vsel %vm3075, %v3074, 0
    %v3077 = vshrl.u32 %v3076, 5
    %v3078 = vand.u32 %v3076, 31
    %v3079 = vsub.s32 32, %v3078
    %v3080 = vshrl.u32 683565275, %v3079
    %v3081 = vshll.u32 683565275, %v3078
    %v3082 = vshrl.u32 2475754826, %v3079
    %v3083 = vor.u32 %v3081, %v3082
    %v3084 = vshll.u32 2475754826, %v3078
    %v3085 = vshrl.u32 2131351028, %v3079
    %v3086 = vor.u32 %v3084, %v3085
    %v3087 = vshll.u32 2131351028, %v3078
    %v3088 = vshrl.u32 2102212464, %v3079
    %v3089 = vor.u32 %v3087, %v3088
    %v3090 = vshll.u32 2102212464, %v3078
    %v3091 = vshrl.u32 920167782, %v3079
    %v3092 = vor.u32 %v3090, %v3091
    %v3093 = vshll.u32 920167782, %v3078
    %v3094 = vshrl.u32 1326507024, %v3079
    %v3095 = vor.u32 %v3093, %v3094
    %vm3096 = vcmp.lt.s32.totalorder %v3077, 1
    %vm3097 = vcmp.lt.s32.totalorder %v3077, 2
    %vm3098 = vcmp.lt.s32.totalorder %v3077, 3
    %vm3099 = vcmp.lt.s32.totalorder %v3077, 4
    %v3100 = vsel %vm3096, %v3080, %v3083
    %v3101 = vsel %vm3099, %v3089, 2102212464
    %v3102 = vsel %vm3098, %v3086, %v3101
    %v3103 = vsel %vm3097, %v3100, %v3102
    %v3104 = vsel %vm3096, %v3083, %v3086
    %v3105 = vsel %vm3099, %v3092, 920167782
    %v3106 = vsel %vm3098, %v3089, %v3105
    %v3107 = vsel %vm3097, %v3104, %v3106
    %v3108 = vsel %vm3096, %v3086, %v3089
    %v3109 = vsel %vm3099, %v3095, 1326507024
    %v3110 = vsel %vm3098, %v3092, %v3109
    %v3111 = vsel %vm3097, %v3108, %v3110
    %v3112 = vshll.u32 %v3072, 8
    %v3113 = vmul.u32.u64.compose %v3112, %v3111
    %v3114 = vextract.low.u32 %v3113
    %v3115 = vextract.high.u32 %v3113
    %v3116 = vmul.u32.u64.compose %v3112, %v3107
    %v3117 = vextract.low.u32 %v3116
    %v3118 = vextract.high.u32 %v3116
    %v3119 = vmul.u32 %v3112, %v3103
    %v3120 = vadd.s32 %v3115, %v3117
    %vm3121 = vc.u32 %v3115, %v3117
    %v3122 = vadd.s32 %v3118, 1
    %v3123 = vsel %vm3121, %v3122, %v3118
    %v3124 = vadd.s32 %v3119, %v3123
    %v3125 = vadd.s32 %v3124, 536870912
    %v3126 = vshrl.u32 %v3125, 30
    %v3127 = vshll.u32 %v3126, 30
    %v3128 = vsub.s32 %v3124, %v3127
    %vm3129 = vcmp.lt.s32.totalorder %v3128, 0
    %v3130 = vsub.s32 0, %v3128
    %v3131 = vsel %vm3129, %v3130, %v3128
    %v3132 = vclz %v3131
    %v3133 = vsub.s32 %v3132, 2
    %vm3134 = vcmp.gt.s32.totalorder 0, %v3133
    %v3135 = vsel %vm3134, 0, %v3133
    %v3136 = vsub.s32 32, %v3135
    %v3137 = vshll.u32 %v3128, %v3135
    %v3138 = vshrl.u32 %v3120, %v3136
    %v3139 = vor.u32 %v3137, %v3138
    %v3140 = vsub.s32 4294967266, %v3135
    %v3141 = vadd.s32 %v3140, 127
    %v3142 = vshll.u32 %v3141, 23
    %v3143 = vor.u32 4788187, %v3142
    %v3144 = vand.u32 2147483647, %v3143
    %v3146 = vcvt.s32.f32 %v3139
    %v3147 = vmul.f32 %v3146, %v3144
    %v3148 = vxor.u32 %v3147, 2147483648
    %v3149 = vsel %vm3066, %v3148, %v3147
    %v3150 = vsub.s32 4, %v3126
    %v3151 = vsel %vm3066, %v3150, %v3126
    %v3152 = vsel %vm3065, %v469, %v3149
    %v3153 = vsel %vm3065, 0, %v3151
    %v3154 = vcosq.f32.pop %v3152
    %v3155 = vsinq.f32.pop %v3152
    %vm3156 = vweird.f32 %v469
    %v3157 = vadd.s32 %v3153, 3
    %v3158 = vand.u32 %v3157, 3
    %vm3159 = vcmp.lt.s32.totalorder %v3158, 2
    %vm3160 = vcmp.eq.s32.totalorder %v3158, 0
    %v3161 = vxor.u32 %v3155, 2147483648
    %v3162 = vsel %vm3160, %v3154, %v3161
    %vm3163 = vcmp.eq.s32.totalorder %v3158, 2
    %v3164 = vxor.u32 %v3154, 2147483648
    %v3165 = vsel %vm3163, %v3164, %v3155
    %v3166 = vsel %vm3159, %v3162, %v3165
    %v3167 = vsel %vm3156, nan, %v3166
    %v3168 = vand.u32 2147483647, %v474
    %vm3169 = vcmp.le.f32.partialorder %v3168, 0.7853982
    %vm3170 = vcmp.lt.s32.totalorder %v474, 0
    %v3171 = vand.u32 %v474, 2139095040
    %v3172 = vshrl.u32 %v3171, 23
    %v3173 = vsub.s32 %v3172, 127
    %v3174 = vand.u32 2147483647, %v474
    %v3175 = vand.u32 %v3174, 8388607
    %v3176 = vor.u32 %v3175, 8388608
    %v3177 = vsub.s32 0, %v3176
    %v3178 = vadd.s32 %v3173, 1
    %vm3179 = vcmp.gt.s32.totalorder %v3178, 0
    %v3180 = vsel %vm3179, %v3178, 0
    %v3181 = vshrl.u32 %v3180, 5
    %v3182 = vand.u32 %v3180, 31
    %v3183 = vsub.s32 32, %v3182
    %v3184 = vshrl.u32 683565275, %v3183
    %v3185 = vshll.u32 683565275, %v3182
    %v3186 = vshrl.u32 2475754826, %v3183
    %v3187 = vor.u32 %v3185, %v3186
    %v3188 = vshll.u32 2475754826, %v3182
    %v3189 = vshrl.u32 2131351028, %v3183
    %v3190 = vor.u32 %v3188, %v3189
    %v3191 = vshll.u32 2131351028, %v3182
    %v3192 = vshrl.u32 2102212464, %v3183
    %v3193 = vor.u32 %v3191, %v3192
    %v3194 = vshll.u32 2102212464, %v3182
    %v3195 = vshrl.u32 920167782, %v3183
    %v3196 = vor.u32 %v3194, %v3195
    %v3197 = vshll.u32 920167782, %v3182
    %v3198 = vshrl.u32 1326507024, %v3183
    %v3199 = vor.u32 %v3197, %v3198
    %vm3200 = vcmp.lt.s32.totalorder %v3181, 1
    %vm3201 = vcmp.lt.s32.totalorder %v3181, 2
    %vm3202 = vcmp.lt.s32.totalorder %v3181, 3
    %vm3203 = vcmp.lt.s32.totalorder %v3181, 4
    %v3204 = vsel %vm3200, %v3184, %v3187
    %v3205 = vsel %vm3203, %v3193, 2102212464
    %v3206 = vsel %vm3202, %v3190, %v3205
    %v3207 = vsel %vm3201, %v3204, %v3206
    %v3208 = vsel %vm3200, %v3187, %v3190
    %v3209 = vsel %vm3203, %v3196, 920167782
    %v3210 = vsel %vm3202, %v3193, %v3209
    %v3211 = vsel %vm3201, %v3208, %v3210
    %v3212 = vsel %vm3200, %v3190, %v3193
    %v3213 = vsel %vm3203, %v3199, 1326507024
    %v3214 = vsel %vm3202, %v3196, %v3213
    %v3215 = vsel %vm3201, %v3212, %v3214
    %v3216 = vshll.u32 %v3176, 8
    %v3217 = vmul.u32.u64.compose %v3216, %v3215
    %v3218 = vextract.low.u32 %v3217
    %v3219 = vextract.high.u32 %v3217
    %v3220 = vmul.u32.u64.compose %v3216, %v3211
    %v3221 = vextract.low.u32 %v3220
    %v3222 = vextract.high.u32 %v3220
    %v3223 = vmul.u32 %v3216, %v3207
    %v3224 = vadd.s32 %v3219, %v3221
    %vm3225 = vc.u32 %v3219, %v3221
    %v3226 = vadd.s32 %v3222, 1
    %v3227 = vsel %vm3225, %v3226, %v3222
    %v3228 = vadd.s32 %v3223, %v3227
    %v3229 = vadd.s32 %v3228, 536870912
    %v3230 = vshrl.u32 %v3229, 30
    %v3231 = vshll.u32 %v3230, 30
    %v3232 = vsub.s32 %v3228, %v3231
    %vm3233 = vcmp.lt.s32.totalorder %v3232, 0
    %v3234 = vsub.s32 0, %v3232
    %v3235 = vsel %vm3233, %v3234, %v3232
    %v3236 = vclz %v3235
    %v3237 = vsub.s32 %v3236, 2
    %vm3238 = vcmp.gt.s32.totalorder 0, %v3237
    %v3239 = vsel %vm3238, 0, %v3237
    %v3240 = vsub.s32 32, %v3239
    %v3241 = vshll.u32 %v3232, %v3239
    %v3242 = vshrl.u32 %v3224, %v3240
    %v3243 = vor.u32 %v3241, %v3242
    %v3244 = vsub.s32 4294967266, %v3239
    %v3245 = vadd.s32 %v3244, 127
    %v3246 = vshll.u32 %v3245, 23
    %v3247 = vor.u32 4788187, %v3246
    %v3248 = vand.u32 2147483647, %v3247
    %v3250 = vcvt.s32.f32 %v3243
    %v3251 = vmul.f32 %v3250, %v3248
    %v3252 = vxor.u32 %v3251, 2147483648
    %v3253 = vsel %vm3170, %v3252, %v3251
    %v3254 = vsub.s32 4, %v3230
    %v3255 = vsel %vm3170, %v3254, %v3230
    %v3256 = vsel %vm3169, %v474, %v3253
    %v3257 = vsel %vm3169, 0, %v3255
    %v3258 = vcosq.f32.pop %v3256
    %v3259 = vsinq.f32.pop %v3256
    %vm3260 = vweird.f32 %v474
    %v3261 = vadd.s32 %v3257, 3
    %v3262 = vand.u32 %v3261, 3
    %vm3263 = vcmp.lt.s32.totalorder %v3262, 2
    %vm3264 = vcmp.eq.s32.totalorder %v3262, 0
    %v3265 = vxor.u32 %v3259, 2147483648
    %v3266 = vsel %vm3264, %v3258, %v3265
    %vm3267 = vcmp.eq.s32.totalorder %v3262, 2
    %v3268 = vxor.u32 %v3258, 2147483648
    %v3269 = vsel %vm3267, %v3268, %v3259
    %v3270 = vsel %vm3263, %v3266, %v3269
    %v3271 = vsel %vm3260, nan, %v3270
    %v3272 = vand.u32 2147483647, %v479
    %vm3273 = vcmp.le.f32.partialorder %v3272, 0.7853982
    %vm3274 = vcmp.lt.s32.totalorder %v479, 0
    %v3275 = vand.u32 %v479, 2139095040
    %v3276 = vshrl.u32 %v3275, 23
    %v3277 = vsub.s32 %v3276, 127
    %v3278 = vand.u32 2147483647, %v479
    %v3279 = vand.u32 %v3278, 8388607
    %v3280 = vor.u32 %v3279, 8388608
    %v3281 = vsub.s32 0, %v3280
    %v3282 = vadd.s32 %v3277, 1
    %vm3283 = vcmp.gt.s32.totalorder %v3282, 0
    %v3284 = vsel %vm3283, %v3282, 0
    %v3285 = vshrl.u32 %v3284, 5
    %v3286 = vand.u32 %v3284, 31
    %v3287 = vsub.s32 32, %v3286
    %v3288 = vshrl.u32 683565275, %v3287
    %v3289 = vshll.u32 683565275, %v3286
    %v3290 = vshrl.u32 2475754826, %v3287
    %v3291 = vor.u32 %v3289, %v3290
    %v3292 = vshll.u32 2475754826, %v3286
    %v3293 = vshrl.u32 2131351028, %v3287
    %v3294 = vor.u32 %v3292, %v3293
    %v3295 = vshll.u32 2131351028, %v3286
    %v3296 = vshrl.u32 2102212464, %v3287
    %v3297 = vor.u32 %v3295, %v3296
    %v3298 = vshll.u32 2102212464, %v3286
    %v3299 = vshrl.u32 920167782, %v3287
    %v3300 = vor.u32 %v3298, %v3299
    %v3301 = vshll.u32 920167782, %v3286
    %v3302 = vshrl.u32 1326507024, %v3287
    %v3303 = vor.u32 %v3301, %v3302
    %vm3304 = vcmp.lt.s32.totalorder %v3285, 1
    %vm3305 = vcmp.lt.s32.totalorder %v3285, 2
    %vm3306 = vcmp.lt.s32.totalorder %v3285, 3
    %vm3307 = vcmp.lt.s32.totalorder %v3285, 4
    %v3308 = vsel %vm3304, %v3288, %v3291
    %v3309 = vsel %vm3307, %v3297, 2102212464
    %v3310 = vsel %vm3306, %v3294, %v3309
    %v3311 = vsel %vm3305, %v3308, %v3310
    %v3312 = vsel %vm3304, %v3291, %v3294
    %v3313 = vsel %vm3307, %v3300, 920167782
    %v3314 = vsel %vm3306, %v3297, %v3313
    %v3315 = vsel %vm3305, %v3312, %v3314
    %v3316 = vsel %vm3304, %v3294, %v3297
    %v3317 = vsel %vm3307, %v3303, 1326507024
    %v3318 = vsel %vm3306, %v3300, %v3317
    %v3319 = vsel %vm3305, %v3316, %v3318
    %v3320 = vshll.u32 %v3280, 8
    %v3321 = vmul.u32.u64.compose %v3320, %v3319
    %v3322 = vextract.low.u32 %v3321
    %v3323 = vextract.high.u32 %v3321
    %v3324 = vmul.u32.u64.compose %v3320, %v3315
    %v3325 = vextract.low.u32 %v3324
    %v3326 = vextract.high.u32 %v3324
    %v3327 = vmul.u32 %v3320, %v3311
    %v3328 = vadd.s32 %v3323, %v3325
    %vm3329 = vc.u32 %v3323, %v3325
    %v3330 = vadd.s32 %v3326, 1
    %v3331 = vsel %vm3329, %v3330, %v3326
    %v3332 = vadd.s32 %v3327, %v3331
    %v3333 = vadd.s32 %v3332, 536870912
    %v3334 = vshrl.u32 %v3333, 30
    %v3335 = vshll.u32 %v3334, 30
    %v3336 = vsub.s32 %v3332, %v3335
    %vm3337 = vcmp.lt.s32.totalorder %v3336, 0
    %v3338 = vsub.s32 0, %v3336
    %v3339 = vsel %vm3337, %v3338, %v3336
    %v3340 = vclz %v3339
    %v3341 = vsub.s32 %v3340, 2
    %vm3342 = vcmp.gt.s32.totalorder 0, %v3341
    %v3343 = vsel %vm3342, 0, %v3341
    %v3344 = vsub.s32 32, %v3343
    %v3345 = vshll.u32 %v3336, %v3343
    %v3346 = vshrl.u32 %v3328, %v3344
    %v3347 = vor.u32 %v3345, %v3346
    %v3348 = vsub.s32 4294967266, %v3343
    %v3349 = vadd.s32 %v3348, 127
    %v3350 = vshll.u32 %v3349, 23
    %v3351 = vor.u32 4788187, %v3350
    %v3352 = vand.u32 2147483647, %v3351
    %v3354 = vcvt.s32.f32 %v3347
    %v3355 = vmul.f32 %v3354, %v3352
    %v3356 = vxor.u32 %v3355, 2147483648
    %v3357 = vsel %vm3274, %v3356, %v3355
    %v3358 = vsub.s32 4, %v3334
    %v3359 = vsel %vm3274, %v3358, %v3334
    %v3360 = vsel %vm3273, %v479, %v3357
    %v3361 = vsel %vm3273, 0, %v3359
    %v3362 = vcosq.f32.pop %v3360
    %v3363 = vsinq.f32.pop %v3360
    %vm3364 = vweird.f32 %v479
    %v3365 = vadd.s32 %v3361, 3
    %v3366 = vand.u32 %v3365, 3
    %vm3367 = vcmp.lt.s32.totalorder %v3366, 2
    %vm3368 = vcmp.eq.s32.totalorder %v3366, 0
    %v3369 = vxor.u32 %v3363, 2147483648
    %v3370 = vsel %vm3368, %v3362, %v3369
    %vm3371 = vcmp.eq.s32.totalorder %v3366, 2
    %v3372 = vxor.u32 %v3362, 2147483648
    %v3373 = vsel %vm3371, %v3372, %v3363
    %v3374 = vsel %vm3367, %v3370, %v3373
    %v3375 = vsel %vm3364, nan, %v3374
    %v3376 = vand.u32 2147483647, %v484
    %vm3377 = vcmp.le.f32.partialorder %v3376, 0.7853982
    %vm3378 = vcmp.lt.s32.totalorder %v484, 0
    %v3379 = vand.u32 %v484, 2139095040
    %v3380 = vshrl.u32 %v3379, 23
    %v3381 = vsub.s32 %v3380, 127
    %v3382 = vand.u32 2147483647, %v484
    %v3383 = vand.u32 %v3382, 8388607
    %v3384 = vor.u32 %v3383, 8388608
    %v3385 = vsub.s32 0, %v3384
    %v3386 = vadd.s32 %v3381, 1
    %vm3387 = vcmp.gt.s32.totalorder %v3386, 0
    %v3388 = vsel %vm3387, %v3386, 0
    %v3389 = vshrl.u32 %v3388, 5
    %v3390 = vand.u32 %v3388, 31
    %v3391 = vsub.s32 32, %v3390
    %v3392 = vshrl.u32 683565275, %v3391
    %v3393 = vshll.u32 683565275, %v3390
    %v3394 = vshrl.u32 2475754826, %v3391
    %v3395 = vor.u32 %v3393, %v3394
    %v3396 = vshll.u32 2475754826, %v3390
    %v3397 = vshrl.u32 2131351028, %v3391
    %v3398 = vor.u32 %v3396, %v3397
    %v3399 = vshll.u32 2131351028, %v3390
    %v3400 = vshrl.u32 2102212464, %v3391
    %v3401 = vor.u32 %v3399, %v3400
    %v3402 = vshll.u32 2102212464, %v3390
    %v3403 = vshrl.u32 920167782, %v3391
    %v3404 = vor.u32 %v3402, %v3403
    %v3405 = vshll.u32 920167782, %v3390
    %v3406 = vshrl.u32 1326507024, %v3391
    %v3407 = vor.u32 %v3405, %v3406
    %vm3408 = vcmp.lt.s32.totalorder %v3389, 1
    %vm3409 = vcmp.lt.s32.totalorder %v3389, 2
    %vm3410 = vcmp.lt.s32.totalorder %v3389, 3
    %vm3411 = vcmp.lt.s32.totalorder %v3389, 4
    %v3412 = vsel %vm3408, %v3392, %v3395
    %v3413 = vsel %vm3411, %v3401, 2102212464
    %v3414 = vsel %vm3410, %v3398, %v3413
    %v3415 = vsel %vm3409, %v3412, %v3414
    %v3416 = vsel %vm3408, %v3395, %v3398
    %v3417 = vsel %vm3411, %v3404, 920167782
    %v3418 = vsel %vm3410, %v3401, %v3417
    %v3419 = vsel %vm3409, %v3416, %v3418
    %v3420 = vsel %vm3408, %v3398, %v3401
    %v3421 = vsel %vm3411, %v3407, 1326507024
    %v3422 = vsel %vm3410, %v3404, %v3421
    %v3423 = vsel %vm3409, %v3420, %v3422
    %v3424 = vshll.u32 %v3384, 8
    %v3425 = vmul.u32.u64.compose %v3424, %v3423
    %v3426 = vextract.low.u32 %v3425
    %v3427 = vextract.high.u32 %v3425
    %v3428 = vmul.u32.u64.compose %v3424, %v3419
    %v3429 = vextract.low.u32 %v3428
    %v3430 = vextract.high.u32 %v3428
    %v3431 = vmul.u32 %v3424, %v3415
    %v3432 = vadd.s32 %v3427, %v3429
    %vm3433 = vc.u32 %v3427, %v3429
    %v3434 = vadd.s32 %v3430, 1
    %v3435 = vsel %vm3433, %v3434, %v3430
    %v3436 = vadd.s32 %v3431, %v3435
    %v3437 = vadd.s32 %v3436, 536870912
    %v3438 = vshrl.u32 %v3437, 30
    %v3439 = vshll.u32 %v3438, 30
    %v3440 = vsub.s32 %v3436, %v3439
    %vm3441 = vcmp.lt.s32.totalorder %v3440, 0
    %v3442 = vsub.s32 0, %v3440
    %v3443 = vsel %vm3441, %v3442, %v3440
    %v3444 = vclz %v3443
    %v3445 = vsub.s32 %v3444, 2
    %vm3446 = vcmp.gt.s32.totalorder 0, %v3445
    %v3447 = vsel %vm3446, 0, %v3445
    %v3448 = vsub.s32 32, %v3447
    %v3449 = vshll.u32 %v3440, %v3447
    %v3450 = vshrl.u32 %v3432, %v3448
    %v3451 = vor.u32 %v3449, %v3450
    %v3452 = vsub.s32 4294967266, %v3447
    %v3453 = vadd.s32 %v3452, 127
    %v3454 = vshll.u32 %v3453, 23
    %v3455 = vor.u32 4788187, %v3454
    %v3456 = vand.u32 2147483647, %v3455
    %v3458 = vcvt.s32.f32 %v3451
    %v3459 = vmul.f32 %v3458, %v3456
    %v3460 = vxor.u32 %v3459, 2147483648
    %v3461 = vsel %vm3378, %v3460, %v3459
    %v3462 = vsub.s32 4, %v3438
    %v3463 = vsel %vm3378, %v3462, %v3438
    %v3464 = vsel %vm3377, %v484, %v3461
    %v3465 = vsel %vm3377, 0, %v3463
    %v3466 = vcosq.f32.pop %v3464
    %v3467 = vsinq.f32.pop %v3464
    %vm3468 = vweird.f32 %v484
    %v3469 = vadd.s32 %v3465, 3
    %v3470 = vand.u32 %v3469, 3
    %vm3471 = vcmp.lt.s32.totalorder %v3470, 2
    %vm3472 = vcmp.eq.s32.totalorder %v3470, 0
    %v3473 = vxor.u32 %v3467, 2147483648
    %v3474 = vsel %vm3472, %v3466, %v3473
    %vm3475 = vcmp.eq.s32.totalorder %v3470, 2
    %v3476 = vxor.u32 %v3466, 2147483648
    %v3477 = vsel %vm3475, %v3476, %v3467
    %v3478 = vsel %vm3471, %v3474, %v3477
    %v3479 = vsel %vm3468, nan, %v3478
    %v3480 = vand.u32 2147483647, %v489
    %vm3481 = vcmp.le.f32.partialorder %v3480, 0.7853982
    %vm3482 = vcmp.lt.s32.totalorder %v489, 0
    %v3483 = vand.u32 %v489, 2139095040
    %v3484 = vshrl.u32 %v3483, 23
    %v3485 = vsub.s32 %v3484, 127
    %v3486 = vand.u32 2147483647, %v489
    %v3487 = vand.u32 %v3486, 8388607
    %v3488 = vor.u32 %v3487, 8388608
    %v3489 = vsub.s32 0, %v3488
    %v3490 = vadd.s32 %v3485, 1
    %vm3491 = vcmp.gt.s32.totalorder %v3490, 0
    %v3492 = vsel %vm3491, %v3490, 0
    %v3493 = vshrl.u32 %v3492, 5
    %v3494 = vand.u32 %v3492, 31
    %v3495 = vsub.s32 32, %v3494
    %v3496 = vshrl.u32 683565275, %v3495
    %v3497 = vshll.u32 683565275, %v3494
    %v3498 = vshrl.u32 2475754826, %v3495
    %v3499 = vor.u32 %v3497, %v3498
    %v3500 = vshll.u32 2475754826, %v3494
    %v3501 = vshrl.u32 2131351028, %v3495
    %v3502 = vor.u32 %v3500, %v3501
    %v3503 = vshll.u32 2131351028, %v3494
    %v3504 = vshrl.u32 2102212464, %v3495
    %v3505 = vor.u32 %v3503, %v3504
    %v3506 = vshll.u32 2102212464, %v3494
    %v3507 = vshrl.u32 920167782, %v3495
    %v3508 = vor.u32 %v3506, %v3507
    %v3509 = vshll.u32 920167782, %v3494
    %v3510 = vshrl.u32 1326507024, %v3495
    %v3511 = vor.u32 %v3509, %v3510
    %vm3512 = vcmp.lt.s32.totalorder %v3493, 1
    %vm3513 = vcmp.lt.s32.totalorder %v3493, 2
    %vm3514 = vcmp.lt.s32.totalorder %v3493, 3
    %vm3515 = vcmp.lt.s32.totalorder %v3493, 4
    %v3516 = vsel %vm3512, %v3496, %v3499
    %v3517 = vsel %vm3515, %v3505, 2102212464
    %v3518 = vsel %vm3514, %v3502, %v3517
    %v3519 = vsel %vm3513, %v3516, %v3518
    %v3520 = vsel %vm3512, %v3499, %v3502
    %v3521 = vsel %vm3515, %v3508, 920167782
    %v3522 = vsel %vm3514, %v3505, %v3521
    %v3523 = vsel %vm3513, %v3520, %v3522
    %v3524 = vsel %vm3512, %v3502, %v3505
    %v3525 = vsel %vm3515, %v3511, 1326507024
    %v3526 = vsel %vm3514, %v3508, %v3525
    %v3527 = vsel %vm3513, %v3524, %v3526
    %v3528 = vshll.u32 %v3488, 8
    %v3529 = vmul.u32.u64.compose %v3528, %v3527
    %v3530 = vextract.low.u32 %v3529
    %v3531 = vextract.high.u32 %v3529
    %v3532 = vmul.u32.u64.compose %v3528, %v3523
    %v3533 = vextract.low.u32 %v3532
    %v3534 = vextract.high.u32 %v3532
    %v3535 = vmul.u32 %v3528, %v3519
    %v3536 = vadd.s32 %v3531, %v3533
    %vm3537 = vc.u32 %v3531, %v3533
    %v3538 = vadd.s32 %v3534, 1
    %v3539 = vsel %vm3537, %v3538, %v3534
    %v3540 = vadd.s32 %v3535, %v3539
    %v3541 = vadd.s32 %v3540, 536870912
    %v3542 = vshrl.u32 %v3541, 30
    %v3543 = vshll.u32 %v3542, 30
    %v3544 = vsub.s32 %v3540, %v3543
    %vm3545 = vcmp.lt.s32.totalorder %v3544, 0
    %v3546 = vsub.s32 0, %v3544
    %v3547 = vsel %vm3545, %v3546, %v3544
    %v3548 = vclz %v3547
    %v3549 = vsub.s32 %v3548, 2
    %vm3550 = vcmp.gt.s32.totalorder 0, %v3549
    %v3551 = vsel %vm3550, 0, %v3549
    %v3552 = vsub.s32 32, %v3551
    %v3553 = vshll.u32 %v3544, %v3551
    %v3554 = vshrl.u32 %v3536, %v3552
    %v3555 = vor.u32 %v3553, %v3554
    %v3556 = vsub.s32 4294967266, %v3551
    %v3557 = vadd.s32 %v3556, 127
    %v3558 = vshll.u32 %v3557, 23
    %v3559 = vor.u32 4788187, %v3558
    %v3560 = vand.u32 2147483647, %v3559
    %v3562 = vcvt.s32.f32 %v3555
    %v3563 = vmul.f32 %v3562, %v3560
    %v3564 = vxor.u32 %v3563, 2147483648
    %v3565 = vsel %vm3482, %v3564, %v3563
    %v3566 = vsub.s32 4, %v3542
    %v3567 = vsel %vm3482, %v3566, %v3542
    %v3568 = vsel %vm3481, %v489, %v3565
    %v3569 = vsel %vm3481, 0, %v3567
    %v3570 = vcosq.f32.pop %v3568
    %v3571 = vsinq.f32.pop %v3568
    %vm3572 = vweird.f32 %v489
    %v3573 = vadd.s32 %v3569, 3
    %v3574 = vand.u32 %v3573, 3
    %vm3575 = vcmp.lt.s32.totalorder %v3574, 2
    %vm3576 = vcmp.eq.s32.totalorder %v3574, 0
    %v3577 = vxor.u32 %v3571, 2147483648
    %v3578 = vsel %vm3576, %v3570, %v3577
    %vm3579 = vcmp.eq.s32.totalorder %v3574, 2
    %v3580 = vxor.u32 %v3570, 2147483648
    %v3581 = vsel %vm3579, %v3580, %v3571
    %v3582 = vsel %vm3575, %v3578, %v3581
    %v3583 = vsel %vm3572, nan, %v3582
    %v3584 = vand.u32 2147483647, %v494
    %vm3585 = vcmp.le.f32.partialorder %v3584, 0.7853982
    %vm3586 = vcmp.lt.s32.totalorder %v494, 0
    %v3587 = vand.u32 %v494, 2139095040
    %v3588 = vshrl.u32 %v3587, 23
    %v3589 = vsub.s32 %v3588, 127
    %v3590 = vand.u32 2147483647, %v494
    %v3591 = vand.u32 %v3590, 8388607
    %v3592 = vor.u32 %v3591, 8388608
    %v3593 = vsub.s32 0, %v3592
    %v3594 = vadd.s32 %v3589, 1
    %vm3595 = vcmp.gt.s32.totalorder %v3594, 0
    %v3596 = vsel %vm3595, %v3594, 0
    %v3597 = vshrl.u32 %v3596, 5
    %v3598 = vand.u32 %v3596, 31
    %v3599 = vsub.s32 32, %v3598
    %v3600 = vshrl.u32 683565275, %v3599
    %v3601 = vshll.u32 683565275, %v3598
    %v3602 = vshrl.u32 2475754826, %v3599
    %v3603 = vor.u32 %v3601, %v3602
    %v3604 = vshll.u32 2475754826, %v3598
    %v3605 = vshrl.u32 2131351028, %v3599
    %v3606 = vor.u32 %v3604, %v3605
    %v3607 = vshll.u32 2131351028, %v3598
    %v3608 = vshrl.u32 2102212464, %v3599
    %v3609 = vor.u32 %v3607, %v3608
    %v3610 = vshll.u32 2102212464, %v3598
    %v3611 = vshrl.u32 920167782, %v3599
    %v3612 = vor.u32 %v3610, %v3611
    %v3613 = vshll.u32 920167782, %v3598
    %v3614 = vshrl.u32 1326507024, %v3599
    %v3615 = vor.u32 %v3613, %v3614
    %vm3616 = vcmp.lt.s32.totalorder %v3597, 1
    %vm3617 = vcmp.lt.s32.totalorder %v3597, 2
    %vm3618 = vcmp.lt.s32.totalorder %v3597, 3
    %vm3619 = vcmp.lt.s32.totalorder %v3597, 4
    %v3620 = vsel %vm3616, %v3600, %v3603
    %v3621 = vsel %vm3619, %v3609, 2102212464
    %v3622 = vsel %vm3618, %v3606, %v3621
    %v3623 = vsel %vm3617, %v3620, %v3622
    %v3624 = vsel %vm3616, %v3603, %v3606
    %v3625 = vsel %vm3619, %v3612, 920167782
    %v3626 = vsel %vm3618, %v3609, %v3625
    %v3627 = vsel %vm3617, %v3624, %v3626
    %v3628 = vsel %vm3616, %v3606, %v3609
    %v3629 = vsel %vm3619, %v3615, 1326507024
    %v3630 = vsel %vm3618, %v3612, %v3629
    %v3631 = vsel %vm3617, %v3628, %v3630
    %v3632 = vshll.u32 %v3592, 8
    %v3633 = vmul.u32.u64.compose %v3632, %v3631
    %v3634 = vextract.low.u32 %v3633
    %v3635 = vextract.high.u32 %v3633
    %v3636 = vmul.u32.u64.compose %v3632, %v3627
    %v3637 = vextract.low.u32 %v3636
    %v3638 = vextract.high.u32 %v3636
    %v3639 = vmul.u32 %v3632, %v3623
    %v3640 = vadd.s32 %v3635, %v3637
    %vm3641 = vc.u32 %v3635, %v3637
    %v3642 = vadd.s32 %v3638, 1
    %v3643 = vsel %vm3641, %v3642, %v3638
    %v3644 = vadd.s32 %v3639, %v3643
    %v3645 = vadd.s32 %v3644, 536870912
    %v3646 = vshrl.u32 %v3645, 30
    %v3647 = vshll.u32 %v3646, 30
    %v3648 = vsub.s32 %v3644, %v3647
    %vm3649 = vcmp.lt.s32.totalorder %v3648, 0
    %v3650 = vsub.s32 0, %v3648
    %v3651 = vsel %vm3649, %v3650, %v3648
    %v3652 = vclz %v3651
    %v3653 = vsub.s32 %v3652, 2
    %vm3654 = vcmp.gt.s32.totalorder 0, %v3653
    %v3655 = vsel %vm3654, 0, %v3653
    %v3656 = vsub.s32 32, %v3655
    %v3657 = vshll.u32 %v3648, %v3655
    %v3658 = vshrl.u32 %v3640, %v3656
    %v3659 = vor.u32 %v3657, %v3658
    %v3660 = vsub.s32 4294967266, %v3655
    %v3661 = vadd.s32 %v3660, 127
    %v3662 = vshll.u32 %v3661, 23
    %v3663 = vor.u32 4788187, %v3662
    %v3664 = vand.u32 2147483647, %v3663
    %v3666 = vcvt.s32.f32 %v3659
    %v3667 = vmul.f32 %v3666, %v3664
    %v3668 = vxor.u32 %v3667, 2147483648
    %v3669 = vsel %vm3586, %v3668, %v3667
    %v3670 = vsub.s32 4, %v3646
    %v3671 = vsel %vm3586, %v3670, %v3646
    %v3672 = vsel %vm3585, %v494, %v3669
    %v3673 = vsel %vm3585, 0, %v3671
    %v3674 = vcosq.f32.pop %v3672
    %v3675 = vsinq.f32.pop %v3672
    %vm3676 = vweird.f32 %v494
    %v3677 = vadd.s32 %v3673, 3
    %v3678 = vand.u32 %v3677, 3
    %vm3679 = vcmp.lt.s32.totalorder %v3678, 2
    %vm3680 = vcmp.eq.s32.totalorder %v3678, 0
    %v3681 = vxor.u32 %v3675, 2147483648
    %v3682 = vsel %vm3680, %v3674, %v3681
    %vm3683 = vcmp.eq.s32.totalorder %v3678, 2
    %v3684 = vxor.u32 %v3674, 2147483648
    %v3685 = vsel %vm3683, %v3684, %v3675
    %v3686 = vsel %vm3679, %v3682, %v3685
    %v3687 = vsel %vm3676, nan, %v3686
    %v3688 = vand.u32 2147483647, %v499
    %vm3689 = vcmp.le.f32.partialorder %v3688, 0.7853982
    %vm3690 = vcmp.lt.s32.totalorder %v499, 0
    %v3691 = vand.u32 %v499, 2139095040
    %v3692 = vshrl.u32 %v3691, 23
    %v3693 = vsub.s32 %v3692, 127
    %v3694 = vand.u32 2147483647, %v499
    %v3695 = vand.u32 %v3694, 8388607
    %v3696 = vor.u32 %v3695, 8388608
    %v3697 = vsub.s32 0, %v3696
    %v3698 = vadd.s32 %v3693, 1
    %vm3699 = vcmp.gt.s32.totalorder %v3698, 0
    %v3700 = vsel %vm3699, %v3698, 0
    %v3701 = vshrl.u32 %v3700, 5
    %v3702 = vand.u32 %v3700, 31
    %v3703 = vsub.s32 32, %v3702
    %v3704 = vshrl.u32 683565275, %v3703
    %v3705 = vshll.u32 683565275, %v3702
    %v3706 = vshrl.u32 2475754826, %v3703
    %v3707 = vor.u32 %v3705, %v3706
    %v3708 = vshll.u32 2475754826, %v3702
    %v3709 = vshrl.u32 2131351028, %v3703
    %v3710 = vor.u32 %v3708, %v3709
    %v3711 = vshll.u32 2131351028, %v3702
    %v3712 = vshrl.u32 2102212464, %v3703
    %v3713 = vor.u32 %v3711, %v3712
    %v3714 = vshll.u32 2102212464, %v3702
    %v3715 = vshrl.u32 920167782, %v3703
    %v3716 = vor.u32 %v3714, %v3715
    %v3717 = vshll.u32 920167782, %v3702
    %v3718 = vshrl.u32 1326507024, %v3703
    %v3719 = vor.u32 %v3717, %v3718
    %vm3720 = vcmp.lt.s32.totalorder %v3701, 1
    %vm3721 = vcmp.lt.s32.totalorder %v3701, 2
    %vm3722 = vcmp.lt.s32.totalorder %v3701, 3
    %vm3723 = vcmp.lt.s32.totalorder %v3701, 4
    %v3724 = vsel %vm3720, %v3704, %v3707
    %v3725 = vsel %vm3723, %v3713, 2102212464
    %v3726 = vsel %vm3722, %v3710, %v3725
    %v3727 = vsel %vm3721, %v3724, %v3726
    %v3728 = vsel %vm3720, %v3707, %v3710
    %v3729 = vsel %vm3723, %v3716, 920167782
    %v3730 = vsel %vm3722, %v3713, %v3729
    %v3731 = vsel %vm3721, %v3728, %v3730
    %v3732 = vsel %vm3720, %v3710, %v3713
    %v3733 = vsel %vm3723, %v3719, 1326507024
    %v3734 = vsel %vm3722, %v3716, %v3733
    %v3735 = vsel %vm3721, %v3732, %v3734
    %v3736 = vshll.u32 %v3696, 8
    %v3737 = vmul.u32.u64.compose %v3736, %v3735
    %v3738 = vextract.low.u32 %v3737
    %v3739 = vextract.high.u32 %v3737
    %v3740 = vmul.u32.u64.compose %v3736, %v3731
    %v3741 = vextract.low.u32 %v3740
    %v3742 = vextract.high.u32 %v3740
    %v3743 = vmul.u32 %v3736, %v3727
    %v3744 = vadd.s32 %v3739, %v3741
    %vm3745 = vc.u32 %v3739, %v3741
    %v3746 = vadd.s32 %v3742, 1
    %v3747 = vsel %vm3745, %v3746, %v3742
    %v3748 = vadd.s32 %v3743, %v3747
    %v3749 = vadd.s32 %v3748, 536870912
    %v3750 = vshrl.u32 %v3749, 30
    %v3751 = vshll.u32 %v3750, 30
    %v3752 = vsub.s32 %v3748, %v3751
    %vm3753 = vcmp.lt.s32.totalorder %v3752, 0
    %v3754 = vsub.s32 0, %v3752
    %v3755 = vsel %vm3753, %v3754, %v3752
    %v3756 = vclz %v3755
    %v3757 = vsub.s32 %v3756, 2
    %vm3758 = vcmp.gt.s32.totalorder 0, %v3757
    %v3759 = vsel %vm3758, 0, %v3757
    %v3760 = vsub.s32 32, %v3759
    %v3761 = vshll.u32 %v3752, %v3759
    %v3762 = vshrl.u32 %v3744, %v3760
    %v3763 = vor.u32 %v3761, %v3762
    %v3764 = vsub.s32 4294967266, %v3759
    %v3765 = vadd.s32 %v3764, 127
    %v3766 = vshll.u32 %v3765, 23
    %v3767 = vor.u32 4788187, %v3766
    %v3768 = vand.u32 2147483647, %v3767
    %v3770 = vcvt.s32.f32 %v3763
    %v3771 = vmul.f32 %v3770, %v3768
    %v3772 = vxor.u32 %v3771, 2147483648
    %v3773 = vsel %vm3690, %v3772, %v3771
    %v3774 = vsub.s32 4, %v3750
    %v3775 = vsel %vm3690, %v3774, %v3750
    %v3776 = vsel %vm3689, %v499, %v3773
    %v3777 = vsel %vm3689, 0, %v3775
    %v3778 = vcosq.f32.pop %v3776
    %v3779 = vsinq.f32.pop %v3776
    %vm3780 = vweird.f32 %v499
    %v3781 = vadd.s32 %v3777, 3
    %v3782 = vand.u32 %v3781, 3
    %vm3783 = vcmp.lt.s32.totalorder %v3782, 2
    %vm3784 = vcmp.eq.s32.totalorder %v3782, 0
    %v3785 = vxor.u32 %v3779, 2147483648
    %v3786 = vsel %vm3784, %v3778, %v3785
    %vm3787 = vcmp.eq.s32.totalorder %v3782, 2
    %v3788 = vxor.u32 %v3778, 2147483648
    %v3789 = vsel %vm3787, %v3788, %v3779
    %v3790 = vsel %vm3783, %v3786, %v3789
    %v3791 = vsel %vm3780, nan, %v3790
    %v3792 = vand.u32 2147483647, %v504
    %vm3793 = vcmp.le.f32.partialorder %v3792, 0.7853982
    %vm3794 = vcmp.lt.s32.totalorder %v504, 0
    %v3795 = vand.u32 %v504, 2139095040
    %v3796 = vshrl.u32 %v3795, 23
    %v3797 = vsub.s32 %v3796, 127
    %v3798 = vand.u32 2147483647, %v504
    %v3799 = vand.u32 %v3798, 8388607
    %v3800 = vor.u32 %v3799, 8388608
    %v3801 = vsub.s32 0, %v3800
    %v3802 = vadd.s32 %v3797, 1
    %vm3803 = vcmp.gt.s32.totalorder %v3802, 0
    %v3804 = vsel %vm3803, %v3802, 0
    %v3805 = vshrl.u32 %v3804, 5
    %v3806 = vand.u32 %v3804, 31
    %v3807 = vsub.s32 32, %v3806
    %v3808 = vshrl.u32 683565275, %v3807
    %v3809 = vshll.u32 683565275, %v3806
    %v3810 = vshrl.u32 2475754826, %v3807
    %v3811 = vor.u32 %v3809, %v3810
    %v3812 = vshll.u32 2475754826, %v3806
    %v3813 = vshrl.u32 2131351028, %v3807
    %v3814 = vor.u32 %v3812, %v3813
    %v3815 = vshll.u32 2131351028, %v3806
    %v3816 = vshrl.u32 2102212464, %v3807
    %v3817 = vor.u32 %v3815, %v3816
    %v3818 = vshll.u32 2102212464, %v3806
    %v3819 = vshrl.u32 920167782, %v3807
    %v3820 = vor.u32 %v3818, %v3819
    %v3821 = vshll.u32 920167782, %v3806
    %v3822 = vshrl.u32 1326507024, %v3807
    %v3823 = vor.u32 %v3821, %v3822
    %vm3824 = vcmp.lt.s32.totalorder %v3805, 1
    %vm3825 = vcmp.lt.s32.totalorder %v3805, 2
    %vm3826 = vcmp.lt.s32.totalorder %v3805, 3
    %vm3827 = vcmp.lt.s32.totalorder %v3805, 4
    %v3828 = vsel %vm3824, %v3808, %v3811
    %v3829 = vsel %vm3827, %v3817, 2102212464
    %v3830 = vsel %vm3826, %v3814, %v3829
    %v3831 = vsel %vm3825, %v3828, %v3830
    %v3832 = vsel %vm3824, %v3811, %v3814
    %v3833 = vsel %vm3827, %v3820, 920167782
    %v3834 = vsel %vm3826, %v3817, %v3833
    %v3835 = vsel %vm3825, %v3832, %v3834
    %v3836 = vsel %vm3824, %v3814, %v3817
    %v3837 = vsel %vm3827, %v3823, 1326507024
    %v3838 = vsel %vm3826, %v3820, %v3837
    %v3839 = vsel %vm3825, %v3836, %v3838
    %v3840 = vshll.u32 %v3800, 8
    %v3841 = vmul.u32.u64.compose %v3840, %v3839
    %v3842 = vextract.low.u32 %v3841
    %v3843 = vextract.high.u32 %v3841
    %v3844 = vmul.u32.u64.compose %v3840, %v3835
    %v3845 = vextract.low.u32 %v3844
    %v3846 = vextract.high.u32 %v3844
    %v3847 = vmul.u32 %v3840, %v3831
    %v3848 = vadd.s32 %v3843, %v3845
    %vm3849 = vc.u32 %v3843, %v3845
    %v3850 = vadd.s32 %v3846, 1
    %v3851 = vsel %vm3849, %v3850, %v3846
    %v3852 = vadd.s32 %v3847, %v3851
    %v3853 = vadd.s32 %v3852, 536870912
    %v3854 = vshrl.u32 %v3853, 30
    %v3855 = vshll.u32 %v3854, 30
    %v3856 = vsub.s32 %v3852, %v3855
    %vm3857 = vcmp.lt.s32.totalorder %v3856, 0
    %v3858 = vsub.s32 0, %v3856
    %v3859 = vsel %vm3857, %v3858, %v3856
    %v3860 = vclz %v3859
    %v3861 = vsub.s32 %v3860, 2
    %vm3862 = vcmp.gt.s32.totalorder 0, %v3861
    %v3863 = vsel %vm3862, 0, %v3861
    %v3864 = vsub.s32 32, %v3863
    %v3865 = vshll.u32 %v3856, %v3863
    %v3866 = vshrl.u32 %v3848, %v3864
    %v3867 = vor.u32 %v3865, %v3866
    %v3868 = vsub.s32 4294967266, %v3863
    %v3869 = vadd.s32 %v3868, 127
    %v3870 = vshll.u32 %v3869, 23
    %v3871 = vor.u32 4788187, %v3870
    %v3872 = vand.u32 2147483647, %v3871
    %v3874 = vcvt.s32.f32 %v3867
    %v3875 = vmul.f32 %v3874, %v3872
    %v3876 = vxor.u32 %v3875, 2147483648
    %v3877 = vsel %vm3794, %v3876, %v3875
    %v3878 = vsub.s32 4, %v3854
    %v3879 = vsel %vm3794, %v3878, %v3854
    %v3880 = vsel %vm3793, %v504, %v3877
    %v3881 = vsel %vm3793, 0, %v3879
    %v3882 = vcosq.f32.pop %v3880
    %v3883 = vsinq.f32.pop %v3880
    %vm3884 = vweird.f32 %v504
    %v3885 = vadd.s32 %v3881, 3
    %v3886 = vand.u32 %v3885, 3
    %vm3887 = vcmp.lt.s32.totalorder %v3886, 2
    %vm3888 = vcmp.eq.s32.totalorder %v3886, 0
    %v3889 = vxor.u32 %v3883, 2147483648
    %v3890 = vsel %vm3888, %v3882, %v3889
    %vm3891 = vcmp.eq.s32.totalorder %v3886, 2
    %v3892 = vxor.u32 %v3882, 2147483648
    %v3893 = vsel %vm3891, %v3892, %v3883
    %v3894 = vsel %vm3887, %v3890, %v3893
    %v3895 = vsel %vm3884, nan, %v3894
    %v3896 = vand.u32 2147483647, %v509
    %vm3897 = vcmp.le.f32.partialorder %v3896, 0.7853982
    %vm3898 = vcmp.lt.s32.totalorder %v509, 0
    %v3899 = vand.u32 %v509, 2139095040
    %v3900 = vshrl.u32 %v3899, 23
    %v3901 = vsub.s32 %v3900, 127
    %v3902 = vand.u32 2147483647, %v509
    %v3903 = vand.u32 %v3902, 8388607
    %v3904 = vor.u32 %v3903, 8388608
    %v3905 = vsub.s32 0, %v3904
    %v3906 = vadd.s32 %v3901, 1
    %vm3907 = vcmp.gt.s32.totalorder %v3906, 0
    %v3908 = vsel %vm3907, %v3906, 0
    %v3909 = vshrl.u32 %v3908, 5
    %v3910 = vand.u32 %v3908, 31
    %v3911 = vsub.s32 32, %v3910
    %v3912 = vshrl.u32 683565275, %v3911
    %v3913 = vshll.u32 683565275, %v3910
    %v3914 = vshrl.u32 2475754826, %v3911
    %v3915 = vor.u32 %v3913, %v3914
    %v3916 = vshll.u32 2475754826, %v3910
    %v3917 = vshrl.u32 2131351028, %v3911
    %v3918 = vor.u32 %v3916, %v3917
    %v3919 = vshll.u32 2131351028, %v3910
    %v3920 = vshrl.u32 2102212464, %v3911
    %v3921 = vor.u32 %v3919, %v3920
    %v3922 = vshll.u32 2102212464, %v3910
    %v3923 = vshrl.u32 920167782, %v3911
    %v3924 = vor.u32 %v3922, %v3923
    %v3925 = vshll.u32 920167782, %v3910
    %v3926 = vshrl.u32 1326507024, %v3911
    %v3927 = vor.u32 %v3925, %v3926
    %vm3928 = vcmp.lt.s32.totalorder %v3909, 1
    %vm3929 = vcmp.lt.s32.totalorder %v3909, 2
    %vm3930 = vcmp.lt.s32.totalorder %v3909, 3
    %vm3931 = vcmp.lt.s32.totalorder %v3909, 4
    %v3932 = vsel %vm3928, %v3912, %v3915
    %v3933 = vsel %vm3931, %v3921, 2102212464
    %v3934 = vsel %vm3930, %v3918, %v3933
    %v3935 = vsel %vm3929, %v3932, %v3934
    %v3936 = vsel %vm3928, %v3915, %v3918
    %v3937 = vsel %vm3931, %v3924, 920167782
    %v3938 = vsel %vm3930, %v3921, %v3937
    %v3939 = vsel %vm3929, %v3936, %v3938
    %v3940 = vsel %vm3928, %v3918, %v3921
    %v3941 = vsel %vm3931, %v3927, 1326507024
    %v3942 = vsel %vm3930, %v3924, %v3941
    %v3943 = vsel %vm3929, %v3940, %v3942
    %v3944 = vshll.u32 %v3904, 8
    %v3945 = vmul.u32.u64.compose %v3944, %v3943
    %v3946 = vextract.low.u32 %v3945
    %v3947 = vextract.high.u32 %v3945
    %v3948 = vmul.u32.u64.compose %v3944, %v3939
    %v3949 = vextract.low.u32 %v3948
    %v3950 = vextract.high.u32 %v3948
    %v3951 = vmul.u32 %v3944, %v3935
    %v3952 = vadd.s32 %v3947, %v3949
    %vm3953 = vc.u32 %v3947, %v3949
    %v3954 = vadd.s32 %v3950, 1
    %v3955 = vsel %vm3953, %v3954, %v3950
    %v3956 = vadd.s32 %v3951, %v3955
    %v3957 = vadd.s32 %v3956, 536870912
    %v3958 = vshrl.u32 %v3957, 30
    %v3959 = vshll.u32 %v3958, 30
    %v3960 = vsub.s32 %v3956, %v3959
    %vm3961 = vcmp.lt.s32.totalorder %v3960, 0
    %v3962 = vsub.s32 0, %v3960
    %v3963 = vsel %vm3961, %v3962, %v3960
    %v3964 = vclz %v3963
    %v3965 = vsub.s32 %v3964, 2
    %vm3966 = vcmp.gt.s32.totalorder 0, %v3965
    %v3967 = vsel %vm3966, 0, %v3965
    %v3968 = vsub.s32 32, %v3967
    %v3969 = vshll.u32 %v3960, %v3967
    %v3970 = vshrl.u32 %v3952, %v3968
    %v3971 = vor.u32 %v3969, %v3970
    %v3972 = vsub.s32 4294967266, %v3967
    %v3973 = vadd.s32 %v3972, 127
    %v3974 = vshll.u32 %v3973, 23
    %v3975 = vor.u32 4788187, %v3974
    %v3976 = vand.u32 2147483647, %v3975
    %v3978 = vcvt.s32.f32 %v3971
    %v3979 = vmul.f32 %v3978, %v3976
    %v3980 = vxor.u32 %v3979, 2147483648
    %v3981 = vsel %vm3898, %v3980, %v3979
    %v3982 = vsub.s32 4, %v3958
    %v3983 = vsel %vm3898, %v3982, %v3958
    %v3984 = vsel %vm3897, %v509, %v3981
    %v3985 = vsel %vm3897, 0, %v3983
    %v3986 = vcosq.f32.pop %v3984
    %v3987 = vsinq.f32.pop %v3984
    %vm3988 = vweird.f32 %v509
    %v3989 = vadd.s32 %v3985, 3
    %v3990 = vand.u32 %v3989, 3
    %vm3991 = vcmp.lt.s32.totalorder %v3990, 2
    %vm3992 = vcmp.eq.s32.totalorder %v3990, 0
    %v3993 = vxor.u32 %v3987, 2147483648
    %v3994 = vsel %vm3992, %v3986, %v3993
    %vm3995 = vcmp.eq.s32.totalorder %v3990, 2
    %v3996 = vxor.u32 %v3986, 2147483648
    %v3997 = vsel %vm3995, %v3996, %v3987
    %v3998 = vsel %vm3991, %v3994, %v3997
    %v3999 = vsel %vm3988, nan, %v3998
    %v4000 = vand.u32 2147483647, %v514
    %vm4001 = vcmp.le.f32.partialorder %v4000, 0.7853982
    %vm4002 = vcmp.lt.s32.totalorder %v514, 0
    %v4003 = vand.u32 %v514, 2139095040
    %v4004 = vshrl.u32 %v4003, 23
    %v4005 = vsub.s32 %v4004, 127
    %v4006 = vand.u32 2147483647, %v514
    %v4007 = vand.u32 %v4006, 8388607
    %v4008 = vor.u32 %v4007, 8388608
    %v4009 = vsub.s32 0, %v4008
    %v4010 = vadd.s32 %v4005, 1
    %vm4011 = vcmp.gt.s32.totalorder %v4010, 0
    %v4012 = vsel %vm4011, %v4010, 0
    %v4013 = vshrl.u32 %v4012, 5
    %v4014 = vand.u32 %v4012, 31
    %v4015 = vsub.s32 32, %v4014
    %v4016 = vshrl.u32 683565275, %v4015
    %v4017 = vshll.u32 683565275, %v4014
    %v4018 = vshrl.u32 2475754826, %v4015
    %v4019 = vor.u32 %v4017, %v4018
    %v4020 = vshll.u32 2475754826, %v4014
    %v4021 = vshrl.u32 2131351028, %v4015
    %v4022 = vor.u32 %v4020, %v4021
    %v4023 = vshll.u32 2131351028, %v4014
    %v4024 = vshrl.u32 2102212464, %v4015
    %v4025 = vor.u32 %v4023, %v4024
    %v4026 = vshll.u32 2102212464, %v4014
    %v4027 = vshrl.u32 920167782, %v4015
    %v4028 = vor.u32 %v4026, %v4027
    %v4029 = vshll.u32 920167782, %v4014
    %v4030 = vshrl.u32 1326507024, %v4015
    %v4031 = vor.u32 %v4029, %v4030
    %vm4032 = vcmp.lt.s32.totalorder %v4013, 1
    %vm4033 = vcmp.lt.s32.totalorder %v4013, 2
    %vm4034 = vcmp.lt.s32.totalorder %v4013, 3
    %vm4035 = vcmp.lt.s32.totalorder %v4013, 4
    %v4036 = vsel %vm4032, %v4016, %v4019
    %v4037 = vsel %vm4035, %v4025, 2102212464
    %v4038 = vsel %vm4034, %v4022, %v4037
    %v4039 = vsel %vm4033, %v4036, %v4038
    %v4040 = vsel %vm4032, %v4019, %v4022
    %v4041 = vsel %vm4035, %v4028, 920167782
    %v4042 = vsel %vm4034, %v4025, %v4041
    %v4043 = vsel %vm4033, %v4040, %v4042
    %v4044 = vsel %vm4032, %v4022, %v4025
    %v4045 = vsel %vm4035, %v4031, 1326507024
    %v4046 = vsel %vm4034, %v4028, %v4045
    %v4047 = vsel %vm4033, %v4044, %v4046
    %v4048 = vshll.u32 %v4008, 8
    %v4049 = vmul.u32.u64.compose %v4048, %v4047
    %v4050 = vextract.low.u32 %v4049
    %v4051 = vextract.high.u32 %v4049
    %v4052 = vmul.u32.u64.compose %v4048, %v4043
    %v4053 = vextract.low.u32 %v4052
    %v4054 = vextract.high.u32 %v4052
    %v4055 = vmul.u32 %v4048, %v4039
    %v4056 = vadd.s32 %v4051, %v4053
    %vm4057 = vc.u32 %v4051, %v4053
    %v4058 = vadd.s32 %v4054, 1
    %v4059 = vsel %vm4057, %v4058, %v4054
    %v4060 = vadd.s32 %v4055, %v4059
    %v4061 = vadd.s32 %v4060, 536870912
    %v4062 = vshrl.u32 %v4061, 30
    %v4063 = vshll.u32 %v4062, 30
    %v4064 = vsub.s32 %v4060, %v4063
    %vm4065 = vcmp.lt.s32.totalorder %v4064, 0
    %v4066 = vsub.s32 0, %v4064
    %v4067 = vsel %vm4065, %v4066, %v4064
    %v4068 = vclz %v4067
    %v4069 = vsub.s32 %v4068, 2
    %vm4070 = vcmp.gt.s32.totalorder 0, %v4069
    %v4071 = vsel %vm4070, 0, %v4069
    %v4072 = vsub.s32 32, %v4071
    %v4073 = vshll.u32 %v4064, %v4071
    %v4074 = vshrl.u32 %v4056, %v4072
    %v4075 = vor.u32 %v4073, %v4074
    %v4076 = vsub.s32 4294967266, %v4071
    %v4077 = vadd.s32 %v4076, 127
    %v4078 = vshll.u32 %v4077, 23
    %v4079 = vor.u32 4788187, %v4078
    %v4080 = vand.u32 2147483647, %v4079
    %v4082 = vcvt.s32.f32 %v4075
    %v4083 = vmul.f32 %v4082, %v4080
    %v4084 = vxor.u32 %v4083, 2147483648
    %v4085 = vsel %vm4002, %v4084, %v4083
    %v4086 = vsub.s32 4, %v4062
    %v4087 = vsel %vm4002, %v4086, %v4062
    %v4088 = vsel %vm4001, %v514, %v4085
    %v4089 = vsel %vm4001, 0, %v4087
    %v4090 = vcosq.f32.pop %v4088
    %v4091 = vsinq.f32.pop %v4088
    %vm4092 = vweird.f32 %v514
    %v4093 = vadd.s32 %v4089, 3
    %v4094 = vand.u32 %v4093, 3
    %vm4095 = vcmp.lt.s32.totalorder %v4094, 2
    %vm4096 = vcmp.eq.s32.totalorder %v4094, 0
    %v4097 = vxor.u32 %v4091, 2147483648
    %v4098 = vsel %vm4096, %v4090, %v4097
    %vm4099 = vcmp.eq.s32.totalorder %v4094, 2
    %v4100 = vxor.u32 %v4090, 2147483648
    %v4101 = vsel %vm4099, %v4100, %v4091
    %v4102 = vsel %vm4095, %v4098, %v4101
    %v4103 = vsel %vm4092, nan, %v4102
    %v4104 = vand.u32 2147483647, %v519
    %vm4105 = vcmp.le.f32.partialorder %v4104, 0.7853982
    %vm4106 = vcmp.lt.s32.totalorder %v519, 0
    %v4107 = vand.u32 %v519, 2139095040
    %v4108 = vshrl.u32 %v4107, 23
    %v4109 = vsub.s32 %v4108, 127
    %v4110 = vand.u32 2147483647, %v519
    %v4111 = vand.u32 %v4110, 8388607
    %v4112 = vor.u32 %v4111, 8388608
    %v4113 = vsub.s32 0, %v4112
    %v4114 = vadd.s32 %v4109, 1
    %vm4115 = vcmp.gt.s32.totalorder %v4114, 0
    %v4116 = vsel %vm4115, %v4114, 0
    %v4117 = vshrl.u32 %v4116, 5
    %v4118 = vand.u32 %v4116, 31
    %v4119 = vsub.s32 32, %v4118
    %v4120 = vshrl.u32 683565275, %v4119
    %v4121 = vshll.u32 683565275, %v4118
    %v4122 = vshrl.u32 2475754826, %v4119
    %v4123 = vor.u32 %v4121, %v4122
    %v4124 = vshll.u32 2475754826, %v4118
    %v4125 = vshrl.u32 2131351028, %v4119
    %v4126 = vor.u32 %v4124, %v4125
    %v4127 = vshll.u32 2131351028, %v4118
    %v4128 = vshrl.u32 2102212464, %v4119
    %v4129 = vor.u32 %v4127, %v4128
    %v4130 = vshll.u32 2102212464, %v4118
    %v4131 = vshrl.u32 920167782, %v4119
    %v4132 = vor.u32 %v4130, %v4131
    %v4133 = vshll.u32 920167782, %v4118
    %v4134 = vshrl.u32 1326507024, %v4119
    %v4135 = vor.u32 %v4133, %v4134
    %vm4136 = vcmp.lt.s32.totalorder %v4117, 1
    %vm4137 = vcmp.lt.s32.totalorder %v4117, 2
    %vm4138 = vcmp.lt.s32.totalorder %v4117, 3
    %vm4139 = vcmp.lt.s32.totalorder %v4117, 4
    %v4140 = vsel %vm4136, %v4120, %v4123
    %v4141 = vsel %vm4139, %v4129, 2102212464
    %v4142 = vsel %vm4138, %v4126, %v4141
    %v4143 = vsel %vm4137, %v4140, %v4142
    %v4144 = vsel %vm4136, %v4123, %v4126
    %v4145 = vsel %vm4139, %v4132, 920167782
    %v4146 = vsel %vm4138, %v4129, %v4145
    %v4147 = vsel %vm4137, %v4144, %v4146
    %v4148 = vsel %vm4136, %v4126, %v4129
    %v4149 = vsel %vm4139, %v4135, 1326507024
    %v4150 = vsel %vm4138, %v4132, %v4149
    %v4151 = vsel %vm4137, %v4148, %v4150
    %v4152 = vshll.u32 %v4112, 8
    %v4153 = vmul.u32.u64.compose %v4152, %v4151
    %v4154 = vextract.low.u32 %v4153
    %v4155 = vextract.high.u32 %v4153
    %v4156 = vmul.u32.u64.compose %v4152, %v4147
    %v4157 = vextract.low.u32 %v4156
    %v4158 = vextract.high.u32 %v4156
    %v4159 = vmul.u32 %v4152, %v4143
    %v4160 = vadd.s32 %v4155, %v4157
    %vm4161 = vc.u32 %v4155, %v4157
    %v4162 = vadd.s32 %v4158, 1
    %v4163 = vsel %vm4161, %v4162, %v4158
    %v4164 = vadd.s32 %v4159, %v4163
    %v4165 = vadd.s32 %v4164, 536870912
    %v4166 = vshrl.u32 %v4165, 30
    %v4167 = vshll.u32 %v4166, 30
    %v4168 = vsub.s32 %v4164, %v4167
    %vm4169 = vcmp.lt.s32.totalorder %v4168, 0
    %v4170 = vsub.s32 0, %v4168
    %v4171 = vsel %vm4169, %v4170, %v4168
    %v4172 = vclz %v4171
    %v4173 = vsub.s32 %v4172, 2
    %vm4174 = vcmp.gt.s32.totalorder 0, %v4173
    %v4175 = vsel %vm4174, 0, %v4173
    %v4176 = vsub.s32 32, %v4175
    %v4177 = vshll.u32 %v4168, %v4175
    %v4178 = vshrl.u32 %v4160, %v4176
    %v4179 = vor.u32 %v4177, %v4178
    %v4180 = vsub.s32 4294967266, %v4175
    %v4181 = vadd.s32 %v4180, 127
    %v4182 = vshll.u32 %v4181, 23
    %v4183 = vor.u32 4788187, %v4182
    %v4184 = vand.u32 2147483647, %v4183
    %v4186 = vcvt.s32.f32 %v4179
    %v4187 = vmul.f32 %v4186, %v4184
    %v4188 = vxor.u32 %v4187, 2147483648
    %v4189 = vsel %vm4106, %v4188, %v4187
    %v4190 = vsub.s32 4, %v4166
    %v4191 = vsel %vm4106, %v4190, %v4166
    %v4192 = vsel %vm4105, %v519, %v4189
    %v4193 = vsel %vm4105, 0, %v4191
    %v4194 = vcosq.f32.pop %v4192
    %v4195 = vsinq.f32.pop %v4192
    %vm4196 = vweird.f32 %v519
    %v4197 = vadd.s32 %v4193, 3
    %v4198 = vand.u32 %v4197, 3
    %vm4199 = vcmp.lt.s32.totalorder %v4198, 2
    %vm4200 = vcmp.eq.s32.totalorder %v4198, 0
    %v4201 = vxor.u32 %v4195, 2147483648
    %v4202 = vsel %vm4200, %v4194, %v4201
    %vm4203 = vcmp.eq.s32.totalorder %v4198, 2
    %v4204 = vxor.u32 %v4194, 2147483648
    %v4205 = vsel %vm4203, %v4204, %v4195
    %v4206 = vsel %vm4199, %v4202, %v4205
    %v4207 = vsel %vm4196, nan, %v4206
    %v4208 = vand.u32 2147483647, %v524
    %vm4209 = vcmp.le.f32.partialorder %v4208, 0.7853982
    %vm4210 = vcmp.lt.s32.totalorder %v524, 0
    %v4211 = vand.u32 %v524, 2139095040
    %v4212 = vshrl.u32 %v4211, 23
    %v4213 = vsub.s32 %v4212, 127
    %v4214 = vand.u32 2147483647, %v524
    %v4215 = vand.u32 %v4214, 8388607
    %v4216 = vor.u32 %v4215, 8388608
    %v4217 = vsub.s32 0, %v4216
    %v4218 = vadd.s32 %v4213, 1
    %vm4219 = vcmp.gt.s32.totalorder %v4218, 0
    %v4220 = vsel %vm4219, %v4218, 0
    %v4221 = vshrl.u32 %v4220, 5
    %v4222 = vand.u32 %v4220, 31
    %v4223 = vsub.s32 32, %v4222
    %v4224 = vshrl.u32 683565275, %v4223
    %v4225 = vshll.u32 683565275, %v4222
    %v4226 = vshrl.u32 2475754826, %v4223
    %v4227 = vor.u32 %v4225, %v4226
    %v4228 = vshll.u32 2475754826, %v4222
    %v4229 = vshrl.u32 2131351028, %v4223
    %v4230 = vor.u32 %v4228, %v4229
    %v4231 = vshll.u32 2131351028, %v4222
    %v4232 = vshrl.u32 2102212464, %v4223
    %v4233 = vor.u32 %v4231, %v4232
    %v4234 = vshll.u32 2102212464, %v4222
    %v4235 = vshrl.u32 920167782, %v4223
    %v4236 = vor.u32 %v4234, %v4235
    %v4237 = vshll.u32 920167782, %v4222
    %v4238 = vshrl.u32 1326507024, %v4223
    %v4239 = vor.u32 %v4237, %v4238
    %vm4240 = vcmp.lt.s32.totalorder %v4221, 1
    %vm4241 = vcmp.lt.s32.totalorder %v4221, 2
    %vm4242 = vcmp.lt.s32.totalorder %v4221, 3
    %vm4243 = vcmp.lt.s32.totalorder %v4221, 4
    %v4244 = vsel %vm4240, %v4224, %v4227
    %v4245 = vsel %vm4243, %v4233, 2102212464
    %v4246 = vsel %vm4242, %v4230, %v4245
    %v4247 = vsel %vm4241, %v4244, %v4246
    %v4248 = vsel %vm4240, %v4227, %v4230
    %v4249 = vsel %vm4243, %v4236, 920167782
    %v4250 = vsel %vm4242, %v4233, %v4249
    %v4251 = vsel %vm4241, %v4248, %v4250
    %v4252 = vsel %vm4240, %v4230, %v4233
    %v4253 = vsel %vm4243, %v4239, 1326507024
    %v4254 = vsel %vm4242, %v4236, %v4253
    %v4255 = vsel %vm4241, %v4252, %v4254
    %v4256 = vshll.u32 %v4216, 8
    %v4257 = vmul.u32.u64.compose %v4256, %v4255
    %v4258 = vextract.low.u32 %v4257
    %v4259 = vextract.high.u32 %v4257
    %v4260 = vmul.u32.u64.compose %v4256, %v4251
    %v4261 = vextract.low.u32 %v4260
    %v4262 = vextract.high.u32 %v4260
    %v4263 = vmul.u32 %v4256, %v4247
    %v4264 = vadd.s32 %v4259, %v4261
    %vm4265 = vc.u32 %v4259, %v4261
    %v4266 = vadd.s32 %v4262, 1
    %v4267 = vsel %vm4265, %v4266, %v4262
    %v4268 = vadd.s32 %v4263, %v4267
    %v4269 = vadd.s32 %v4268, 536870912
    %v4270 = vshrl.u32 %v4269, 30
    %v4271 = vshll.u32 %v4270, 30
    %v4272 = vsub.s32 %v4268, %v4271
    %vm4273 = vcmp.lt.s32.totalorder %v4272, 0
    %v4274 = vsub.s32 0, %v4272
    %v4275 = vsel %vm4273, %v4274, %v4272
    %v4276 = vclz %v4275
    %v4277 = vsub.s32 %v4276, 2
    %vm4278 = vcmp.gt.s32.totalorder 0, %v4277
    %v4279 = vsel %vm4278, 0, %v4277
    %v4280 = vsub.s32 32, %v4279
    %v4281 = vshll.u32 %v4272, %v4279
    %v4282 = vshrl.u32 %v4264, %v4280
    %v4283 = vor.u32 %v4281, %v4282
    %v4284 = vsub.s32 4294967266, %v4279
    %v4285 = vadd.s32 %v4284, 127
    %v4286 = vshll.u32 %v4285, 23
    %v4287 = vor.u32 4788187, %v4286
    %v4288 = vand.u32 2147483647, %v4287
    %v4290 = vcvt.s32.f32 %v4283
    %v4291 = vmul.f32 %v4290, %v4288
    %v4292 = vxor.u32 %v4291, 2147483648
    %v4293 = vsel %vm4210, %v4292, %v4291
    %v4294 = vsub.s32 4, %v4270
    %v4295 = vsel %vm4210, %v4294, %v4270
    %v4296 = vsel %vm4209, %v524, %v4293
    %v4297 = vsel %vm4209, 0, %v4295
    %v4298 = vcosq.f32.pop %v4296
    %v4299 = vsinq.f32.pop %v4296
    %vm4300 = vweird.f32 %v524
    %v4301 = vadd.s32 %v4297, 3
    %v4302 = vand.u32 %v4301, 3
    %vm4303 = vcmp.lt.s32.totalorder %v4302, 2
    %vm4304 = vcmp.eq.s32.totalorder %v4302, 0
    %v4305 = vxor.u32 %v4299, 2147483648
    %v4306 = vsel %vm4304, %v4298, %v4305
    %vm4307 = vcmp.eq.s32.totalorder %v4302, 2
    %v4308 = vxor.u32 %v4298, 2147483648
    %v4309 = vsel %vm4307, %v4308, %v4299
    %v4310 = vsel %vm4303, %v4306, %v4309
    %v4311 = vsel %vm4300, nan, %v4310
    %v4312 = vand.u32 2147483647, %v529
    %vm4313 = vcmp.le.f32.partialorder %v4312, 0.7853982
    %vm4314 = vcmp.lt.s32.totalorder %v529, 0
    %v4315 = vand.u32 %v529, 2139095040
    %v4316 = vshrl.u32 %v4315, 23
    %v4317 = vsub.s32 %v4316, 127
    %v4318 = vand.u32 2147483647, %v529
    %v4319 = vand.u32 %v4318, 8388607
    %v4320 = vor.u32 %v4319, 8388608
    %v4321 = vsub.s32 0, %v4320
    %v4322 = vadd.s32 %v4317, 1
    %vm4323 = vcmp.gt.s32.totalorder %v4322, 0
    %v4324 = vsel %vm4323, %v4322, 0
    %v4325 = vshrl.u32 %v4324, 5
    %v4326 = vand.u32 %v4324, 31
    %v4327 = vsub.s32 32, %v4326
    %v4328 = vshrl.u32 683565275, %v4327
    %v4329 = vshll.u32 683565275, %v4326
    %v4330 = vshrl.u32 2475754826, %v4327
    %v4331 = vor.u32 %v4329, %v4330
    %v4332 = vshll.u32 2475754826, %v4326
    %v4333 = vshrl.u32 2131351028, %v4327
    %v4334 = vor.u32 %v4332, %v4333
    %v4335 = vshll.u32 2131351028, %v4326
    %v4336 = vshrl.u32 2102212464, %v4327
    %v4337 = vor.u32 %v4335, %v4336
    %v4338 = vshll.u32 2102212464, %v4326
    %v4339 = vshrl.u32 920167782, %v4327
    %v4340 = vor.u32 %v4338, %v4339
    %v4341 = vshll.u32 920167782, %v4326
    %v4342 = vshrl.u32 1326507024, %v4327
    %v4343 = vor.u32 %v4341, %v4342
    %vm4344 = vcmp.lt.s32.totalorder %v4325, 1
    %vm4345 = vcmp.lt.s32.totalorder %v4325, 2
    %vm4346 = vcmp.lt.s32.totalorder %v4325, 3
    %vm4347 = vcmp.lt.s32.totalorder %v4325, 4
    %v4348 = vsel %vm4344, %v4328, %v4331
    %v4349 = vsel %vm4347, %v4337, 2102212464
    %v4350 = vsel %vm4346, %v4334, %v4349
    %v4351 = vsel %vm4345, %v4348, %v4350
    %v4352 = vsel %vm4344, %v4331, %v4334
    %v4353 = vsel %vm4347, %v4340, 920167782
    %v4354 = vsel %vm4346, %v4337, %v4353
    %v4355 = vsel %vm4345, %v4352, %v4354
    %v4356 = vsel %vm4344, %v4334, %v4337
    %v4357 = vsel %vm4347, %v4343, 1326507024
    %v4358 = vsel %vm4346, %v4340, %v4357
    %v4359 = vsel %vm4345, %v4356, %v4358
    %v4360 = vshll.u32 %v4320, 8
    %v4361 = vmul.u32.u64.compose %v4360, %v4359
    %v4362 = vextract.low.u32 %v4361
    %v4363 = vextract.high.u32 %v4361
    %v4364 = vmul.u32.u64.compose %v4360, %v4355
    %v4365 = vextract.low.u32 %v4364
    %v4366 = vextract.high.u32 %v4364
    %v4367 = vmul.u32 %v4360, %v4351
    %v4368 = vadd.s32 %v4363, %v4365
    %vm4369 = vc.u32 %v4363, %v4365
    %v4370 = vadd.s32 %v4366, 1
    %v4371 = vsel %vm4369, %v4370, %v4366
    %v4372 = vadd.s32 %v4367, %v4371
    %v4373 = vadd.s32 %v4372, 536870912
    %v4374 = vshrl.u32 %v4373, 30
    %v4375 = vshll.u32 %v4374, 30
    %v4376 = vsub.s32 %v4372, %v4375
    %vm4377 = vcmp.lt.s32.totalorder %v4376, 0
    %v4378 = vsub.s32 0, %v4376
    %v4379 = vsel %vm4377, %v4378, %v4376
    %v4380 = vclz %v4379
    %v4381 = vsub.s32 %v4380, 2
    %vm4382 = vcmp.gt.s32.totalorder 0, %v4381
    %v4383 = vsel %vm4382, 0, %v4381
    %v4384 = vsub.s32 32, %v4383
    %v4385 = vshll.u32 %v4376, %v4383
    %v4386 = vshrl.u32 %v4368, %v4384
    %v4387 = vor.u32 %v4385, %v4386
    %v4388 = vsub.s32 4294967266, %v4383
    %v4389 = vadd.s32 %v4388, 127
    %v4390 = vshll.u32 %v4389, 23
    %v4391 = vor.u32 4788187, %v4390
    %v4392 = vand.u32 2147483647, %v4391
    %v4394 = vcvt.s32.f32 %v4387
    %v4395 = vmul.f32 %v4394, %v4392
    %v4396 = vxor.u32 %v4395, 2147483648
    %v4397 = vsel %vm4314, %v4396, %v4395
    %v4398 = vsub.s32 4, %v4374
    %v4399 = vsel %vm4314, %v4398, %v4374
    %v4400 = vsel %vm4313, %v529, %v4397
    %v4401 = vsel %vm4313, 0, %v4399
    %v4402 = vcosq.f32.pop %v4400
    %v4403 = vsinq.f32.pop %v4400
    %vm4404 = vweird.f32 %v529
    %v4405 = vadd.s32 %v4401, 3
    %v4406 = vand.u32 %v4405, 3
    %vm4407 = vcmp.lt.s32.totalorder %v4406, 2
    %vm4408 = vcmp.eq.s32.totalorder %v4406, 0
    %v4409 = vxor.u32 %v4403, 2147483648
    %v4410 = vsel %vm4408, %v4402, %v4409
    %vm4411 = vcmp.eq.s32.totalorder %v4406, 2
    %v4412 = vxor.u32 %v4402, 2147483648
    %v4413 = vsel %vm4411, %v4412, %v4403
    %v4414 = vsel %vm4407, %v4410, %v4413
    %v4415 = vsel %vm4404, nan, %v4414
    %v4416 = vand.u32 2147483647, %v534
    %vm4417 = vcmp.le.f32.partialorder %v4416, 0.7853982
    %vm4418 = vcmp.lt.s32.totalorder %v534, 0
    %v4419 = vand.u32 %v534, 2139095040
    %v4420 = vshrl.u32 %v4419, 23
    %v4421 = vsub.s32 %v4420, 127
    %v4422 = vand.u32 2147483647, %v534
    %v4423 = vand.u32 %v4422, 8388607
    %v4424 = vor.u32 %v4423, 8388608
    %v4425 = vsub.s32 0, %v4424
    %v4426 = vadd.s32 %v4421, 1
    %vm4427 = vcmp.gt.s32.totalorder %v4426, 0
    %v4428 = vsel %vm4427, %v4426, 0
    %v4429 = vshrl.u32 %v4428, 5
    %v4430 = vand.u32 %v4428, 31
    %v4431 = vsub.s32 32, %v4430
    %v4432 = vshrl.u32 683565275, %v4431
    %v4433 = vshll.u32 683565275, %v4430
    %v4434 = vshrl.u32 2475754826, %v4431
    %v4435 = vor.u32 %v4433, %v4434
    %v4436 = vshll.u32 2475754826, %v4430
    %v4437 = vshrl.u32 2131351028, %v4431
    %v4438 = vor.u32 %v4436, %v4437
    %v4439 = vshll.u32 2131351028, %v4430
    %v4440 = vshrl.u32 2102212464, %v4431
    %v4441 = vor.u32 %v4439, %v4440
    %v4442 = vshll.u32 2102212464, %v4430
    %v4443 = vshrl.u32 920167782, %v4431
    %v4444 = vor.u32 %v4442, %v4443
    %v4445 = vshll.u32 920167782, %v4430
    %v4446 = vshrl.u32 1326507024, %v4431
    %v4447 = vor.u32 %v4445, %v4446
    %vm4448 = vcmp.lt.s32.totalorder %v4429, 1
    %vm4449 = vcmp.lt.s32.totalorder %v4429, 2
    %vm4450 = vcmp.lt.s32.totalorder %v4429, 3
    %vm4451 = vcmp.lt.s32.totalorder %v4429, 4
    %v4452 = vsel %vm4448, %v4432, %v4435
    %v4453 = vsel %vm4451, %v4441, 2102212464
    %v4454 = vsel %vm4450, %v4438, %v4453
    %v4455 = vsel %vm4449, %v4452, %v4454
    %v4456 = vsel %vm4448, %v4435, %v4438
    %v4457 = vsel %vm4451, %v4444, 920167782
    %v4458 = vsel %vm4450, %v4441, %v4457
    %v4459 = vsel %vm4449, %v4456, %v4458
    %v4460 = vsel %vm4448, %v4438, %v4441
    %v4461 = vsel %vm4451, %v4447, 1326507024
    %v4462 = vsel %vm4450, %v4444, %v4461
    %v4463 = vsel %vm4449, %v4460, %v4462
    %v4464 = vshll.u32 %v4424, 8
    %v4465 = vmul.u32.u64.compose %v4464, %v4463
    %v4466 = vextract.low.u32 %v4465
    %v4467 = vextract.high.u32 %v4465
    %v4468 = vmul.u32.u64.compose %v4464, %v4459
    %v4469 = vextract.low.u32 %v4468
    %v4470 = vextract.high.u32 %v4468
    %v4471 = vmul.u32 %v4464, %v4455
    %v4472 = vadd.s32 %v4467, %v4469
    %vm4473 = vc.u32 %v4467, %v4469
    %v4474 = vadd.s32 %v4470, 1
    %v4475 = vsel %vm4473, %v4474, %v4470
    %v4476 = vadd.s32 %v4471, %v4475
    %v4477 = vadd.s32 %v4476, 536870912
    %v4478 = vshrl.u32 %v4477, 30
    %v4479 = vshll.u32 %v4478, 30
    %v4480 = vsub.s32 %v4476, %v4479
    %vm4481 = vcmp.lt.s32.totalorder %v4480, 0
    %v4482 = vsub.s32 0, %v4480
    %v4483 = vsel %vm4481, %v4482, %v4480
    %v4484 = vclz %v4483
    %v4485 = vsub.s32 %v4484, 2
    %vm4486 = vcmp.gt.s32.totalorder 0, %v4485
    %v4487 = vsel %vm4486, 0, %v4485
    %v4488 = vsub.s32 32, %v4487
    %v4489 = vshll.u32 %v4480, %v4487
    %v4490 = vshrl.u32 %v4472, %v4488
    %v4491 = vor.u32 %v4489, %v4490
    %v4492 = vsub.s32 4294967266, %v4487
    %v4493 = vadd.s32 %v4492, 127
    %v4494 = vshll.u32 %v4493, 23
    %v4495 = vor.u32 4788187, %v4494
    %v4496 = vand.u32 2147483647, %v4495
    %v4498 = vcvt.s32.f32 %v4491
    %v4499 = vmul.f32 %v4498, %v4496
    %v4500 = vxor.u32 %v4499, 2147483648
    %v4501 = vsel %vm4418, %v4500, %v4499
    %v4502 = vsub.s32 4, %v4478
    %v4503 = vsel %vm4418, %v4502, %v4478
    %v4504 = vsel %vm4417, %v534, %v4501
    %v4505 = vsel %vm4417, 0, %v4503
    %v4506 = vcosq.f32.pop %v4504
    %v4507 = vsinq.f32.pop %v4504
    %vm4508 = vweird.f32 %v534
    %v4509 = vadd.s32 %v4505, 3
    %v4510 = vand.u32 %v4509, 3
    %vm4511 = vcmp.lt.s32.totalorder %v4510, 2
    %vm4512 = vcmp.eq.s32.totalorder %v4510, 0
    %v4513 = vxor.u32 %v4507, 2147483648
    %v4514 = vsel %vm4512, %v4506, %v4513
    %vm4515 = vcmp.eq.s32.totalorder %v4510, 2
    %v4516 = vxor.u32 %v4506, 2147483648
    %v4517 = vsel %vm4515, %v4516, %v4507
    %v4518 = vsel %vm4511, %v4514, %v4517
    %v4519 = vsel %vm4508, nan, %v4518
    %v4520 = vand.u32 2147483647, %v539
    %vm4521 = vcmp.le.f32.partialorder %v4520, 0.7853982
    %vm4522 = vcmp.lt.s32.totalorder %v539, 0
    %v4523 = vand.u32 %v539, 2139095040
    %v4524 = vshrl.u32 %v4523, 23
    %v4525 = vsub.s32 %v4524, 127
    %v4526 = vand.u32 2147483647, %v539
    %v4527 = vand.u32 %v4526, 8388607
    %v4528 = vor.u32 %v4527, 8388608
    %v4529 = vsub.s32 0, %v4528
    %v4530 = vadd.s32 %v4525, 1
    %vm4531 = vcmp.gt.s32.totalorder %v4530, 0
    %v4532 = vsel %vm4531, %v4530, 0
    %v4533 = vshrl.u32 %v4532, 5
    %v4534 = vand.u32 %v4532, 31
    %v4535 = vsub.s32 32, %v4534
    %v4536 = vshrl.u32 683565275, %v4535
    %v4537 = vshll.u32 683565275, %v4534
    %v4538 = vshrl.u32 2475754826, %v4535
    %v4539 = vor.u32 %v4537, %v4538
    %v4540 = vshll.u32 2475754826, %v4534
    %v4541 = vshrl.u32 2131351028, %v4535
    %v4542 = vor.u32 %v4540, %v4541
    %v4543 = vshll.u32 2131351028, %v4534
    %v4544 = vshrl.u32 2102212464, %v4535
    %v4545 = vor.u32 %v4543, %v4544
    %v4546 = vshll.u32 2102212464, %v4534
    %v4547 = vshrl.u32 920167782, %v4535
    %v4548 = vor.u32 %v4546, %v4547
    %v4549 = vshll.u32 920167782, %v4534
    %v4550 = vshrl.u32 1326507024, %v4535
    %v4551 = vor.u32 %v4549, %v4550
    %vm4552 = vcmp.lt.s32.totalorder %v4533, 1
    %vm4553 = vcmp.lt.s32.totalorder %v4533, 2
    %vm4554 = vcmp.lt.s32.totalorder %v4533, 3
    %vm4555 = vcmp.lt.s32.totalorder %v4533, 4
    %v4556 = vsel %vm4552, %v4536, %v4539
    %v4557 = vsel %vm4555, %v4545, 2102212464
    %v4558 = vsel %vm4554, %v4542, %v4557
    %v4559 = vsel %vm4553, %v4556, %v4558
    %v4560 = vsel %vm4552, %v4539, %v4542
    %v4561 = vsel %vm4555, %v4548, 920167782
    %v4562 = vsel %vm4554, %v4545, %v4561
    %v4563 = vsel %vm4553, %v4560, %v4562
    %v4564 = vsel %vm4552, %v4542, %v4545
    %v4565 = vsel %vm4555, %v4551, 1326507024
    %v4566 = vsel %vm4554, %v4548, %v4565
    %v4567 = vsel %vm4553, %v4564, %v4566
    %v4568 = vshll.u32 %v4528, 8
    %v4569 = vmul.u32.u64.compose %v4568, %v4567
    %v4570 = vextract.low.u32 %v4569
    %v4571 = vextract.high.u32 %v4569
    %v4572 = vmul.u32.u64.compose %v4568, %v4563
    %v4573 = vextract.low.u32 %v4572
    %v4574 = vextract.high.u32 %v4572
    %v4575 = vmul.u32 %v4568, %v4559
    %v4576 = vadd.s32 %v4571, %v4573
    %vm4577 = vc.u32 %v4571, %v4573
    %v4578 = vadd.s32 %v4574, 1
    %v4579 = vsel %vm4577, %v4578, %v4574
    %v4580 = vadd.s32 %v4575, %v4579
    %v4581 = vadd.s32 %v4580, 536870912
    %v4582 = vshrl.u32 %v4581, 30
    %v4583 = vshll.u32 %v4582, 30
    %v4584 = vsub.s32 %v4580, %v4583
    %vm4585 = vcmp.lt.s32.totalorder %v4584, 0
    %v4586 = vsub.s32 0, %v4584
    %v4587 = vsel %vm4585, %v4586, %v4584
    %v4588 = vclz %v4587
    %v4589 = vsub.s32 %v4588, 2
    %vm4590 = vcmp.gt.s32.totalorder 0, %v4589
    %v4591 = vsel %vm4590, 0, %v4589
    %v4592 = vsub.s32 32, %v4591
    %v4593 = vshll.u32 %v4584, %v4591
    %v4594 = vshrl.u32 %v4576, %v4592
    %v4595 = vor.u32 %v4593, %v4594
    %v4596 = vsub.s32 4294967266, %v4591
    %v4597 = vadd.s32 %v4596, 127
    %v4598 = vshll.u32 %v4597, 23
    %v4599 = vor.u32 4788187, %v4598
    %v4600 = vand.u32 2147483647, %v4599
    %v4602 = vcvt.s32.f32 %v4595
    %v4603 = vmul.f32 %v4602, %v4600
    %v4604 = vxor.u32 %v4603, 2147483648
    %v4605 = vsel %vm4522, %v4604, %v4603
    %v4606 = vsub.s32 4, %v4582
    %v4607 = vsel %vm4522, %v4606, %v4582
    %v4608 = vsel %vm4521, %v539, %v4605
    %v4609 = vsel %vm4521, 0, %v4607
    %v4610 = vcosq.f32.pop %v4608
    %v4611 = vsinq.f32.pop %v4608
    %vm4612 = vweird.f32 %v539
    %v4613 = vadd.s32 %v4609, 3
    %v4614 = vand.u32 %v4613, 3
    %vm4615 = vcmp.lt.s32.totalorder %v4614, 2
    %vm4616 = vcmp.eq.s32.totalorder %v4614, 0
    %v4617 = vxor.u32 %v4611, 2147483648
    %v4618 = vsel %vm4616, %v4610, %v4617
    %vm4619 = vcmp.eq.s32.totalorder %v4614, 2
    %v4620 = vxor.u32 %v4610, 2147483648
    %v4621 = vsel %vm4619, %v4620, %v4611
    %v4622 = vsel %vm4615, %v4618, %v4621
    %v4623 = vsel %vm4612, nan, %v4622
    %v4624 = vand.u32 2147483647, %v544
    %vm4625 = vcmp.le.f32.partialorder %v4624, 0.7853982
    %vm4626 = vcmp.lt.s32.totalorder %v544, 0
    %v4627 = vand.u32 %v544, 2139095040
    %v4628 = vshrl.u32 %v4627, 23
    %v4629 = vsub.s32 %v4628, 127
    %v4630 = vand.u32 2147483647, %v544
    %v4631 = vand.u32 %v4630, 8388607
    %v4632 = vor.u32 %v4631, 8388608
    %v4633 = vsub.s32 0, %v4632
    %v4634 = vadd.s32 %v4629, 1
    %vm4635 = vcmp.gt.s32.totalorder %v4634, 0
    %v4636 = vsel %vm4635, %v4634, 0
    %v4637 = vshrl.u32 %v4636, 5
    %v4638 = vand.u32 %v4636, 31
    %v4639 = vsub.s32 32, %v4638
    %v4640 = vshrl.u32 683565275, %v4639
    %v4641 = vshll.u32 683565275, %v4638
    %v4642 = vshrl.u32 2475754826, %v4639
    %v4643 = vor.u32 %v4641, %v4642
    %v4644 = vshll.u32 2475754826, %v4638
    %v4645 = vshrl.u32 2131351028, %v4639
    %v4646 = vor.u32 %v4644, %v4645
    %v4647 = vshll.u32 2131351028, %v4638
    %v4648 = vshrl.u32 2102212464, %v4639
    %v4649 = vor.u32 %v4647, %v4648
    %v4650 = vshll.u32 2102212464, %v4638
    %v4651 = vshrl.u32 920167782, %v4639
    %v4652 = vor.u32 %v4650, %v4651
    %v4653 = vshll.u32 920167782, %v4638
    %v4654 = vshrl.u32 1326507024, %v4639
    %v4655 = vor.u32 %v4653, %v4654
    %vm4656 = vcmp.lt.s32.totalorder %v4637, 1
    %vm4657 = vcmp.lt.s32.totalorder %v4637, 2
    %vm4658 = vcmp.lt.s32.totalorder %v4637, 3
    %vm4659 = vcmp.lt.s32.totalorder %v4637, 4
    %v4660 = vsel %vm4656, %v4640, %v4643
    %v4661 = vsel %vm4659, %v4649, 2102212464
    %v4662 = vsel %vm4658, %v4646, %v4661
    %v4663 = vsel %vm4657, %v4660, %v4662
    %v4664 = vsel %vm4656, %v4643, %v4646
    %v4665 = vsel %vm4659, %v4652, 920167782
    %v4666 = vsel %vm4658, %v4649, %v4665
    %v4667 = vsel %vm4657, %v4664, %v4666
    %v4668 = vsel %vm4656, %v4646, %v4649
    %v4669 = vsel %vm4659, %v4655, 1326507024
    %v4670 = vsel %vm4658, %v4652, %v4669
    %v4671 = vsel %vm4657, %v4668, %v4670
    %v4672 = vshll.u32 %v4632, 8
    %v4673 = vmul.u32.u64.compose %v4672, %v4671
    %v4674 = vextract.low.u32 %v4673
    %v4675 = vextract.high.u32 %v4673
    %v4676 = vmul.u32.u64.compose %v4672, %v4667
    %v4677 = vextract.low.u32 %v4676
    %v4678 = vextract.high.u32 %v4676
    %v4679 = vmul.u32 %v4672, %v4663
    %v4680 = vadd.s32 %v4675, %v4677
    %vm4681 = vc.u32 %v4675, %v4677
    %v4682 = vadd.s32 %v4678, 1
    %v4683 = vsel %vm4681, %v4682, %v4678
    %v4684 = vadd.s32 %v4679, %v4683
    %v4685 = vadd.s32 %v4684, 536870912
    %v4686 = vshrl.u32 %v4685, 30
    %v4687 = vshll.u32 %v4686, 30
    %v4688 = vsub.s32 %v4684, %v4687
    %vm4689 = vcmp.lt.s32.totalorder %v4688, 0
    %v4690 = vsub.s32 0, %v4688
    %v4691 = vsel %vm4689, %v4690, %v4688
    %v4692 = vclz %v4691
    %v4693 = vsub.s32 %v4692, 2
    %vm4694 = vcmp.gt.s32.totalorder 0, %v4693
    %v4695 = vsel %vm4694, 0, %v4693
    %v4696 = vsub.s32 32, %v4695
    %v4697 = vshll.u32 %v4688, %v4695
    %v4698 = vshrl.u32 %v4680, %v4696
    %v4699 = vor.u32 %v4697, %v4698
    %v4700 = vsub.s32 4294967266, %v4695
    %v4701 = vadd.s32 %v4700, 127
    %v4702 = vshll.u32 %v4701, 23
    %v4703 = vor.u32 4788187, %v4702
    %v4704 = vand.u32 2147483647, %v4703
    %v4706 = vcvt.s32.f32 %v4699
    %v4707 = vmul.f32 %v4706, %v4704
    %v4708 = vxor.u32 %v4707, 2147483648
    %v4709 = vsel %vm4626, %v4708, %v4707
    %v4710 = vsub.s32 4, %v4686
    %v4711 = vsel %vm4626, %v4710, %v4686
    %v4712 = vsel %vm4625, %v544, %v4709
    %v4713 = vsel %vm4625, 0, %v4711
    %v4714 = vcosq.f32.pop %v4712
    %v4715 = vsinq.f32.pop %v4712
    %vm4716 = vweird.f32 %v544
    %v4717 = vadd.s32 %v4713, 3
    %v4718 = vand.u32 %v4717, 3
    %vm4719 = vcmp.lt.s32.totalorder %v4718, 2
    %vm4720 = vcmp.eq.s32.totalorder %v4718, 0
    %v4721 = vxor.u32 %v4715, 2147483648
    %v4722 = vsel %vm4720, %v4714, %v4721
    %vm4723 = vcmp.eq.s32.totalorder %v4718, 2
    %v4724 = vxor.u32 %v4714, 2147483648
    %v4725 = vsel %vm4723, %v4724, %v4715
    %v4726 = vsel %vm4719, %v4722, %v4725
    %v4727 = vsel %vm4716, nan, %v4726
    %v4728 = vand.u32 2147483647, %v549
    %vm4729 = vcmp.le.f32.partialorder %v4728, 0.7853982
    %vm4730 = vcmp.lt.s32.totalorder %v549, 0
    %v4731 = vand.u32 %v549, 2139095040
    %v4732 = vshrl.u32 %v4731, 23
    %v4733 = vsub.s32 %v4732, 127
    %v4734 = vand.u32 2147483647, %v549
    %v4735 = vand.u32 %v4734, 8388607
    %v4736 = vor.u32 %v4735, 8388608
    %v4737 = vsub.s32 0, %v4736
    %v4738 = vadd.s32 %v4733, 1
    %vm4739 = vcmp.gt.s32.totalorder %v4738, 0
    %v4740 = vsel %vm4739, %v4738, 0
    %v4741 = vshrl.u32 %v4740, 5
    %v4742 = vand.u32 %v4740, 31
    %v4743 = vsub.s32 32, %v4742
    %v4744 = vshrl.u32 683565275, %v4743
    %v4745 = vshll.u32 683565275, %v4742
    %v4746 = vshrl.u32 2475754826, %v4743
    %v4747 = vor.u32 %v4745, %v4746
    %v4748 = vshll.u32 2475754826, %v4742
    %v4749 = vshrl.u32 2131351028, %v4743
    %v4750 = vor.u32 %v4748, %v4749
    %v4751 = vshll.u32 2131351028, %v4742
    %v4752 = vshrl.u32 2102212464, %v4743
    %v4753 = vor.u32 %v4751, %v4752
    %v4754 = vshll.u32 2102212464, %v4742
    %v4755 = vshrl.u32 920167782, %v4743
    %v4756 = vor.u32 %v4754, %v4755
    %v4757 = vshll.u32 920167782, %v4742
    %v4758 = vshrl.u32 1326507024, %v4743
    %v4759 = vor.u32 %v4757, %v4758
    %vm4760 = vcmp.lt.s32.totalorder %v4741, 1
    %vm4761 = vcmp.lt.s32.totalorder %v4741, 2
    %vm4762 = vcmp.lt.s32.totalorder %v4741, 3
    %vm4763 = vcmp.lt.s32.totalorder %v4741, 4
    %v4764 = vsel %vm4760, %v4744, %v4747
    %v4765 = vsel %vm4763, %v4753, 2102212464
    %v4766 = vsel %vm4762, %v4750, %v4765
    %v4767 = vsel %vm4761, %v4764, %v4766
    %v4768 = vsel %vm4760, %v4747, %v4750
    %v4769 = vsel %vm4763, %v4756, 920167782
    %v4770 = vsel %vm4762, %v4753, %v4769
    %v4771 = vsel %vm4761, %v4768, %v4770
    %v4772 = vsel %vm4760, %v4750, %v4753
    %v4773 = vsel %vm4763, %v4759, 1326507024
    %v4774 = vsel %vm4762, %v4756, %v4773
    %v4775 = vsel %vm4761, %v4772, %v4774
    %v4776 = vshll.u32 %v4736, 8
    %v4777 = vmul.u32.u64.compose %v4776, %v4775
    %v4778 = vextract.low.u32 %v4777
    %v4779 = vextract.high.u32 %v4777
    %v4780 = vmul.u32.u64.compose %v4776, %v4771
    %v4781 = vextract.low.u32 %v4780
    %v4782 = vextract.high.u32 %v4780
    %v4783 = vmul.u32 %v4776, %v4767
    %v4784 = vadd.s32 %v4779, %v4781
    %vm4785 = vc.u32 %v4779, %v4781
    %v4786 = vadd.s32 %v4782, 1
    %v4787 = vsel %vm4785, %v4786, %v4782
    %v4788 = vadd.s32 %v4783, %v4787
    %v4789 = vadd.s32 %v4788, 536870912
    %v4790 = vshrl.u32 %v4789, 30
    %v4791 = vshll.u32 %v4790, 30
    %v4792 = vsub.s32 %v4788, %v4791
    %vm4793 = vcmp.lt.s32.totalorder %v4792, 0
    %v4794 = vsub.s32 0, %v4792
    %v4795 = vsel %vm4793, %v4794, %v4792
    %v4796 = vclz %v4795
    %v4797 = vsub.s32 %v4796, 2
    %vm4798 = vcmp.gt.s32.totalorder 0, %v4797
    %v4799 = vsel %vm4798, 0, %v4797
    %v4800 = vsub.s32 32, %v4799
    %v4801 = vshll.u32 %v4792, %v4799
    %v4802 = vshrl.u32 %v4784, %v4800
    %v4803 = vor.u32 %v4801, %v4802
    %v4804 = vsub.s32 4294967266, %v4799
    %v4805 = vadd.s32 %v4804, 127
    %v4806 = vshll.u32 %v4805, 23
    %v4807 = vor.u32 4788187, %v4806
    %v4808 = vand.u32 2147483647, %v4807
    %v4810 = vcvt.s32.f32 %v4803
    %v4811 = vmul.f32 %v4810, %v4808
    %v4812 = vxor.u32 %v4811, 2147483648
    %v4813 = vsel %vm4730, %v4812, %v4811
    %v4814 = vsub.s32 4, %v4790
    %v4815 = vsel %vm4730, %v4814, %v4790
    %v4816 = vsel %vm4729, %v549, %v4813
    %v4817 = vsel %vm4729, 0, %v4815
    %v4818 = vcosq.f32.pop %v4816
    %v4819 = vsinq.f32.pop %v4816
    %vm4820 = vweird.f32 %v549
    %v4821 = vadd.s32 %v4817, 3
    %v4822 = vand.u32 %v4821, 3
    %vm4823 = vcmp.lt.s32.totalorder %v4822, 2
    %vm4824 = vcmp.eq.s32.totalorder %v4822, 0
    %v4825 = vxor.u32 %v4819, 2147483648
    %v4826 = vsel %vm4824, %v4818, %v4825
    %vm4827 = vcmp.eq.s32.totalorder %v4822, 2
    %v4828 = vxor.u32 %v4818, 2147483648
    %v4829 = vsel %vm4827, %v4828, %v4819
    %v4830 = vsel %vm4823, %v4826, %v4829
    %v4831 = vsel %vm4820, nan, %v4830
    %v4832 = vand.u32 2147483647, %v554
    %vm4833 = vcmp.le.f32.partialorder %v4832, 0.7853982
    %vm4834 = vcmp.lt.s32.totalorder %v554, 0
    %v4835 = vand.u32 %v554, 2139095040
    %v4836 = vshrl.u32 %v4835, 23
    %v4837 = vsub.s32 %v4836, 127
    %v4838 = vand.u32 2147483647, %v554
    %v4839 = vand.u32 %v4838, 8388607
    %v4840 = vor.u32 %v4839, 8388608
    %v4841 = vsub.s32 0, %v4840
    %v4842 = vadd.s32 %v4837, 1
    %vm4843 = vcmp.gt.s32.totalorder %v4842, 0
    %v4844 = vsel %vm4843, %v4842, 0
    %v4845 = vshrl.u32 %v4844, 5
    %v4846 = vand.u32 %v4844, 31
    %v4847 = vsub.s32 32, %v4846
    %v4848 = vshrl.u32 683565275, %v4847
    %v4849 = vshll.u32 683565275, %v4846
    %v4850 = vshrl.u32 2475754826, %v4847
    %v4851 = vor.u32 %v4849, %v4850
    %v4852 = vshll.u32 2475754826, %v4846
    %v4853 = vshrl.u32 2131351028, %v4847
    %v4854 = vor.u32 %v4852, %v4853
    %v4855 = vshll.u32 2131351028, %v4846
    %v4856 = vshrl.u32 2102212464, %v4847
    %v4857 = vor.u32 %v4855, %v4856
    %v4858 = vshll.u32 2102212464, %v4846
    %v4859 = vshrl.u32 920167782, %v4847
    %v4860 = vor.u32 %v4858, %v4859
    %v4861 = vshll.u32 920167782, %v4846
    %v4862 = vshrl.u32 1326507024, %v4847
    %v4863 = vor.u32 %v4861, %v4862
    %vm4864 = vcmp.lt.s32.totalorder %v4845, 1
    %vm4865 = vcmp.lt.s32.totalorder %v4845, 2
    %vm4866 = vcmp.lt.s32.totalorder %v4845, 3
    %vm4867 = vcmp.lt.s32.totalorder %v4845, 4
    %v4868 = vsel %vm4864, %v4848, %v4851
    %v4869 = vsel %vm4867, %v4857, 2102212464
    %v4870 = vsel %vm4866, %v4854, %v4869
    %v4871 = vsel %vm4865, %v4868, %v4870
    %v4872 = vsel %vm4864, %v4851, %v4854
    %v4873 = vsel %vm4867, %v4860, 920167782
    %v4874 = vsel %vm4866, %v4857, %v4873
    %v4875 = vsel %vm4865, %v4872, %v4874
    %v4876 = vsel %vm4864, %v4854, %v4857
    %v4877 = vsel %vm4867, %v4863, 1326507024
    %v4878 = vsel %vm4866, %v4860, %v4877
    %v4879 = vsel %vm4865, %v4876, %v4878
    %v4880 = vshll.u32 %v4840, 8
    %v4881 = vmul.u32.u64.compose %v4880, %v4879
    %v4882 = vextract.low.u32 %v4881
    %v4883 = vextract.high.u32 %v4881
    %v4884 = vmul.u32.u64.compose %v4880, %v4875
    %v4885 = vextract.low.u32 %v4884
    %v4886 = vextract.high.u32 %v4884
    %v4887 = vmul.u32 %v4880, %v4871
    %v4888 = vadd.s32 %v4883, %v4885
    %vm4889 = vc.u32 %v4883, %v4885
    %v4890 = vadd.s32 %v4886, 1
    %v4891 = vsel %vm4889, %v4890, %v4886
    %v4892 = vadd.s32 %v4887, %v4891
    %v4893 = vadd.s32 %v4892, 536870912
    %v4894 = vshrl.u32 %v4893, 30
    %v4895 = vshll.u32 %v4894, 30
    %v4896 = vsub.s32 %v4892, %v4895
    %vm4897 = vcmp.lt.s32.totalorder %v4896, 0
    %v4898 = vsub.s32 0, %v4896
    %v4899 = vsel %vm4897, %v4898, %v4896
    %v4900 = vclz %v4899
    %v4901 = vsub.s32 %v4900, 2
    %vm4902 = vcmp.gt.s32.totalorder 0, %v4901
    %v4903 = vsel %vm4902, 0, %v4901
    %v4904 = vsub.s32 32, %v4903
    %v4905 = vshll.u32 %v4896, %v4903
    %v4906 = vshrl.u32 %v4888, %v4904
    %v4907 = vor.u32 %v4905, %v4906
    %v4908 = vsub.s32 4294967266, %v4903
    %v4909 = vadd.s32 %v4908, 127
    %v4910 = vshll.u32 %v4909, 23
    %v4911 = vor.u32 4788187, %v4910
    %v4912 = vand.u32 2147483647, %v4911
    %v4914 = vcvt.s32.f32 %v4907
    %v4915 = vmul.f32 %v4914, %v4912
    %v4916 = vxor.u32 %v4915, 2147483648
    %v4917 = vsel %vm4834, %v4916, %v4915
    %v4918 = vsub.s32 4, %v4894
    %v4919 = vsel %vm4834, %v4918, %v4894
    %v4920 = vsel %vm4833, %v554, %v4917
    %v4921 = vsel %vm4833, 0, %v4919
    %v4922 = vcosq.f32.pop %v4920
    %v4923 = vsinq.f32.pop %v4920
    %vm4924 = vweird.f32 %v554
    %v4925 = vadd.s32 %v4921, 3
    %v4926 = vand.u32 %v4925, 3
    %vm4927 = vcmp.lt.s32.totalorder %v4926, 2
    %vm4928 = vcmp.eq.s32.totalorder %v4926, 0
    %v4929 = vxor.u32 %v4923, 2147483648
    %v4930 = vsel %vm4928, %v4922, %v4929
    %vm4931 = vcmp.eq.s32.totalorder %v4926, 2
    %v4932 = vxor.u32 %v4922, 2147483648
    %v4933 = vsel %vm4931, %v4932, %v4923
    %v4934 = vsel %vm4927, %v4930, %v4933
    %v4935 = vsel %vm4924, nan, %v4934
    %v4936 = vand.u32 2147483647, %v559
    %vm4937 = vcmp.le.f32.partialorder %v4936, 0.7853982
    %vm4938 = vcmp.lt.s32.totalorder %v559, 0
    %v4939 = vand.u32 %v559, 2139095040
    %v4940 = vshrl.u32 %v4939, 23
    %v4941 = vsub.s32 %v4940, 127
    %v4942 = vand.u32 2147483647, %v559
    %v4943 = vand.u32 %v4942, 8388607
    %v4944 = vor.u32 %v4943, 8388608
    %v4945 = vsub.s32 0, %v4944
    %v4946 = vadd.s32 %v4941, 1
    %vm4947 = vcmp.gt.s32.totalorder %v4946, 0
    %v4948 = vsel %vm4947, %v4946, 0
    %v4949 = vshrl.u32 %v4948, 5
    %v4950 = vand.u32 %v4948, 31
    %v4951 = vsub.s32 32, %v4950
    %v4952 = vshrl.u32 683565275, %v4951
    %v4953 = vshll.u32 683565275, %v4950
    %v4954 = vshrl.u32 2475754826, %v4951
    %v4955 = vor.u32 %v4953, %v4954
    %v4956 = vshll.u32 2475754826, %v4950
    %v4957 = vshrl.u32 2131351028, %v4951
    %v4958 = vor.u32 %v4956, %v4957
    %v4959 = vshll.u32 2131351028, %v4950
    %v4960 = vshrl.u32 2102212464, %v4951
    %v4961 = vor.u32 %v4959, %v4960
    %v4962 = vshll.u32 2102212464, %v4950
    %v4963 = vshrl.u32 920167782, %v4951
    %v4964 = vor.u32 %v4962, %v4963
    %v4965 = vshll.u32 920167782, %v4950
    %v4966 = vshrl.u32 1326507024, %v4951
    %v4967 = vor.u32 %v4965, %v4966
    %vm4968 = vcmp.lt.s32.totalorder %v4949, 1
    %vm4969 = vcmp.lt.s32.totalorder %v4949, 2
    %vm4970 = vcmp.lt.s32.totalorder %v4949, 3
    %vm4971 = vcmp.lt.s32.totalorder %v4949, 4
    %v4972 = vsel %vm4968, %v4952, %v4955
    %v4973 = vsel %vm4971, %v4961, 2102212464
    %v4974 = vsel %vm4970, %v4958, %v4973
    %v4975 = vsel %vm4969, %v4972, %v4974
    %v4976 = vsel %vm4968, %v4955, %v4958
    %v4977 = vsel %vm4971, %v4964, 920167782
    %v4978 = vsel %vm4970, %v4961, %v4977
    %v4979 = vsel %vm4969, %v4976, %v4978
    %v4980 = vsel %vm4968, %v4958, %v4961
    %v4981 = vsel %vm4971, %v4967, 1326507024
    %v4982 = vsel %vm4970, %v4964, %v4981
    %v4983 = vsel %vm4969, %v4980, %v4982
    %v4984 = vshll.u32 %v4944, 8
    %v4985 = vmul.u32.u64.compose %v4984, %v4983
    %v4986 = vextract.low.u32 %v4985
    %v4987 = vextract.high.u32 %v4985
    %v4988 = vmul.u32.u64.compose %v4984, %v4979
    %v4989 = vextract.low.u32 %v4988
    %v4990 = vextract.high.u32 %v4988
    %v4991 = vmul.u32 %v4984, %v4975
    %v4992 = vadd.s32 %v4987, %v4989
    %vm4993 = vc.u32 %v4987, %v4989
    %v4994 = vadd.s32 %v4990, 1
    %v4995 = vsel %vm4993, %v4994, %v4990
    %v4996 = vadd.s32 %v4991, %v4995
    %v4997 = vadd.s32 %v4996, 536870912
    %v4998 = vshrl.u32 %v4997, 30
    %v4999 = vshll.u32 %v4998, 30
    %v5000 = vsub.s32 %v4996, %v4999
    %vm5001 = vcmp.lt.s32.totalorder %v5000, 0
    %v5002 = vsub.s32 0, %v5000
    %v5003 = vsel %vm5001, %v5002, %v5000
    %v5004 = vclz %v5003
    %v5005 = vsub.s32 %v5004, 2
    %vm5006 = vcmp.gt.s32.totalorder 0, %v5005
    %v5007 = vsel %vm5006, 0, %v5005
    %v5008 = vsub.s32 32, %v5007
    %v5009 = vshll.u32 %v5000, %v5007
    %v5010 = vshrl.u32 %v4992, %v5008
    %v5011 = vor.u32 %v5009, %v5010
    %v5012 = vsub.s32 4294967266, %v5007
    %v5013 = vadd.s32 %v5012, 127
    %v5014 = vshll.u32 %v5013, 23
    %v5015 = vor.u32 4788187, %v5014
    %v5016 = vand.u32 2147483647, %v5015
    %v5018 = vcvt.s32.f32 %v5011
    %v5019 = vmul.f32 %v5018, %v5016
    %v5020 = vxor.u32 %v5019, 2147483648
    %v5021 = vsel %vm4938, %v5020, %v5019
    %v5022 = vsub.s32 4, %v4998
    %v5023 = vsel %vm4938, %v5022, %v4998
    %v5024 = vsel %vm4937, %v559, %v5021
    %v5025 = vsel %vm4937, 0, %v5023
    %v5026 = vcosq.f32.pop %v5024
    %v5027 = vsinq.f32.pop %v5024
    %vm5028 = vweird.f32 %v559
    %v5029 = vadd.s32 %v5025, 3
    %v5030 = vand.u32 %v5029, 3
    %vm5031 = vcmp.lt.s32.totalorder %v5030, 2
    %vm5032 = vcmp.eq.s32.totalorder %v5030, 0
    %v5033 = vxor.u32 %v5027, 2147483648
    %v5034 = vsel %vm5032, %v5026, %v5033
    %vm5035 = vcmp.eq.s32.totalorder %v5030, 2
    %v5036 = vxor.u32 %v5026, 2147483648
    %v5037 = vsel %vm5035, %v5036, %v5027
    %v5038 = vsel %vm5031, %v5034, %v5037
    %v5039 = vsel %vm5028, nan, %v5038
    %v5040 = vand.u32 2147483647, %v564
    %vm5041 = vcmp.le.f32.partialorder %v5040, 0.7853982
    %vm5042 = vcmp.lt.s32.totalorder %v564, 0
    %v5043 = vand.u32 %v564, 2139095040
    %v5044 = vshrl.u32 %v5043, 23
    %v5045 = vsub.s32 %v5044, 127
    %v5046 = vand.u32 2147483647, %v564
    %v5047 = vand.u32 %v5046, 8388607
    %v5048 = vor.u32 %v5047, 8388608
    %v5049 = vsub.s32 0, %v5048
    %v5050 = vadd.s32 %v5045, 1
    %vm5051 = vcmp.gt.s32.totalorder %v5050, 0
    %v5052 = vsel %vm5051, %v5050, 0
    %v5053 = vshrl.u32 %v5052, 5
    %v5054 = vand.u32 %v5052, 31
    %v5055 = vsub.s32 32, %v5054
    %v5056 = vshrl.u32 683565275, %v5055
    %v5057 = vshll.u32 683565275, %v5054
    %v5058 = vshrl.u32 2475754826, %v5055
    %v5059 = vor.u32 %v5057, %v5058
    %v5060 = vshll.u32 2475754826, %v5054
    %v5061 = vshrl.u32 2131351028, %v5055
    %v5062 = vor.u32 %v5060, %v5061
    %v5063 = vshll.u32 2131351028, %v5054
    %v5064 = vshrl.u32 2102212464, %v5055
    %v5065 = vor.u32 %v5063, %v5064
    %v5066 = vshll.u32 2102212464, %v5054
    %v5067 = vshrl.u32 920167782, %v5055
    %v5068 = vor.u32 %v5066, %v5067
    %v5069 = vshll.u32 920167782, %v5054
    %v5070 = vshrl.u32 1326507024, %v5055
    %v5071 = vor.u32 %v5069, %v5070
    %vm5072 = vcmp.lt.s32.totalorder %v5053, 1
    %vm5073 = vcmp.lt.s32.totalorder %v5053, 2
    %vm5074 = vcmp.lt.s32.totalorder %v5053, 3
    %vm5075 = vcmp.lt.s32.totalorder %v5053, 4
    %v5076 = vsel %vm5072, %v5056, %v5059
    %v5077 = vsel %vm5075, %v5065, 2102212464
    %v5078 = vsel %vm5074, %v5062, %v5077
    %v5079 = vsel %vm5073, %v5076, %v5078
    %v5080 = vsel %vm5072, %v5059, %v5062
    %v5081 = vsel %vm5075, %v5068, 920167782
    %v5082 = vsel %vm5074, %v5065, %v5081
    %v5083 = vsel %vm5073, %v5080, %v5082
    %v5084 = vsel %vm5072, %v5062, %v5065
    %v5085 = vsel %vm5075, %v5071, 1326507024
    %v5086 = vsel %vm5074, %v5068, %v5085
    %v5087 = vsel %vm5073, %v5084, %v5086
    %v5088 = vshll.u32 %v5048, 8
    %v5089 = vmul.u32.u64.compose %v5088, %v5087
    %v5090 = vextract.low.u32 %v5089
    %v5091 = vextract.high.u32 %v5089
    %v5092 = vmul.u32.u64.compose %v5088, %v5083
    %v5093 = vextract.low.u32 %v5092
    %v5094 = vextract.high.u32 %v5092
    %v5095 = vmul.u32 %v5088, %v5079
    %v5096 = vadd.s32 %v5091, %v5093
    %vm5097 = vc.u32 %v5091, %v5093
    %v5098 = vadd.s32 %v5094, 1
    %v5099 = vsel %vm5097, %v5098, %v5094
    %v5100 = vadd.s32 %v5095, %v5099
    %v5101 = vadd.s32 %v5100, 536870912
    %v5102 = vshrl.u32 %v5101, 30
    %v5103 = vshll.u32 %v5102, 30
    %v5104 = vsub.s32 %v5100, %v5103
    %vm5105 = vcmp.lt.s32.totalorder %v5104, 0
    %v5106 = vsub.s32 0, %v5104
    %v5107 = vsel %vm5105, %v5106, %v5104
    %v5108 = vclz %v5107
    %v5109 = vsub.s32 %v5108, 2
    %vm5110 = vcmp.gt.s32.totalorder 0, %v5109
    %v5111 = vsel %vm5110, 0, %v5109
    %v5112 = vsub.s32 32, %v5111
    %v5113 = vshll.u32 %v5104, %v5111
    %v5114 = vshrl.u32 %v5096, %v5112
    %v5115 = vor.u32 %v5113, %v5114
    %v5116 = vsub.s32 4294967266, %v5111
    %v5117 = vadd.s32 %v5116, 127
    %v5118 = vshll.u32 %v5117, 23
    %v5119 = vor.u32 4788187, %v5118
    %v5120 = vand.u32 2147483647, %v5119
    %v5122 = vcvt.s32.f32 %v5115
    %v5123 = vmul.f32 %v5122, %v5120
    %v5124 = vxor.u32 %v5123, 2147483648
    %v5125 = vsel %vm5042, %v5124, %v5123
    %v5126 = vsub.s32 4, %v5102
    %v5127 = vsel %vm5042, %v5126, %v5102
    %v5128 = vsel %vm5041, %v564, %v5125
    %v5129 = vsel %vm5041, 0, %v5127
    %v5130 = vcosq.f32.pop %v5128
    %v5131 = vsinq.f32.pop %v5128
    %vm5132 = vweird.f32 %v564
    %v5133 = vadd.s32 %v5129, 3
    %v5134 = vand.u32 %v5133, 3
    %vm5135 = vcmp.lt.s32.totalorder %v5134, 2
    %vm5136 = vcmp.eq.s32.totalorder %v5134, 0
    %v5137 = vxor.u32 %v5131, 2147483648
    %v5138 = vsel %vm5136, %v5130, %v5137
    %vm5139 = vcmp.eq.s32.totalorder %v5134, 2
    %v5140 = vxor.u32 %v5130, 2147483648
    %v5141 = vsel %vm5139, %v5140, %v5131
    %v5142 = vsel %vm5135, %v5138, %v5141
    %v5143 = vsel %vm5132, nan, %v5142
    %v5144 = vand.u32 2147483647, %v569
    %vm5145 = vcmp.le.f32.partialorder %v5144, 0.7853982
    %vm5146 = vcmp.lt.s32.totalorder %v569, 0
    %v5147 = vand.u32 %v569, 2139095040
    %v5148 = vshrl.u32 %v5147, 23
    %v5149 = vsub.s32 %v5148, 127
    %v5150 = vand.u32 2147483647, %v569
    %v5151 = vand.u32 %v5150, 8388607
    %v5152 = vor.u32 %v5151, 8388608
    %v5153 = vsub.s32 0, %v5152
    %v5154 = vadd.s32 %v5149, 1
    %vm5155 = vcmp.gt.s32.totalorder %v5154, 0
    %v5156 = vsel %vm5155, %v5154, 0
    %v5157 = vshrl.u32 %v5156, 5
    %v5158 = vand.u32 %v5156, 31
    %v5159 = vsub.s32 32, %v5158
    %v5160 = vshrl.u32 683565275, %v5159
    %v5161 = vshll.u32 683565275, %v5158
    %v5162 = vshrl.u32 2475754826, %v5159
    %v5163 = vor.u32 %v5161, %v5162
    %v5164 = vshll.u32 2475754826, %v5158
    %v5165 = vshrl.u32 2131351028, %v5159
    %v5166 = vor.u32 %v5164, %v5165
    %v5167 = vshll.u32 2131351028, %v5158
    %v5168 = vshrl.u32 2102212464, %v5159
    %v5169 = vor.u32 %v5167, %v5168
    %v5170 = vshll.u32 2102212464, %v5158
    %v5171 = vshrl.u32 920167782, %v5159
    %v5172 = vor.u32 %v5170, %v5171
    %v5173 = vshll.u32 920167782, %v5158
    %v5174 = vshrl.u32 1326507024, %v5159
    %v5175 = vor.u32 %v5173, %v5174
    %vm5176 = vcmp.lt.s32.totalorder %v5157, 1
    %vm5177 = vcmp.lt.s32.totalorder %v5157, 2
    %vm5178 = vcmp.lt.s32.totalorder %v5157, 3
    %vm5179 = vcmp.lt.s32.totalorder %v5157, 4
    %v5180 = vsel %vm5176, %v5160, %v5163
    %v5181 = vsel %vm5179, %v5169, 2102212464
    %v5182 = vsel %vm5178, %v5166, %v5181
    %v5183 = vsel %vm5177, %v5180, %v5182
    %v5184 = vsel %vm5176, %v5163, %v5166
    %v5185 = vsel %vm5179, %v5172, 920167782
    %v5186 = vsel %vm5178, %v5169, %v5185
    %v5187 = vsel %vm5177, %v5184, %v5186
    %v5188 = vsel %vm5176, %v5166, %v5169
    %v5189 = vsel %vm5179, %v5175, 1326507024
    %v5190 = vsel %vm5178, %v5172, %v5189
    %v5191 = vsel %vm5177, %v5188, %v5190
    %v5192 = vshll.u32 %v5152, 8
    %v5193 = vmul.u32.u64.compose %v5192, %v5191
    %v5194 = vextract.low.u32 %v5193
    %v5195 = vextract.high.u32 %v5193
    %v5196 = vmul.u32.u64.compose %v5192, %v5187
    %v5197 = vextract.low.u32 %v5196
    %v5198 = vextract.high.u32 %v5196
    %v5199 = vmul.u32 %v5192, %v5183
    %v5200 = vadd.s32 %v5195, %v5197
    %vm5201 = vc.u32 %v5195, %v5197
    %v5202 = vadd.s32 %v5198, 1
    %v5203 = vsel %vm5201, %v5202, %v5198
    %v5204 = vadd.s32 %v5199, %v5203
    %v5205 = vadd.s32 %v5204, 536870912
    %v5206 = vshrl.u32 %v5205, 30
    %v5207 = vshll.u32 %v5206, 30
    %v5208 = vsub.s32 %v5204, %v5207
    %vm5209 = vcmp.lt.s32.totalorder %v5208, 0
    %v5210 = vsub.s32 0, %v5208
    %v5211 = vsel %vm5209, %v5210, %v5208
    %v5212 = vclz %v5211
    %v5213 = vsub.s32 %v5212, 2
    %vm5214 = vcmp.gt.s32.totalorder 0, %v5213
    %v5215 = vsel %vm5214, 0, %v5213
    %v5216 = vsub.s32 32, %v5215
    %v5217 = vshll.u32 %v5208, %v5215
    %v5218 = vshrl.u32 %v5200, %v5216
    %v5219 = vor.u32 %v5217, %v5218
    %v5220 = vsub.s32 4294967266, %v5215
    %v5221 = vadd.s32 %v5220, 127
    %v5222 = vshll.u32 %v5221, 23
    %v5223 = vor.u32 4788187, %v5222
    %v5224 = vand.u32 2147483647, %v5223
    %v5226 = vcvt.s32.f32 %v5219
    %v5227 = vmul.f32 %v5226, %v5224
    %v5228 = vxor.u32 %v5227, 2147483648
    %v5229 = vsel %vm5146, %v5228, %v5227
    %v5230 = vsub.s32 4, %v5206
    %v5231 = vsel %vm5146, %v5230, %v5206
    %v5232 = vsel %vm5145, %v569, %v5229
    %v5233 = vsel %vm5145, 0, %v5231
    %v5234 = vcosq.f32.pop %v5232
    %v5235 = vsinq.f32.pop %v5232
    %vm5236 = vweird.f32 %v569
    %v5237 = vadd.s32 %v5233, 3
    %v5238 = vand.u32 %v5237, 3
    %vm5239 = vcmp.lt.s32.totalorder %v5238, 2
    %vm5240 = vcmp.eq.s32.totalorder %v5238, 0
    %v5241 = vxor.u32 %v5235, 2147483648
    %v5242 = vsel %vm5240, %v5234, %v5241
    %vm5243 = vcmp.eq.s32.totalorder %v5238, 2
    %v5244 = vxor.u32 %v5234, 2147483648
    %v5245 = vsel %vm5243, %v5244, %v5235
    %v5246 = vsel %vm5239, %v5242, %v5245
    %v5247 = vsel %vm5236, nan, %v5246
    %v5248 = vand.u32 2147483647, %v574
    %vm5249 = vcmp.le.f32.partialorder %v5248, 0.7853982
    %vm5250 = vcmp.lt.s32.totalorder %v574, 0
    %v5251 = vand.u32 %v574, 2139095040
    %v5252 = vshrl.u32 %v5251, 23
    %v5253 = vsub.s32 %v5252, 127
    %v5254 = vand.u32 2147483647, %v574
    %v5255 = vand.u32 %v5254, 8388607
    %v5256 = vor.u32 %v5255, 8388608
    %v5257 = vsub.s32 0, %v5256
    %v5258 = vadd.s32 %v5253, 1
    %vm5259 = vcmp.gt.s32.totalorder %v5258, 0
    %v5260 = vsel %vm5259, %v5258, 0
    %v5261 = vshrl.u32 %v5260, 5
    %v5262 = vand.u32 %v5260, 31
    %v5263 = vsub.s32 32, %v5262
    %v5264 = vshrl.u32 683565275, %v5263
    %v5265 = vshll.u32 683565275, %v5262
    %v5266 = vshrl.u32 2475754826, %v5263
    %v5267 = vor.u32 %v5265, %v5266
    %v5268 = vshll.u32 2475754826, %v5262
    %v5269 = vshrl.u32 2131351028, %v5263
    %v5270 = vor.u32 %v5268, %v5269
    %v5271 = vshll.u32 2131351028, %v5262
    %v5272 = vshrl.u32 2102212464, %v5263
    %v5273 = vor.u32 %v5271, %v5272
    %v5274 = vshll.u32 2102212464, %v5262
    %v5275 = vshrl.u32 920167782, %v5263
    %v5276 = vor.u32 %v5274, %v5275
    %v5277 = vshll.u32 920167782, %v5262
    %v5278 = vshrl.u32 1326507024, %v5263
    %v5279 = vor.u32 %v5277, %v5278
    %vm5280 = vcmp.lt.s32.totalorder %v5261, 1
    %vm5281 = vcmp.lt.s32.totalorder %v5261, 2
    %vm5282 = vcmp.lt.s32.totalorder %v5261, 3
    %vm5283 = vcmp.lt.s32.totalorder %v5261, 4
    %v5284 = vsel %vm5280, %v5264, %v5267
    %v5285 = vsel %vm5283, %v5273, 2102212464
    %v5286 = vsel %vm5282, %v5270, %v5285
    %v5287 = vsel %vm5281, %v5284, %v5286
    %v5288 = vsel %vm5280, %v5267, %v5270
    %v5289 = vsel %vm5283, %v5276, 920167782
    %v5290 = vsel %vm5282, %v5273, %v5289
    %v5291 = vsel %vm5281, %v5288, %v5290
    %v5292 = vsel %vm5280, %v5270, %v5273
    %v5293 = vsel %vm5283, %v5279, 1326507024
    %v5294 = vsel %vm5282, %v5276, %v5293
    %v5295 = vsel %vm5281, %v5292, %v5294
    %v5296 = vshll.u32 %v5256, 8
    %v5297 = vmul.u32.u64.compose %v5296, %v5295
    %v5298 = vextract.low.u32 %v5297
    %v5299 = vextract.high.u32 %v5297
    %v5300 = vmul.u32.u64.compose %v5296, %v5291
    %v5301 = vextract.low.u32 %v5300
    %v5302 = vextract.high.u32 %v5300
    %v5303 = vmul.u32 %v5296, %v5287
    %v5304 = vadd.s32 %v5299, %v5301
    %vm5305 = vc.u32 %v5299, %v5301
    %v5306 = vadd.s32 %v5302, 1
    %v5307 = vsel %vm5305, %v5306, %v5302
    %v5308 = vadd.s32 %v5303, %v5307
    %v5309 = vadd.s32 %v5308, 536870912
    %v5310 = vshrl.u32 %v5309, 30
    %v5311 = vshll.u32 %v5310, 30
    %v5312 = vsub.s32 %v5308, %v5311
    %vm5313 = vcmp.lt.s32.totalorder %v5312, 0
    %v5314 = vsub.s32 0, %v5312
    %v5315 = vsel %vm5313, %v5314, %v5312
    %v5316 = vclz %v5315
    %v5317 = vsub.s32 %v5316, 2
    %vm5318 = vcmp.gt.s32.totalorder 0, %v5317
    %v5319 = vsel %vm5318, 0, %v5317
    %v5320 = vsub.s32 32, %v5319
    %v5321 = vshll.u32 %v5312, %v5319
    %v5322 = vshrl.u32 %v5304, %v5320
    %v5323 = vor.u32 %v5321, %v5322
    %v5324 = vsub.s32 4294967266, %v5319
    %v5325 = vadd.s32 %v5324, 127
    %v5326 = vshll.u32 %v5325, 23
    %v5327 = vor.u32 4788187, %v5326
    %v5328 = vand.u32 2147483647, %v5327
    %v5330 = vcvt.s32.f32 %v5323
    %v5331 = vmul.f32 %v5330, %v5328
    %v5332 = vxor.u32 %v5331, 2147483648
    %v5333 = vsel %vm5250, %v5332, %v5331
    %v5334 = vsub.s32 4, %v5310
    %v5335 = vsel %vm5250, %v5334, %v5310
    %v5336 = vsel %vm5249, %v574, %v5333
    %v5337 = vsel %vm5249, 0, %v5335
    %v5338 = vcosq.f32.pop %v5336
    %v5339 = vsinq.f32.pop %v5336
    %vm5340 = vweird.f32 %v574
    %v5341 = vadd.s32 %v5337, 3
    %v5342 = vand.u32 %v5341, 3
    %vm5343 = vcmp.lt.s32.totalorder %v5342, 2
    %vm5344 = vcmp.eq.s32.totalorder %v5342, 0
    %v5345 = vxor.u32 %v5339, 2147483648
    %v5346 = vsel %vm5344, %v5338, %v5345
    %vm5347 = vcmp.eq.s32.totalorder %v5342, 2
    %v5348 = vxor.u32 %v5338, 2147483648
    %v5349 = vsel %vm5347, %v5348, %v5339
    %v5350 = vsel %vm5343, %v5346, %v5349
    %v5351 = vsel %vm5340, nan, %v5350
    %v5352 = vand.u32 2147483647, %v579
    %vm5353 = vcmp.le.f32.partialorder %v5352, 0.7853982
    %vm5354 = vcmp.lt.s32.totalorder %v579, 0
    %v5355 = vand.u32 %v579, 2139095040
    %v5356 = vshrl.u32 %v5355, 23
    %v5357 = vsub.s32 %v5356, 127
    %v5358 = vand.u32 2147483647, %v579
    %v5359 = vand.u32 %v5358, 8388607
    %v5360 = vor.u32 %v5359, 8388608
    %v5361 = vsub.s32 0, %v5360
    %v5362 = vadd.s32 %v5357, 1
    %vm5363 = vcmp.gt.s32.totalorder %v5362, 0
    %v5364 = vsel %vm5363, %v5362, 0
    %v5365 = vshrl.u32 %v5364, 5
    %v5366 = vand.u32 %v5364, 31
    %v5367 = vsub.s32 32, %v5366
    %v5368 = vshrl.u32 683565275, %v5367
    %v5369 = vshll.u32 683565275, %v5366
    %v5370 = vshrl.u32 2475754826, %v5367
    %v5371 = vor.u32 %v5369, %v5370
    %v5372 = vshll.u32 2475754826, %v5366
    %v5373 = vshrl.u32 2131351028, %v5367
    %v5374 = vor.u32 %v5372, %v5373
    %v5375 = vshll.u32 2131351028, %v5366
    %v5376 = vshrl.u32 2102212464, %v5367
    %v5377 = vor.u32 %v5375, %v5376
    %v5378 = vshll.u32 2102212464, %v5366
    %v5379 = vshrl.u32 920167782, %v5367
    %v5380 = vor.u32 %v5378, %v5379
    %v5381 = vshll.u32 920167782, %v5366
    %v5382 = vshrl.u32 1326507024, %v5367
    %v5383 = vor.u32 %v5381, %v5382
    %vm5384 = vcmp.lt.s32.totalorder %v5365, 1
    %vm5385 = vcmp.lt.s32.totalorder %v5365, 2
    %vm5386 = vcmp.lt.s32.totalorder %v5365, 3
    %vm5387 = vcmp.lt.s32.totalorder %v5365, 4
    %v5388 = vsel %vm5384, %v5368, %v5371
    %v5389 = vsel %vm5387, %v5377, 2102212464
    %v5390 = vsel %vm5386, %v5374, %v5389
    %v5391 = vsel %vm5385, %v5388, %v5390
    %v5392 = vsel %vm5384, %v5371, %v5374
    %v5393 = vsel %vm5387, %v5380, 920167782
    %v5394 = vsel %vm5386, %v5377, %v5393
    %v5395 = vsel %vm5385, %v5392, %v5394
    %v5396 = vsel %vm5384, %v5374, %v5377
    %v5397 = vsel %vm5387, %v5383, 1326507024
    %v5398 = vsel %vm5386, %v5380, %v5397
    %v5399 = vsel %vm5385, %v5396, %v5398
    %v5400 = vshll.u32 %v5360, 8
    %v5401 = vmul.u32.u64.compose %v5400, %v5399
    %v5402 = vextract.low.u32 %v5401
    %v5403 = vextract.high.u32 %v5401
    %v5404 = vmul.u32.u64.compose %v5400, %v5395
    %v5405 = vextract.low.u32 %v5404
    %v5406 = vextract.high.u32 %v5404
    %v5407 = vmul.u32 %v5400, %v5391
    %v5408 = vadd.s32 %v5403, %v5405
    %vm5409 = vc.u32 %v5403, %v5405
    %v5410 = vadd.s32 %v5406, 1
    %v5411 = vsel %vm5409, %v5410, %v5406
    %v5412 = vadd.s32 %v5407, %v5411
    %v5413 = vadd.s32 %v5412, 536870912
    %v5414 = vshrl.u32 %v5413, 30
    %v5415 = vshll.u32 %v5414, 30
    %v5416 = vsub.s32 %v5412, %v5415
    %vm5417 = vcmp.lt.s32.totalorder %v5416, 0
    %v5418 = vsub.s32 0, %v5416
    %v5419 = vsel %vm5417, %v5418, %v5416
    %v5420 = vclz %v5419
    %v5421 = vsub.s32 %v5420, 2
    %vm5422 = vcmp.gt.s32.totalorder 0, %v5421
    %v5423 = vsel %vm5422, 0, %v5421
    %v5424 = vsub.s32 32, %v5423
    %v5425 = vshll.u32 %v5416, %v5423
    %v5426 = vshrl.u32 %v5408, %v5424
    %v5427 = vor.u32 %v5425, %v5426
    %v5428 = vsub.s32 4294967266, %v5423
    %v5429 = vadd.s32 %v5428, 127
    %v5430 = vshll.u32 %v5429, 23
    %v5431 = vor.u32 4788187, %v5430
    %v5432 = vand.u32 2147483647, %v5431
    %v5434 = vcvt.s32.f32 %v5427
    %v5435 = vmul.f32 %v5434, %v5432
    %v5436 = vxor.u32 %v5435, 2147483648
    %v5437 = vsel %vm5354, %v5436, %v5435
    %v5438 = vsub.s32 4, %v5414
    %v5439 = vsel %vm5354, %v5438, %v5414
    %v5440 = vsel %vm5353, %v579, %v5437
    %v5441 = vsel %vm5353, 0, %v5439
    %v5442 = vcosq.f32.pop %v5440
    %v5443 = vsinq.f32.pop %v5440
    %vm5444 = vweird.f32 %v579
    %v5445 = vadd.s32 %v5441, 3
    %v5446 = vand.u32 %v5445, 3
    %vm5447 = vcmp.lt.s32.totalorder %v5446, 2
    %vm5448 = vcmp.eq.s32.totalorder %v5446, 0
    %v5449 = vxor.u32 %v5443, 2147483648
    %v5450 = vsel %vm5448, %v5442, %v5449
    %vm5451 = vcmp.eq.s32.totalorder %v5446, 2
    %v5452 = vxor.u32 %v5442, 2147483648
    %v5453 = vsel %vm5451, %v5452, %v5443
    %v5454 = vsel %vm5447, %v5450, %v5453
    %v5455 = vsel %vm5444, nan, %v5454
    %v5456 = vand.u32 2147483647, %v584
    %vm5457 = vcmp.le.f32.partialorder %v5456, 0.7853982
    %vm5458 = vcmp.lt.s32.totalorder %v584, 0
    %v5459 = vand.u32 %v584, 2139095040
    %v5460 = vshrl.u32 %v5459, 23
    %v5461 = vsub.s32 %v5460, 127
    %v5462 = vand.u32 2147483647, %v584
    %v5463 = vand.u32 %v5462, 8388607
    %v5464 = vor.u32 %v5463, 8388608
    %v5465 = vsub.s32 0, %v5464
    %v5466 = vadd.s32 %v5461, 1
    %vm5467 = vcmp.gt.s32.totalorder %v5466, 0
    %v5468 = vsel %vm5467, %v5466, 0
    %v5469 = vshrl.u32 %v5468, 5
    %v5470 = vand.u32 %v5468, 31
    %v5471 = vsub.s32 32, %v5470
    %v5472 = vshrl.u32 683565275, %v5471
    %v5473 = vshll.u32 683565275, %v5470
    %v5474 = vshrl.u32 2475754826, %v5471
    %v5475 = vor.u32 %v5473, %v5474
    %v5476 = vshll.u32 2475754826, %v5470
    %v5477 = vshrl.u32 2131351028, %v5471
    %v5478 = vor.u32 %v5476, %v5477
    %v5479 = vshll.u32 2131351028, %v5470
    %v5480 = vshrl.u32 2102212464, %v5471
    %v5481 = vor.u32 %v5479, %v5480
    %v5482 = vshll.u32 2102212464, %v5470
    %v5483 = vshrl.u32 920167782, %v5471
    %v5484 = vor.u32 %v5482, %v5483
    %v5485 = vshll.u32 920167782, %v5470
    %v5486 = vshrl.u32 1326507024, %v5471
    %v5487 = vor.u32 %v5485, %v5486
    %vm5488 = vcmp.lt.s32.totalorder %v5469, 1
    %vm5489 = vcmp.lt.s32.totalorder %v5469, 2
    %vm5490 = vcmp.lt.s32.totalorder %v5469, 3
    %vm5491 = vcmp.lt.s32.totalorder %v5469, 4
    %v5492 = vsel %vm5488, %v5472, %v5475
    %v5493 = vsel %vm5491, %v5481, 2102212464
    %v5494 = vsel %vm5490, %v5478, %v5493
    %v5495 = vsel %vm5489, %v5492, %v5494
    %v5496 = vsel %vm5488, %v5475, %v5478
    %v5497 = vsel %vm5491, %v5484, 920167782
    %v5498 = vsel %vm5490, %v5481, %v5497
    %v5499 = vsel %vm5489, %v5496, %v5498
    %v5500 = vsel %vm5488, %v5478, %v5481
    %v5501 = vsel %vm5491, %v5487, 1326507024
    %v5502 = vsel %vm5490, %v5484, %v5501
    %v5503 = vsel %vm5489, %v5500, %v5502
    %v5504 = vshll.u32 %v5464, 8
    %v5505 = vmul.u32.u64.compose %v5504, %v5503
    %v5506 = vextract.low.u32 %v5505
    %v5507 = vextract.high.u32 %v5505
    %v5508 = vmul.u32.u64.compose %v5504, %v5499
    %v5509 = vextract.low.u32 %v5508
    %v5510 = vextract.high.u32 %v5508
    %v5511 = vmul.u32 %v5504, %v5495
    %v5512 = vadd.s32 %v5507, %v5509
    %vm5513 = vc.u32 %v5507, %v5509
    %v5514 = vadd.s32 %v5510, 1
    %v5515 = vsel %vm5513, %v5514, %v5510
    %v5516 = vadd.s32 %v5511, %v5515
    %v5517 = vadd.s32 %v5516, 536870912
    %v5518 = vshrl.u32 %v5517, 30
    %v5519 = vshll.u32 %v5518, 30
    %v5520 = vsub.s32 %v5516, %v5519
    %vm5521 = vcmp.lt.s32.totalorder %v5520, 0
    %v5522 = vsub.s32 0, %v5520
    %v5523 = vsel %vm5521, %v5522, %v5520
    %v5524 = vclz %v5523
    %v5525 = vsub.s32 %v5524, 2
    %vm5526 = vcmp.gt.s32.totalorder 0, %v5525
    %v5527 = vsel %vm5526, 0, %v5525
    %v5528 = vsub.s32 32, %v5527
    %v5529 = vshll.u32 %v5520, %v5527
    %v5530 = vshrl.u32 %v5512, %v5528
    %v5531 = vor.u32 %v5529, %v5530
    %v5532 = vsub.s32 4294967266, %v5527
    %v5533 = vadd.s32 %v5532, 127
    %v5534 = vshll.u32 %v5533, 23
    %v5535 = vor.u32 4788187, %v5534
    %v5536 = vand.u32 2147483647, %v5535
    %v5538 = vcvt.s32.f32 %v5531
    %v5539 = vmul.f32 %v5538, %v5536
    %v5540 = vxor.u32 %v5539, 2147483648
    %v5541 = vsel %vm5458, %v5540, %v5539
    %v5542 = vsub.s32 4, %v5518
    %v5543 = vsel %vm5458, %v5542, %v5518
    %v5544 = vsel %vm5457, %v584, %v5541
    %v5545 = vsel %vm5457, 0, %v5543
    %v5546 = vcosq.f32.pop %v5544
    %v5547 = vsinq.f32.pop %v5544
    %vm5548 = vweird.f32 %v584
    %v5549 = vadd.s32 %v5545, 3
    %v5550 = vand.u32 %v5549, 3
    %vm5551 = vcmp.lt.s32.totalorder %v5550, 2
    %vm5552 = vcmp.eq.s32.totalorder %v5550, 0
    %v5553 = vxor.u32 %v5547, 2147483648
    %v5554 = vsel %vm5552, %v5546, %v5553
    %vm5555 = vcmp.eq.s32.totalorder %v5550, 2
    %v5556 = vxor.u32 %v5546, 2147483648
    %v5557 = vsel %vm5555, %v5556, %v5547
    %v5558 = vsel %vm5551, %v5554, %v5557
    %v5559 = vsel %vm5548, nan, %v5558
    %v5560 = vand.u32 2147483647, %v589
    %vm5561 = vcmp.le.f32.partialorder %v5560, 0.7853982
    %vm5562 = vcmp.lt.s32.totalorder %v589, 0
    %v5563 = vand.u32 %v589, 2139095040
    %v5564 = vshrl.u32 %v5563, 23
    %v5565 = vsub.s32 %v5564, 127
    %v5566 = vand.u32 2147483647, %v589
    %v5567 = vand.u32 %v5566, 8388607
    %v5568 = vor.u32 %v5567, 8388608
    %v5569 = vsub.s32 0, %v5568
    %v5570 = vadd.s32 %v5565, 1
    %vm5571 = vcmp.gt.s32.totalorder %v5570, 0
    %v5572 = vsel %vm5571, %v5570, 0
    %v5573 = vshrl.u32 %v5572, 5
    %v5574 = vand.u32 %v5572, 31
    %v5575 = vsub.s32 32, %v5574
    %v5576 = vshrl.u32 683565275, %v5575
    %v5577 = vshll.u32 683565275, %v5574
    %v5578 = vshrl.u32 2475754826, %v5575
    %v5579 = vor.u32 %v5577, %v5578
    %v5580 = vshll.u32 2475754826, %v5574
    %v5581 = vshrl.u32 2131351028, %v5575
    %v5582 = vor.u32 %v5580, %v5581
    %v5583 = vshll.u32 2131351028, %v5574
    %v5584 = vshrl.u32 2102212464, %v5575
    %v5585 = vor.u32 %v5583, %v5584
    %v5586 = vshll.u32 2102212464, %v5574
    %v5587 = vshrl.u32 920167782, %v5575
    %v5588 = vor.u32 %v5586, %v5587
    %v5589 = vshll.u32 920167782, %v5574
    %v5590 = vshrl.u32 1326507024, %v5575
    %v5591 = vor.u32 %v5589, %v5590
    %vm5592 = vcmp.lt.s32.totalorder %v5573, 1
    %vm5593 = vcmp.lt.s32.totalorder %v5573, 2
    %vm5594 = vcmp.lt.s32.totalorder %v5573, 3
    %vm5595 = vcmp.lt.s32.totalorder %v5573, 4
    %v5596 = vsel %vm5592, %v5576, %v5579
    %v5597 = vsel %vm5595, %v5585, 2102212464
    %v5598 = vsel %vm5594, %v5582, %v5597
    %v5599 = vsel %vm5593, %v5596, %v5598
    %v5600 = vsel %vm5592, %v5579, %v5582
    %v5601 = vsel %vm5595, %v5588, 920167782
    %v5602 = vsel %vm5594, %v5585, %v5601
    %v5603 = vsel %vm5593, %v5600, %v5602
    %v5604 = vsel %vm5592, %v5582, %v5585
    %v5605 = vsel %vm5595, %v5591, 1326507024
    %v5606 = vsel %vm5594, %v5588, %v5605
    %v5607 = vsel %vm5593, %v5604, %v5606
    %v5608 = vshll.u32 %v5568, 8
    %v5609 = vmul.u32.u64.compose %v5608, %v5607
    %v5610 = vextract.low.u32 %v5609
    %v5611 = vextract.high.u32 %v5609
    %v5612 = vmul.u32.u64.compose %v5608, %v5603
    %v5613 = vextract.low.u32 %v5612
    %v5614 = vextract.high.u32 %v5612
    %v5615 = vmul.u32 %v5608, %v5599
    %v5616 = vadd.s32 %v5611, %v5613
    %vm5617 = vc.u32 %v5611, %v5613
    %v5618 = vadd.s32 %v5614, 1
    %v5619 = vsel %vm5617, %v5618, %v5614
    %v5620 = vadd.s32 %v5615, %v5619
    %v5621 = vadd.s32 %v5620, 536870912
    %v5622 = vshrl.u32 %v5621, 30
    %v5623 = vshll.u32 %v5622, 30
    %v5624 = vsub.s32 %v5620, %v5623
    %vm5625 = vcmp.lt.s32.totalorder %v5624, 0
    %v5626 = vsub.s32 0, %v5624
    %v5627 = vsel %vm5625, %v5626, %v5624
    %v5628 = vclz %v5627
    %v5629 = vsub.s32 %v5628, 2
    %vm5630 = vcmp.gt.s32.totalorder 0, %v5629
    %v5631 = vsel %vm5630, 0, %v5629
    %v5632 = vsub.s32 32, %v5631
    %v5633 = vshll.u32 %v5624, %v5631
    %v5634 = vshrl.u32 %v5616, %v5632
    %v5635 = vor.u32 %v5633, %v5634
    %v5636 = vsub.s32 4294967266, %v5631
    %v5637 = vadd.s32 %v5636, 127
    %v5638 = vshll.u32 %v5637, 23
    %v5639 = vor.u32 4788187, %v5638
    %v5640 = vand.u32 2147483647, %v5639
    %v5642 = vcvt.s32.f32 %v5635
    %v5643 = vmul.f32 %v5642, %v5640
    %v5644 = vxor.u32 %v5643, 2147483648
    %v5645 = vsel %vm5562, %v5644, %v5643
    %v5646 = vsub.s32 4, %v5622
    %v5647 = vsel %vm5562, %v5646, %v5622
    %v5648 = vsel %vm5561, %v589, %v5645
    %v5649 = vsel %vm5561, 0, %v5647
    %v5650 = vcosq.f32.pop %v5648
    %v5651 = vsinq.f32.pop %v5648
    %vm5652 = vweird.f32 %v589
    %v5653 = vadd.s32 %v5649, 3
    %v5654 = vand.u32 %v5653, 3
    %vm5655 = vcmp.lt.s32.totalorder %v5654, 2
    %vm5656 = vcmp.eq.s32.totalorder %v5654, 0
    %v5657 = vxor.u32 %v5651, 2147483648
    %v5658 = vsel %vm5656, %v5650, %v5657
    %vm5659 = vcmp.eq.s32.totalorder %v5654, 2
    %v5660 = vxor.u32 %v5650, 2147483648
    %v5661 = vsel %vm5659, %v5660, %v5651
    %v5662 = vsel %vm5655, %v5658, %v5661
    %v5663 = vsel %vm5652, nan, %v5662
    %v5664 = vand.u32 2147483647, %v594
    %vm5665 = vcmp.le.f32.partialorder %v5664, 0.7853982
    %vm5666 = vcmp.lt.s32.totalorder %v594, 0
    %v5667 = vand.u32 %v594, 2139095040
    %v5668 = vshrl.u32 %v5667, 23
    %v5669 = vsub.s32 %v5668, 127
    %v5670 = vand.u32 2147483647, %v594
    %v5671 = vand.u32 %v5670, 8388607
    %v5672 = vor.u32 %v5671, 8388608
    %v5673 = vsub.s32 0, %v5672
    %v5674 = vadd.s32 %v5669, 1
    %vm5675 = vcmp.gt.s32.totalorder %v5674, 0
    %v5676 = vsel %vm5675, %v5674, 0
    %v5677 = vshrl.u32 %v5676, 5
    %v5678 = vand.u32 %v5676, 31
    %v5679 = vsub.s32 32, %v5678
    %v5680 = vshrl.u32 683565275, %v5679
    %v5681 = vshll.u32 683565275, %v5678
    %v5682 = vshrl.u32 2475754826, %v5679
    %v5683 = vor.u32 %v5681, %v5682
    %v5684 = vshll.u32 2475754826, %v5678
    %v5685 = vshrl.u32 2131351028, %v5679
    %v5686 = vor.u32 %v5684, %v5685
    %v5687 = vshll.u32 2131351028, %v5678
    %v5688 = vshrl.u32 2102212464, %v5679
    %v5689 = vor.u32 %v5687, %v5688
    %v5690 = vshll.u32 2102212464, %v5678
    %v5691 = vshrl.u32 920167782, %v5679
    %v5692 = vor.u32 %v5690, %v5691
    %v5693 = vshll.u32 920167782, %v5678
    %v5694 = vshrl.u32 1326507024, %v5679
    %v5695 = vor.u32 %v5693, %v5694
    %vm5696 = vcmp.lt.s32.totalorder %v5677, 1
    %vm5697 = vcmp.lt.s32.totalorder %v5677, 2
    %vm5698 = vcmp.lt.s32.totalorder %v5677, 3
    %vm5699 = vcmp.lt.s32.totalorder %v5677, 4
    %v5700 = vsel %vm5696, %v5680, %v5683
    %v5701 = vsel %vm5699, %v5689, 2102212464
    %v5702 = vsel %vm5698, %v5686, %v5701
    %v5703 = vsel %vm5697, %v5700, %v5702
    %v5704 = vsel %vm5696, %v5683, %v5686
    %v5705 = vsel %vm5699, %v5692, 920167782
    %v5706 = vsel %vm5698, %v5689, %v5705
    %v5707 = vsel %vm5697, %v5704, %v5706
    %v5708 = vsel %vm5696, %v5686, %v5689
    %v5709 = vsel %vm5699, %v5695, 1326507024
    %v5710 = vsel %vm5698, %v5692, %v5709
    %v5711 = vsel %vm5697, %v5708, %v5710
    %v5712 = vshll.u32 %v5672, 8
    %v5713 = vmul.u32.u64.compose %v5712, %v5711
    %v5714 = vextract.low.u32 %v5713
    %v5715 = vextract.high.u32 %v5713
    %v5716 = vmul.u32.u64.compose %v5712, %v5707
    %v5717 = vextract.low.u32 %v5716
    %v5718 = vextract.high.u32 %v5716
    %v5719 = vmul.u32 %v5712, %v5703
    %v5720 = vadd.s32 %v5715, %v5717
    %vm5721 = vc.u32 %v5715, %v5717
    %v5722 = vadd.s32 %v5718, 1
    %v5723 = vsel %vm5721, %v5722, %v5718
    %v5724 = vadd.s32 %v5719, %v5723
    %v5725 = vadd.s32 %v5724, 536870912
    %v5726 = vshrl.u32 %v5725, 30
    %v5727 = vshll.u32 %v5726, 30
    %v5728 = vsub.s32 %v5724, %v5727
    %vm5729 = vcmp.lt.s32.totalorder %v5728, 0
    %v5730 = vsub.s32 0, %v5728
    %v5731 = vsel %vm5729, %v5730, %v5728
    %v5732 = vclz %v5731
    %v5733 = vsub.s32 %v5732, 2
    %vm5734 = vcmp.gt.s32.totalorder 0, %v5733
    %v5735 = vsel %vm5734, 0, %v5733
    %v5736 = vsub.s32 32, %v5735
    %v5737 = vshll.u32 %v5728, %v5735
    %v5738 = vshrl.u32 %v5720, %v5736
    %v5739 = vor.u32 %v5737, %v5738
    %v5740 = vsub.s32 4294967266, %v5735
    %v5741 = vadd.s32 %v5740, 127
    %v5742 = vshll.u32 %v5741, 23
    %v5743 = vor.u32 4788187, %v5742
    %v5744 = vand.u32 2147483647, %v5743
    %v5746 = vcvt.s32.f32 %v5739
    %v5747 = vmul.f32 %v5746, %v5744
    %v5748 = vxor.u32 %v5747, 2147483648
    %v5749 = vsel %vm5666, %v5748, %v5747
    %v5750 = vsub.s32 4, %v5726
    %v5751 = vsel %vm5666, %v5750, %v5726
    %v5752 = vsel %vm5665, %v594, %v5749
    %v5753 = vsel %vm5665, 0, %v5751
    %v5754 = vcosq.f32.pop %v5752
    %v5755 = vsinq.f32.pop %v5752
    %vm5756 = vweird.f32 %v594
    %v5757 = vadd.s32 %v5753, 3
    %v5758 = vand.u32 %v5757, 3
    %vm5759 = vcmp.lt.s32.totalorder %v5758, 2
    %vm5760 = vcmp.eq.s32.totalorder %v5758, 0
    %v5761 = vxor.u32 %v5755, 2147483648
    %v5762 = vsel %vm5760, %v5754, %v5761
    %vm5763 = vcmp.eq.s32.totalorder %v5758, 2
    %v5764 = vxor.u32 %v5754, 2147483648
    %v5765 = vsel %vm5763, %v5764, %v5755
    %v5766 = vsel %vm5759, %v5762, %v5765
    %v5767 = vsel %vm5756, nan, %v5766
    %v5768 = vand.u32 2147483647, %v599
    %vm5769 = vcmp.le.f32.partialorder %v5768, 0.7853982
    %vm5770 = vcmp.lt.s32.totalorder %v599, 0
    %v5771 = vand.u32 %v599, 2139095040
    %v5772 = vshrl.u32 %v5771, 23
    %v5773 = vsub.s32 %v5772, 127
    %v5774 = vand.u32 2147483647, %v599
    %v5775 = vand.u32 %v5774, 8388607
    %v5776 = vor.u32 %v5775, 8388608
    %v5777 = vsub.s32 0, %v5776
    %v5778 = vadd.s32 %v5773, 1
    %vm5779 = vcmp.gt.s32.totalorder %v5778, 0
    %v5780 = vsel %vm5779, %v5778, 0
    %v5781 = vshrl.u32 %v5780, 5
    %v5782 = vand.u32 %v5780, 31
    %v5783 = vsub.s32 32, %v5782
    %v5784 = vshrl.u32 683565275, %v5783
    %v5785 = vshll.u32 683565275, %v5782
    %v5786 = vshrl.u32 2475754826, %v5783
    %v5787 = vor.u32 %v5785, %v5786
    %v5788 = vshll.u32 2475754826, %v5782
    %v5789 = vshrl.u32 2131351028, %v5783
    %v5790 = vor.u32 %v5788, %v5789
    %v5791 = vshll.u32 2131351028, %v5782
    %v5792 = vshrl.u32 2102212464, %v5783
    %v5793 = vor.u32 %v5791, %v5792
    %v5794 = vshll.u32 2102212464, %v5782
    %v5795 = vshrl.u32 920167782, %v5783
    %v5796 = vor.u32 %v5794, %v5795
    %v5797 = vshll.u32 920167782, %v5782
    %v5798 = vshrl.u32 1326507024, %v5783
    %v5799 = vor.u32 %v5797, %v5798
    %vm5800 = vcmp.lt.s32.totalorder %v5781, 1
    %vm5801 = vcmp.lt.s32.totalorder %v5781, 2
    %vm5802 = vcmp.lt.s32.totalorder %v5781, 3
    %vm5803 = vcmp.lt.s32.totalorder %v5781, 4
    %v5804 = vsel %vm5800, %v5784, %v5787
    %v5805 = vsel %vm5803, %v5793, 2102212464
    %v5806 = vsel %vm5802, %v5790, %v5805
    %v5807 = vsel %vm5801, %v5804, %v5806
    %v5808 = vsel %vm5800, %v5787, %v5790
    %v5809 = vsel %vm5803, %v5796, 920167782
    %v5810 = vsel %vm5802, %v5793, %v5809
    %v5811 = vsel %vm5801, %v5808, %v5810
    %v5812 = vsel %vm5800, %v5790, %v5793
    %v5813 = vsel %vm5803, %v5799, 1326507024
    %v5814 = vsel %vm5802, %v5796, %v5813
    %v5815 = vsel %vm5801, %v5812, %v5814
    %v5816 = vshll.u32 %v5776, 8
    %v5817 = vmul.u32.u64.compose %v5816, %v5815
    %v5818 = vextract.low.u32 %v5817
    %v5819 = vextract.high.u32 %v5817
    %v5820 = vmul.u32.u64.compose %v5816, %v5811
    %v5821 = vextract.low.u32 %v5820
    %v5822 = vextract.high.u32 %v5820
    %v5823 = vmul.u32 %v5816, %v5807
    %v5824 = vadd.s32 %v5819, %v5821
    %vm5825 = vc.u32 %v5819, %v5821
    %v5826 = vadd.s32 %v5822, 1
    %v5827 = vsel %vm5825, %v5826, %v5822
    %v5828 = vadd.s32 %v5823, %v5827
    %v5829 = vadd.s32 %v5828, 536870912
    %v5830 = vshrl.u32 %v5829, 30
    %v5831 = vshll.u32 %v5830, 30
    %v5832 = vsub.s32 %v5828, %v5831
    %vm5833 = vcmp.lt.s32.totalorder %v5832, 0
    %v5834 = vsub.s32 0, %v5832
    %v5835 = vsel %vm5833, %v5834, %v5832
    %v5836 = vclz %v5835
    %v5837 = vsub.s32 %v5836, 2
    %vm5838 = vcmp.gt.s32.totalorder 0, %v5837
    %v5839 = vsel %vm5838, 0, %v5837
    %v5840 = vsub.s32 32, %v5839
    %v5841 = vshll.u32 %v5832, %v5839
    %v5842 = vshrl.u32 %v5824, %v5840
    %v5843 = vor.u32 %v5841, %v5842
    %v5844 = vsub.s32 4294967266, %v5839
    %v5845 = vadd.s32 %v5844, 127
    %v5846 = vshll.u32 %v5845, 23
    %v5847 = vor.u32 4788187, %v5846
    %v5848 = vand.u32 2147483647, %v5847
    %v5850 = vcvt.s32.f32 %v5843
    %v5851 = vmul.f32 %v5850, %v5848
    %v5852 = vxor.u32 %v5851, 2147483648
    %v5853 = vsel %vm5770, %v5852, %v5851
    %v5854 = vsub.s32 4, %v5830
    %v5855 = vsel %vm5770, %v5854, %v5830
    %v5856 = vsel %vm5769, %v599, %v5853
    %v5857 = vsel %vm5769, 0, %v5855
    %v5858 = vcosq.f32.pop %v5856
    %v5859 = vsinq.f32.pop %v5856
    %vm5860 = vweird.f32 %v599
    %v5861 = vadd.s32 %v5857, 3
    %v5862 = vand.u32 %v5861, 3
    %vm5863 = vcmp.lt.s32.totalorder %v5862, 2
    %vm5864 = vcmp.eq.s32.totalorder %v5862, 0
    %v5865 = vxor.u32 %v5859, 2147483648
    %v5866 = vsel %vm5864, %v5858, %v5865
    %vm5867 = vcmp.eq.s32.totalorder %v5862, 2
    %v5868 = vxor.u32 %v5858, 2147483648
    %v5869 = vsel %vm5867, %v5868, %v5859
    %v5870 = vsel %vm5863, %v5866, %v5869
    %v5871 = vsel %vm5860, nan, %v5870
    %v5872 = vand.u32 2147483647, %v604
    %vm5873 = vcmp.le.f32.partialorder %v5872, 0.7853982
    %vm5874 = vcmp.lt.s32.totalorder %v604, 0
    %v5875 = vand.u32 %v604, 2139095040
    %v5876 = vshrl.u32 %v5875, 23
    %v5877 = vsub.s32 %v5876, 127
    %v5878 = vand.u32 2147483647, %v604
    %v5879 = vand.u32 %v5878, 8388607
    %v5880 = vor.u32 %v5879, 8388608
    %v5881 = vsub.s32 0, %v5880
    %v5882 = vadd.s32 %v5877, 1
    %vm5883 = vcmp.gt.s32.totalorder %v5882, 0
    %v5884 = vsel %vm5883, %v5882, 0
    %v5885 = vshrl.u32 %v5884, 5
    %v5886 = vand.u32 %v5884, 31
    %v5887 = vsub.s32 32, %v5886
    %v5888 = vshrl.u32 683565275, %v5887
    %v5889 = vshll.u32 683565275, %v5886
    %v5890 = vshrl.u32 2475754826, %v5887
    %v5891 = vor.u32 %v5889, %v5890
    %v5892 = vshll.u32 2475754826, %v5886
    %v5893 = vshrl.u32 2131351028, %v5887
    %v5894 = vor.u32 %v5892, %v5893
    %v5895 = vshll.u32 2131351028, %v5886
    %v5896 = vshrl.u32 2102212464, %v5887
    %v5897 = vor.u32 %v5895, %v5896
    %v5898 = vshll.u32 2102212464, %v5886
    %v5899 = vshrl.u32 920167782, %v5887
    %v5900 = vor.u32 %v5898, %v5899
    %v5901 = vshll.u32 920167782, %v5886
    %v5902 = vshrl.u32 1326507024, %v5887
    %v5903 = vor.u32 %v5901, %v5902
    %vm5904 = vcmp.lt.s32.totalorder %v5885, 1
    %vm5905 = vcmp.lt.s32.totalorder %v5885, 2
    %vm5906 = vcmp.lt.s32.totalorder %v5885, 3
    %vm5907 = vcmp.lt.s32.totalorder %v5885, 4
    %v5908 = vsel %vm5904, %v5888, %v5891
    %v5909 = vsel %vm5907, %v5897, 2102212464
    %v5910 = vsel %vm5906, %v5894, %v5909
    %v5911 = vsel %vm5905, %v5908, %v5910
    %v5912 = vsel %vm5904, %v5891, %v5894
    %v5913 = vsel %vm5907, %v5900, 920167782
    %v5914 = vsel %vm5906, %v5897, %v5913
    %v5915 = vsel %vm5905, %v5912, %v5914
    %v5916 = vsel %vm5904, %v5894, %v5897
    %v5917 = vsel %vm5907, %v5903, 1326507024
    %v5918 = vsel %vm5906, %v5900, %v5917
    %v5919 = vsel %vm5905, %v5916, %v5918
    %v5920 = vshll.u32 %v5880, 8
    %v5921 = vmul.u32.u64.compose %v5920, %v5919
    %v5922 = vextract.low.u32 %v5921
    %v5923 = vextract.high.u32 %v5921
    %v5924 = vmul.u32.u64.compose %v5920, %v5915
    %v5925 = vextract.low.u32 %v5924
    %v5926 = vextract.high.u32 %v5924
    %v5927 = vmul.u32 %v5920, %v5911
    %v5928 = vadd.s32 %v5923, %v5925
    %vm5929 = vc.u32 %v5923, %v5925
    %v5930 = vadd.s32 %v5926, 1
    %v5931 = vsel %vm5929, %v5930, %v5926
    %v5932 = vadd.s32 %v5927, %v5931
    %v5933 = vadd.s32 %v5932, 536870912
    %v5934 = vshrl.u32 %v5933, 30
    %v5935 = vshll.u32 %v5934, 30
    %v5936 = vsub.s32 %v5932, %v5935
    %vm5937 = vcmp.lt.s32.totalorder %v5936, 0
    %v5938 = vsub.s32 0, %v5936
    %v5939 = vsel %vm5937, %v5938, %v5936
    %v5940 = vclz %v5939
    %v5941 = vsub.s32 %v5940, 2
    %vm5942 = vcmp.gt.s32.totalorder 0, %v5941
    %v5943 = vsel %vm5942, 0, %v5941
    %v5944 = vsub.s32 32, %v5943
    %v5945 = vshll.u32 %v5936, %v5943
    %v5946 = vshrl.u32 %v5928, %v5944
    %v5947 = vor.u32 %v5945, %v5946
    %v5948 = vsub.s32 4294967266, %v5943
    %v5949 = vadd.s32 %v5948, 127
    %v5950 = vshll.u32 %v5949, 23
    %v5951 = vor.u32 4788187, %v5950
    %v5952 = vand.u32 2147483647, %v5951
    %v5954 = vcvt.s32.f32 %v5947
    %v5955 = vmul.f32 %v5954, %v5952
    %v5956 = vxor.u32 %v5955, 2147483648
    %v5957 = vsel %vm5874, %v5956, %v5955
    %v5958 = vsub.s32 4, %v5934
    %v5959 = vsel %vm5874, %v5958, %v5934
    %v5960 = vsel %vm5873, %v604, %v5957
    %v5961 = vsel %vm5873, 0, %v5959
    %v5962 = vcosq.f32.pop %v5960
    %v5963 = vsinq.f32.pop %v5960
    %vm5964 = vweird.f32 %v604
    %v5965 = vadd.s32 %v5961, 3
    %v5966 = vand.u32 %v5965, 3
    %vm5967 = vcmp.lt.s32.totalorder %v5966, 2
    %vm5968 = vcmp.eq.s32.totalorder %v5966, 0
    %v5969 = vxor.u32 %v5963, 2147483648
    %v5970 = vsel %vm5968, %v5962, %v5969
    %vm5971 = vcmp.eq.s32.totalorder %v5966, 2
    %v5972 = vxor.u32 %v5962, 2147483648
    %v5973 = vsel %vm5971, %v5972, %v5963
    %v5974 = vsel %vm5967, %v5970, %v5973
    %v5975 = vsel %vm5964, nan, %v5974
    %v5976 = vand.u32 2147483647, %v609
    %vm5977 = vcmp.le.f32.partialorder %v5976, 0.7853982
    %vm5978 = vcmp.lt.s32.totalorder %v609, 0
    %v5979 = vand.u32 %v609, 2139095040
    %v5980 = vshrl.u32 %v5979, 23
    %v5981 = vsub.s32 %v5980, 127
    %v5982 = vand.u32 2147483647, %v609
    %v5983 = vand.u32 %v5982, 8388607
    %v5984 = vor.u32 %v5983, 8388608
    %v5985 = vsub.s32 0, %v5984
    %v5986 = vadd.s32 %v5981, 1
    %vm5987 = vcmp.gt.s32.totalorder %v5986, 0
    %v5988 = vsel %vm5987, %v5986, 0
    %v5989 = vshrl.u32 %v5988, 5
    %v5990 = vand.u32 %v5988, 31
    %v5991 = vsub.s32 32, %v5990
    %v5992 = vshrl.u32 683565275, %v5991
    %v5993 = vshll.u32 683565275, %v5990
    %v5994 = vshrl.u32 2475754826, %v5991
    %v5995 = vor.u32 %v5993, %v5994
    %v5996 = vshll.u32 2475754826, %v5990
    %v5997 = vshrl.u32 2131351028, %v5991
    %v5998 = vor.u32 %v5996, %v5997
    %v5999 = vshll.u32 2131351028, %v5990
    %v6000 = vshrl.u32 2102212464, %v5991
    %v6001 = vor.u32 %v5999, %v6000
    %v6002 = vshll.u32 2102212464, %v5990
    %v6003 = vshrl.u32 920167782, %v5991
    %v6004 = vor.u32 %v6002, %v6003
    %v6005 = vshll.u32 920167782, %v5990
    %v6006 = vshrl.u32 1326507024, %v5991
    %v6007 = vor.u32 %v6005, %v6006
    %vm6008 = vcmp.lt.s32.totalorder %v5989, 1
    %vm6009 = vcmp.lt.s32.totalorder %v5989, 2
    %vm6010 = vcmp.lt.s32.totalorder %v5989, 3
    %vm6011 = vcmp.lt.s32.totalorder %v5989, 4
    %v6012 = vsel %vm6008, %v5992, %v5995
    %v6013 = vsel %vm6011, %v6001, 2102212464
    %v6014 = vsel %vm6010, %v5998, %v6013
    %v6015 = vsel %vm6009, %v6012, %v6014
    %v6016 = vsel %vm6008, %v5995, %v5998
    %v6017 = vsel %vm6011, %v6004, 920167782
    %v6018 = vsel %vm6010, %v6001, %v6017
    %v6019 = vsel %vm6009, %v6016, %v6018
    %v6020 = vsel %vm6008, %v5998, %v6001
    %v6021 = vsel %vm6011, %v6007, 1326507024
    %v6022 = vsel %vm6010, %v6004, %v6021
    %v6023 = vsel %vm6009, %v6020, %v6022
    %v6024 = vshll.u32 %v5984, 8
    %v6025 = vmul.u32.u64.compose %v6024, %v6023
    %v6026 = vextract.low.u32 %v6025
    %v6027 = vextract.high.u32 %v6025
    %v6028 = vmul.u32.u64.compose %v6024, %v6019
    %v6029 = vextract.low.u32 %v6028
    %v6030 = vextract.high.u32 %v6028
    %v6031 = vmul.u32 %v6024, %v6015
    %v6032 = vadd.s32 %v6027, %v6029
    %vm6033 = vc.u32 %v6027, %v6029
    %v6034 = vadd.s32 %v6030, 1
    %v6035 = vsel %vm6033, %v6034, %v6030
    %v6036 = vadd.s32 %v6031, %v6035
    %v6037 = vadd.s32 %v6036, 536870912
    %v6038 = vshrl.u32 %v6037, 30
    %v6039 = vshll.u32 %v6038, 30
    %v6040 = vsub.s32 %v6036, %v6039
    %vm6041 = vcmp.lt.s32.totalorder %v6040, 0
    %v6042 = vsub.s32 0, %v6040
    %v6043 = vsel %vm6041, %v6042, %v6040
    %v6044 = vclz %v6043
    %v6045 = vsub.s32 %v6044, 2
    %vm6046 = vcmp.gt.s32.totalorder 0, %v6045
    %v6047 = vsel %vm6046, 0, %v6045
    %v6048 = vsub.s32 32, %v6047
    %v6049 = vshll.u32 %v6040, %v6047
    %v6050 = vshrl.u32 %v6032, %v6048
    %v6051 = vor.u32 %v6049, %v6050
    %v6052 = vsub.s32 4294967266, %v6047
    %v6053 = vadd.s32 %v6052, 127
    %v6054 = vshll.u32 %v6053, 23
    %v6055 = vor.u32 4788187, %v6054
    %v6056 = vand.u32 2147483647, %v6055
    %v6058 = vcvt.s32.f32 %v6051
    %v6059 = vmul.f32 %v6058, %v6056
    %v6060 = vxor.u32 %v6059, 2147483648
    %v6061 = vsel %vm5978, %v6060, %v6059
    %v6062 = vsub.s32 4, %v6038
    %v6063 = vsel %vm5978, %v6062, %v6038
    %v6064 = vsel %vm5977, %v609, %v6061
    %v6065 = vsel %vm5977, 0, %v6063
    %v6066 = vcosq.f32.pop %v6064
    %v6067 = vsinq.f32.pop %v6064
    %vm6068 = vweird.f32 %v609
    %v6069 = vadd.s32 %v6065, 3
    %v6070 = vand.u32 %v6069, 3
    %vm6071 = vcmp.lt.s32.totalorder %v6070, 2
    %vm6072 = vcmp.eq.s32.totalorder %v6070, 0
    %v6073 = vxor.u32 %v6067, 2147483648
    %v6074 = vsel %vm6072, %v6066, %v6073
    %vm6075 = vcmp.eq.s32.totalorder %v6070, 2
    %v6076 = vxor.u32 %v6066, 2147483648
    %v6077 = vsel %vm6075, %v6076, %v6067
    %v6078 = vsel %vm6071, %v6074, %v6077
    %v6079 = vsel %vm6068, nan, %v6078
    %v6080 = vand.u32 2147483647, %v614
    %vm6081 = vcmp.le.f32.partialorder %v6080, 0.7853982
    %vm6082 = vcmp.lt.s32.totalorder %v614, 0
    %v6083 = vand.u32 %v614, 2139095040
    %v6084 = vshrl.u32 %v6083, 23
    %v6085 = vsub.s32 %v6084, 127
    %v6086 = vand.u32 2147483647, %v614
    %v6087 = vand.u32 %v6086, 8388607
    %v6088 = vor.u32 %v6087, 8388608
    %v6089 = vsub.s32 0, %v6088
    %v6090 = vadd.s32 %v6085, 1
    %vm6091 = vcmp.gt.s32.totalorder %v6090, 0
    %v6092 = vsel %vm6091, %v6090, 0
    %v6093 = vshrl.u32 %v6092, 5
    %v6094 = vand.u32 %v6092, 31
    %v6095 = vsub.s32 32, %v6094
    %v6096 = vshrl.u32 683565275, %v6095
    %v6097 = vshll.u32 683565275, %v6094
    %v6098 = vshrl.u32 2475754826, %v6095
    %v6099 = vor.u32 %v6097, %v6098
    %v6100 = vshll.u32 2475754826, %v6094
    %v6101 = vshrl.u32 2131351028, %v6095
    %v6102 = vor.u32 %v6100, %v6101
    %v6103 = vshll.u32 2131351028, %v6094
    %v6104 = vshrl.u32 2102212464, %v6095
    %v6105 = vor.u32 %v6103, %v6104
    %v6106 = vshll.u32 2102212464, %v6094
    %v6107 = vshrl.u32 920167782, %v6095
    %v6108 = vor.u32 %v6106, %v6107
    %v6109 = vshll.u32 920167782, %v6094
    %v6110 = vshrl.u32 1326507024, %v6095
    %v6111 = vor.u32 %v6109, %v6110
    %vm6112 = vcmp.lt.s32.totalorder %v6093, 1
    %vm6113 = vcmp.lt.s32.totalorder %v6093, 2
    %vm6114 = vcmp.lt.s32.totalorder %v6093, 3
    %vm6115 = vcmp.lt.s32.totalorder %v6093, 4
    %v6116 = vsel %vm6112, %v6096, %v6099
    %v6117 = vsel %vm6115, %v6105, 2102212464
    %v6118 = vsel %vm6114, %v6102, %v6117
    %v6119 = vsel %vm6113, %v6116, %v6118
    %v6120 = vsel %vm6112, %v6099, %v6102
    %v6121 = vsel %vm6115, %v6108, 920167782
    %v6122 = vsel %vm6114, %v6105, %v6121
    %v6123 = vsel %vm6113, %v6120, %v6122
    %v6124 = vsel %vm6112, %v6102, %v6105
    %v6125 = vsel %vm6115, %v6111, 1326507024
    %v6126 = vsel %vm6114, %v6108, %v6125
    %v6127 = vsel %vm6113, %v6124, %v6126
    %v6128 = vshll.u32 %v6088, 8
    %v6129 = vmul.u32.u64.compose %v6128, %v6127
    %v6130 = vextract.low.u32 %v6129
    %v6131 = vextract.high.u32 %v6129
    %v6132 = vmul.u32.u64.compose %v6128, %v6123
    %v6133 = vextract.low.u32 %v6132
    %v6134 = vextract.high.u32 %v6132
    %v6135 = vmul.u32 %v6128, %v6119
    %v6136 = vadd.s32 %v6131, %v6133
    %vm6137 = vc.u32 %v6131, %v6133
    %v6138 = vadd.s32 %v6134, 1
    %v6139 = vsel %vm6137, %v6138, %v6134
    %v6140 = vadd.s32 %v6135, %v6139
    %v6141 = vadd.s32 %v6140, 536870912
    %v6142 = vshrl.u32 %v6141, 30
    %v6143 = vshll.u32 %v6142, 30
    %v6144 = vsub.s32 %v6140, %v6143
    %vm6145 = vcmp.lt.s32.totalorder %v6144, 0
    %v6146 = vsub.s32 0, %v6144
    %v6147 = vsel %vm6145, %v6146, %v6144
    %v6148 = vclz %v6147
    %v6149 = vsub.s32 %v6148, 2
    %vm6150 = vcmp.gt.s32.totalorder 0, %v6149
    %v6151 = vsel %vm6150, 0, %v6149
    %v6152 = vsub.s32 32, %v6151
    %v6153 = vshll.u32 %v6144, %v6151
    %v6154 = vshrl.u32 %v6136, %v6152
    %v6155 = vor.u32 %v6153, %v6154
    %v6156 = vsub.s32 4294967266, %v6151
    %v6157 = vadd.s32 %v6156, 127
    %v6158 = vshll.u32 %v6157, 23
    %v6159 = vor.u32 4788187, %v6158
    %v6160 = vand.u32 2147483647, %v6159
    %v6162 = vcvt.s32.f32 %v6155
    %v6163 = vmul.f32 %v6162, %v6160
    %v6164 = vxor.u32 %v6163, 2147483648
    %v6165 = vsel %vm6082, %v6164, %v6163
    %v6166 = vsub.s32 4, %v6142
    %v6167 = vsel %vm6082, %v6166, %v6142
    %v6168 = vsel %vm6081, %v614, %v6165
    %v6169 = vsel %vm6081, 0, %v6167
    %v6170 = vcosq.f32.pop %v6168
    %v6171 = vsinq.f32.pop %v6168
    %vm6172 = vweird.f32 %v614
    %v6173 = vadd.s32 %v6169, 3
    %v6174 = vand.u32 %v6173, 3
    %vm6175 = vcmp.lt.s32.totalorder %v6174, 2
    %vm6176 = vcmp.eq.s32.totalorder %v6174, 0
    %v6177 = vxor.u32 %v6171, 2147483648
    %v6178 = vsel %vm6176, %v6170, %v6177
    %vm6179 = vcmp.eq.s32.totalorder %v6174, 2
    %v6180 = vxor.u32 %v6170, 2147483648
    %v6181 = vsel %vm6179, %v6180, %v6171
    %v6182 = vsel %vm6175, %v6178, %v6181
    %v6183 = vsel %vm6172, nan, %v6182
    %v6184 = vand.u32 2147483647, %v619
    %vm6185 = vcmp.le.f32.partialorder %v6184, 0.7853982
    %vm6186 = vcmp.lt.s32.totalorder %v619, 0
    %v6187 = vand.u32 %v619, 2139095040
    %v6188 = vshrl.u32 %v6187, 23
    %v6189 = vsub.s32 %v6188, 127
    %v6190 = vand.u32 2147483647, %v619
    %v6191 = vand.u32 %v6190, 8388607
    %v6192 = vor.u32 %v6191, 8388608
    %v6193 = vsub.s32 0, %v6192
    %v6194 = vadd.s32 %v6189, 1
    %vm6195 = vcmp.gt.s32.totalorder %v6194, 0
    %v6196 = vsel %vm6195, %v6194, 0
    %v6197 = vshrl.u32 %v6196, 5
    %v6198 = vand.u32 %v6196, 31
    %v6199 = vsub.s32 32, %v6198
    %v6200 = vshrl.u32 683565275, %v6199
    %v6201 = vshll.u32 683565275, %v6198
    %v6202 = vshrl.u32 2475754826, %v6199
    %v6203 = vor.u32 %v6201, %v6202
    %v6204 = vshll.u32 2475754826, %v6198
    %v6205 = vshrl.u32 2131351028, %v6199
    %v6206 = vor.u32 %v6204, %v6205
    %v6207 = vshll.u32 2131351028, %v6198
    %v6208 = vshrl.u32 2102212464, %v6199
    %v6209 = vor.u32 %v6207, %v6208
    %v6210 = vshll.u32 2102212464, %v6198
    %v6211 = vshrl.u32 920167782, %v6199
    %v6212 = vor.u32 %v6210, %v6211
    %v6213 = vshll.u32 920167782, %v6198
    %v6214 = vshrl.u32 1326507024, %v6199
    %v6215 = vor.u32 %v6213, %v6214
    %vm6216 = vcmp.lt.s32.totalorder %v6197, 1
    %vm6217 = vcmp.lt.s32.totalorder %v6197, 2
    %vm6218 = vcmp.lt.s32.totalorder %v6197, 3
    %vm6219 = vcmp.lt.s32.totalorder %v6197, 4
    %v6220 = vsel %vm6216, %v6200, %v6203
    %v6221 = vsel %vm6219, %v6209, 2102212464
    %v6222 = vsel %vm6218, %v6206, %v6221
    %v6223 = vsel %vm6217, %v6220, %v6222
    %v6224 = vsel %vm6216, %v6203, %v6206
    %v6225 = vsel %vm6219, %v6212, 920167782
    %v6226 = vsel %vm6218, %v6209, %v6225
    %v6227 = vsel %vm6217, %v6224, %v6226
    %v6228 = vsel %vm6216, %v6206, %v6209
    %v6229 = vsel %vm6219, %v6215, 1326507024
    %v6230 = vsel %vm6218, %v6212, %v6229
    %v6231 = vsel %vm6217, %v6228, %v6230
    %v6232 = vshll.u32 %v6192, 8
    %v6233 = vmul.u32.u64.compose %v6232, %v6231
    %v6234 = vextract.low.u32 %v6233
    %v6235 = vextract.high.u32 %v6233
    %v6236 = vmul.u32.u64.compose %v6232, %v6227
    %v6237 = vextract.low.u32 %v6236
    %v6238 = vextract.high.u32 %v6236
    %v6239 = vmul.u32 %v6232, %v6223
    %v6240 = vadd.s32 %v6235, %v6237
    %vm6241 = vc.u32 %v6235, %v6237
    %v6242 = vadd.s32 %v6238, 1
    %v6243 = vsel %vm6241, %v6242, %v6238
    %v6244 = vadd.s32 %v6239, %v6243
    %v6245 = vadd.s32 %v6244, 536870912
    %v6246 = vshrl.u32 %v6245, 30
    %v6247 = vshll.u32 %v6246, 30
    %v6248 = vsub.s32 %v6244, %v6247
    %vm6249 = vcmp.lt.s32.totalorder %v6248, 0
    %v6250 = vsub.s32 0, %v6248
    %v6251 = vsel %vm6249, %v6250, %v6248
    %v6252 = vclz %v6251
    %v6253 = vsub.s32 %v6252, 2
    %vm6254 = vcmp.gt.s32.totalorder 0, %v6253
    %v6255 = vsel %vm6254, 0, %v6253
    %v6256 = vsub.s32 32, %v6255
    %v6257 = vshll.u32 %v6248, %v6255
    %v6258 = vshrl.u32 %v6240, %v6256
    %v6259 = vor.u32 %v6257, %v6258
    %v6260 = vsub.s32 4294967266, %v6255
    %v6261 = vadd.s32 %v6260, 127
    %v6262 = vshll.u32 %v6261, 23
    %v6263 = vor.u32 4788187, %v6262
    %v6264 = vand.u32 2147483647, %v6263
    %v6266 = vcvt.s32.f32 %v6259
    %v6267 = vmul.f32 %v6266, %v6264
    %v6268 = vxor.u32 %v6267, 2147483648
    %v6269 = vsel %vm6186, %v6268, %v6267
    %v6270 = vsub.s32 4, %v6246
    %v6271 = vsel %vm6186, %v6270, %v6246
    %v6272 = vsel %vm6185, %v619, %v6269
    %v6273 = vsel %vm6185, 0, %v6271
    %v6274 = vcosq.f32.pop %v6272
    %v6275 = vsinq.f32.pop %v6272
    %vm6276 = vweird.f32 %v619
    %v6277 = vadd.s32 %v6273, 3
    %v6278 = vand.u32 %v6277, 3
    %vm6279 = vcmp.lt.s32.totalorder %v6278, 2
    %vm6280 = vcmp.eq.s32.totalorder %v6278, 0
    %v6281 = vxor.u32 %v6275, 2147483648
    %v6282 = vsel %vm6280, %v6274, %v6281
    %vm6283 = vcmp.eq.s32.totalorder %v6278, 2
    %v6284 = vxor.u32 %v6274, 2147483648
    %v6285 = vsel %vm6283, %v6284, %v6275
    %v6286 = vsel %vm6279, %v6282, %v6285
    %v6287 = vsel %vm6276, nan, %v6286
    %v6288 = vand.u32 2147483647, %v624
    %vm6289 = vcmp.le.f32.partialorder %v6288, 0.7853982
    %vm6290 = vcmp.lt.s32.totalorder %v624, 0
    %v6291 = vand.u32 %v624, 2139095040
    %v6292 = vshrl.u32 %v6291, 23
    %v6293 = vsub.s32 %v6292, 127
    %v6294 = vand.u32 2147483647, %v624
    %v6295 = vand.u32 %v6294, 8388607
    %v6296 = vor.u32 %v6295, 8388608
    %v6297 = vsub.s32 0, %v6296
    %v6298 = vadd.s32 %v6293, 1
    %vm6299 = vcmp.gt.s32.totalorder %v6298, 0
    %v6300 = vsel %vm6299, %v6298, 0
    %v6301 = vshrl.u32 %v6300, 5
    %v6302 = vand.u32 %v6300, 31
    %v6303 = vsub.s32 32, %v6302
    %v6304 = vshrl.u32 683565275, %v6303
    %v6305 = vshll.u32 683565275, %v6302
    %v6306 = vshrl.u32 2475754826, %v6303
    %v6307 = vor.u32 %v6305, %v6306
    %v6308 = vshll.u32 2475754826, %v6302
    %v6309 = vshrl.u32 2131351028, %v6303
    %v6310 = vor.u32 %v6308, %v6309
    %v6311 = vshll.u32 2131351028, %v6302
    %v6312 = vshrl.u32 2102212464, %v6303
    %v6313 = vor.u32 %v6311, %v6312
    %v6314 = vshll.u32 2102212464, %v6302
    %v6315 = vshrl.u32 920167782, %v6303
    %v6316 = vor.u32 %v6314, %v6315
    %v6317 = vshll.u32 920167782, %v6302
    %v6318 = vshrl.u32 1326507024, %v6303
    %v6319 = vor.u32 %v6317, %v6318
    %vm6320 = vcmp.lt.s32.totalorder %v6301, 1
    %vm6321 = vcmp.lt.s32.totalorder %v6301, 2
    %vm6322 = vcmp.lt.s32.totalorder %v6301, 3
    %vm6323 = vcmp.lt.s32.totalorder %v6301, 4
    %v6324 = vsel %vm6320, %v6304, %v6307
    %v6325 = vsel %vm6323, %v6313, 2102212464
    %v6326 = vsel %vm6322, %v6310, %v6325
    %v6327 = vsel %vm6321, %v6324, %v6326
    %v6328 = vsel %vm6320, %v6307, %v6310
    %v6329 = vsel %vm6323, %v6316, 920167782
    %v6330 = vsel %vm6322, %v6313, %v6329
    %v6331 = vsel %vm6321, %v6328, %v6330
    %v6332 = vsel %vm6320, %v6310, %v6313
    %v6333 = vsel %vm6323, %v6319, 1326507024
    %v6334 = vsel %vm6322, %v6316, %v6333
    %v6335 = vsel %vm6321, %v6332, %v6334
    %v6336 = vshll.u32 %v6296, 8
    %v6337 = vmul.u32.u64.compose %v6336, %v6335
    %v6338 = vextract.low.u32 %v6337
    %v6339 = vextract.high.u32 %v6337
    %v6340 = vmul.u32.u64.compose %v6336, %v6331
    %v6341 = vextract.low.u32 %v6340
    %v6342 = vextract.high.u32 %v6340
    %v6343 = vmul.u32 %v6336, %v6327
    %v6344 = vadd.s32 %v6339, %v6341
    %vm6345 = vc.u32 %v6339, %v6341
    %v6346 = vadd.s32 %v6342, 1
    %v6347 = vsel %vm6345, %v6346, %v6342
    %v6348 = vadd.s32 %v6343, %v6347
    %v6349 = vadd.s32 %v6348, 536870912
    %v6350 = vshrl.u32 %v6349, 30
    %v6351 = vshll.u32 %v6350, 30
    %v6352 = vsub.s32 %v6348, %v6351
    %vm6353 = vcmp.lt.s32.totalorder %v6352, 0
    %v6354 = vsub.s32 0, %v6352
    %v6355 = vsel %vm6353, %v6354, %v6352
    %v6356 = vclz %v6355
    %v6357 = vsub.s32 %v6356, 2
    %vm6358 = vcmp.gt.s32.totalorder 0, %v6357
    %v6359 = vsel %vm6358, 0, %v6357
    %v6360 = vsub.s32 32, %v6359
    %v6361 = vshll.u32 %v6352, %v6359
    %v6362 = vshrl.u32 %v6344, %v6360
    %v6363 = vor.u32 %v6361, %v6362
    %v6364 = vsub.s32 4294967266, %v6359
    %v6365 = vadd.s32 %v6364, 127
    %v6366 = vshll.u32 %v6365, 23
    %v6367 = vor.u32 4788187, %v6366
    %v6368 = vand.u32 2147483647, %v6367
    %v6370 = vcvt.s32.f32 %v6363
    %v6371 = vmul.f32 %v6370, %v6368
    %v6372 = vxor.u32 %v6371, 2147483648
    %v6373 = vsel %vm6290, %v6372, %v6371
    %v6374 = vsub.s32 4, %v6350
    %v6375 = vsel %vm6290, %v6374, %v6350
    %v6376 = vsel %vm6289, %v624, %v6373
    %v6377 = vsel %vm6289, 0, %v6375
    %v6378 = vcosq.f32.pop %v6376
    %v6379 = vsinq.f32.pop %v6376
    %vm6380 = vweird.f32 %v624
    %v6381 = vadd.s32 %v6377, 3
    %v6382 = vand.u32 %v6381, 3
    %vm6383 = vcmp.lt.s32.totalorder %v6382, 2
    %vm6384 = vcmp.eq.s32.totalorder %v6382, 0
    %v6385 = vxor.u32 %v6379, 2147483648
    %v6386 = vsel %vm6384, %v6378, %v6385
    %vm6387 = vcmp.eq.s32.totalorder %v6382, 2
    %v6388 = vxor.u32 %v6378, 2147483648
    %v6389 = vsel %vm6387, %v6388, %v6379
    %v6390 = vsel %vm6383, %v6386, %v6389
    %v6391 = vsel %vm6380, nan, %v6390
    %v6392 = vand.u32 2147483647, %v629
    %vm6393 = vcmp.le.f32.partialorder %v6392, 0.7853982
    %vm6394 = vcmp.lt.s32.totalorder %v629, 0
    %v6395 = vand.u32 %v629, 2139095040
    %v6396 = vshrl.u32 %v6395, 23
    %v6397 = vsub.s32 %v6396, 127
    %v6398 = vand.u32 2147483647, %v629
    %v6399 = vand.u32 %v6398, 8388607
    %v6400 = vor.u32 %v6399, 8388608
    %v6401 = vsub.s32 0, %v6400
    %v6402 = vadd.s32 %v6397, 1
    %vm6403 = vcmp.gt.s32.totalorder %v6402, 0
    %v6404 = vsel %vm6403, %v6402, 0
    %v6405 = vshrl.u32 %v6404, 5
    %v6406 = vand.u32 %v6404, 31
    %v6407 = vsub.s32 32, %v6406
    %v6408 = vshrl.u32 683565275, %v6407
    %v6409 = vshll.u32 683565275, %v6406
    %v6410 = vshrl.u32 2475754826, %v6407
    %v6411 = vor.u32 %v6409, %v6410
    %v6412 = vshll.u32 2475754826, %v6406
    %v6413 = vshrl.u32 2131351028, %v6407
    %v6414 = vor.u32 %v6412, %v6413
    %v6415 = vshll.u32 2131351028, %v6406
    %v6416 = vshrl.u32 2102212464, %v6407
    %v6417 = vor.u32 %v6415, %v6416
    %v6418 = vshll.u32 2102212464, %v6406
    %v6419 = vshrl.u32 920167782, %v6407
    %v6420 = vor.u32 %v6418, %v6419
    %v6421 = vshll.u32 920167782, %v6406
    %v6422 = vshrl.u32 1326507024, %v6407
    %v6423 = vor.u32 %v6421, %v6422
    %vm6424 = vcmp.lt.s32.totalorder %v6405, 1
    %vm6425 = vcmp.lt.s32.totalorder %v6405, 2
    %vm6426 = vcmp.lt.s32.totalorder %v6405, 3
    %vm6427 = vcmp.lt.s32.totalorder %v6405, 4
    %v6428 = vsel %vm6424, %v6408, %v6411
    %v6429 = vsel %vm6427, %v6417, 2102212464
    %v6430 = vsel %vm6426, %v6414, %v6429
    %v6431 = vsel %vm6425, %v6428, %v6430
    %v6432 = vsel %vm6424, %v6411, %v6414
    %v6433 = vsel %vm6427, %v6420, 920167782
    %v6434 = vsel %vm6426, %v6417, %v6433
    %v6435 = vsel %vm6425, %v6432, %v6434
    %v6436 = vsel %vm6424, %v6414, %v6417
    %v6437 = vsel %vm6427, %v6423, 1326507024
    %v6438 = vsel %vm6426, %v6420, %v6437
    %v6439 = vsel %vm6425, %v6436, %v6438
    %v6440 = vshll.u32 %v6400, 8
    %v6441 = vmul.u32.u64.compose %v6440, %v6439
    %v6442 = vextract.low.u32 %v6441
    %v6443 = vextract.high.u32 %v6441
    %v6444 = vmul.u32.u64.compose %v6440, %v6435
    %v6445 = vextract.low.u32 %v6444
    %v6446 = vextract.high.u32 %v6444
    %v6447 = vmul.u32 %v6440, %v6431
    %v6448 = vadd.s32 %v6443, %v6445
    %vm6449 = vc.u32 %v6443, %v6445
    %v6450 = vadd.s32 %v6446, 1
    %v6451 = vsel %vm6449, %v6450, %v6446
    %v6452 = vadd.s32 %v6447, %v6451
    %v6453 = vadd.s32 %v6452, 536870912
    %v6454 = vshrl.u32 %v6453, 30
    %v6455 = vshll.u32 %v6454, 30
    %v6456 = vsub.s32 %v6452, %v6455
    %vm6457 = vcmp.lt.s32.totalorder %v6456, 0
    %v6458 = vsub.s32 0, %v6456
    %v6459 = vsel %vm6457, %v6458, %v6456
    %v6460 = vclz %v6459
    %v6461 = vsub.s32 %v6460, 2
    %vm6462 = vcmp.gt.s32.totalorder 0, %v6461
    %v6463 = vsel %vm6462, 0, %v6461
    %v6464 = vsub.s32 32, %v6463
    %v6465 = vshll.u32 %v6456, %v6463
    %v6466 = vshrl.u32 %v6448, %v6464
    %v6467 = vor.u32 %v6465, %v6466
    %v6468 = vsub.s32 4294967266, %v6463
    %v6469 = vadd.s32 %v6468, 127
    %v6470 = vshll.u32 %v6469, 23
    %v6471 = vor.u32 4788187, %v6470
    %v6472 = vand.u32 2147483647, %v6471
    %v6474 = vcvt.s32.f32 %v6467
    %v6475 = vmul.f32 %v6474, %v6472
    %v6476 = vxor.u32 %v6475, 2147483648
    %v6477 = vsel %vm6394, %v6476, %v6475
    %v6478 = vsub.s32 4, %v6454
    %v6479 = vsel %vm6394, %v6478, %v6454
    %v6480 = vsel %vm6393, %v629, %v6477
    %v6481 = vsel %vm6393, 0, %v6479
    %v6482 = vcosq.f32.pop %v6480
    %v6483 = vsinq.f32.pop %v6480
    %vm6484 = vweird.f32 %v629
    %v6485 = vadd.s32 %v6481, 3
    %v6486 = vand.u32 %v6485, 3
    %vm6487 = vcmp.lt.s32.totalorder %v6486, 2
    %vm6488 = vcmp.eq.s32.totalorder %v6486, 0
    %v6489 = vxor.u32 %v6483, 2147483648
    %v6490 = vsel %vm6488, %v6482, %v6489
    %vm6491 = vcmp.eq.s32.totalorder %v6486, 2
    %v6492 = vxor.u32 %v6482, 2147483648
    %v6493 = vsel %vm6491, %v6492, %v6483
    %v6494 = vsel %vm6487, %v6490, %v6493
    %v6495 = vsel %vm6484, nan, %v6494
    %v6496 = vand.u32 2147483647, %v634
    %vm6497 = vcmp.le.f32.partialorder %v6496, 0.7853982
    %vm6498 = vcmp.lt.s32.totalorder %v634, 0
    %v6499 = vand.u32 %v634, 2139095040
    %v6500 = vshrl.u32 %v6499, 23
    %v6501 = vsub.s32 %v6500, 127
    %v6502 = vand.u32 2147483647, %v634
    %v6503 = vand.u32 %v6502, 8388607
    %v6504 = vor.u32 %v6503, 8388608
    %v6505 = vsub.s32 0, %v6504
    %v6506 = vadd.s32 %v6501, 1
    %vm6507 = vcmp.gt.s32.totalorder %v6506, 0
    %v6508 = vsel %vm6507, %v6506, 0
    %v6509 = vshrl.u32 %v6508, 5
    %v6510 = vand.u32 %v6508, 31
    %v6511 = vsub.s32 32, %v6510
    %v6512 = vshrl.u32 683565275, %v6511
    %v6513 = vshll.u32 683565275, %v6510
    %v6514 = vshrl.u32 2475754826, %v6511
    %v6515 = vor.u32 %v6513, %v6514
    %v6516 = vshll.u32 2475754826, %v6510
    %v6517 = vshrl.u32 2131351028, %v6511
    %v6518 = vor.u32 %v6516, %v6517
    %v6519 = vshll.u32 2131351028, %v6510
    %v6520 = vshrl.u32 2102212464, %v6511
    %v6521 = vor.u32 %v6519, %v6520
    %v6522 = vshll.u32 2102212464, %v6510
    %v6523 = vshrl.u32 920167782, %v6511
    %v6524 = vor.u32 %v6522, %v6523
    %v6525 = vshll.u32 920167782, %v6510
    %v6526 = vshrl.u32 1326507024, %v6511
    %v6527 = vor.u32 %v6525, %v6526
    %vm6528 = vcmp.lt.s32.totalorder %v6509, 1
    %vm6529 = vcmp.lt.s32.totalorder %v6509, 2
    %vm6530 = vcmp.lt.s32.totalorder %v6509, 3
    %vm6531 = vcmp.lt.s32.totalorder %v6509, 4
    %v6532 = vsel %vm6528, %v6512, %v6515
    %v6533 = vsel %vm6531, %v6521, 2102212464
    %v6534 = vsel %vm6530, %v6518, %v6533
    %v6535 = vsel %vm6529, %v6532, %v6534
    %v6536 = vsel %vm6528, %v6515, %v6518
    %v6537 = vsel %vm6531, %v6524, 920167782
    %v6538 = vsel %vm6530, %v6521, %v6537
    %v6539 = vsel %vm6529, %v6536, %v6538
    %v6540 = vsel %vm6528, %v6518, %v6521
    %v6541 = vsel %vm6531, %v6527, 1326507024
    %v6542 = vsel %vm6530, %v6524, %v6541
    %v6543 = vsel %vm6529, %v6540, %v6542
    %v6544 = vshll.u32 %v6504, 8
    %v6545 = vmul.u32.u64.compose %v6544, %v6543
    %v6546 = vextract.low.u32 %v6545
    %v6547 = vextract.high.u32 %v6545
    %v6548 = vmul.u32.u64.compose %v6544, %v6539
    %v6549 = vextract.low.u32 %v6548
    %v6550 = vextract.high.u32 %v6548
    %v6551 = vmul.u32 %v6544, %v6535
    %v6552 = vadd.s32 %v6547, %v6549
    %vm6553 = vc.u32 %v6547, %v6549
    %v6554 = vadd.s32 %v6550, 1
    %v6555 = vsel %vm6553, %v6554, %v6550
    %v6556 = vadd.s32 %v6551, %v6555
    %v6557 = vadd.s32 %v6556, 536870912
    %v6558 = vshrl.u32 %v6557, 30
    %v6559 = vshll.u32 %v6558, 30
    %v6560 = vsub.s32 %v6556, %v6559
    %vm6561 = vcmp.lt.s32.totalorder %v6560, 0
    %v6562 = vsub.s32 0, %v6560
    %v6563 = vsel %vm6561, %v6562, %v6560
    %v6564 = vclz %v6563
    %v6565 = vsub.s32 %v6564, 2
    %vm6566 = vcmp.gt.s32.totalorder 0, %v6565
    %v6567 = vsel %vm6566, 0, %v6565
    %v6568 = vsub.s32 32, %v6567
    %v6569 = vshll.u32 %v6560, %v6567
    %v6570 = vshrl.u32 %v6552, %v6568
    %v6571 = vor.u32 %v6569, %v6570
    %v6572 = vsub.s32 4294967266, %v6567
    %v6573 = vadd.s32 %v6572, 127
    %v6574 = vshll.u32 %v6573, 23
    %v6575 = vor.u32 4788187, %v6574
    %v6576 = vand.u32 2147483647, %v6575
    %v6578 = vcvt.s32.f32 %v6571
    %v6579 = vmul.f32 %v6578, %v6576
    %v6580 = vxor.u32 %v6579, 2147483648
    %v6581 = vsel %vm6498, %v6580, %v6579
    %v6582 = vsub.s32 4, %v6558
    %v6583 = vsel %vm6498, %v6582, %v6558
    %v6584 = vsel %vm6497, %v634, %v6581
    %v6585 = vsel %vm6497, 0, %v6583
    %v6586 = vcosq.f32.pop %v6584
    %v6587 = vsinq.f32.pop %v6584
    %vm6588 = vweird.f32 %v634
    %v6589 = vadd.s32 %v6585, 3
    %v6590 = vand.u32 %v6589, 3
    %vm6591 = vcmp.lt.s32.totalorder %v6590, 2
    %vm6592 = vcmp.eq.s32.totalorder %v6590, 0
    %v6593 = vxor.u32 %v6587, 2147483648
    %v6594 = vsel %vm6592, %v6586, %v6593
    %vm6595 = vcmp.eq.s32.totalorder %v6590, 2
    %v6596 = vxor.u32 %v6586, 2147483648
    %v6597 = vsel %vm6595, %v6596, %v6587
    %v6598 = vsel %vm6591, %v6594, %v6597
    %v6599 = vsel %vm6588, nan, %v6598
    %v6600 = vand.u32 2147483647, %v639
    %vm6601 = vcmp.le.f32.partialorder %v6600, 0.7853982
    %vm6602 = vcmp.lt.s32.totalorder %v639, 0
    %v6603 = vand.u32 %v639, 2139095040
    %v6604 = vshrl.u32 %v6603, 23
    %v6605 = vsub.s32 %v6604, 127
    %v6606 = vand.u32 2147483647, %v639
    %v6607 = vand.u32 %v6606, 8388607
    %v6608 = vor.u32 %v6607, 8388608
    %v6609 = vsub.s32 0, %v6608
    %v6610 = vadd.s32 %v6605, 1
    %vm6611 = vcmp.gt.s32.totalorder %v6610, 0
    %v6612 = vsel %vm6611, %v6610, 0
    %v6613 = vshrl.u32 %v6612, 5
    %v6614 = vand.u32 %v6612, 31
    %v6615 = vsub.s32 32, %v6614
    %v6616 = vshrl.u32 683565275, %v6615
    %v6617 = vshll.u32 683565275, %v6614
    %v6618 = vshrl.u32 2475754826, %v6615
    %v6619 = vor.u32 %v6617, %v6618
    %v6620 = vshll.u32 2475754826, %v6614
    %v6621 = vshrl.u32 2131351028, %v6615
    %v6622 = vor.u32 %v6620, %v6621
    %v6623 = vshll.u32 2131351028, %v6614
    %v6624 = vshrl.u32 2102212464, %v6615
    %v6625 = vor.u32 %v6623, %v6624
    %v6626 = vshll.u32 2102212464, %v6614
    %v6627 = vshrl.u32 920167782, %v6615
    %v6628 = vor.u32 %v6626, %v6627
    %v6629 = vshll.u32 920167782, %v6614
    %v6630 = vshrl.u32 1326507024, %v6615
    %v6631 = vor.u32 %v6629, %v6630
    %vm6632 = vcmp.lt.s32.totalorder %v6613, 1
    %vm6633 = vcmp.lt.s32.totalorder %v6613, 2
    %vm6634 = vcmp.lt.s32.totalorder %v6613, 3
    %vm6635 = vcmp.lt.s32.totalorder %v6613, 4
    %v6636 = vsel %vm6632, %v6616, %v6619
    %v6637 = vsel %vm6635, %v6625, 2102212464
    %v6638 = vsel %vm6634, %v6622, %v6637
    %v6639 = vsel %vm6633, %v6636, %v6638
    %v6640 = vsel %vm6632, %v6619, %v6622
    %v6641 = vsel %vm6635, %v6628, 920167782
    %v6642 = vsel %vm6634, %v6625, %v6641
    %v6643 = vsel %vm6633, %v6640, %v6642
    %v6644 = vsel %vm6632, %v6622, %v6625
    %v6645 = vsel %vm6635, %v6631, 1326507024
    %v6646 = vsel %vm6634, %v6628, %v6645
    %v6647 = vsel %vm6633, %v6644, %v6646
    %v6648 = vshll.u32 %v6608, 8
    %v6649 = vmul.u32.u64.compose %v6648, %v6647
    %v6650 = vextract.low.u32 %v6649
    %v6651 = vextract.high.u32 %v6649
    %v6652 = vmul.u32.u64.compose %v6648, %v6643
    %v6653 = vextract.low.u32 %v6652
    %v6654 = vextract.high.u32 %v6652
    %v6655 = vmul.u32 %v6648, %v6639
    %v6656 = vadd.s32 %v6651, %v6653
    %vm6657 = vc.u32 %v6651, %v6653
    %v6658 = vadd.s32 %v6654, 1
    %v6659 = vsel %vm6657, %v6658, %v6654
    %v6660 = vadd.s32 %v6655, %v6659
    %v6661 = vadd.s32 %v6660, 536870912
    %v6662 = vshrl.u32 %v6661, 30
    %v6663 = vshll.u32 %v6662, 30
    %v6664 = vsub.s32 %v6660, %v6663
    %vm6665 = vcmp.lt.s32.totalorder %v6664, 0
    %v6666 = vsub.s32 0, %v6664
    %v6667 = vsel %vm6665, %v6666, %v6664
    %v6668 = vclz %v6667
    %v6669 = vsub.s32 %v6668, 2
    %vm6670 = vcmp.gt.s32.totalorder 0, %v6669
    %v6671 = vsel %vm6670, 0, %v6669
    %v6672 = vsub.s32 32, %v6671
    %v6673 = vshll.u32 %v6664, %v6671
    %v6674 = vshrl.u32 %v6656, %v6672
    %v6675 = vor.u32 %v6673, %v6674
    %v6676 = vsub.s32 4294967266, %v6671
    %v6677 = vadd.s32 %v6676, 127
    %v6678 = vshll.u32 %v6677, 23
    %v6679 = vor.u32 4788187, %v6678
    %v6680 = vand.u32 2147483647, %v6679
    %v6682 = vcvt.s32.f32 %v6675
    %v6683 = vmul.f32 %v6682, %v6680
    %v6684 = vxor.u32 %v6683, 2147483648
    %v6685 = vsel %vm6602, %v6684, %v6683
    %v6686 = vsub.s32 4, %v6662
    %v6687 = vsel %vm6602, %v6686, %v6662
    %v6688 = vsel %vm6601, %v639, %v6685
    %v6689 = vsel %vm6601, 0, %v6687
    %v6690 = vcosq.f32.pop %v6688
    %v6691 = vsinq.f32.pop %v6688
    %vm6692 = vweird.f32 %v639
    %v6693 = vadd.s32 %v6689, 3
    %v6694 = vand.u32 %v6693, 3
    %vm6695 = vcmp.lt.s32.totalorder %v6694, 2
    %vm6696 = vcmp.eq.s32.totalorder %v6694, 0
    %v6697 = vxor.u32 %v6691, 2147483648
    %v6698 = vsel %vm6696, %v6690, %v6697
    %vm6699 = vcmp.eq.s32.totalorder %v6694, 2
    %v6700 = vxor.u32 %v6690, 2147483648
    %v6701 = vsel %vm6699, %v6700, %v6691
    %v6702 = vsel %vm6695, %v6698, %v6701
    %v6703 = vsel %vm6692, nan, %v6702
    %v6704 = vand.u32 2147483647, %v644
    %vm6705 = vcmp.le.f32.partialorder %v6704, 0.7853982
    %vm6706 = vcmp.lt.s32.totalorder %v644, 0
    %v6707 = vand.u32 %v644, 2139095040
    %v6708 = vshrl.u32 %v6707, 23
    %v6709 = vsub.s32 %v6708, 127
    %v6710 = vand.u32 2147483647, %v644
    %v6711 = vand.u32 %v6710, 8388607
    %v6712 = vor.u32 %v6711, 8388608
    %v6713 = vsub.s32 0, %v6712
    %v6714 = vadd.s32 %v6709, 1
    %vm6715 = vcmp.gt.s32.totalorder %v6714, 0
    %v6716 = vsel %vm6715, %v6714, 0
    %v6717 = vshrl.u32 %v6716, 5
    %v6718 = vand.u32 %v6716, 31
    %v6719 = vsub.s32 32, %v6718
    %v6720 = vshrl.u32 683565275, %v6719
    %v6721 = vshll.u32 683565275, %v6718
    %v6722 = vshrl.u32 2475754826, %v6719
    %v6723 = vor.u32 %v6721, %v6722
    %v6724 = vshll.u32 2475754826, %v6718
    %v6725 = vshrl.u32 2131351028, %v6719
    %v6726 = vor.u32 %v6724, %v6725
    %v6727 = vshll.u32 2131351028, %v6718
    %v6728 = vshrl.u32 2102212464, %v6719
    %v6729 = vor.u32 %v6727, %v6728
    %v6730 = vshll.u32 2102212464, %v6718
    %v6731 = vshrl.u32 920167782, %v6719
    %v6732 = vor.u32 %v6730, %v6731
    %v6733 = vshll.u32 920167782, %v6718
    %v6734 = vshrl.u32 1326507024, %v6719
    %v6735 = vor.u32 %v6733, %v6734
    %vm6736 = vcmp.lt.s32.totalorder %v6717, 1
    %vm6737 = vcmp.lt.s32.totalorder %v6717, 2
    %vm6738 = vcmp.lt.s32.totalorder %v6717, 3
    %vm6739 = vcmp.lt.s32.totalorder %v6717, 4
    %v6740 = vsel %vm6736, %v6720, %v6723
    %v6741 = vsel %vm6739, %v6729, 2102212464
    %v6742 = vsel %vm6738, %v6726, %v6741
    %v6743 = vsel %vm6737, %v6740, %v6742
    %v6744 = vsel %vm6736, %v6723, %v6726
    %v6745 = vsel %vm6739, %v6732, 920167782
    %v6746 = vsel %vm6738, %v6729, %v6745
    %v6747 = vsel %vm6737, %v6744, %v6746
    %v6748 = vsel %vm6736, %v6726, %v6729
    %v6749 = vsel %vm6739, %v6735, 1326507024
    %v6750 = vsel %vm6738, %v6732, %v6749
    %v6751 = vsel %vm6737, %v6748, %v6750
    %v6752 = vshll.u32 %v6712, 8
    %v6753 = vmul.u32.u64.compose %v6752, %v6751
    %v6754 = vextract.low.u32 %v6753
    %v6755 = vextract.high.u32 %v6753
    %v6756 = vmul.u32.u64.compose %v6752, %v6747
    %v6757 = vextract.low.u32 %v6756
    %v6758 = vextract.high.u32 %v6756
    %v6759 = vmul.u32 %v6752, %v6743
    %v6760 = vadd.s32 %v6755, %v6757
    %vm6761 = vc.u32 %v6755, %v6757
    %v6762 = vadd.s32 %v6758, 1
    %v6763 = vsel %vm6761, %v6762, %v6758
    %v6764 = vadd.s32 %v6759, %v6763
    %v6765 = vadd.s32 %v6764, 536870912
    %v6766 = vshrl.u32 %v6765, 30
    %v6767 = vshll.u32 %v6766, 30
    %v6768 = vsub.s32 %v6764, %v6767
    %vm6769 = vcmp.lt.s32.totalorder %v6768, 0
    %v6770 = vsub.s32 0, %v6768
    %v6771 = vsel %vm6769, %v6770, %v6768
    %v6772 = vclz %v6771
    %v6773 = vsub.s32 %v6772, 2
    %vm6774 = vcmp.gt.s32.totalorder 0, %v6773
    %v6775 = vsel %vm6774, 0, %v6773
    %v6776 = vsub.s32 32, %v6775
    %v6777 = vshll.u32 %v6768, %v6775
    %v6778 = vshrl.u32 %v6760, %v6776
    %v6779 = vor.u32 %v6777, %v6778
    %v6780 = vsub.s32 4294967266, %v6775
    %v6781 = vadd.s32 %v6780, 127
    %v6782 = vshll.u32 %v6781, 23
    %v6783 = vor.u32 4788187, %v6782
    %v6784 = vand.u32 2147483647, %v6783
    %v6786 = vcvt.s32.f32 %v6779
    %v6787 = vmul.f32 %v6786, %v6784
    %v6788 = vxor.u32 %v6787, 2147483648
    %v6789 = vsel %vm6706, %v6788, %v6787
    %v6790 = vsub.s32 4, %v6766
    %v6791 = vsel %vm6706, %v6790, %v6766
    %v6792 = vsel %vm6705, %v644, %v6789
    %v6793 = vsel %vm6705, 0, %v6791
    %v6794 = vcosq.f32.pop %v6792
    %v6795 = vsinq.f32.pop %v6792
    %vm6796 = vweird.f32 %v644
    %v6797 = vadd.s32 %v6793, 3
    %v6798 = vand.u32 %v6797, 3
    %vm6799 = vcmp.lt.s32.totalorder %v6798, 2
    %vm6800 = vcmp.eq.s32.totalorder %v6798, 0
    %v6801 = vxor.u32 %v6795, 2147483648
    %v6802 = vsel %vm6800, %v6794, %v6801
    %vm6803 = vcmp.eq.s32.totalorder %v6798, 2
    %v6804 = vxor.u32 %v6794, 2147483648
    %v6805 = vsel %vm6803, %v6804, %v6795
    %v6806 = vsel %vm6799, %v6802, %v6805
    %v6807 = vsel %vm6796, nan, %v6806
    %v6808 = vand.u32 2147483647, %v649
    %vm6809 = vcmp.le.f32.partialorder %v6808, 0.7853982
    %vm6810 = vcmp.lt.s32.totalorder %v649, 0
    %v6811 = vand.u32 %v649, 2139095040
    %v6812 = vshrl.u32 %v6811, 23
    %v6813 = vsub.s32 %v6812, 127
    %v6814 = vand.u32 2147483647, %v649
    %v6815 = vand.u32 %v6814, 8388607
    %v6816 = vor.u32 %v6815, 8388608
    %v6817 = vsub.s32 0, %v6816
    %v6818 = vadd.s32 %v6813, 1
    %vm6819 = vcmp.gt.s32.totalorder %v6818, 0
    %v6820 = vsel %vm6819, %v6818, 0
    %v6821 = vshrl.u32 %v6820, 5
    %v6822 = vand.u32 %v6820, 31
    %v6823 = vsub.s32 32, %v6822
    %v6824 = vshrl.u32 683565275, %v6823
    %v6825 = vshll.u32 683565275, %v6822
    %v6826 = vshrl.u32 2475754826, %v6823
    %v6827 = vor.u32 %v6825, %v6826
    %v6828 = vshll.u32 2475754826, %v6822
    %v6829 = vshrl.u32 2131351028, %v6823
    %v6830 = vor.u32 %v6828, %v6829
    %v6831 = vshll.u32 2131351028, %v6822
    %v6832 = vshrl.u32 2102212464, %v6823
    %v6833 = vor.u32 %v6831, %v6832
    %v6834 = vshll.u32 2102212464, %v6822
    %v6835 = vshrl.u32 920167782, %v6823
    %v6836 = vor.u32 %v6834, %v6835
    %v6837 = vshll.u32 920167782, %v6822
    %v6838 = vshrl.u32 1326507024, %v6823
    %v6839 = vor.u32 %v6837, %v6838
    %vm6840 = vcmp.lt.s32.totalorder %v6821, 1
    %vm6841 = vcmp.lt.s32.totalorder %v6821, 2
    %vm6842 = vcmp.lt.s32.totalorder %v6821, 3
    %vm6843 = vcmp.lt.s32.totalorder %v6821, 4
    %v6844 = vsel %vm6840, %v6824, %v6827
    %v6845 = vsel %vm6843, %v6833, 2102212464
    %v6846 = vsel %vm6842, %v6830, %v6845
    %v6847 = vsel %vm6841, %v6844, %v6846
    %v6848 = vsel %vm6840, %v6827, %v6830
    %v6849 = vsel %vm6843, %v6836, 920167782
    %v6850 = vsel %vm6842, %v6833, %v6849
    %v6851 = vsel %vm6841, %v6848, %v6850
    %v6852 = vsel %vm6840, %v6830, %v6833
    %v6853 = vsel %vm6843, %v6839, 1326507024
    %v6854 = vsel %vm6842, %v6836, %v6853
    %v6855 = vsel %vm6841, %v6852, %v6854
    %v6856 = vshll.u32 %v6816, 8
    %v6857 = vmul.u32.u64.compose %v6856, %v6855
    %v6858 = vextract.low.u32 %v6857
    %v6859 = vextract.high.u32 %v6857
    %v6860 = vmul.u32.u64.compose %v6856, %v6851
    %v6861 = vextract.low.u32 %v6860
    %v6862 = vextract.high.u32 %v6860
    %v6863 = vmul.u32 %v6856, %v6847
    %v6864 = vadd.s32 %v6859, %v6861
    %vm6865 = vc.u32 %v6859, %v6861
    %v6866 = vadd.s32 %v6862, 1
    %v6867 = vsel %vm6865, %v6866, %v6862
    %v6868 = vadd.s32 %v6863, %v6867
    %v6869 = vadd.s32 %v6868, 536870912
    %v6870 = vshrl.u32 %v6869, 30
    %v6871 = vshll.u32 %v6870, 30
    %v6872 = vsub.s32 %v6868, %v6871
    %vm6873 = vcmp.lt.s32.totalorder %v6872, 0
    %v6874 = vsub.s32 0, %v6872
    %v6875 = vsel %vm6873, %v6874, %v6872
    %v6876 = vclz %v6875
    %v6877 = vsub.s32 %v6876, 2
    %vm6878 = vcmp.gt.s32.totalorder 0, %v6877
    %v6879 = vsel %vm6878, 0, %v6877
    %v6880 = vsub.s32 32, %v6879
    %v6881 = vshll.u32 %v6872, %v6879
    %v6882 = vshrl.u32 %v6864, %v6880
    %v6883 = vor.u32 %v6881, %v6882
    %v6884 = vsub.s32 4294967266, %v6879
    %v6885 = vadd.s32 %v6884, 127
    %v6886 = vshll.u32 %v6885, 23
    %v6887 = vor.u32 4788187, %v6886
    %v6888 = vand.u32 2147483647, %v6887
    %v6890 = vcvt.s32.f32 %v6883
    %v6891 = vmul.f32 %v6890, %v6888
    %v6892 = vxor.u32 %v6891, 2147483648
    %v6893 = vsel %vm6810, %v6892, %v6891
    %v6894 = vsub.s32 4, %v6870
    %v6895 = vsel %vm6810, %v6894, %v6870
    %v6896 = vsel %vm6809, %v649, %v6893
    %v6897 = vsel %vm6809, 0, %v6895
    %v6898 = vcosq.f32.pop %v6896
    %v6899 = vsinq.f32.pop %v6896
    %vm6900 = vweird.f32 %v649
    %v6901 = vadd.s32 %v6897, 3
    %v6902 = vand.u32 %v6901, 3
    %vm6903 = vcmp.lt.s32.totalorder %v6902, 2
    %vm6904 = vcmp.eq.s32.totalorder %v6902, 0
    %v6905 = vxor.u32 %v6899, 2147483648
    %v6906 = vsel %vm6904, %v6898, %v6905
    %vm6907 = vcmp.eq.s32.totalorder %v6902, 2
    %v6908 = vxor.u32 %v6898, 2147483648
    %v6909 = vsel %vm6907, %v6908, %v6899
    %v6910 = vsel %vm6903, %v6906, %v6909
    %v6911 = vsel %vm6900, nan, %v6910
    %v6912 = vand.u32 2147483647, %v654
    %vm6913 = vcmp.le.f32.partialorder %v6912, 0.7853982
    %vm6914 = vcmp.lt.s32.totalorder %v654, 0
    %v6915 = vand.u32 %v654, 2139095040
    %v6916 = vshrl.u32 %v6915, 23
    %v6917 = vsub.s32 %v6916, 127
    %v6918 = vand.u32 2147483647, %v654
    %v6919 = vand.u32 %v6918, 8388607
    %v6920 = vor.u32 %v6919, 8388608
    %v6921 = vsub.s32 0, %v6920
    %v6922 = vadd.s32 %v6917, 1
    %vm6923 = vcmp.gt.s32.totalorder %v6922, 0
    %v6924 = vsel %vm6923, %v6922, 0
    %v6925 = vshrl.u32 %v6924, 5
    %v6926 = vand.u32 %v6924, 31
    %v6927 = vsub.s32 32, %v6926
    %v6928 = vshrl.u32 683565275, %v6927
    %v6929 = vshll.u32 683565275, %v6926
    %v6930 = vshrl.u32 2475754826, %v6927
    %v6931 = vor.u32 %v6929, %v6930
    %v6932 = vshll.u32 2475754826, %v6926
    %v6933 = vshrl.u32 2131351028, %v6927
    %v6934 = vor.u32 %v6932, %v6933
    %v6935 = vshll.u32 2131351028, %v6926
    %v6936 = vshrl.u32 2102212464, %v6927
    %v6937 = vor.u32 %v6935, %v6936
    %v6938 = vshll.u32 2102212464, %v6926
    %v6939 = vshrl.u32 920167782, %v6927
    %v6940 = vor.u32 %v6938, %v6939
    %v6941 = vshll.u32 920167782, %v6926
    %v6942 = vshrl.u32 1326507024, %v6927
    %v6943 = vor.u32 %v6941, %v6942
    %vm6944 = vcmp.lt.s32.totalorder %v6925, 1
    %vm6945 = vcmp.lt.s32.totalorder %v6925, 2
    %vm6946 = vcmp.lt.s32.totalorder %v6925, 3
    %vm6947 = vcmp.lt.s32.totalorder %v6925, 4
    %v6948 = vsel %vm6944, %v6928, %v6931
    %v6949 = vsel %vm6947, %v6937, 2102212464
    %v6950 = vsel %vm6946, %v6934, %v6949
    %v6951 = vsel %vm6945, %v6948, %v6950
    %v6952 = vsel %vm6944, %v6931, %v6934
    %v6953 = vsel %vm6947, %v6940, 920167782
    %v6954 = vsel %vm6946, %v6937, %v6953
    %v6955 = vsel %vm6945, %v6952, %v6954
    %v6956 = vsel %vm6944, %v6934, %v6937
    %v6957 = vsel %vm6947, %v6943, 1326507024
    %v6958 = vsel %vm6946, %v6940, %v6957
    %v6959 = vsel %vm6945, %v6956, %v6958
    %v6960 = vshll.u32 %v6920, 8
    %v6961 = vmul.u32.u64.compose %v6960, %v6959
    %v6962 = vextract.low.u32 %v6961
    %v6963 = vextract.high.u32 %v6961
    %v6964 = vmul.u32.u64.compose %v6960, %v6955
    %v6965 = vextract.low.u32 %v6964
    %v6966 = vextract.high.u32 %v6964
    %v6967 = vmul.u32 %v6960, %v6951
    %v6968 = vadd.s32 %v6963, %v6965
    %vm6969 = vc.u32 %v6963, %v6965
    %v6970 = vadd.s32 %v6966, 1
    %v6971 = vsel %vm6969, %v6970, %v6966
    %v6972 = vadd.s32 %v6967, %v6971
    %v6973 = vadd.s32 %v6972, 536870912
    %v6974 = vshrl.u32 %v6973, 30
    %v6975 = vshll.u32 %v6974, 30
    %v6976 = vsub.s32 %v6972, %v6975
    %vm6977 = vcmp.lt.s32.totalorder %v6976, 0
    %v6978 = vsub.s32 0, %v6976
    %v6979 = vsel %vm6977, %v6978, %v6976
    %v6980 = vclz %v6979
    %v6981 = vsub.s32 %v6980, 2
    %vm6982 = vcmp.gt.s32.totalorder 0, %v6981
    %v6983 = vsel %vm6982, 0, %v6981
    %v6984 = vsub.s32 32, %v6983
    %v6985 = vshll.u32 %v6976, %v6983
    %v6986 = vshrl.u32 %v6968, %v6984
    %v6987 = vor.u32 %v6985, %v6986
    %v6988 = vsub.s32 4294967266, %v6983
    %v6989 = vadd.s32 %v6988, 127
    %v6990 = vshll.u32 %v6989, 23
    %v6991 = vor.u32 4788187, %v6990
    %v6992 = vand.u32 2147483647, %v6991
    %v6994 = vcvt.s32.f32 %v6987
    %v6995 = vmul.f32 %v6994, %v6992
    %v6996 = vxor.u32 %v6995, 2147483648
    %v6997 = vsel %vm6914, %v6996, %v6995
    %v6998 = vsub.s32 4, %v6974
    %v6999 = vsel %vm6914, %v6998, %v6974
    %v7000 = vsel %vm6913, %v654, %v6997
    %v7001 = vsel %vm6913, 0, %v6999
    %v7002 = vcosq.f32.pop %v7000
    %v7003 = vsinq.f32.pop %v7000
    %vm7004 = vweird.f32 %v654
    %v7005 = vadd.s32 %v7001, 3
    %v7006 = vand.u32 %v7005, 3
    %vm7007 = vcmp.lt.s32.totalorder %v7006, 2
    %vm7008 = vcmp.eq.s32.totalorder %v7006, 0
    %v7009 = vxor.u32 %v7003, 2147483648
    %v7010 = vsel %vm7008, %v7002, %v7009
    %vm7011 = vcmp.eq.s32.totalorder %v7006, 2
    %v7012 = vxor.u32 %v7002, 2147483648
    %v7013 = vsel %vm7011, %v7012, %v7003
    %v7014 = vsel %vm7007, %v7010, %v7013
    %v7015 = vsel %vm7004, nan, %v7014
    %v7016 = vand.u32 2147483647, %v659
    %vm7017 = vcmp.le.f32.partialorder %v7016, 0.7853982
    %vm7018 = vcmp.lt.s32.totalorder %v659, 0
    %v7019 = vand.u32 %v659, 2139095040
    %v7020 = vshrl.u32 %v7019, 23
    %v7021 = vsub.s32 %v7020, 127
    %v7022 = vand.u32 2147483647, %v659
    %v7023 = vand.u32 %v7022, 8388607
    %v7024 = vor.u32 %v7023, 8388608
    %v7025 = vsub.s32 0, %v7024
    %v7026 = vadd.s32 %v7021, 1
    %vm7027 = vcmp.gt.s32.totalorder %v7026, 0
    %v7028 = vsel %vm7027, %v7026, 0
    %v7029 = vshrl.u32 %v7028, 5
    %v7030 = vand.u32 %v7028, 31
    %v7031 = vsub.s32 32, %v7030
    %v7032 = vshrl.u32 683565275, %v7031
    %v7033 = vshll.u32 683565275, %v7030
    %v7034 = vshrl.u32 2475754826, %v7031
    %v7035 = vor.u32 %v7033, %v7034
    %v7036 = vshll.u32 2475754826, %v7030
    %v7037 = vshrl.u32 2131351028, %v7031
    %v7038 = vor.u32 %v7036, %v7037
    %v7039 = vshll.u32 2131351028, %v7030
    %v7040 = vshrl.u32 2102212464, %v7031
    %v7041 = vor.u32 %v7039, %v7040
    %v7042 = vshll.u32 2102212464, %v7030
    %v7043 = vshrl.u32 920167782, %v7031
    %v7044 = vor.u32 %v7042, %v7043
    %v7045 = vshll.u32 920167782, %v7030
    %v7046 = vshrl.u32 1326507024, %v7031
    %v7047 = vor.u32 %v7045, %v7046
    %vm7048 = vcmp.lt.s32.totalorder %v7029, 1
    %vm7049 = vcmp.lt.s32.totalorder %v7029, 2
    %vm7050 = vcmp.lt.s32.totalorder %v7029, 3
    %vm7051 = vcmp.lt.s32.totalorder %v7029, 4
    %v7052 = vsel %vm7048, %v7032, %v7035
    %v7053 = vsel %vm7051, %v7041, 2102212464
    %v7054 = vsel %vm7050, %v7038, %v7053
    %v7055 = vsel %vm7049, %v7052, %v7054
    %v7056 = vsel %vm7048, %v7035, %v7038
    %v7057 = vsel %vm7051, %v7044, 920167782
    %v7058 = vsel %vm7050, %v7041, %v7057
    %v7059 = vsel %vm7049, %v7056, %v7058
    %v7060 = vsel %vm7048, %v7038, %v7041
    %v7061 = vsel %vm7051, %v7047, 1326507024
    %v7062 = vsel %vm7050, %v7044, %v7061
    %v7063 = vsel %vm7049, %v7060, %v7062
    %v7064 = vshll.u32 %v7024, 8
    %v7065 = vmul.u32.u64.compose %v7064, %v7063
    %v7066 = vextract.low.u32 %v7065
    %v7067 = vextract.high.u32 %v7065
    %v7068 = vmul.u32.u64.compose %v7064, %v7059
    %v7069 = vextract.low.u32 %v7068
    %v7070 = vextract.high.u32 %v7068
    %v7071 = vmul.u32 %v7064, %v7055
    %v7072 = vadd.s32 %v7067, %v7069
    %vm7073 = vc.u32 %v7067, %v7069
    %v7074 = vadd.s32 %v7070, 1
    %v7075 = vsel %vm7073, %v7074, %v7070
    %v7076 = vadd.s32 %v7071, %v7075
    %v7077 = vadd.s32 %v7076, 536870912
    %v7078 = vshrl.u32 %v7077, 30
    %v7079 = vshll.u32 %v7078, 30
    %v7080 = vsub.s32 %v7076, %v7079
    %vm7081 = vcmp.lt.s32.totalorder %v7080, 0
    %v7082 = vsub.s32 0, %v7080
    %v7083 = vsel %vm7081, %v7082, %v7080
    %v7084 = vclz %v7083
    %v7085 = vsub.s32 %v7084, 2
    %vm7086 = vcmp.gt.s32.totalorder 0, %v7085
    %v7087 = vsel %vm7086, 0, %v7085
    %v7088 = vsub.s32 32, %v7087
    %v7089 = vshll.u32 %v7080, %v7087
    %v7090 = vshrl.u32 %v7072, %v7088
    %v7091 = vor.u32 %v7089, %v7090
    %v7092 = vsub.s32 4294967266, %v7087
    %v7093 = vadd.s32 %v7092, 127
    %v7094 = vshll.u32 %v7093, 23
    %v7095 = vor.u32 4788187, %v7094
    %v7096 = vand.u32 2147483647, %v7095
    %v7098 = vcvt.s32.f32 %v7091
    %v7099 = vmul.f32 %v7098, %v7096
    %v7100 = vxor.u32 %v7099, 2147483648
    %v7101 = vsel %vm7018, %v7100, %v7099
    %v7102 = vsub.s32 4, %v7078
    %v7103 = vsel %vm7018, %v7102, %v7078
    %v7104 = vsel %vm7017, %v659, %v7101
    %v7105 = vsel %vm7017, 0, %v7103
    %v7106 = vcosq.f32.pop %v7104
    %v7107 = vsinq.f32.pop %v7104
    %vm7108 = vweird.f32 %v659
    %v7109 = vadd.s32 %v7105, 3
    %v7110 = vand.u32 %v7109, 3
    %vm7111 = vcmp.lt.s32.totalorder %v7110, 2
    %vm7112 = vcmp.eq.s32.totalorder %v7110, 0
    %v7113 = vxor.u32 %v7107, 2147483648
    %v7114 = vsel %vm7112, %v7106, %v7113
    %vm7115 = vcmp.eq.s32.totalorder %v7110, 2
    %v7116 = vxor.u32 %v7106, 2147483648
    %v7117 = vsel %vm7115, %v7116, %v7107
    %v7118 = vsel %vm7111, %v7114, %v7117
    %v7119 = vsel %vm7108, nan, %v7118
    %v7120 = vand.u32 2147483647, %v664
    %vm7121 = vcmp.le.f32.partialorder %v7120, 0.7853982
    %vm7122 = vcmp.lt.s32.totalorder %v664, 0
    %v7123 = vand.u32 %v664, 2139095040
    %v7124 = vshrl.u32 %v7123, 23
    %v7125 = vsub.s32 %v7124, 127
    %v7126 = vand.u32 2147483647, %v664
    %v7127 = vand.u32 %v7126, 8388607
    %v7128 = vor.u32 %v7127, 8388608
    %v7129 = vsub.s32 0, %v7128
    %v7130 = vadd.s32 %v7125, 1
    %vm7131 = vcmp.gt.s32.totalorder %v7130, 0
    %v7132 = vsel %vm7131, %v7130, 0
    %v7133 = vshrl.u32 %v7132, 5
    %v7134 = vand.u32 %v7132, 31
    %v7135 = vsub.s32 32, %v7134
    %v7136 = vshrl.u32 683565275, %v7135
    %v7137 = vshll.u32 683565275, %v7134
    %v7138 = vshrl.u32 2475754826, %v7135
    %v7139 = vor.u32 %v7137, %v7138
    %v7140 = vshll.u32 2475754826, %v7134
    %v7141 = vshrl.u32 2131351028, %v7135
    %v7142 = vor.u32 %v7140, %v7141
    %v7143 = vshll.u32 2131351028, %v7134
    %v7144 = vshrl.u32 2102212464, %v7135
    %v7145 = vor.u32 %v7143, %v7144
    %v7146 = vshll.u32 2102212464, %v7134
    %v7147 = vshrl.u32 920167782, %v7135
    %v7148 = vor.u32 %v7146, %v7147
    %v7149 = vshll.u32 920167782, %v7134
    %v7150 = vshrl.u32 1326507024, %v7135
    %v7151 = vor.u32 %v7149, %v7150
    %vm7152 = vcmp.lt.s32.totalorder %v7133, 1
    %vm7153 = vcmp.lt.s32.totalorder %v7133, 2
    %vm7154 = vcmp.lt.s32.totalorder %v7133, 3
    %vm7155 = vcmp.lt.s32.totalorder %v7133, 4
    %v7156 = vsel %vm7152, %v7136, %v7139
    %v7157 = vsel %vm7155, %v7145, 2102212464
    %v7158 = vsel %vm7154, %v7142, %v7157
    %v7159 = vsel %vm7153, %v7156, %v7158
    %v7160 = vsel %vm7152, %v7139, %v7142
    %v7161 = vsel %vm7155, %v7148, 920167782
    %v7162 = vsel %vm7154, %v7145, %v7161
    %v7163 = vsel %vm7153, %v7160, %v7162
    %v7164 = vsel %vm7152, %v7142, %v7145
    %v7165 = vsel %vm7155, %v7151, 1326507024
    %v7166 = vsel %vm7154, %v7148, %v7165
    %v7167 = vsel %vm7153, %v7164, %v7166
    %v7168 = vshll.u32 %v7128, 8
    %v7169 = vmul.u32.u64.compose %v7168, %v7167
    %v7170 = vextract.low.u32 %v7169
    %v7171 = vextract.high.u32 %v7169
    %v7172 = vmul.u32.u64.compose %v7168, %v7163
    %v7173 = vextract.low.u32 %v7172
    %v7174 = vextract.high.u32 %v7172
    %v7175 = vmul.u32 %v7168, %v7159
    %v7176 = vadd.s32 %v7171, %v7173
    %vm7177 = vc.u32 %v7171, %v7173
    %v7178 = vadd.s32 %v7174, 1
    %v7179 = vsel %vm7177, %v7178, %v7174
    %v7180 = vadd.s32 %v7175, %v7179
    %v7181 = vadd.s32 %v7180, 536870912
    %v7182 = vshrl.u32 %v7181, 30
    %v7183 = vshll.u32 %v7182, 30
    %v7184 = vsub.s32 %v7180, %v7183
    %vm7185 = vcmp.lt.s32.totalorder %v7184, 0
    %v7186 = vsub.s32 0, %v7184
    %v7187 = vsel %vm7185, %v7186, %v7184
    %v7188 = vclz %v7187
    %v7189 = vsub.s32 %v7188, 2
    %vm7190 = vcmp.gt.s32.totalorder 0, %v7189
    %v7191 = vsel %vm7190, 0, %v7189
    %v7192 = vsub.s32 32, %v7191
    %v7193 = vshll.u32 %v7184, %v7191
    %v7194 = vshrl.u32 %v7176, %v7192
    %v7195 = vor.u32 %v7193, %v7194
    %v7196 = vsub.s32 4294967266, %v7191
    %v7197 = vadd.s32 %v7196, 127
    %v7198 = vshll.u32 %v7197, 23
    %v7199 = vor.u32 4788187, %v7198
    %v7200 = vand.u32 2147483647, %v7199
    %v7202 = vcvt.s32.f32 %v7195
    %v7203 = vmul.f32 %v7202, %v7200
    %v7204 = vxor.u32 %v7203, 2147483648
    %v7205 = vsel %vm7122, %v7204, %v7203
    %v7206 = vsub.s32 4, %v7182
    %v7207 = vsel %vm7122, %v7206, %v7182
    %v7208 = vsel %vm7121, %v664, %v7205
    %v7209 = vsel %vm7121, 0, %v7207
    %v7210 = vcosq.f32.pop %v7208
    %v7211 = vsinq.f32.pop %v7208
    %vm7212 = vweird.f32 %v664
    %v7213 = vadd.s32 %v7209, 3
    %v7214 = vand.u32 %v7213, 3
    %vm7215 = vcmp.lt.s32.totalorder %v7214, 2
    %vm7216 = vcmp.eq.s32.totalorder %v7214, 0
    %v7217 = vxor.u32 %v7211, 2147483648
    %v7218 = vsel %vm7216, %v7210, %v7217
    %vm7219 = vcmp.eq.s32.totalorder %v7214, 2
    %v7220 = vxor.u32 %v7210, 2147483648
    %v7221 = vsel %vm7219, %v7220, %v7211
    %v7222 = vsel %vm7215, %v7218, %v7221
    %v7223 = vsel %vm7212, nan, %v7222
    %v7224 = vand.u32 2147483647, %v669
    %vm7225 = vcmp.le.f32.partialorder %v7224, 0.7853982
    %vm7226 = vcmp.lt.s32.totalorder %v669, 0
    %v7227 = vand.u32 %v669, 2139095040
    %v7228 = vshrl.u32 %v7227, 23
    %v7229 = vsub.s32 %v7228, 127
    %v7230 = vand.u32 2147483647, %v669
    %v7231 = vand.u32 %v7230, 8388607
    %v7232 = vor.u32 %v7231, 8388608
    %v7233 = vsub.s32 0, %v7232
    %v7234 = vadd.s32 %v7229, 1
    %vm7235 = vcmp.gt.s32.totalorder %v7234, 0
    %v7236 = vsel %vm7235, %v7234, 0
    %v7237 = vshrl.u32 %v7236, 5
    %v7238 = vand.u32 %v7236, 31
    %v7239 = vsub.s32 32, %v7238
    %v7240 = vshrl.u32 683565275, %v7239
    %v7241 = vshll.u32 683565275, %v7238
    %v7242 = vshrl.u32 2475754826, %v7239
    %v7243 = vor.u32 %v7241, %v7242
    %v7244 = vshll.u32 2475754826, %v7238
    %v7245 = vshrl.u32 2131351028, %v7239
    %v7246 = vor.u32 %v7244, %v7245
    %v7247 = vshll.u32 2131351028, %v7238
    %v7248 = vshrl.u32 2102212464, %v7239
    %v7249 = vor.u32 %v7247, %v7248
    %v7250 = vshll.u32 2102212464, %v7238
    %v7251 = vshrl.u32 920167782, %v7239
    %v7252 = vor.u32 %v7250, %v7251
    %v7253 = vshll.u32 920167782, %v7238
    %v7254 = vshrl.u32 1326507024, %v7239
    %v7255 = vor.u32 %v7253, %v7254
    %vm7256 = vcmp.lt.s32.totalorder %v7237, 1
    %vm7257 = vcmp.lt.s32.totalorder %v7237, 2
    %vm7258 = vcmp.lt.s32.totalorder %v7237, 3
    %vm7259 = vcmp.lt.s32.totalorder %v7237, 4
    %v7260 = vsel %vm7256, %v7240, %v7243
    %v7261 = vsel %vm7259, %v7249, 2102212464
    %v7262 = vsel %vm7258, %v7246, %v7261
    %v7263 = vsel %vm7257, %v7260, %v7262
    %v7264 = vsel %vm7256, %v7243, %v7246
    %v7265 = vsel %vm7259, %v7252, 920167782
    %v7266 = vsel %vm7258, %v7249, %v7265
    %v7267 = vsel %vm7257, %v7264, %v7266
    %v7268 = vsel %vm7256, %v7246, %v7249
    %v7269 = vsel %vm7259, %v7255, 1326507024
    %v7270 = vsel %vm7258, %v7252, %v7269
    %v7271 = vsel %vm7257, %v7268, %v7270
    %v7272 = vshll.u32 %v7232, 8
    %v7273 = vmul.u32.u64.compose %v7272, %v7271
    %v7274 = vextract.low.u32 %v7273
    %v7275 = vextract.high.u32 %v7273
    %v7276 = vmul.u32.u64.compose %v7272, %v7267
    %v7277 = vextract.low.u32 %v7276
    %v7278 = vextract.high.u32 %v7276
    %v7279 = vmul.u32 %v7272, %v7263
    %v7280 = vadd.s32 %v7275, %v7277
    %vm7281 = vc.u32 %v7275, %v7277
    %v7282 = vadd.s32 %v7278, 1
    %v7283 = vsel %vm7281, %v7282, %v7278
    %v7284 = vadd.s32 %v7279, %v7283
    %v7285 = vadd.s32 %v7284, 536870912
    %v7286 = vshrl.u32 %v7285, 30
    %v7287 = vshll.u32 %v7286, 30
    %v7288 = vsub.s32 %v7284, %v7287
    %vm7289 = vcmp.lt.s32.totalorder %v7288, 0
    %v7290 = vsub.s32 0, %v7288
    %v7291 = vsel %vm7289, %v7290, %v7288
    %v7292 = vclz %v7291
    %v7293 = vsub.s32 %v7292, 2
    %vm7294 = vcmp.gt.s32.totalorder 0, %v7293
    %v7295 = vsel %vm7294, 0, %v7293
    %v7296 = vsub.s32 32, %v7295
    %v7297 = vshll.u32 %v7288, %v7295
    %v7298 = vshrl.u32 %v7280, %v7296
    %v7299 = vor.u32 %v7297, %v7298
    %v7300 = vsub.s32 4294967266, %v7295
    %v7301 = vadd.s32 %v7300, 127
    %v7302 = vshll.u32 %v7301, 23
    %v7303 = vor.u32 4788187, %v7302
    %v7304 = vand.u32 2147483647, %v7303
    %v7306 = vcvt.s32.f32 %v7299
    %v7307 = vmul.f32 %v7306, %v7304
    %v7308 = vxor.u32 %v7307, 2147483648
    %v7309 = vsel %vm7226, %v7308, %v7307
    %v7310 = vsub.s32 4, %v7286
    %v7311 = vsel %vm7226, %v7310, %v7286
    %v7312 = vsel %vm7225, %v669, %v7309
    %v7313 = vsel %vm7225, 0, %v7311
    %v7314 = vcosq.f32.pop %v7312
    %v7315 = vsinq.f32.pop %v7312
    %vm7316 = vweird.f32 %v669
    %v7317 = vadd.s32 %v7313, 3
    %v7318 = vand.u32 %v7317, 3
    %vm7319 = vcmp.lt.s32.totalorder %v7318, 2
    %vm7320 = vcmp.eq.s32.totalorder %v7318, 0
    %v7321 = vxor.u32 %v7315, 2147483648
    %v7322 = vsel %vm7320, %v7314, %v7321
    %vm7323 = vcmp.eq.s32.totalorder %v7318, 2
    %v7324 = vxor.u32 %v7314, 2147483648
    %v7325 = vsel %vm7323, %v7324, %v7315
    %v7326 = vsel %vm7319, %v7322, %v7325
    %v7327 = vsel %vm7316, nan, %v7326
    %v7328 = vld [vmem:[%s3] sm:$0xff]
    %v7329 = vld [vmem:[%s3 + $0x8] sm:$0xff]
    %v7330 = vld [vmem:[%s3 + $0x10] sm:$0xff]
    %v7331 = vld [vmem:[%s3 + $0x18] sm:$0xff]
    %v7332 = vld [vmem:[%s3 + $0x20] sm:$0xff]
    %v7333 = vld [vmem:[%s3 + $0x28] sm:$0xff]
    %v7334 = vld [vmem:[%s3 + $0x30] sm:$0xff]
    %v7335 = vld [vmem:[%s3 + $0x38] sm:$0xff]
    %v7336 = vld [vmem:[%s3 + $0x40] sm:$0xff]
    %v7337 = vld [vmem:[%s3 + $0x48] sm:$0xff]
    %v7338 = vld [vmem:[%s3 + $0x50] sm:$0xff]
    %v7339 = vld [vmem:[%s3 + $0x58] sm:$0xff]
    %v7340 = vld [vmem:[%s3 + $0x60] sm:$0xff]
    %v7341 = vld [vmem:[%s3 + $0x68] sm:$0xff]
    %v7342 = vld [vmem:[%s3 + $0x70] sm:$0xff]
    %v7343 = vld [vmem:[%s3 + $0x78] sm:$0xff]
    %7344 = vmatprep.subr.mxu0 0.0
    %7345 = vmatpush1.msra.mxu0 %v7343
    %7346 = vmatprep.subr.mxu0 0.0
    %7347 = vmatpush1.msra.mxu0 %v7342
    %7348 = vmatprep.subr.mxu0 0.0
    %7349 = vmatpush1.msra.mxu0 %v7341
    %7350 = vmatprep.subr.mxu0 0.0
    %7351 = vmatpush1.msra.mxu0 %v7340
    %7352 = vmatprep.subr.mxu0 0.0
    %7353 = vmatpush1.msra.mxu0 %v7339
    %7354 = vmatprep.subr.mxu0 0.0
    %7355 = vmatpush1.msra.mxu0 %v7338
    %7356 = vmatprep.subr.mxu0 0.0
    %7357 = vmatpush1.msra.mxu0 %v7337
    %7358 = vmatprep.subr.mxu0 0.0
    %7359 = vmatpush1.msra.mxu0 %v7336
    %7360 = vmatprep.subr.mxu0 0.0
    %7361 = vmatpush1.msra.mxu0 %v7335
    %7362 = vmatprep.subr.mxu0 0.0
    %7363 = vmatpush1.msra.mxu0 %v7334
    %7364 = vmatprep.subr.mxu0 0.0
    %7365 = vmatpush1.msra.mxu0 %v7333
    %7366 = vmatprep.subr.mxu0 0.0
    %7367 = vmatpush1.msra.mxu0 %v7332
    %7368 = vmatprep.subr.mxu0 0.0
    %7369 = vmatpush1.msra.mxu0 %v7331
    %7370 = vmatprep.subr.mxu0 0.0
    %7371 = vmatpush1.msra.mxu0 %v7330
    %7372 = vmatprep.subr.mxu0 0.0
    %7373 = vmatpush1.msra.mxu0 %v7329
    %7374 = vmatprep.subr.mxu0 0.0
    %7375 = vmatpush1.msra.mxu0 %v7328
    %7376 = vmatprep.subr.mxu0 0.0
    %7377 = vmatpush2.msra.mxu0 0.0
    %7378 = vmatprep.subr.mxu0 0.0
    %7379 = vmatpush2.msra.mxu0 0.0
    %7380 = vmatprep.subr.mxu0 0.0
    %7381 = vmatpush2.msra.mxu0 0.0
    %7382 = vmatprep.subr.mxu0 0.0
    %7383 = vmatpush2.msra.mxu0 0.0
    %7384 = vmatprep.subr.mxu0 0.0
    %7385 = vmatpush2.msra.mxu0 0.0
    %7386 = vmatprep.subr.mxu0 0.0
    %7387 = vmatpush2.msra.mxu0 0.0
    %7388 = vmatprep.subr.mxu0 0.0
    %7389 = vmatpush2.msra.mxu0 0.0
    %7390 = vmatprep.subr.mxu0 0.0
    %7391 = vmatpush2.msra.mxu0 0.0
    %7392 = vmatprep.subr.mxu0 0.0
    %7393 = vmatpush2.msra.mxu0 0.0
    %7394 = vmatprep.subr.mxu0 0.0
    %7395 = vmatpush2.msra.mxu0 0.0
    %7396 = vmatprep.subr.mxu0 0.0
    %7397 = vmatpush2.msra.mxu0 0.0
    %7398 = vmatprep.subr.mxu0 0.0
    %7399 = vmatpush2.msra.mxu0 0.0
    %7400 = vmatprep.subr.mxu0 0.0
    %7401 = vmatpush2.msra.mxu0 0.0
    %7402 = vmatprep.subr.mxu0 0.0
    %7403 = vmatpush2.msra.mxu0 0.0
    %7404 = vmatprep.subr.mxu0 0.0
    %7405 = vmatpush2.msra.mxu0 0.0
    %7406 = vmatprep.subr.mxu0 0.0
    %7407 = vmatpush2.msra.mxu0 0.0
    %7408 = vmatprep.mubr.f32.mxu0 0.0
    %7409 = vmatmul.mubr.f32.gmra.mxu0 %v775
    %v7410 = vpop.f32.mrf.mxu0
    %v7411 = vadd.f32 0.0, %v7410
    %v7412 = vpop.f32.mrf.mxu0
    %7413 = vmatprep.mubr.f32.mxu0 0.0
    %7414 = vmatmul.mubr.f32.gmra.mxu0 %v879
    %v7415 = vpop.f32.mrf.mxu0
    %v7416 = vadd.f32 0.0, %v7415
    %v7417 = vpop.f32.mrf.mxu0
    %7418 = vmatprep.mubr.f32.mxu0 0.0
    %7419 = vmatmul.mubr.f32.gmra.mxu0 %v983
    %v7420 = vpop.f32.mrf.mxu0
    %v7421 = vadd.f32 0.0, %v7420
    %v7422 = vpop.f32.mrf.mxu0
    %7423 = vmatprep.mubr.f32.mxu0 0.0
    %7424 = vmatmul.mubr.f32.gmra.mxu0 %v1087
    %v7425 = vpop.f32.mrf.mxu0
    %v7426 = vadd.f32 0.0, %v7425
    %v7427 = vpop.f32.mrf.mxu0
    %7428 = vmatprep.mubr.f32.mxu0 0.0
    %7429 = vmatmul.mubr.f32.gmra.mxu0 %v1191
    %v7430 = vpop.f32.mrf.mxu0
    %v7431 = vadd.f32 0.0, %v7430
    %v7432 = vpop.f32.mrf.mxu0
    %7433 = vmatprep.mubr.f32.mxu0 0.0
    %7434 = vmatmul.mubr.f32.gmra.mxu0 %v1295
    %v7435 = vpop.f32.mrf.mxu0
    %v7436 = vadd.f32 0.0, %v7435
    %v7437 = vpop.f32.mrf.mxu0
    %7438 = vmatprep.mubr.f32.mxu0 0.0
    %7439 = vmatmul.mubr.f32.gmra.mxu0 %v1399
    %v7440 = vpop.f32.mrf.mxu0
    %v7441 = vadd.f32 0.0, %v7440
    %v7442 = vpop.f32.mrf.mxu0
    %7443 = vmatprep.mubr.f32.mxu0 0.0
    %7444 = vmatmul.mubr.f32.gmra.mxu0 %v1503
    %v7445 = vpop.f32.mrf.mxu0
    %v7446 = vadd.f32 0.0, %v7445
    %v7447 = vpop.f32.mrf.mxu0
    %7448 = vmatprep.mubr.f32.mxu0 0.0
    %7449 = vmatmul.mubr.f32.gmra.mxu0 %v1607
    %v7450 = vpop.f32.mrf.mxu0
    %v7451 = vadd.f32 0.0, %v7450
    %v7452 = vpop.f32.mrf.mxu0
    %7453 = vmatprep.mubr.f32.mxu0 0.0
    %7454 = vmatmul.mubr.f32.gmra.mxu0 %v1711
    %v7455 = vpop.f32.mrf.mxu0
    %v7456 = vadd.f32 0.0, %v7455
    %v7457 = vpop.f32.mrf.mxu0
    %7458 = vmatprep.mubr.f32.mxu0 0.0
    %7459 = vmatmul.mubr.f32.gmra.mxu0 %v1815
    %v7460 = vpop.f32.mrf.mxu0
    %v7461 = vadd.f32 0.0, %v7460
    %v7462 = vpop.f32.mrf.mxu0
    %7463 = vmatprep.mubr.f32.mxu0 0.0
    %7464 = vmatmul.mubr.f32.gmra.mxu0 %v1919
    %v7465 = vpop.f32.mrf.mxu0
    %v7466 = vadd.f32 0.0, %v7465
    %v7467 = vpop.f32.mrf.mxu0
    %7468 = vmatprep.mubr.f32.mxu0 0.0
    %7469 = vmatmul.mubr.f32.gmra.mxu0 %v2023
    %v7470 = vpop.f32.mrf.mxu0
    %v7471 = vadd.f32 0.0, %v7470
    %v7472 = vpop.f32.mrf.mxu0
    %7473 = vmatprep.mubr.f32.mxu0 0.0
    %7474 = vmatmul.mubr.f32.gmra.mxu0 %v2127
    %v7475 = vpop.f32.mrf.mxu0
    %v7476 = vadd.f32 0.0, %v7475
    %v7477 = vpop.f32.mrf.mxu0
    %7478 = vmatprep.mubr.f32.mxu0 0.0
    %7479 = vmatmul.mubr.f32.gmra.mxu0 %v2231
    %v7480 = vpop.f32.mrf.mxu0
    %v7481 = vadd.f32 0.0, %v7480
    %v7482 = vpop.f32.mrf.mxu0
    %7483 = vmatprep.mubr.f32.mxu0 0.0
    %7484 = vmatmul.mubr.f32.gmra.mxu0 %v2335
    %v7485 = vpop.f32.mrf.mxu0
    %v7486 = vadd.f32 0.0, %v7485
    %v7487 = vpop.f32.mrf.mxu0
    %7488 = vmatprep.mubr.f32.mxu0 0.0
    %7489 = vmatmul.mubr.f32.gmra.mxu0 %v2439
    %v7490 = vpop.f32.mrf.mxu0
    %v7491 = vadd.f32 0.0, %v7490
    %v7492 = vpop.f32.mrf.mxu0
    %7493 = vmatprep.mubr.f32.mxu0 0.0
    %7494 = vmatmul.mubr.f32.gmra.mxu0 %v2543
    %v7495 = vpop.f32.mrf.mxu0
    %v7496 = vadd.f32 0.0, %v7495
    %v7497 = vpop.f32.mrf.mxu0
    %7498 = vmatprep.mubr.f32.mxu0 0.0
    %7499 = vmatmul.mubr.f32.gmra.mxu0 %v2647
    %v7500 = vpop.f32.mrf.mxu0
    %v7501 = vadd.f32 0.0, %v7500
    %v7502 = vpop.f32.mrf.mxu0
    %7503 = vmatprep.mubr.f32.mxu0 0.0
    %7504 = vmatmul.mubr.f32.gmra.mxu0 %v2751
    %v7505 = vpop.f32.mrf.mxu0
    %v7506 = vadd.f32 0.0, %v7505
    %v7507 = vpop.f32.mrf.mxu0
    %7508 = vmatprep.mubr.f32.mxu0 0.0
    %7509 = vmatmul.mubr.f32.gmra.mxu0 %v2855
    %v7510 = vpop.f32.mrf.mxu0
    %v7511 = vadd.f32 0.0, %v7510
    %v7512 = vpop.f32.mrf.mxu0
    %7513 = vmatprep.mubr.f32.mxu0 0.0
    %7514 = vmatmul.mubr.f32.gmra.mxu0 %v2959
    %v7515 = vpop.f32.mrf.mxu0
    %v7516 = vadd.f32 0.0, %v7515
    %v7517 = vpop.f32.mrf.mxu0
    %7518 = vmatprep.mubr.f32.mxu0 0.0
    %7519 = vmatmul.mubr.f32.gmra.mxu0 %v3063
    %v7520 = vpop.f32.mrf.mxu0
    %v7521 = vadd.f32 0.0, %v7520
    %v7522 = vpop.f32.mrf.mxu0
    %7523 = vmatprep.mubr.f32.mxu0 0.0
    %7524 = vmatmul.mubr.f32.gmra.mxu0 %v3167
    %v7525 = vpop.f32.mrf.mxu0
    %v7526 = vadd.f32 0.0, %v7525
    %v7527 = vpop.f32.mrf.mxu0
    %7528 = vmatprep.mubr.f32.mxu0 0.0
    %7529 = vmatmul.mubr.f32.gmra.mxu0 %v3271
    %v7530 = vpop.f32.mrf.mxu0
    %v7531 = vadd.f32 0.0, %v7530
    %v7532 = vpop.f32.mrf.mxu0
    %7533 = vmatprep.mubr.f32.mxu0 0.0
    %7534 = vmatmul.mubr.f32.gmra.mxu0 %v3375
    %v7535 = vpop.f32.mrf.mxu0
    %v7536 = vadd.f32 0.0, %v7535
    %v7537 = vpop.f32.mrf.mxu0
    %7538 = vmatprep.mubr.f32.mxu0 0.0
    %7539 = vmatmul.mubr.f32.gmra.mxu0 %v3479
    %v7540 = vpop.f32.mrf.mxu0
    %v7541 = vadd.f32 0.0, %v7540
    %v7542 = vpop.f32.mrf.mxu0
    %7543 = vmatprep.mubr.f32.mxu0 0.0
    %7544 = vmatmul.mubr.f32.gmra.mxu0 %v3583
    %v7545 = vpop.f32.mrf.mxu0
    %v7546 = vadd.f32 0.0, %v7545
    %v7547 = vpop.f32.mrf.mxu0
    %7548 = vmatprep.mubr.f32.mxu0 0.0
    %7549 = vmatmul.mubr.f32.gmra.mxu0 %v3687
    %v7550 = vpop.f32.mrf.mxu0
    %v7551 = vadd.f32 0.0, %v7550
    %v7552 = vpop.f32.mrf.mxu0
    %7553 = vmatprep.mubr.f32.mxu0 0.0
    %7554 = vmatmul.mubr.f32.gmra.mxu0 %v3791
    %v7555 = vpop.f32.mrf.mxu0
    %v7556 = vadd.f32 0.0, %v7555
    %v7557 = vpop.f32.mrf.mxu0
    %7558 = vmatprep.mubr.f32.mxu0 0.0
    %7559 = vmatmul.mubr.f32.gmra.mxu0 %v3895
    %v7560 = vpop.f32.mrf.mxu0
    %v7561 = vadd.f32 0.0, %v7560
    %v7562 = vpop.f32.mrf.mxu0
    %7563 = vmatprep.mubr.f32.mxu0 0.0
    %7564 = vmatmul.mubr.f32.gmra.mxu0 %v3999
    %v7565 = vpop.f32.mrf.mxu0
    %v7566 = vadd.f32 0.0, %v7565
    %v7567 = vpop.f32.mrf.mxu0
    %7568 = vmatprep.mubr.f32.mxu0 0.0
    %7569 = vmatmul.mubr.f32.gmra.mxu0 %v4103
    %v7570 = vpop.f32.mrf.mxu0
    %v7571 = vadd.f32 0.0, %v7570
    %v7572 = vpop.f32.mrf.mxu0
    %7573 = vmatprep.mubr.f32.mxu0 0.0
    %7574 = vmatmul.mubr.f32.gmra.mxu0 %v4207
    %v7575 = vpop.f32.mrf.mxu0
    %v7576 = vadd.f32 0.0, %v7575
    %v7577 = vpop.f32.mrf.mxu0
    %7578 = vmatprep.mubr.f32.mxu0 0.0
    %7579 = vmatmul.mubr.f32.gmra.mxu0 %v4311
    %v7580 = vpop.f32.mrf.mxu0
    %v7581 = vadd.f32 0.0, %v7580
    %v7582 = vpop.f32.mrf.mxu0
    %7583 = vmatprep.mubr.f32.mxu0 0.0
    %7584 = vmatmul.mubr.f32.gmra.mxu0 %v4415
    %v7585 = vpop.f32.mrf.mxu0
    %v7586 = vadd.f32 0.0, %v7585
    %v7587 = vpop.f32.mrf.mxu0
    %7588 = vmatprep.mubr.f32.mxu0 0.0
    %7589 = vmatmul.mubr.f32.gmra.mxu0 %v4519
    %v7590 = vpop.f32.mrf.mxu0
    %v7591 = vadd.f32 0.0, %v7590
    %v7592 = vpop.f32.mrf.mxu0
    %7593 = vmatprep.mubr.f32.mxu0 0.0
    %7594 = vmatmul.mubr.f32.gmra.mxu0 %v4623
    %v7595 = vpop.f32.mrf.mxu0
    %v7596 = vadd.f32 0.0, %v7595
    %v7597 = vpop.f32.mrf.mxu0
    %7598 = vmatprep.mubr.f32.mxu0 0.0
    %7599 = vmatmul.mubr.f32.gmra.mxu0 %v4727
    %v7600 = vpop.f32.mrf.mxu0
    %v7601 = vadd.f32 0.0, %v7600
    %v7602 = vpop.f32.mrf.mxu0
    %7603 = vmatprep.mubr.f32.mxu0 0.0
    %7604 = vmatmul.mubr.f32.gmra.mxu0 %v4831
    %v7605 = vpop.f32.mrf.mxu0
    %v7606 = vadd.f32 0.0, %v7605
    %v7607 = vpop.f32.mrf.mxu0
    %7608 = vmatprep.mubr.f32.mxu0 0.0
    %7609 = vmatmul.mubr.f32.gmra.mxu0 %v4935
    %v7610 = vpop.f32.mrf.mxu0
    %v7611 = vadd.f32 0.0, %v7610
    %v7612 = vpop.f32.mrf.mxu0
    %7613 = vmatprep.mubr.f32.mxu0 0.0
    %7614 = vmatmul.mubr.f32.gmra.mxu0 %v5039
    %v7615 = vpop.f32.mrf.mxu0
    %v7616 = vadd.f32 0.0, %v7615
    %v7617 = vpop.f32.mrf.mxu0
    %7618 = vmatprep.mubr.f32.mxu0 0.0
    %7619 = vmatmul.mubr.f32.gmra.mxu0 %v5143
    %v7620 = vpop.f32.mrf.mxu0
    %v7621 = vadd.f32 0.0, %v7620
    %v7622 = vpop.f32.mrf.mxu0
    %7623 = vmatprep.mubr.f32.mxu0 0.0
    %7624 = vmatmul.mubr.f32.gmra.mxu0 %v5247
    %v7625 = vpop.f32.mrf.mxu0
    %v7626 = vadd.f32 0.0, %v7625
    %v7627 = vpop.f32.mrf.mxu0
    %7628 = vmatprep.mubr.f32.mxu0 0.0
    %7629 = vmatmul.mubr.f32.gmra.mxu0 %v5351
    %v7630 = vpop.f32.mrf.mxu0
    %v7631 = vadd.f32 0.0, %v7630
    %v7632 = vpop.f32.mrf.mxu0
    %7633 = vmatprep.mubr.f32.mxu0 0.0
    %7634 = vmatmul.mubr.f32.gmra.mxu0 %v5455
    %v7635 = vpop.f32.mrf.mxu0
    %v7636 = vadd.f32 0.0, %v7635
    %v7637 = vpop.f32.mrf.mxu0
    %7638 = vmatprep.mubr.f32.mxu0 0.0
    %7639 = vmatmul.mubr.f32.gmra.mxu0 %v5559
    %v7640 = vpop.f32.mrf.mxu0
    %v7641 = vadd.f32 0.0, %v7640
    %v7642 = vpop.f32.mrf.mxu0
    %7643 = vmatprep.mubr.f32.mxu0 0.0
    %7644 = vmatmul.mubr.f32.gmra.mxu0 %v5663
    %v7645 = vpop.f32.mrf.mxu0
    %v7646 = vadd.f32 0.0, %v7645
    %v7647 = vpop.f32.mrf.mxu0
    %7648 = vmatprep.mubr.f32.mxu0 0.0
    %7649 = vmatmul.mubr.f32.gmra.mxu0 %v5767
    %v7650 = vpop.f32.mrf.mxu0
    %v7651 = vadd.f32 0.0, %v7650
    %v7652 = vpop.f32.mrf.mxu0
    %7653 = vmatprep.mubr.f32.mxu0 0.0
    %7654 = vmatmul.mubr.f32.gmra.mxu0 %v5871
    %v7655 = vpop.f32.mrf.mxu0
    %v7656 = vadd.f32 0.0, %v7655
    %v7657 = vpop.f32.mrf.mxu0
    %7658 = vmatprep.mubr.f32.mxu0 0.0
    %7659 = vmatmul.mubr.f32.gmra.mxu0 %v5975
    %v7660 = vpop.f32.mrf.mxu0
    %v7661 = vadd.f32 0.0, %v7660
    %v7662 = vpop.f32.mrf.mxu0
    %7663 = vmatprep.mubr.f32.mxu0 0.0
    %7664 = vmatmul.mubr.f32.gmra.mxu0 %v6079
    %v7665 = vpop.f32.mrf.mxu0
    %v7666 = vadd.f32 0.0, %v7665
    %v7667 = vpop.f32.mrf.mxu0
    %7668 = vmatprep.mubr.f32.mxu0 0.0
    %7669 = vmatmul.mubr.f32.gmra.mxu0 %v6183
    %v7670 = vpop.f32.mrf.mxu0
    %v7671 = vadd.f32 0.0, %v7670
    %v7672 = vpop.f32.mrf.mxu0
    %7673 = vmatprep.mubr.f32.mxu0 0.0
    %7674 = vmatmul.mubr.f32.gmra.mxu0 %v6287
    %v7675 = vpop.f32.mrf.mxu0
    %v7676 = vadd.f32 0.0, %v7675
    %v7677 = vpop.f32.mrf.mxu0
    %7678 = vmatprep.mubr.f32.mxu0 0.0
    %7679 = vmatmul.mubr.f32.gmra.mxu0 %v6391
    %v7680 = vpop.f32.mrf.mxu0
    %v7681 = vadd.f32 0.0, %v7680
    %v7682 = vpop.f32.mrf.mxu0
    %7683 = vmatprep.mubr.f32.mxu0 0.0
    %7684 = vmatmul.mubr.f32.gmra.mxu0 %v6495
    %v7685 = vpop.f32.mrf.mxu0
    %v7686 = vadd.f32 0.0, %v7685
    %v7687 = vpop.f32.mrf.mxu0
    %7688 = vmatprep.mubr.f32.mxu0 0.0
    %7689 = vmatmul.mubr.f32.gmra.mxu0 %v6599
    %v7690 = vpop.f32.mrf.mxu0
    %v7691 = vadd.f32 0.0, %v7690
    %v7692 = vpop.f32.mrf.mxu0
    %7693 = vmatprep.mubr.f32.mxu0 0.0
    %7694 = vmatmul.mubr.f32.gmra.mxu0 %v6703
    %v7695 = vpop.f32.mrf.mxu0
    %v7696 = vadd.f32 0.0, %v7695
    %v7697 = vpop.f32.mrf.mxu0
    %7698 = vmatprep.mubr.f32.mxu0 0.0
    %7699 = vmatmul.mubr.f32.gmra.mxu0 %v6807
    %v7700 = vpop.f32.mrf.mxu0
    %v7701 = vadd.f32 0.0, %v7700
    %v7702 = vpop.f32.mrf.mxu0
    %7703 = vmatprep.mubr.f32.mxu0 0.0
    %7704 = vmatmul.mubr.f32.gmra.mxu0 %v6911
    %v7705 = vpop.f32.mrf.mxu0
    %v7706 = vadd.f32 0.0, %v7705
    %v7707 = vpop.f32.mrf.mxu0
    %7708 = vmatprep.mubr.f32.mxu0 0.0
    %7709 = vmatmul.mubr.f32.gmra.mxu0 %v7015
    %v7710 = vpop.f32.mrf.mxu0
    %v7711 = vadd.f32 0.0, %v7710
    %v7712 = vpop.f32.mrf.mxu0
    %7713 = vmatprep.mubr.f32.mxu0 0.0
    %7714 = vmatmul.mubr.f32.gmra.mxu0 %v7119
    %v7715 = vpop.f32.mrf.mxu0
    %v7716 = vadd.f32 0.0, %v7715
    %v7717 = vpop.f32.mrf.mxu0
    %7718 = vmatprep.mubr.f32.mxu0 0.0
    %7719 = vmatmul.mubr.f32.gmra.mxu0 %v7223
    %v7720 = vpop.f32.mrf.mxu0
    %v7721 = vadd.f32 0.0, %v7720
    %v7722 = vpop.f32.mrf.mxu0
    %7723 = vmatprep.mubr.f32.mxu0 0.0
    %7724 = vmatmul.mubr.f32.gmra.mxu0 %v7327
    %v7725 = vpop.f32.mrf.mxu0
    %v7726 = vadd.f32 0.0, %v7725
    %v7727 = vpop.f32.mrf.mxu0
    %7728 = vdwg.mxu0
    %7729 = vst [vmem:[#allocation2] sm:$0xff] %v7411
    %7730 = vst [vmem:[#allocation2 + $0x8] sm:$0xff] %v7416
    %7731 = vst [vmem:[#allocation2 + $0x10] sm:$0xff] %v7421
    %7732 = vst [vmem:[#allocation2 + $0x18] sm:$0xff] %v7426
    %7733 = vst [vmem:[#allocation2 + $0x20] sm:$0xff] %v7431
    %7734 = vst [vmem:[#allocation2 + $0x28] sm:$0xff] %v7436
    %7735 = vst [vmem:[#allocation2 + $0x30] sm:$0xff] %v7441
    %7736 = vst [vmem:[#allocation2 + $0x38] sm:$0xff] %v7446
    %7737 = vst [vmem:[#allocation2 + $0x40] sm:$0xff] %v7451
    %7738 = vst [vmem:[#allocation2 + $0x48] sm:$0xff] %v7456
    %7739 = vst [vmem:[#allocation2 + $0x50] sm:$0xff] %v7461
    %7740 = vst [vmem:[#allocation2 + $0x58] sm:$0xff] %v7466
    %7741 = vst [vmem:[#allocation2 + $0x60] sm:$0xff] %v7471
    %7742 = vst [vmem:[#allocation2 + $0x68] sm:$0xff] %v7476
    %7743 = vst [vmem:[#allocation2 + $0x70] sm:$0xff] %v7481
    %7744 = vst [vmem:[#allocation2 + $0x78] sm:$0xff] %v7486
    %7745 = vst [vmem:[#allocation2 + $0x80] sm:$0xff] %v7491
    %7746 = vst [vmem:[#allocation2 + $0x88] sm:$0xff] %v7496
    %7747 = vst [vmem:[#allocation2 + $0x90] sm:$0xff] %v7501
    %7748 = vst [vmem:[#allocation2 + $0x98] sm:$0xff] %v7506
    %7749 = vst [vmem:[#allocation2 + $0xa0] sm:$0xff] %v7511
    %7750 = vst [vmem:[#allocation2 + $0xa8] sm:$0xff] %v7516
    %7751 = vst [vmem:[#allocation2 + $0xb0] sm:$0xff] %v7521
    %7752 = vst [vmem:[#allocation2 + $0xb8] sm:$0xff] %v7526
    %7753 = vst [vmem:[#allocation2 + $0xc0] sm:$0xff] %v7531
    %7754 = vst [vmem:[#allocation2 + $0xc8] sm:$0xff] %v7536
    %7755 = vst [vmem:[#allocation2 + $0xd0] sm:$0xff] %v7541
    %7756 = vst [vmem:[#allocation2 + $0xd8] sm:$0xff] %v7546
    %7757 = vst [vmem:[#allocation2 + $0xe0] sm:$0xff] %v7551
    %7758 = vst [vmem:[#allocation2 + $0xe8] sm:$0xff] %v7556
    %7759 = vst [vmem:[#allocation2 + $0xf0] sm:$0xff] %v7561
    %7760 = vst [vmem:[#allocation2 + $0xf8] sm:$0xff] %v7566
    %7761 = vst [vmem:[#allocation2 + $0x100] sm:$0xff] %v7571
    %7762 = vst [vmem:[#allocation2 + $0x108] sm:$0xff] %v7576
    %7763 = vst [vmem:[#allocation2 + $0x110] sm:$0xff] %v7581
    %7764 = vst [vmem:[#allocation2 + $0x118] sm:$0xff] %v7586
    %7765 = vst [vmem:[#allocation2 + $0x120] sm:$0xff] %v7591
    %7766 = vst [vmem:[#allocation2 + $0x128] sm:$0xff] %v7596
    %7767 = vst [vmem:[#allocation2 + $0x130] sm:$0xff] %v7601
    %7768 = vst [vmem:[#allocation2 + $0x138] sm:$0xff] %v7606
    %7769 = vst [vmem:[#allocation2 + $0x140] sm:$0xff] %v7611
    %7770 = vst [vmem:[#allocation2 + $0x148] sm:$0xff] %v7616
    %7771 = vst [vmem:[#allocation2 + $0x150] sm:$0xff] %v7621
    %7772 = vst [vmem:[#allocation2 + $0x158] sm:$0xff] %v7626
    %7773 = vst [vmem:[#allocation2 + $0x160] sm:$0xff] %v7631
    %7774 = vst [vmem:[#allocation2 + $0x168] sm:$0xff] %v7636
    %7775 = vst [vmem:[#allocation2 + $0x170] sm:$0xff] %v7641
    %7776 = vst [vmem:[#allocation2 + $0x178] sm:$0xff] %v7646
    %7777 = vst [vmem:[#allocation2 + $0x180] sm:$0xff] %v7651
    %7778 = vst [vmem:[#allocation2 + $0x188] sm:$0xff] %v7656
    %7779 = vst [vmem:[#allocation2 + $0x190] sm:$0xff] %v7661
    %7780 = vst [vmem:[#allocation2 + $0x198] sm:$0xff] %v7666
    %7781 = vst [vmem:[#allocation2 + $0x1a0] sm:$0xff] %v7671
    %7782 = vst [vmem:[#allocation2 + $0x1a8] sm:$0xff] %v7676
    %7783 = vst [vmem:[#allocation2 + $0x1b0] sm:$0xff] %v7681
    %7784 = vst [vmem:[#allocation2 + $0x1b8] sm:$0xff] %v7686
    %7785 = vst [vmem:[#allocation2 + $0x1c0] sm:$0xff] %v7691
    %7786 = vst [vmem:[#allocation2 + $0x1c8] sm:$0xff] %v7696
    %7787 = vst [vmem:[#allocation2 + $0x1d0] sm:$0xff] %v7701
    %7788 = vst [vmem:[#allocation2 + $0x1d8] sm:$0xff] %v7706
    %7789 = vst [vmem:[#allocation2 + $0x1e0] sm:$0xff] %v7711
    %7790 = vst [vmem:[#allocation2 + $0x1e8] sm:$0xff] %v7716
    %7791 = vst [vmem:[#allocation2 + $0x1f0] sm:$0xff] %v7721
    %7792 = vst [vmem:[#allocation2 + $0x1f8] sm:$0xff] %v7726
    // Predicated region
    $region18: #{tpu_custom_call.1} parent=1 // pred_check
      _
    $region19: #{tpu_custom_call.1} parent=1 // pred_check_branch
      %7794 = sbr.rel (0) target = $region21
    $region20: #{tpu_custom_call.1} parent=1 // pred_region
      %s7796 = ssub.s32 8192, 8192
      %7797 = vsyncadd [#allocation3], %s7796
      %s7798 = sshll.u32 [#allocation2], 4
      %s7799 = int_to_ptr.vmem [resolvable:$true] %s7798
      %7804 = dma.vmem_to_hbm [thread:$0]  %s7799, 8192, %s4, [#allocation3], 128, 128, 8
    $region21: #{tpu_custom_call.1} parent=1 // pred_fallthru
      _
    // Predicated region
    $region22: #{tpu_custom_call.1} parent=1 // pred_check
      _
    $region23: #{tpu_custom_call.1} parent=1 // pred_check_branch
      %7806 = sbr.rel (0) target = $region25
    $region24: #{tpu_custom_call.1} parent=1 // pred_region
      %7807 = dma.done [#allocation3], 8192
    $region25: #{tpu_custom_call.1} parent=1 // pred_fallthru
      _
    %7808 = vsyncpa [#allocation3], 1

</llo_original>
